<compile_context>
chip_gen: v7x
topology: tpu7x:2x2x1
jax: 0.10.0
libtpu: 0.0.40
codegen_flags: <defaults>
</compile_context>

<pallas_src>
import math
import functools

import jax
import jax.numpy as jnp
from jax.experimental import pallas as pl
from jax.experimental.pallas import tpu as pltpu

_LANES = 128
_SUBLANES = 8
_HIGHEST = jax.lax.Precision.HIGHEST  # full-f32 MXU passes; freqs up to 2^9*pi
                                      # would amplify low-precision passes.


def _round_up(x, m):
    return (x + m - 1) // m * m


def _pick_row_tile(rows, block_rows):
    """Row tile (multiple of 8); keep >=2 grid steps when possible so the
    'parallel' axis can be sharded across both v7x TensorCores."""
    tb = min(block_rows, _round_up(rows, _SUBLANES))
    if rows > _SUBLANES and _round_up(rows, tb) // tb < 2:
        tb = _round_up(pl.cdiv(rows, 2), _SUBLANES)
    return tb


def _pick_groups(out_dim):
    """How many batch rows to fold into the lane axis (no-affine path)."""
    if out_dim % _LANES == 0 or out_dim >= 4 * _LANES:
        return 1
    for g in (8, 16, 32, 64):
        if (g * out_dim) % _LANES == 0:
            return g
    return 32


# ----------------------------- kernel bodies --------------------------------

def _make_affine_kernel(in_dim, D, FD, append_xyz, KP):
    pad = KP - in_dim

    def _x_padded(x_ref):
        x = x_ref[...].astype(jnp.float32)
        if pad == 0:
            return x
        # Zero-pad the contracting dim to a full lane tile (cheap, in-register).
        return jnp.concatenate(
            [x, jnp.zeros((x.shape[0], pad), jnp.float32)], axis=-1)

    if append_xyz:
        def kernel(x_ref, ws_ref, bs_ref, w_ref, b_ref, o_ref):
            xp = _x_padded(x_ref)
            # One MXU matmul does affine + per-frequency scaling + replication.
            hs = jnp.dot(xp, ws_ref[...], preferred_element_type=jnp.float32,
                         precision=_HIGHEST)[:, :FD] + bs_ref[...]
            h = jnp.dot(xp, w_ref[...], preferred_element_type=jnp.float32,
                        precision=_HIGHEST)[:, :D] + b_ref[...]
            # Single coalesced full-width (unmasked) store.
            o_ref[...] = jnp.concatenate(
                [h, jnp.sin(hs), jnp.cos(hs)], axis=-1).astype(o_ref.dtype)
    else:
        def kernel(x_ref, ws_ref, bs_ref, o_ref):
            xp = _x_padded(x_ref)
            hs = jnp.dot(xp, ws_ref[...], preferred_element_type=jnp.float32,
                         precision=_HIGHEST)[:, :FD] + bs_ref[...]
            o_ref[...] = jnp.concatenate(
                [jnp.sin(hs), jnp.cos(hs)], axis=-1).astype(o_ref.dtype)
    return kernel


def _make_folded_kernel(width, npad):
    def kernel(x_ref, e_ref, reg_ref, o_ref):
        # Block-diagonal replicate+scale straight into the final lane layout.
        blob = jnp.dot(x_ref[...].astype(jnp.float32), e_ref[...],
                       preferred_element_type=jnp.float32, precision=_HIGHEST)
        reg = jnp.broadcast_to(reg_ref[...], blob.shape)
        res = jnp.where(reg == 1, jnp.sin(blob),
                        jnp.where(reg == 2, jnp.cos(blob), blob))
        if npad != width:
            res = res[:, :width]
        o_ref[...] = res.astype(o_ref.dtype)
    return kernel


# ------------------------------- wrapper -------------------------------------

@functools.partial(
    jax.jit,
    static_argnames=("N_freqs", "append_xyz", "block_rows", "out_dtype"))
def pos_encoding(x, W=None, b=None, *, N_freqs=10, append_xyz=False,
                 block_rows=512, out_dtype=jnp.float32):
    """Pallas implementation of PosEncoding.forward.

    x: (B, in_dim) float32.  W/b: optional affine weight (in_dim, affine_dim)
    and bias (affine_dim,) (the nn.Linear when xyz_affine=True).
    out_dtype=jnp.bfloat16 halves the HBM writeback (compute stays f32).
    """
    has_affine = W is not None
    B, in_dim = x.shape
    D = W.shape[1] if has_affine else in_dim
    FD = N_freqs * D
    out_dim = (D if append_xyz else 0) + 2 * FD
    freqs = jnp.asarray([2.0 ** k * math.pi for k in range(N_freqs)],
                        jnp.float32)
    osize = jnp.dtype(out_dtype).itemsize

    if has_affine:
        assert b is not None
        # Pre-scaled weights (exact, elementwise): WS[k, j*D+d] = W[k,d]*freqs[j]
        WS = (W[:, None, :] * freqs[None, :, None]).reshape(in_dim, FD)
        bS = (freqs[:, None] * b[None, :]).reshape(1, FD)
        KP = _round_up(in_dim, _LANES)
        NPws = _round_up(FD, _LANES)
        WSp = jnp.zeros((KP, NPws), jnp.float32).at[:in_dim, :FD].set(WS)

        TB = _pick_row_tile(B, block_rows)
        Bp = _round_up(B, TB)
        xp = jnp.pad(x, ((0, Bp - B), (0, 0))) if Bp != B else x

        in_specs = [pl.BlockSpec((TB, in_dim), lambda i: (i, 0)),
                    pl.BlockSpec((KP, NPws), lambda i: (0, 0)),   # VMEM-resident
                    pl.BlockSpec((1, FD), lambda i: (0, 0))]
        args = [xp, WSp, bS]
        flops = 2 * Bp * KP * NPws
        if append_xyz:
            NPw = _round_up(D, _LANES)
            Wp = jnp.zeros((KP, NPw), jnp.float32).at[:in_dim, :D].set(W)
            in_specs += [pl.BlockSpec((KP, NPw), lambda i: (0, 0)),
                         pl.BlockSpec((1, D), lambda i: (0, 0))]
            args += [Wp, b.reshape(1, D)]
            flops += 2 * Bp * KP * NPw

        kernel = _make_affine_kernel(in_dim, D, FD, append_xyz, KP)
        cost = pl.CostEstimate(
            flops=flops,
            transcendentals=2 * Bp * FD,
            bytes_accessed=Bp * in_dim * 4 + Bp * out_dim * osize)
        out = pl.pallas_call(
            kernel,
            out_shape=jax.ShapeDtypeStruct((Bp, out_dim), out_dtype),
            grid=(Bp // TB,),
            in_specs=in_specs,
            out_specs=pl.BlockSpec((TB, out_dim), lambda i: (i, 0)),
            compiler_params=pltpu.CompilerParams(
                dimension_semantics=("parallel",)),
            cost_estimate=cost,
        )(*args)
        return out[:B] if Bp != B else out

    # ---------------- no-affine path: fold rows into the lane axis -----------
    G = _pick_groups(out_dim)
    width = G * out_dim                       # lane-dense output width per row
    NP = _round_up(width, _LANES)
    K0 = G * in_dim
    KP = _round_up(K0, _LANES)

    # E0[d, c]: one group's output column c as a function of input feature d.
    eye = jnp.eye(in_dim, dtype=jnp.float32)
    S = jnp.transpose(freqs[:, None, None] * eye[None, :, :],
                      (1, 0, 2)).reshape(in_dim, FD)       # S[d, j*D+d]=freqs[j]
    E0 = jnp.concatenate(([eye] if append_xyz else []) + [S, S], axis=1)
    Ebig = jnp.kron(jnp.eye(G, dtype=jnp.float32), E0)      # block-diagonal
    Ep = jnp.zeros((KP, NP), jnp.float32).at[:K0, :width].set(Ebig)

    # Region id per output lane: 0 = identity, 1 = sin, 2 = cos.
    reg0 = jnp.concatenate(
        ([jnp.zeros((in_dim,), jnp.int32)] if append_xyz else [])
        + [jnp.ones((FD,), jnp.int32), jnp.full((FD,), 2, jnp.int32)])
    reg = jnp.zeros((1, NP), jnp.int32).at[0, :width].set(jnp.tile(reg0, G))

    R = pl.cdiv(B, G)
    TR = _pick_row_tile(R, block_rows)
    Rp = _round_up(R, TR)
    Bp = Rp * G
    xp = jnp.pad(x, ((0, Bp - B), (0, 0))) if Bp != B else x
    xf = xp.reshape(Rp, K0)
    if KP != K0:
        xf = jnp.pad(xf, ((0, 0), (0, KP - K0)))

    kernel = _make_folded_kernel(width, NP)
    cost = pl.CostEstimate(
        flops=2 * Rp * KP * NP,
        transcendentals=2 * Rp * NP,
        bytes_accessed=Rp * KP * 4 + Rp * width * osize)
    out = pl.pallas_call(
        kernel,
        out_shape=jax.ShapeDtypeStruct((Rp, width), out_dtype),
        grid=(Rp // TR,),
        in_specs=[pl.BlockSpec((TR, KP), lambda i: (i, 0)),
                  pl.BlockSpec((KP, NP), lambda i: (0, 0)),   # VMEM-resident
                  pl.BlockSpec((1, NP), lambda i: (0, 0))],   # VMEM-resident
        out_specs=pl.BlockSpec((TR, width), lambda i: (i, 0)),
        compiler_params=pltpu.CompilerParams(
            dimension_semantics=("parallel",)),
        cost_estimate=cost,
    )(xf, Ep, reg)
    out = out.reshape(Bp, out_dim)
    return out[:B] if Bp != B else out


def pos_encoding_ref(x, W=None, b=None, *, N_freqs=10, append_xyz=False):
    """Pure-JAX reference matching the PyTorch forward exactly."""
    if W is not None:
        x = x @ W + b
    freqs = [2.0 ** k * math.pi for k in range(N_freqs)]
    parts = []
    if append_xyz:
        parts.append(x)
    for fn in (jnp.sin, jnp.cos):
        parts += [fn(f * x) for f in freqs]
    return jnp.concatenate(parts, axis=-1)


if __name__ == "__main__":
    key = jax.random.PRNGKey(0)
    kx, kw, kb = jax.random.split(key, 3)

    # Case 1: PosEncoding(N_freqs=10, in_dim=3, xyz_affine=True, affine_dim=32,
    #                     append_xyz=True)
    B, in_dim, affine_dim, N_freqs = 128, 3, 32, 10
    x = jax.random.normal(kx, (B, in_dim), dtype=jnp.float32)
    bound = 1.0 / math.sqrt(in_dim)
    W = jax.random.uniform(kw, (in_dim, affine_dim), jnp.float32, -bound, bound)
    bias = jax.random.uniform(kb, (affine_dim,), jnp.float32, -bound, bound)

    out = pos_encoding(x, W, bias, N_freqs=N_freqs, append_xyz=True)
    jax.block_until_ready(out)
    ref = pos_encoding_ref(x, W, bias, N_freqs=N_freqs, append_xyz=True)
    assert out.shape == (B, affine_dim + 2 * N_freqs * affine_dim)
    # f32 rounding of the affine output is amplified by up to 2^9*pi inside
    # sin/cos, so the full-output check is necessarily loose; the linear block
    # and the lowest-frequency sin block are checked tightly.
    assert jnp.allclose(out, ref, atol=2e-2, rtol=2e-2)
    assert jnp.allclose(out[:, :affine_dim], ref[:, :affine_dim],
                        atol=1e-4, rtol=1e-4)
    assert jnp.allclose(out[:, :2 * affine_dim], ref[:, :2 * affine_dim],
                        atol=1e-3, rtol=1e-3)

    # Case 2: no affine, append_xyz=False (out_dim=60 -> folded lane-dense path).
    out2 = pos_encoding(x, None, None, N_freqs=N_freqs, append_xyz=False)
    jax.block_until_ready(out2)
    ref2 = pos_encoding_ref(x, None, None, N_freqs=N_freqs, append_xyz=False)
    assert out2.shape == (B, 2 * N_freqs * in_dim)
    assert jnp.allclose(out2, ref2, atol=2e-2, rtol=2e-2)
    assert jnp.allclose(out2[:, :in_dim], ref2[:, :in_dim], atol=1e-3, rtol=1e-3)

    # Case 3: ragged batch + append_xyz (pad, fold/unfold, slice-back).
    x3 = jax.random.normal(kx, (100, in_dim), dtype=jnp.float32)
    out3 = pos_encoding(x3, None, None, N_freqs=N_freqs, append_xyz=True)
    jax.block_until_ready(out3)
    ref3 = pos_encoding_ref(x3, None, None, N_freqs=N_freqs, append_xyz=True)
    assert out3.shape == (100, in_dim + 2 * N_freqs * in_dim)
    assert jnp.allclose(out3, ref3, atol=2e-2, rtol=2e-2)
    assert jnp.allclose(out3[:, :in_dim], ref3[:, :in_dim], atol=1e-4, rtol=1e-4)

    # Case 4: bf16 writeback (recommended fast path: halves HBM store traffic;
    # compute stays f32, cast happens at the store).
    out4 = pos_encoding(x, W, bias, N_freqs=N_freqs, append_xyz=True,
                        out_dtype=jnp.bfloat16)
    jax.block_until_ready(out4)
    assert out4.dtype == jnp.bfloat16
    assert jnp.allclose(out4.astype(jnp.float32), ref, atol=4e-2, rtol=4e-2)

    print("KERNEL_OK")
</pallas_src>

<mosaic_0001>
module attributes {stable_mosaic.version = 11 : i64} {
  func.func @kernel(%arg0: i32, %arg1: memref<64x3xf32, #tpu.memory_space<vmem>>, %arg2: memref<128x384xf32, #tpu.memory_space<vmem>>, %arg3: memref<1x320xf32, #tpu.memory_space<vmem>>, %arg4: memref<128x128xf32, #tpu.memory_space<vmem>>, %arg5: memref<1x32xf32, #tpu.memory_space<vmem>>, %arg6: memref<64x672xf32, #tpu.memory_space<vmem>>) attributes {dimension_semantics = [#tpu.dimension_semantics<parallel>], iteration_bounds = array<i64: 2>, scalar_prefetch = 0 : i64, scratch_operands = 0 : i64, tpu.core_type = #tpu.core_type<tc>, window_params = [{transform_indices = @transform_0, window_bounds = array<i64: 64, 3>}, {pipeline_mode = #tpu.pipeline_mode<synchronous>, transform_indices = @transform_1, window_bounds = array<i64: 128, 384>}, {pipeline_mode = #tpu.pipeline_mode<synchronous>, transform_indices = @transform_2, window_bounds = array<i64: 1, 320>}, {pipeline_mode = #tpu.pipeline_mode<synchronous>, transform_indices = @transform_3, window_bounds = array<i64: 128, 128>}, {pipeline_mode = #tpu.pipeline_mode<synchronous>, transform_indices = @transform_4, window_bounds = array<i64: 1, 32>}, {transform_indices = @transform_5, window_bounds = array<i64: 64, 672>}]} {
    %c0 = arith.constant 0 : index
    %c0_0 = arith.constant 0 : index
    %0 = vector.load %arg1[%c0, %c0_0] : memref<64x3xf32, #tpu.memory_space<vmem>>, vector<64x3xf32>
    %cst = arith.constant 0.000000e+00 : f32
    %1 = vector.broadcast %cst : f32 to vector<64x125xf32>
    %2 = tpu.concatenate %0, %1 in 1 : vector<64x3xf32>, vector<64x125xf32> -> vector<64x128xf32>
    %c0_1 = arith.constant 0 : index
    %c0_2 = arith.constant 0 : index
    %3 = vector.load %arg2[%c0_1, %c0_2] : memref<128x384xf32, #tpu.memory_space<vmem>>, vector<128x384xf32>
    %cst_3 = arith.constant dense<0.000000e+00> : vector<64x384xf32>
    %4 = tpu.matmul %2, %3, %cst_3 {dimension_numbers = #tpu.dot_dimension_numbers<[1], [0], [0], [1], [0, 0, 1, 1], [], []>, precision = #tpu.contract_precision<fp32>} : vector<64x128xf32>, vector<128x384xf32>, vector<64x384xf32> -> vector<64x384xf32>
    %5 = vector.extract_strided_slice %4 {offsets = [0, 0], sizes = [64, 320], strides = [1, 1]} : vector<64x384xf32> to vector<64x320xf32>
    %c0_4 = arith.constant 0 : index
    %c0_5 = arith.constant 0 : index
    %6 = vector.load %arg3[%c0_4, %c0_5] : memref<1x320xf32, #tpu.memory_space<vmem>>, vector<1x320xf32>
    %7 = vector.broadcast %6 : vector<1x320xf32> to vector<64x320xf32>
    %8 = arith.addf %5, %7 : vector<64x320xf32>
    %c0_6 = arith.constant 0 : index
    %c0_7 = arith.constant 0 : index
    %9 = vector.load %arg4[%c0_6, %c0_7] : memref<128x128xf32, #tpu.memory_space<vmem>>, vector<128x128xf32>
    %cst_8 = arith.constant dense<0.000000e+00> : vector<64x128xf32>
    %10 = tpu.matmul %2, %9, %cst_8 {dimension_numbers = #tpu.dot_dimension_numbers<[1], [0], [0], [1], [0, 0, 1, 1], [], []>, precision = #tpu.contract_precision<fp32>} : vector<64x128xf32>, vector<128x128xf32>, vector<64x128xf32> -> vector<64x128xf32>
    %11 = vector.extract_strided_slice %10 {offsets = [0, 0], sizes = [64, 32], strides = [1, 1]} : vector<64x128xf32> to vector<64x32xf32>
    %c0_9 = arith.constant 0 : index
    %c0_10 = arith.constant 0 : index
    %12 = vector.load %arg5[%c0_9, %c0_10] : memref<1x32xf32, #tpu.memory_space<vmem>>, vector<1x32xf32>
    %13 = vector.broadcast %12 : vector<1x32xf32> to vector<64x32xf32>
    %14 = arith.addf %11, %13 : vector<64x32xf32>
    %15 = math.sin %8 : vector<64x320xf32>
    %16 = math.cos %8 : vector<64x320xf32>
    %17 = tpu.concatenate %14, %15, %16 in 1 : vector<64x32xf32>, vector<64x320xf32>, vector<64x320xf32> -> vector<64x672xf32>
    %c0_11 = arith.constant 0 : index
    %c0_12 = arith.constant 0 : index
    %18 = vector.load %arg6[%c0_11, %c0_12] : memref<64x672xf32, #tpu.memory_space<vmem>>, vector<64x672xf32>
    tpu.vector_store %arg6[%c0_11, %c0_12], %17 {strides = array<i32>} : memref<64x672xf32, #tpu.memory_space<vmem>>, vector<64x672xf32>,
    return
  }
  func.func @transform_0(%arg0: i32) -> (i32, i32) {
    %c0_i32 = arith.constant 0 : i32
    %c0_i32_0 = arith.constant 0 : i32
    return %arg0, %c0_i32 : i32, i32
  }
  func.func @transform_1(%arg0: i32) -> (i32, i32) {
    %c0_i32 = arith.constant 0 : i32
    %c0_i32_0 = arith.constant 0 : i32
    %c0_i32_1 = arith.constant 0 : i32
    return %c0_i32, %c0_i32_0 : i32, i32
  }
  func.func @transform_2(%arg0: i32) -> (i32, i32) {
    %c0_i32 = arith.constant 0 : i32
    %c0_i32_0 = arith.constant 0 : i32
    %c0_i32_1 = arith.constant 0 : i32
    return %c0_i32, %c0_i32_0 : i32, i32
  }
  func.func @transform_3(%arg0: i32) -> (i32, i32) {
    %c0_i32 = arith.constant 0 : i32
    %c0_i32_0 = arith.constant 0 : i32
    %c0_i32_1 = arith.constant 0 : i32
    return %c0_i32, %c0_i32_0 : i32, i32
  }
  func.func @transform_4(%arg0: i32) -> (i32, i32) {
    %c0_i32 = arith.constant 0 : i32
    %c0_i32_0 = arith.constant 0 : i32
    %c0_i32_1 = arith.constant 0 : i32
    return %c0_i32, %c0_i32_0 : i32, i32
  }
  func.func @transform_5(%arg0: i32) -> (i32, i32) {
    %c0_i32 = arith.constant 0 : i32
    %c0_i32_0 = arith.constant 0 : i32
    return %arg0, %c0_i32 : i32, i32
  }
}

</mosaic_0001>

<llo_original>
// kernel: pos_encoding.1
$region0: #{pos_encoding.1}
  #allocation0 [shape = 'u32[]', space=smem, size = 0x4, offset = 0x4, fixed_abs, tag = 'smem constant byte address 0x4 - core index']
  #allocation1 [shape = 'u32[144,128]{1,0:T(1,128)}', space=vmem, size = 0x12000, scoped, tag = 'internal scratch']
  %s0 = inlined_call_operand.vmem [shape: f32[128,3], index: 0, kind: input, shape index: {}]
  %s1 = inlined_call_operand.vmem [shape: f32[128,384], index: 1, kind: input, shape index: {}]
  %s2 = inlined_call_operand.vmem [shape: f32[1,320], index: 2, kind: input, shape index: {}]
  %s3 = inlined_call_operand.vmem [shape: f32[128,128], index: 3, kind: input, shape index: {}]
  %s4 = inlined_call_operand.vmem [shape: f32[1,32], index: 4, kind: input, shape index: {}]
  %s5 = inlined_call_operand.vmem [shape: f32[128,672], index: 5, kind: output, shape index: {}]
  %s6 = sld [smem:[#allocation0]]
  $region53: #{pos_encoding.1} parent=0
    _
  %s8 = ssub.s32 1, %s6
  %s9 = scalar_select 0, %s8, %s6
  loop: start=0, step=1, limit=4
  $region2: #{pos_encoding.1} parent=0 // loop_pre_header
    _
  $region3: #{pos_encoding.1} parent=0 // loop_header
    %s11 = sphi 0, %s15
    %p12 = scmp.ge.s32.totalorder %s11, 4
    %s21 = sphi 0, %s23
    %s24 = sphi 0, %s21
    %s25 = sphi 0, %s24
    %s41 = sphi 0, %s25
    %s45 = sphi 0, %s45
    %s47 = sphi 0, %s45
    %s48 = sphi 0, %s47
    %s62 = sphi 0, %s48
    %s66 = sphi 0, %s66
    %s68 = sphi 0, %s66
    %s69 = sphi 0, %s68
    %s83 = sphi 0, %s69
    %s87 = sphi 0, %s87
    %s89 = sphi 0, %s87
    %s90 = sphi 0, %s89
    %s104 = sphi 0, %s90
    %s108 = sphi 0, %s108
    %s110 = sphi 0, %s108
    %s111 = sphi 0, %s110
    %s125 = sphi 0, %s111
    %s131 = sphi 0, %s133
    %s134 = sphi 0, %s131
    %s135 = sphi 0, %s134
    %s151 = sphi 0, %s135
  $region4: #{pos_encoding.1} parent=0 // loop_header_branch
    %14 = sbr.rel (%p12) target = $region8
  $region5: #{pos_encoding.1} parent=0 // loop_body
    %s16 = ssub.s32 %s11, 1
    %s17 = ssub.s32 %s11, 2
    %s18 = sadd.s32 %s11, 1
    %s19 = ssub.s32 %s11, %s18
    %p20 = scmp.eq.s32.totalorder %s19, 0
    %s22 = sadd.s32 %s21, 1
    %s23 = scalar_select %p20, %s21, %s22
    %p26 = pneg %p20
    %p27 = scmp.eq.s32.totalorder %s11, 1
    %p28 = por %p26, %p27
    %p29 = scmp.ne.s32.totalorder %s21, %s24
    %p30 = scmp.eq.s32.totalorder %s11, 0
    %p31 = por %p29, %p30
    %p32 = scmp.ne.s32.totalorder %s21, %s24
    %p33 = scmp.eq.s32.totalorder %s16, 1
    %p34 = por %p32, %p33
    %p35 = scmp.ne.s32.totalorder %s24, %s25
    %p36 = scmp.eq.s32.totalorder %s16, 0
    %p37 = por %p35, %p36
    %p38 = scmp.ne.s32.totalorder %s24, %s25
    %p39 = scmp.eq.s32.totalorder %s17, 1
    %p40 = por %p38, %p39
    %p42 = scmp.ne.s32.totalorder %s25, %s41
    %p43 = scmp.eq.s32.totalorder %s17, 0
    %p44 = por %p42, %p43
    %s46 = sadd.s32 %s45, 1
    %p49 = scmp.eq.s32.totalorder %s11, 1
    %p50 = scmp.ne.s32.totalorder %s45, %s47
    %p51 = scmp.eq.s32.totalorder %s11, 0
    %p52 = por %p50, %p51
    %p53 = scmp.ne.s32.totalorder %s45, %s47
    %p54 = scmp.eq.s32.totalorder %s16, 1
    %p55 = por %p53, %p54
    %p56 = scmp.ne.s32.totalorder %s47, %s48
    %p57 = scmp.eq.s32.totalorder %s16, 0
    %p58 = por %p56, %p57
    %p59 = scmp.ne.s32.totalorder %s47, %s48
    %p60 = scmp.eq.s32.totalorder %s17, 1
    %p61 = por %p59, %p60
    %p63 = scmp.ne.s32.totalorder %s48, %s62
    %p64 = scmp.eq.s32.totalorder %s17, 0
    %p65 = por %p63, %p64
    %s67 = sadd.s32 %s66, 1
    %p70 = scmp.eq.s32.totalorder %s11, 1
    %p71 = scmp.ne.s32.totalorder %s66, %s68
    %p72 = scmp.eq.s32.totalorder %s11, 0
    %p73 = por %p71, %p72
    %p74 = scmp.ne.s32.totalorder %s66, %s68
    %p75 = scmp.eq.s32.totalorder %s16, 1
    %p76 = por %p74, %p75
    %p77 = scmp.ne.s32.totalorder %s68, %s69
    %p78 = scmp.eq.s32.totalorder %s16, 0
    %p79 = por %p77, %p78
    %p80 = scmp.ne.s32.totalorder %s68, %s69
    %p81 = scmp.eq.s32.totalorder %s17, 1
    %p82 = por %p80, %p81
    %p84 = scmp.ne.s32.totalorder %s69, %s83
    %p85 = scmp.eq.s32.totalorder %s17, 0
    %p86 = por %p84, %p85
    %s88 = sadd.s32 %s87, 1
    %p91 = scmp.eq.s32.totalorder %s11, 1
    %p92 = scmp.ne.s32.totalorder %s87, %s89
    %p93 = scmp.eq.s32.totalorder %s11, 0
    %p94 = por %p92, %p93
    %p95 = scmp.ne.s32.totalorder %s87, %s89
    %p96 = scmp.eq.s32.totalorder %s16, 1
    %p97 = por %p95, %p96
    %p98 = scmp.ne.s32.totalorder %s89, %s90
    %p99 = scmp.eq.s32.totalorder %s16, 0
    %p100 = por %p98, %p99
    %p101 = scmp.ne.s32.totalorder %s89, %s90
    %p102 = scmp.eq.s32.totalorder %s17, 1
    %p103 = por %p101, %p102
    %p105 = scmp.ne.s32.totalorder %s90, %s104
    %p106 = scmp.eq.s32.totalorder %s17, 0
    %p107 = por %p105, %p106
    %s109 = sadd.s32 %s108, 1
    %p112 = scmp.eq.s32.totalorder %s11, 1
    %p113 = scmp.ne.s32.totalorder %s108, %s110
    %p114 = scmp.eq.s32.totalorder %s11, 0
    %p115 = por %p113, %p114
    %p116 = scmp.ne.s32.totalorder %s108, %s110
    %p117 = scmp.eq.s32.totalorder %s16, 1
    %p118 = por %p116, %p117
    %p119 = scmp.ne.s32.totalorder %s110, %s111
    %p120 = scmp.eq.s32.totalorder %s16, 0
    %p121 = por %p119, %p120
    %p122 = scmp.ne.s32.totalorder %s110, %s111
    %p123 = scmp.eq.s32.totalorder %s17, 1
    %p124 = por %p122, %p123
    %p126 = scmp.ne.s32.totalorder %s111, %s125
    %p127 = scmp.eq.s32.totalorder %s17, 0
    %p128 = por %p126, %p127
    %s129 = ssub.s32 %s11, %s18
    %p130 = scmp.eq.s32.totalorder %s129, 0
    %s132 = sadd.s32 %s131, 1
    %s133 = scalar_select %p130, %s131, %s132
    %p136 = pneg %p130
    %p137 = scmp.eq.s32.totalorder %s11, 1
    %p138 = por %p136, %p137
    %p139 = scmp.ne.s32.totalorder %s131, %s134
    %p140 = scmp.eq.s32.totalorder %s11, 0
    %p141 = por %p139, %p140
    %p142 = scmp.ne.s32.totalorder %s131, %s134
    %p143 = scmp.eq.s32.totalorder %s16, 1
    %p144 = por %p142, %p143
    %p145 = scmp.ne.s32.totalorder %s134, %s135
    %p146 = scmp.eq.s32.totalorder %s16, 0
    %p147 = por %p145, %p146
    %p148 = scmp.ne.s32.totalorder %s134, %s135
    %p149 = scmp.eq.s32.totalorder %s17, 1
    %p150 = por %p148, %p149
    %p152 = scmp.ne.s32.totalorder %s135, %s151
    %p153 = scmp.eq.s32.totalorder %s17, 0
    %p154 = por %p152, %p153
    %p155 = scmp.le.s32.totalorder 1, %s11
    %p156 = scmp.lt.s32.totalorder %s11, 3
    %p157 = pnand %p155, %p156
    %p158 = pneg %p157
    // Predicated region
    $region9: #{pos_encoding.1} parent=5 // pred_check
      _
    $region10: #{pos_encoding.1} parent=5 // pred_check_branch
      %160 = sbr.rel (%p157) target = $region12
    $region11: #{pos_encoding.1} parent=5 // pred_region
      %s161 = ssub.s32 %s11, 1
      // Predicated region
      $region13: #{pos_encoding.1} parent=11 // pred_check
        %p162 = pneg %p58
      $region14: #{pos_encoding.1} parent=11 // pred_check_branch
        %164 = sbr.rel (%p162) target = $region16
      $region15: #{pos_encoding.1} parent=11 // pred_region
        _
      $region16: #{pos_encoding.1} parent=11 // pred_fallthru
        _
      // Predicated region
      $region17: #{pos_encoding.1} parent=11 // pred_check
        %p165 = pneg %p79
      $region18: #{pos_encoding.1} parent=11 // pred_check_branch
        %167 = sbr.rel (%p165) target = $region20
      $region19: #{pos_encoding.1} parent=11 // pred_region
        _
      $region20: #{pos_encoding.1} parent=11 // pred_fallthru
        _
      // Predicated region
      $region21: #{pos_encoding.1} parent=11 // pred_check
        %p168 = pneg %p100
      $region22: #{pos_encoding.1} parent=11 // pred_check_branch
        %170 = sbr.rel (%p168) target = $region24
      $region23: #{pos_encoding.1} parent=11 // pred_region
        _
      $region24: #{pos_encoding.1} parent=11 // pred_fallthru
        _
      // Predicated region
      $region25: #{pos_encoding.1} parent=11 // pred_check
        %p171 = pneg %p121
      $region26: #{pos_encoding.1} parent=11 // pred_check_branch
        %173 = sbr.rel (%p171) target = $region28
      $region27: #{pos_encoding.1} parent=11 // pred_region
        _
      $region28: #{pos_encoding.1} parent=11 // pred_fallthru
        _
    $region12: #{pos_encoding.1} parent=5 // pred_fallthru
      _
    %p174 = scmp.lt.s32.totalorder %s11, 2
    // Predicated region
    $region29: #{pos_encoding.1} parent=5 // pred_check
      %p175 = pneg %p174
    $region30: #{pos_encoding.1} parent=5 // pred_check_branch
      %177 = sbr.rel (%p175) target = $region32
    $region31: #{pos_encoding.1} parent=5 // pred_region
      // Predicated region
      $region33: #{pos_encoding.1} parent=31 // pred_check
        %p178 = pneg %p31
      $region34: #{pos_encoding.1} parent=31 // pred_check_branch
        %180 = sbr.rel (%p178) target = $region36
      $region35: #{pos_encoding.1} parent=31 // pred_region
        %s181 = smul.u32 8, %s11
        %p182 = scmp.lt.s32.totalorder %s181, 15
        %s183 = scalar_select %p182, %s181, 15
        %s184 = smul.addr %s183, 8
        %s185 = scalar_lea.vmem %s0, %s184
        %s186 = smul.u32 8, %s11
      $region36: #{pos_encoding.1} parent=31 // pred_fallthru
        _
    $region32: #{pos_encoding.1} parent=5 // pred_fallthru
      _
    %p187 = scmp.le.s32.totalorder 1, %s11
    %p188 = scmp.lt.s32.totalorder %s11, 3
    %p189 = pnand %p187, %p188
    %p190 = pneg %p189
    // Predicated region
    $region37: #{pos_encoding.1} parent=5 // pred_check
      _
    $region38: #{pos_encoding.1} parent=5 // pred_check_branch
      %192 = sbr.rel (%p189) target = $region40
    $region39: #{pos_encoding.1} parent=5 // pred_region
      %s193 = ssub.s32 %s11, 1
      %s194 = smul.u32 8, %s16
      %p195 = scmp.lt.s32.totalorder %s194, 15
      %s196 = scalar_select %p195, %s194, 15
      %s197 = smul.addr %s196, 8
      %s198 = scalar_lea.vmem %s0, %s197
      %p199 = pneg %p37
      %p200 = pneg %p34
      %p201 = pneg %p58
      %p202 = pneg %p55
      %p203 = pneg %p79
      %p204 = pneg %p76
      %p205 = pneg %p100
      %p206 = pneg %p97
      %p207 = pneg %p121
      %p208 = pneg %p118
      %p209 = pneg %p147
      %p210 = pneg %p144
      %s211 = smul.u32 8, %s16
      %p212 = scmp.lt.s32.totalorder %s211, 15
      %s213 = scalar_select %p212, %s211, 15
      %s214 = smul.addr %s213, 6
      %s215 = smul.addr %s214, 8
      %s216 = scalar_lea.vmem %s5, %s215
      %s217 = smul.u32 8, %s16
      %p218 = scmp.lt.s32.totalorder %s217, 15
      %s219 = scalar_select %p218, %s217, 15
      %s220 = smul.addr %s219, 8
      %s221 = scalar_lea.vmem %s0, %s220
      %s222 = smul.u32 8, %s16
      %s223 = smul.u32 8, %s16
      %p224 = scmp.lt.s32.totalorder %s223, 15
      %s225 = scalar_select %p224, %s223, 15
      %s226 = smul.addr %s225, 6
      %s227 = smul.addr %s226, 8
      %s228 = scalar_lea.vmem %s5, %s227
      %s229 = smul.u32 8, %s16
      %v230 = vld [vmem:[%s221] sm:$0xff]
      %v231 = vld [vmem:[%s221 + $0x8] sm:$0xff]
      %v232 = vld [vmem:[%s221 + $0x10] sm:$0xff]
      %v233 = vld [vmem:[%s221 + $0x18] sm:$0xff]
      %v234 = vld [vmem:[%s221 + $0x20] sm:$0xff]
      %v235 = vld [vmem:[%s221 + $0x28] sm:$0xff]
      %v236 = vld [vmem:[%s221 + $0x30] sm:$0xff]
      %v237 = vld [vmem:[%s221 + $0x38] sm:$0xff]
      %vm238 = vcmask 23552
      %v239 = vsel %vm238, %v230, 0.0
      %v240 = vsel %vm238, %v231, 0.0
      %v241 = vsel %vm238, %v232, 0.0
      %v242 = vsel %vm238, %v233, 0.0
      %v243 = vsel %vm238, %v234, 0.0
      %v244 = vsel %vm238, %v235, 0.0
      %v245 = vsel %vm238, %v236, 0.0
      %v246 = vsel %vm238, %v237, 0.0
      %v247 = vld [vmem:[%s1] sm:$0xff]
      %v248 = vld [vmem:[%s1 + $0x8] sm:$0xff]
      %v249 = vld [vmem:[%s1 + $0x10] sm:$0xff]
      %v250 = vld [vmem:[%s1 + $0x18] sm:$0xff]
      %v251 = vld [vmem:[%s1 + $0x20] sm:$0xff]
      %v252 = vld [vmem:[%s1 + $0x28] sm:$0xff]
      %v253 = vld [vmem:[%s1 + $0x30] sm:$0xff]
      %v254 = vld [vmem:[%s1 + $0x38] sm:$0xff]
      %v255 = vld [vmem:[%s1 + $0x40] sm:$0xff]
      %v256 = vld [vmem:[%s1 + $0x48] sm:$0xff]
      %v257 = vld [vmem:[%s1 + $0x50] sm:$0xff]
      %v258 = vld [vmem:[%s1 + $0x58] sm:$0xff]
      %v259 = vld [vmem:[%s1 + $0x60] sm:$0xff]
      %v260 = vld [vmem:[%s1 + $0x68] sm:$0xff]
      %v261 = vld [vmem:[%s1 + $0x70] sm:$0xff]
      %v262 = vld [vmem:[%s1 + $0x78] sm:$0xff]
      %v263 = vld [vmem:[%s1 + $0x80] sm:$0xff]
      %v264 = vld [vmem:[%s1 + $0x88] sm:$0xff]
      %v265 = vld [vmem:[%s1 + $0x90] sm:$0xff]
      %v266 = vld [vmem:[%s1 + $0x98] sm:$0xff]
      %v267 = vld [vmem:[%s1 + $0xa0] sm:$0xff]
      %v268 = vld [vmem:[%s1 + $0xa8] sm:$0xff]
      %v269 = vld [vmem:[%s1 + $0xb0] sm:$0xff]
      %v270 = vld [vmem:[%s1 + $0xb8] sm:$0xff]
      %v271 = vld [vmem:[%s1 + $0xc0] sm:$0xff]
      %v272 = vld [vmem:[%s1 + $0xc8] sm:$0xff]
      %v273 = vld [vmem:[%s1 + $0xd0] sm:$0xff]
      %v274 = vld [vmem:[%s1 + $0xd8] sm:$0xff]
      %v275 = vld [vmem:[%s1 + $0xe0] sm:$0xff]
      %v276 = vld [vmem:[%s1 + $0xe8] sm:$0xff]
      %v277 = vld [vmem:[%s1 + $0xf0] sm:$0xff]
      %v278 = vld [vmem:[%s1 + $0xf8] sm:$0xff]
      %v279 = vld [vmem:[%s1 + $0x100] sm:$0xff]
      %v280 = vld [vmem:[%s1 + $0x108] sm:$0xff]
      %v281 = vld [vmem:[%s1 + $0x110] sm:$0xff]
      %v282 = vld [vmem:[%s1 + $0x118] sm:$0xff]
      %v283 = vld [vmem:[%s1 + $0x120] sm:$0xff]
      %v284 = vld [vmem:[%s1 + $0x128] sm:$0xff]
      %v285 = vld [vmem:[%s1 + $0x130] sm:$0xff]
      %v286 = vld [vmem:[%s1 + $0x138] sm:$0xff]
      %v287 = vld [vmem:[%s1 + $0x140] sm:$0xff]
      %v288 = vld [vmem:[%s1 + $0x148] sm:$0xff]
      %v289 = vld [vmem:[%s1 + $0x150] sm:$0xff]
      %v290 = vld [vmem:[%s1 + $0x158] sm:$0xff]
      %v291 = vld [vmem:[%s1 + $0x160] sm:$0xff]
      %v292 = vld [vmem:[%s1 + $0x168] sm:$0xff]
      %v293 = vld [vmem:[%s1 + $0x170] sm:$0xff]
      %v294 = vld [vmem:[%s1 + $0x178] sm:$0xff]
      %v295 = vand.u32 %v248, 4294901760
      %296 = vmatprep.subr.mxu0 %v295
      %v297 = vand.u32 %v247, 4294901760
      %298 = vmatpush1.msra.mxu0 %v297
      %v299 = vand.u32 %v251, 4294901760
      %300 = vmatprep.subr.mxu0 %v299
      %v301 = vand.u32 %v250, 4294901760
      %302 = vmatpush1.msra.mxu0 %v301
      %v303 = vand.u32 %v254, 4294901760
      %304 = vmatprep.subr.mxu0 %v303
      %v305 = vand.u32 %v253, 4294901760
      %306 = vmatpush1.msra.mxu0 %v305
      %v307 = vand.u32 %v257, 4294901760
      %308 = vmatprep.subr.mxu0 %v307
      %v309 = vand.u32 %v256, 4294901760
      %310 = vmatpush1.msra.mxu0 %v309
      %v311 = vand.u32 %v260, 4294901760
      %312 = vmatprep.subr.mxu0 %v311
      %v313 = vand.u32 %v259, 4294901760
      %314 = vmatpush1.msra.mxu0 %v313
      %v315 = vand.u32 %v263, 4294901760
      %316 = vmatprep.subr.mxu0 %v315
      %v317 = vand.u32 %v262, 4294901760
      %318 = vmatpush1.msra.mxu0 %v317
      %v319 = vand.u32 %v266, 4294901760
      %320 = vmatprep.subr.mxu0 %v319
      %v321 = vand.u32 %v265, 4294901760
      %322 = vmatpush1.msra.mxu0 %v321
      %v323 = vand.u32 %v269, 4294901760
      %324 = vmatprep.subr.mxu0 %v323
      %v325 = vand.u32 %v268, 4294901760
      %326 = vmatpush1.msra.mxu0 %v325
      %v327 = vand.u32 %v272, 4294901760
      %328 = vmatprep.subr.mxu0 %v327
      %v329 = vand.u32 %v271, 4294901760
      %330 = vmatpush1.msra.mxu0 %v329
      %v331 = vand.u32 %v275, 4294901760
      %332 = vmatprep.subr.mxu0 %v331
      %v333 = vand.u32 %v274, 4294901760
      %334 = vmatpush1.msra.mxu0 %v333
      %v335 = vand.u32 %v278, 4294901760
      %336 = vmatprep.subr.mxu0 %v335
      %v337 = vand.u32 %v277, 4294901760
      %338 = vmatpush1.msra.mxu0 %v337
      %v339 = vand.u32 %v281, 4294901760
      %340 = vmatprep.subr.mxu0 %v339
      %v341 = vand.u32 %v280, 4294901760
      %342 = vmatpush1.msra.mxu0 %v341
      %v343 = vand.u32 %v284, 4294901760
      %344 = vmatprep.subr.mxu0 %v343
      %v345 = vand.u32 %v283, 4294901760
      %346 = vmatpush1.msra.mxu0 %v345
      %v347 = vand.u32 %v287, 4294901760
      %348 = vmatprep.subr.mxu0 %v347
      %v349 = vand.u32 %v286, 4294901760
      %350 = vmatpush1.msra.mxu0 %v349
      %v351 = vand.u32 %v290, 4294901760
      %352 = vmatprep.subr.mxu0 %v351
      %v353 = vand.u32 %v289, 4294901760
      %354 = vmatpush1.msra.mxu0 %v353
      %v355 = vand.u32 %v293, 4294901760
      %356 = vmatprep.subr.mxu0 %v355
      %v357 = vand.u32 %v292, 4294901760
      %358 = vmatpush1.msra.mxu0 %v357
      %359 = vmatprep.subr.mxu0 0.0
      %360 = vmatpush1.msra.mxu0 0.0
      %361 = vmatprep.subr.mxu0 0.0
      %362 = vmatpush1.msra.mxu0 0.0
      %363 = vmatprep.subr.mxu0 0.0
      %364 = vmatpush1.msra.mxu0 0.0
      %365 = vmatprep.subr.mxu0 0.0
      %366 = vmatpush1.msra.mxu0 0.0
      %367 = vmatprep.subr.mxu0 0.0
      %368 = vmatpush1.msra.mxu0 0.0
      %369 = vmatprep.subr.mxu0 0.0
      %370 = vmatpush1.msra.mxu0 0.0
      %371 = vmatprep.subr.mxu0 0.0
      %372 = vmatpush1.msra.mxu0 0.0
      %373 = vmatprep.subr.mxu0 0.0
      %374 = vmatpush1.msra.mxu0 0.0
      %375 = vmatprep.subr.mxu0 0.0
      %376 = vmatpush1.msra.mxu0 0.0
      %377 = vmatprep.subr.mxu0 0.0
      %378 = vmatpush1.msra.mxu0 0.0
      %379 = vmatprep.subr.mxu0 0.0
      %380 = vmatpush1.msra.mxu0 0.0
      %381 = vmatprep.subr.mxu0 0.0
      %382 = vmatpush1.msra.mxu0 0.0
      %383 = vmatprep.subr.mxu0 0.0
      %384 = vmatpush1.msra.mxu0 0.0
      %385 = vmatprep.subr.mxu0 0.0
      %386 = vmatpush1.msra.mxu0 0.0
      %387 = vmatprep.subr.mxu0 0.0
      %388 = vmatpush1.msra.mxu0 0.0
      %389 = vmatprep.subr.mxu0 0.0
      %390 = vmatpush1.msra.mxu0 0.0
      %391 = vmatprep.mubr.f32.mxu0 0.0
      %v392 = vand.u32 %v239, 4294901760
      %v393 = vsub.f32 %v239, %v392
      %v394 = vand.u32 %v393, 4294901760
      %v395 = vsub.f32 %v393, %v394
      %v396 = vand.u32 %v395, 4294901760
      %397 = vmatmul.mubr.f32.gmra.mrb[0].mxu0 %v396
      %v398 = vpop.f32.mrb[0].mxu0
      %v399 = vadd.f32 0.0, %v398
      %v400 = vpop.f32.mrb[0].mxu0
      %v401 = vadd.f32 0.0, %v400
      %402 = vmatprep.mubr.f32.mxu0 0.0
      %v403 = vand.u32 %v240, 4294901760
      %v404 = vsub.f32 %v240, %v403
      %v405 = vand.u32 %v404, 4294901760
      %v406 = vsub.f32 %v404, %v405
      %v407 = vand.u32 %v406, 4294901760
      %408 = vmatmul.mubr.f32.gmra.mrb[0].mxu0 %v407
      %v409 = vpop.f32.mrb[0].mxu0
      %v410 = vadd.f32 0.0, %v409
      %v411 = vpop.f32.mrb[0].mxu0
      %v412 = vadd.f32 0.0, %v411
      %413 = vmatprep.mubr.f32.mxu0 0.0
      %v414 = vand.u32 %v241, 4294901760
      %v415 = vsub.f32 %v241, %v414
      %v416 = vand.u32 %v415, 4294901760
      %v417 = vsub.f32 %v415, %v416
      %v418 = vand.u32 %v417, 4294901760
      %419 = vmatmul.mubr.f32.gmra.mrb[0].mxu0 %v418
      %v420 = vpop.f32.mrb[0].mxu0
      %v421 = vadd.f32 0.0, %v420
      %v422 = vpop.f32.mrb[0].mxu0
      %v423 = vadd.f32 0.0, %v422
      %424 = vmatprep.mubr.f32.mxu0 0.0
      %v425 = vand.u32 %v242, 4294901760
      %v426 = vsub.f32 %v242, %v425
      %v427 = vand.u32 %v426, 4294901760
      %v428 = vsub.f32 %v426, %v427
      %v429 = vand.u32 %v428, 4294901760
      %430 = vmatmul.mubr.f32.gmra.mrb[0].mxu0 %v429
      %v431 = vpop.f32.mrb[0].mxu0
      %v432 = vadd.f32 0.0, %v431
      %v433 = vpop.f32.mrb[0].mxu0
      %v434 = vadd.f32 0.0, %v433
      %435 = vmatprep.mubr.f32.mxu0 0.0
      %v436 = vand.u32 %v243, 4294901760
      %v437 = vsub.f32 %v243, %v436
      %v438 = vand.u32 %v437, 4294901760
      %v439 = vsub.f32 %v437, %v438
      %v440 = vand.u32 %v439, 4294901760
      %441 = vmatmul.mubr.f32.gmra.mrb[0].mxu0 %v440
      %v442 = vpop.f32.mrb[0].mxu0
      %v443 = vadd.f32 0.0, %v442
      %v444 = vpop.f32.mrb[0].mxu0
      %v445 = vadd.f32 0.0, %v444
      %446 = vmatprep.mubr.f32.mxu0 0.0
      %v447 = vand.u32 %v244, 4294901760
      %v448 = vsub.f32 %v244, %v447
      %v449 = vand.u32 %v448, 4294901760
      %v450 = vsub.f32 %v448, %v449
      %v451 = vand.u32 %v450, 4294901760
      %452 = vmatmul.mubr.f32.gmra.mrb[0].mxu0 %v451
      %v453 = vpop.f32.mrb[0].mxu0
      %v454 = vadd.f32 0.0, %v453
      %v455 = vpop.f32.mrb[0].mxu0
      %v456 = vadd.f32 0.0, %v455
      %457 = vmatprep.mubr.f32.mxu0 0.0
      %v458 = vand.u32 %v245, 4294901760
      %v459 = vsub.f32 %v245, %v458
      %v460 = vand.u32 %v459, 4294901760
      %v461 = vsub.f32 %v459, %v460
      %v462 = vand.u32 %v461, 4294901760
      %463 = vmatmul.mubr.f32.gmra.mrb[0].mxu0 %v462
      %v464 = vpop.f32.mrb[0].mxu0
      %v465 = vadd.f32 0.0, %v464
      %v466 = vpop.f32.mrb[0].mxu0
      %v467 = vadd.f32 0.0, %v466
      %468 = vmatprep.mubr.f32.mxu0 0.0
      %v469 = vand.u32 %v246, 4294901760
      %v470 = vsub.f32 %v246, %v469
      %v471 = vand.u32 %v470, 4294901760
      %v472 = vsub.f32 %v470, %v471
      %v473 = vand.u32 %v472, 4294901760
      %474 = vmatmul.mubr.f32.gmra.mrb[0].mxu0 %v473
      %v475 = vpop.f32.mrb[0].mxu0
      %v476 = vadd.f32 0.0, %v475
      %v477 = vpop.f32.mrb[0].mxu0
      %v478 = vadd.f32 0.0, %v477
      %479 = vdwg.mxu0
      %v480 = vand.u32 %v248, 4294901760
      %v481 = vsub.f32 %v248, %v480
      %v482 = vand.u32 %v481, 4294901760
      %v483 = vsub.f32 %v481, %v482
      %v484 = vand.u32 %v483, 4294901760
      %485 = vmatprep.subr.mxu0 %v484
      %v486 = vand.u32 %v247, 4294901760
      %v487 = vsub.f32 %v247, %v486
      %v488 = vand.u32 %v487, 4294901760
      %v489 = vsub.f32 %v487, %v488
      %v490 = vand.u32 %v489, 4294901760
      %491 = vmatpush1.msra.mxu0 %v490
      %v492 = vand.u32 %v251, 4294901760
      %v493 = vsub.f32 %v251, %v492
      %v494 = vand.u32 %v493, 4294901760
      %v495 = vsub.f32 %v493, %v494
      %v496 = vand.u32 %v495, 4294901760
      %497 = vmatprep.subr.mxu0 %v496
      %v498 = vand.u32 %v250, 4294901760
      %v499 = vsub.f32 %v250, %v498
      %v500 = vand.u32 %v499, 4294901760
      %v501 = vsub.f32 %v499, %v500
      %v502 = vand.u32 %v501, 4294901760
      %503 = vmatpush1.msra.mxu0 %v502
      %v504 = vand.u32 %v254, 4294901760
      %v505 = vsub.f32 %v254, %v504
      %v506 = vand.u32 %v505, 4294901760
      %v507 = vsub.f32 %v505, %v506
      %v508 = vand.u32 %v507, 4294901760
      %509 = vmatprep.subr.mxu0 %v508
      %v510 = vand.u32 %v253, 4294901760
      %v511 = vsub.f32 %v253, %v510
      %v512 = vand.u32 %v511, 4294901760
      %v513 = vsub.f32 %v511, %v512
      %v514 = vand.u32 %v513, 4294901760
      %515 = vmatpush1.msra.mxu0 %v514
      %v516 = vand.u32 %v257, 4294901760
      %v517 = vsub.f32 %v257, %v516
      %v518 = vand.u32 %v517, 4294901760
      %v519 = vsub.f32 %v517, %v518
      %v520 = vand.u32 %v519, 4294901760
      %521 = vmatprep.subr.mxu0 %v520
      %v522 = vand.u32 %v256, 4294901760
      %v523 = vsub.f32 %v256, %v522
      %v524 = vand.u32 %v523, 4294901760
      %v525 = vsub.f32 %v523, %v524
      %v526 = vand.u32 %v525, 4294901760
      %527 = vmatpush1.msra.mxu0 %v526
      %v528 = vand.u32 %v260, 4294901760
      %v529 = vsub.f32 %v260, %v528
      %v530 = vand.u32 %v529, 4294901760
      %v531 = vsub.f32 %v529, %v530
      %v532 = vand.u32 %v531, 4294901760
      %533 = vmatprep.subr.mxu0 %v532
      %v534 = vand.u32 %v259, 4294901760
      %v535 = vsub.f32 %v259, %v534
      %v536 = vand.u32 %v535, 4294901760
      %v537 = vsub.f32 %v535, %v536
      %v538 = vand.u32 %v537, 4294901760
      %539 = vmatpush1.msra.mxu0 %v538
      %v540 = vand.u32 %v263, 4294901760
      %v541 = vsub.f32 %v263, %v540
      %v542 = vand.u32 %v541, 4294901760
      %v543 = vsub.f32 %v541, %v542
      %v544 = vand.u32 %v543, 4294901760
      %545 = vmatprep.subr.mxu0 %v544
      %v546 = vand.u32 %v262, 4294901760
      %v547 = vsub.f32 %v262, %v546
      %v548 = vand.u32 %v547, 4294901760
      %v549 = vsub.f32 %v547, %v548
      %v550 = vand.u32 %v549, 4294901760
      %551 = vmatpush1.msra.mxu0 %v550
      %v552 = vand.u32 %v266, 4294901760
      %v553 = vsub.f32 %v266, %v552
      %v554 = vand.u32 %v553, 4294901760
      %v555 = vsub.f32 %v553, %v554
      %v556 = vand.u32 %v555, 4294901760
      %557 = vmatprep.subr.mxu0 %v556
      %v558 = vand.u32 %v265, 4294901760
      %v559 = vsub.f32 %v265, %v558
      %v560 = vand.u32 %v559, 4294901760
      %v561 = vsub.f32 %v559, %v560
      %v562 = vand.u32 %v561, 4294901760
      %563 = vmatpush1.msra.mxu0 %v562
      %v564 = vand.u32 %v269, 4294901760
      %v565 = vsub.f32 %v269, %v564
      %v566 = vand.u32 %v565, 4294901760
      %v567 = vsub.f32 %v565, %v566
      %v568 = vand.u32 %v567, 4294901760
      %569 = vmatprep.subr.mxu0 %v568
      %v570 = vand.u32 %v268, 4294901760
      %v571 = vsub.f32 %v268, %v570
      %v572 = vand.u32 %v571, 4294901760
      %v573 = vsub.f32 %v571, %v572
      %v574 = vand.u32 %v573, 4294901760
      %575 = vmatpush1.msra.mxu0 %v574
      %v576 = vand.u32 %v272, 4294901760
      %v577 = vsub.f32 %v272, %v576
      %v578 = vand.u32 %v577, 4294901760
      %v579 = vsub.f32 %v577, %v578
      %v580 = vand.u32 %v579, 4294901760
      %581 = vmatprep.subr.mxu0 %v580
      %v582 = vand.u32 %v271, 4294901760
      %v583 = vsub.f32 %v271, %v582
      %v584 = vand.u32 %v583, 4294901760
      %v585 = vsub.f32 %v583, %v584
      %v586 = vand.u32 %v585, 4294901760
      %587 = vmatpush1.msra.mxu0 %v586
      %v588 = vand.u32 %v275, 4294901760
      %v589 = vsub.f32 %v275, %v588
      %v590 = vand.u32 %v589, 4294901760
      %v591 = vsub.f32 %v589, %v590
      %v592 = vand.u32 %v591, 4294901760
      %593 = vmatprep.subr.mxu0 %v592
      %v594 = vand.u32 %v274, 4294901760
      %v595 = vsub.f32 %v274, %v594
      %v596 = vand.u32 %v595, 4294901760
      %v597 = vsub.f32 %v595, %v596
      %v598 = vand.u32 %v597, 4294901760
      %599 = vmatpush1.msra.mxu0 %v598
      %v600 = vand.u32 %v278, 4294901760
      %v601 = vsub.f32 %v278, %v600
      %v602 = vand.u32 %v601, 4294901760
      %v603 = vsub.f32 %v601, %v602
      %v604 = vand.u32 %v603, 4294901760
      %605 = vmatprep.subr.mxu0 %v604
      %v606 = vand.u32 %v277, 4294901760
      %v607 = vsub.f32 %v277, %v606
      %v608 = vand.u32 %v607, 4294901760
      %v609 = vsub.f32 %v607, %v608
      %v610 = vand.u32 %v609, 4294901760
      %611 = vmatpush1.msra.mxu0 %v610
      %v612 = vand.u32 %v281, 4294901760
      %v613 = vsub.f32 %v281, %v612
      %v614 = vand.u32 %v613, 4294901760
      %v615 = vsub.f32 %v613, %v614
      %v616 = vand.u32 %v615, 4294901760
      %617 = vmatprep.subr.mxu0 %v616
      %v618 = vand.u32 %v280, 4294901760
      %v619 = vsub.f32 %v280, %v618
      %v620 = vand.u32 %v619, 4294901760
      %v621 = vsub.f32 %v619, %v620
      %v622 = vand.u32 %v621, 4294901760
      %623 = vmatpush1.msra.mxu0 %v622
      %v624 = vand.u32 %v284, 4294901760
      %v625 = vsub.f32 %v284, %v624
      %v626 = vand.u32 %v625, 4294901760
      %v627 = vsub.f32 %v625, %v626
      %v628 = vand.u32 %v627, 4294901760
      %629 = vmatprep.subr.mxu0 %v628
      %v630 = vand.u32 %v283, 4294901760
      %v631 = vsub.f32 %v283, %v630
      %v632 = vand.u32 %v631, 4294901760
      %v633 = vsub.f32 %v631, %v632
      %v634 = vand.u32 %v633, 4294901760
      %635 = vmatpush1.msra.mxu0 %v634
      %v636 = vand.u32 %v287, 4294901760
      %v637 = vsub.f32 %v287, %v636
      %v638 = vand.u32 %v637, 4294901760
      %v639 = vsub.f32 %v637, %v638
      %v640 = vand.u32 %v639, 4294901760
      %641 = vmatprep.subr.mxu0 %v640
      %v642 = vand.u32 %v286, 4294901760
      %v643 = vsub.f32 %v286, %v642
      %v644 = vand.u32 %v643, 4294901760
      %v645 = vsub.f32 %v643, %v644
      %v646 = vand.u32 %v645, 4294901760
      %647 = vmatpush1.msra.mxu0 %v646
      %v648 = vand.u32 %v290, 4294901760
      %v649 = vsub.f32 %v290, %v648
      %v650 = vand.u32 %v649, 4294901760
      %v651 = vsub.f32 %v649, %v650
      %v652 = vand.u32 %v651, 4294901760
      %653 = vmatprep.subr.mxu0 %v652
      %v654 = vand.u32 %v289, 4294901760
      %v655 = vsub.f32 %v289, %v654
      %v656 = vand.u32 %v655, 4294901760
      %v657 = vsub.f32 %v655, %v656
      %v658 = vand.u32 %v657, 4294901760
      %659 = vmatpush1.msra.mxu0 %v658
      %v660 = vand.u32 %v293, 4294901760
      %v661 = vsub.f32 %v293, %v660
      %v662 = vand.u32 %v661, 4294901760
      %v663 = vsub.f32 %v661, %v662
      %v664 = vand.u32 %v663, 4294901760
      %665 = vmatprep.subr.mxu0 %v664
      %v666 = vand.u32 %v292, 4294901760
      %v667 = vsub.f32 %v292, %v666
      %v668 = vand.u32 %v667, 4294901760
      %v669 = vsub.f32 %v667, %v668
      %v670 = vand.u32 %v669, 4294901760
      %671 = vmatpush1.msra.mxu0 %v670
      %672 = vmatprep.subr.mxu0 0.0
      %673 = vmatpush1.msra.mxu0 0.0
      %674 = vmatprep.subr.mxu0 0.0
      %675 = vmatpush1.msra.mxu0 0.0
      %676 = vmatprep.subr.mxu0 0.0
      %677 = vmatpush1.msra.mxu0 0.0
      %678 = vmatprep.subr.mxu0 0.0
      %679 = vmatpush1.msra.mxu0 0.0
      %680 = vmatprep.subr.mxu0 0.0
      %681 = vmatpush1.msra.mxu0 0.0
      %682 = vmatprep.subr.mxu0 0.0
      %683 = vmatpush1.msra.mxu0 0.0
      %684 = vmatprep.subr.mxu0 0.0
      %685 = vmatpush1.msra.mxu0 0.0
      %686 = vmatprep.subr.mxu0 0.0
      %687 = vmatpush1.msra.mxu0 0.0
      %688 = vmatprep.subr.mxu0 0.0
      %689 = vmatpush1.msra.mxu0 0.0
      %690 = vmatprep.subr.mxu0 0.0
      %691 = vmatpush1.msra.mxu0 0.0
      %692 = vmatprep.subr.mxu0 0.0
      %693 = vmatpush1.msra.mxu0 0.0
      %694 = vmatprep.subr.mxu0 0.0
      %695 = vmatpush1.msra.mxu0 0.0
      %696 = vmatprep.subr.mxu0 0.0
      %697 = vmatpush1.msra.mxu0 0.0
      %698 = vmatprep.subr.mxu0 0.0
      %699 = vmatpush1.msra.mxu0 0.0
      %700 = vmatprep.subr.mxu0 0.0
      %701 = vmatpush1.msra.mxu0 0.0
      %702 = vmatprep.subr.mxu0 0.0
      %703 = vmatpush1.msra.mxu0 0.0
      %704 = vmatprep.mubr.f32.mxu0 0.0
      %v705 = vand.u32 %v239, 4294901760
      %706 = vmatmul.mubr.f32.gmra.mrb[0].mxu0 %v705
      %v707 = vpop.f32.mrb[0].mxu0
      %v708 = vadd.f32 %v399, %v707
      %v709 = vpop.f32.mrb[0].mxu0
      %v710 = vadd.f32 %v401, %v709
      %711 = vmatprep.mubr.f32.mxu0 0.0
      %v712 = vand.u32 %v240, 4294901760
      %713 = vmatmul.mubr.f32.gmra.mrb[0].mxu0 %v712
      %v714 = vpop.f32.mrb[0].mxu0
      %v715 = vadd.f32 %v410, %v714
      %v716 = vpop.f32.mrb[0].mxu0
      %v717 = vadd.f32 %v412, %v716
      %718 = vmatprep.mubr.f32.mxu0 0.0
      %v719 = vand.u32 %v241, 4294901760
      %720 = vmatmul.mubr.f32.gmra.mrb[0].mxu0 %v719
      %v721 = vpop.f32.mrb[0].mxu0
      %v722 = vadd.f32 %v421, %v721
      %v723 = vpop.f32.mrb[0].mxu0
      %v724 = vadd.f32 %v423, %v723
      %725 = vmatprep.mubr.f32.mxu0 0.0
      %v726 = vand.u32 %v242, 4294901760
      %727 = vmatmul.mubr.f32.gmra.mrb[0].mxu0 %v726
      %v728 = vpop.f32.mrb[0].mxu0
      %v729 = vadd.f32 %v432, %v728
      %v730 = vpop.f32.mrb[0].mxu0
      %v731 = vadd.f32 %v434, %v730
      %732 = vmatprep.mubr.f32.mxu0 0.0
      %v733 = vand.u32 %v243, 4294901760
      %734 = vmatmul.mubr.f32.gmra.mrb[0].mxu0 %v733
      %v735 = vpop.f32.mrb[0].mxu0
      %v736 = vadd.f32 %v443, %v735
      %v737 = vpop.f32.mrb[0].mxu0
      %v738 = vadd.f32 %v445, %v737
      %739 = vmatprep.mubr.f32.mxu0 0.0
      %v740 = vand.u32 %v244, 4294901760
      %741 = vmatmul.mubr.f32.gmra.mrb[0].mxu0 %v740
      %v742 = vpop.f32.mrb[0].mxu0
      %v743 = vadd.f32 %v454, %v742
      %v744 = vpop.f32.mrb[0].mxu0
      %v745 = vadd.f32 %v456, %v744
      %746 = vmatprep.mubr.f32.mxu0 0.0
      %v747 = vand.u32 %v245, 4294901760
      %748 = vmatmul.mubr.f32.gmra.mrb[0].mxu0 %v747
      %v749 = vpop.f32.mrb[0].mxu0
      %v750 = vadd.f32 %v465, %v749
      %v751 = vpop.f32.mrb[0].mxu0
      %v752 = vadd.f32 %v467, %v751
      %753 = vmatprep.mubr.f32.mxu0 0.0
      %v754 = vand.u32 %v246, 4294901760
      %755 = vmatmul.mubr.f32.gmra.mrb[0].mxu0 %v754
      %v756 = vpop.f32.mrb[0].mxu0
      %v757 = vadd.f32 %v476, %v756
      %v758 = vpop.f32.mrb[0].mxu0
      %v759 = vadd.f32 %v478, %v758
      %760 = vdwg.mxu0
      %v761 = vand.u32 %v248, 4294901760
      %v762 = vsub.f32 %v248, %v761
      %763 = vmatprep.subr.mxu0 %v762
      %v764 = vand.u32 %v247, 4294901760
      %v765 = vsub.f32 %v247, %v764
      %766 = vmatpush1.msra.mxu0 %v765
      %v767 = vand.u32 %v251, 4294901760
      %v768 = vsub.f32 %v251, %v767
      %769 = vmatprep.subr.mxu0 %v768
      %v770 = vand.u32 %v250, 4294901760
      %v771 = vsub.f32 %v250, %v770
      %772 = vmatpush1.msra.mxu0 %v771
      %v773 = vand.u32 %v254, 4294901760
      %v774 = vsub.f32 %v254, %v773
      %775 = vmatprep.subr.mxu0 %v774
      %v776 = vand.u32 %v253, 4294901760
      %v777 = vsub.f32 %v253, %v776
      %778 = vmatpush1.msra.mxu0 %v777
      %v779 = vand.u32 %v257, 4294901760
      %v780 = vsub.f32 %v257, %v779
      %781 = vmatprep.subr.mxu0 %v780
      %v782 = vand.u32 %v256, 4294901760
      %v783 = vsub.f32 %v256, %v782
      %784 = vmatpush1.msra.mxu0 %v783
      %v785 = vand.u32 %v260, 4294901760
      %v786 = vsub.f32 %v260, %v785
      %787 = vmatprep.subr.mxu0 %v786
      %v788 = vand.u32 %v259, 4294901760
      %v789 = vsub.f32 %v259, %v788
      %790 = vmatpush1.msra.mxu0 %v789
      %v791 = vand.u32 %v263, 4294901760
      %v792 = vsub.f32 %v263, %v791
      %793 = vmatprep.subr.mxu0 %v792
      %v794 = vand.u32 %v262, 4294901760
      %v795 = vsub.f32 %v262, %v794
      %796 = vmatpush1.msra.mxu0 %v795
      %v797 = vand.u32 %v266, 4294901760
      %v798 = vsub.f32 %v266, %v797
      %799 = vmatprep.subr.mxu0 %v798
      %v800 = vand.u32 %v265, 4294901760
      %v801 = vsub.f32 %v265, %v800
      %802 = vmatpush1.msra.mxu0 %v801
      %v803 = vand.u32 %v269, 4294901760
      %v804 = vsub.f32 %v269, %v803
      %805 = vmatprep.subr.mxu0 %v804
      %v806 = vand.u32 %v268, 4294901760
      %v807 = vsub.f32 %v268, %v806
      %808 = vmatpush1.msra.mxu0 %v807
      %v809 = vand.u32 %v272, 4294901760
      %v810 = vsub.f32 %v272, %v809
      %811 = vmatprep.subr.mxu0 %v810
      %v812 = vand.u32 %v271, 4294901760
      %v813 = vsub.f32 %v271, %v812
      %814 = vmatpush1.msra.mxu0 %v813
      %v815 = vand.u32 %v275, 4294901760
      %v816 = vsub.f32 %v275, %v815
      %817 = vmatprep.subr.mxu0 %v816
      %v818 = vand.u32 %v274, 4294901760
      %v819 = vsub.f32 %v274, %v818
      %820 = vmatpush1.msra.mxu0 %v819
      %v821 = vand.u32 %v278, 4294901760
      %v822 = vsub.f32 %v278, %v821
      %823 = vmatprep.subr.mxu0 %v822
      %v824 = vand.u32 %v277, 4294901760
      %v825 = vsub.f32 %v277, %v824
      %826 = vmatpush1.msra.mxu0 %v825
      %v827 = vand.u32 %v281, 4294901760
      %v828 = vsub.f32 %v281, %v827
      %829 = vmatprep.subr.mxu0 %v828
      %v830 = vand.u32 %v280, 4294901760
      %v831 = vsub.f32 %v280, %v830
      %832 = vmatpush1.msra.mxu0 %v831
      %v833 = vand.u32 %v284, 4294901760
      %v834 = vsub.f32 %v284, %v833
      %835 = vmatprep.subr.mxu0 %v834
      %v836 = vand.u32 %v283, 4294901760
      %v837 = vsub.f32 %v283, %v836
      %838 = vmatpush1.msra.mxu0 %v837
      %v839 = vand.u32 %v287, 4294901760
      %v840 = vsub.f32 %v287, %v839
      %841 = vmatprep.subr.mxu0 %v840
      %v842 = vand.u32 %v286, 4294901760
      %v843 = vsub.f32 %v286, %v842
      %844 = vmatpush1.msra.mxu0 %v843
      %v845 = vand.u32 %v290, 4294901760
      %v846 = vsub.f32 %v290, %v845
      %847 = vmatprep.subr.mxu0 %v846
      %v848 = vand.u32 %v289, 4294901760
      %v849 = vsub.f32 %v289, %v848
      %850 = vmatpush1.msra.mxu0 %v849
      %v851 = vand.u32 %v293, 4294901760
      %v852 = vsub.f32 %v293, %v851
      %853 = vmatprep.subr.mxu0 %v852
      %v854 = vand.u32 %v292, 4294901760
      %v855 = vsub.f32 %v292, %v854
      %856 = vmatpush1.msra.mxu0 %v855
      %857 = vmatprep.subr.mxu0 0.0
      %858 = vmatpush1.msra.mxu0 0.0
      %859 = vmatprep.subr.mxu0 0.0
      %860 = vmatpush1.msra.mxu0 0.0
      %861 = vmatprep.subr.mxu0 0.0
      %862 = vmatpush1.msra.mxu0 0.0
      %863 = vmatprep.subr.mxu0 0.0
      %864 = vmatpush1.msra.mxu0 0.0
      %865 = vmatprep.subr.mxu0 0.0
      %866 = vmatpush1.msra.mxu0 0.0
      %867 = vmatprep.subr.mxu0 0.0
      %868 = vmatpush1.msra.mxu0 0.0
      %869 = vmatprep.subr.mxu0 0.0
      %870 = vmatpush1.msra.mxu0 0.0
      %871 = vmatprep.subr.mxu0 0.0
      %872 = vmatpush1.msra.mxu0 0.0
      %873 = vmatprep.subr.mxu0 0.0
      %874 = vmatpush1.msra.mxu0 0.0
      %875 = vmatprep.subr.mxu0 0.0
      %876 = vmatpush1.msra.mxu0 0.0
      %877 = vmatprep.subr.mxu0 0.0
      %878 = vmatpush1.msra.mxu0 0.0
      %879 = vmatprep.subr.mxu0 0.0
      %880 = vmatpush1.msra.mxu0 0.0
      %881 = vmatprep.subr.mxu0 0.0
      %882 = vmatpush1.msra.mxu0 0.0
      %883 = vmatprep.subr.mxu0 0.0
      %884 = vmatpush1.msra.mxu0 0.0
      %885 = vmatprep.subr.mxu0 0.0
      %886 = vmatpush1.msra.mxu0 0.0
      %887 = vmatprep.subr.mxu0 0.0
      %888 = vmatpush1.msra.mxu0 0.0
      %889 = vmatprep.mubr.f32.mxu0 0.0
      %v890 = vand.u32 %v239, 4294901760
      %v891 = vsub.f32 %v239, %v890
      %892 = vmatmul.mubr.f32.gmra.mrb[0].mxu0 %v891
      %v893 = vpop.f32.mrb[0].mxu0
      %v894 = vadd.f32 %v708, %v893
      %v895 = vpop.f32.mrb[0].mxu0
      %v896 = vadd.f32 %v710, %v895
      %897 = vmatprep.mubr.f32.mxu0 0.0
      %v898 = vand.u32 %v240, 4294901760
      %v899 = vsub.f32 %v240, %v898
      %900 = vmatmul.mubr.f32.gmra.mrb[0].mxu0 %v899
      %v901 = vpop.f32.mrb[0].mxu0
      %v902 = vadd.f32 %v715, %v901
      %v903 = vpop.f32.mrb[0].mxu0
      %v904 = vadd.f32 %v717, %v903
      %905 = vmatprep.mubr.f32.mxu0 0.0
      %v906 = vand.u32 %v241, 4294901760
      %v907 = vsub.f32 %v241, %v906
      %908 = vmatmul.mubr.f32.gmra.mrb[0].mxu0 %v907
      %v909 = vpop.f32.mrb[0].mxu0
      %v910 = vadd.f32 %v722, %v909
      %v911 = vpop.f32.mrb[0].mxu0
      %v912 = vadd.f32 %v724, %v911
      %913 = vmatprep.mubr.f32.mxu0 0.0
      %v914 = vand.u32 %v242, 4294901760
      %v915 = vsub.f32 %v242, %v914
      %916 = vmatmul.mubr.f32.gmra.mrb[0].mxu0 %v915
      %v917 = vpop.f32.mrb[0].mxu0
      %v918 = vadd.f32 %v729, %v917
      %v919 = vpop.f32.mrb[0].mxu0
      %v920 = vadd.f32 %v731, %v919
      %921 = vmatprep.mubr.f32.mxu0 0.0
      %v922 = vand.u32 %v243, 4294901760
      %v923 = vsub.f32 %v243, %v922
      %924 = vmatmul.mubr.f32.gmra.mrb[0].mxu0 %v923
      %v925 = vpop.f32.mrb[0].mxu0
      %v926 = vadd.f32 %v736, %v925
      %v927 = vpop.f32.mrb[0].mxu0
      %v928 = vadd.f32 %v738, %v927
      %929 = vmatprep.mubr.f32.mxu0 0.0
      %v930 = vand.u32 %v244, 4294901760
      %v931 = vsub.f32 %v244, %v930
      %932 = vmatmul.mubr.f32.gmra.mrb[0].mxu0 %v931
      %v933 = vpop.f32.mrb[0].mxu0
      %v934 = vadd.f32 %v743, %v933
      %v935 = vpop.f32.mrb[0].mxu0
      %v936 = vadd.f32 %v745, %v935
      %937 = vmatprep.mubr.f32.mxu0 0.0
      %v938 = vand.u32 %v245, 4294901760
      %v939 = vsub.f32 %v245, %v938
      %940 = vmatmul.mubr.f32.gmra.mrb[0].mxu0 %v939
      %v941 = vpop.f32.mrb[0].mxu0
      %v942 = vadd.f32 %v750, %v941
      %v943 = vpop.f32.mrb[0].mxu0
      %v944 = vadd.f32 %v752, %v943
      %945 = vmatprep.mubr.f32.mxu0 0.0
      %v946 = vand.u32 %v246, 4294901760
      %v947 = vsub.f32 %v246, %v946
      %948 = vmatmul.mubr.f32.gmra.mrb[0].mxu0 %v947
      %v949 = vpop.f32.mrb[0].mxu0
      %v950 = vadd.f32 %v757, %v949
      %v951 = vpop.f32.mrb[0].mxu0
      %v952 = vadd.f32 %v759, %v951
      %953 = vdwg.mxu0
      %v954 = vand.u32 %v248, 4294901760
      %955 = vmatprep.subr.mxu0 %v954
      %v956 = vand.u32 %v247, 4294901760
      %957 = vmatpush1.msra.mxu0 %v956
      %v958 = vand.u32 %v251, 4294901760
      %959 = vmatprep.subr.mxu0 %v958
      %v960 = vand.u32 %v250, 4294901760
      %961 = vmatpush1.msra.mxu0 %v960
      %v962 = vand.u32 %v254, 4294901760
      %963 = vmatprep.subr.mxu0 %v962
      %v964 = vand.u32 %v253, 4294901760
      %965 = vmatpush1.msra.mxu0 %v964
      %v966 = vand.u32 %v257, 4294901760
      %967 = vmatprep.subr.mxu0 %v966
      %v968 = vand.u32 %v256, 4294901760
      %969 = vmatpush1.msra.mxu0 %v968
      %v970 = vand.u32 %v260, 4294901760
      %971 = vmatprep.subr.mxu0 %v970
      %v972 = vand.u32 %v259, 4294901760
      %973 = vmatpush1.msra.mxu0 %v972
      %v974 = vand.u32 %v263, 4294901760
      %975 = vmatprep.subr.mxu0 %v974
      %v976 = vand.u32 %v262, 4294901760
      %977 = vmatpush1.msra.mxu0 %v976
      %v978 = vand.u32 %v266, 4294901760
      %979 = vmatprep.subr.mxu0 %v978
      %v980 = vand.u32 %v265, 4294901760
      %981 = vmatpush1.msra.mxu0 %v980
      %v982 = vand.u32 %v269, 4294901760
      %983 = vmatprep.subr.mxu0 %v982
      %v984 = vand.u32 %v268, 4294901760
      %985 = vmatpush1.msra.mxu0 %v984
      %v986 = vand.u32 %v272, 4294901760
      %987 = vmatprep.subr.mxu0 %v986
      %v988 = vand.u32 %v271, 4294901760
      %989 = vmatpush1.msra.mxu0 %v988
      %v990 = vand.u32 %v275, 4294901760
      %991 = vmatprep.subr.mxu0 %v990
      %v992 = vand.u32 %v274, 4294901760
      %993 = vmatpush1.msra.mxu0 %v992
      %v994 = vand.u32 %v278, 4294901760
      %995 = vmatprep.subr.mxu0 %v994
      %v996 = vand.u32 %v277, 4294901760
      %997 = vmatpush1.msra.mxu0 %v996
      %v998 = vand.u32 %v281, 4294901760
      %999 = vmatprep.subr.mxu0 %v998
      %v1000 = vand.u32 %v280, 4294901760
      %1001 = vmatpush1.msra.mxu0 %v1000
      %v1002 = vand.u32 %v284, 4294901760
      %1003 = vmatprep.subr.mxu0 %v1002
      %v1004 = vand.u32 %v283, 4294901760
      %1005 = vmatpush1.msra.mxu0 %v1004
      %v1006 = vand.u32 %v287, 4294901760
      %1007 = vmatprep.subr.mxu0 %v1006
      %v1008 = vand.u32 %v286, 4294901760
      %1009 = vmatpush1.msra.mxu0 %v1008
      %v1010 = vand.u32 %v290, 4294901760
      %1011 = vmatprep.subr.mxu0 %v1010
      %v1012 = vand.u32 %v289, 4294901760
      %1013 = vmatpush1.msra.mxu0 %v1012
      %v1014 = vand.u32 %v293, 4294901760
      %1015 = vmatprep.subr.mxu0 %v1014
      %v1016 = vand.u32 %v292, 4294901760
      %1017 = vmatpush1.msra.mxu0 %v1016
      %1018 = vmatprep.subr.mxu0 0.0
      %1019 = vmatpush1.msra.mxu0 0.0
      %1020 = vmatprep.subr.mxu0 0.0
      %1021 = vmatpush1.msra.mxu0 0.0
      %1022 = vmatprep.subr.mxu0 0.0
      %1023 = vmatpush1.msra.mxu0 0.0
      %1024 = vmatprep.subr.mxu0 0.0
      %1025 = vmatpush1.msra.mxu0 0.0
      %1026 = vmatprep.subr.mxu0 0.0
      %1027 = vmatpush1.msra.mxu0 0.0
      %1028 = vmatprep.subr.mxu0 0.0
      %1029 = vmatpush1.msra.mxu0 0.0
      %1030 = vmatprep.subr.mxu0 0.0
      %1031 = vmatpush1.msra.mxu0 0.0
      %1032 = vmatprep.subr.mxu0 0.0
      %1033 = vmatpush1.msra.mxu0 0.0
      %1034 = vmatprep.subr.mxu0 0.0
      %1035 = vmatpush1.msra.mxu0 0.0
      %1036 = vmatprep.subr.mxu0 0.0
      %1037 = vmatpush1.msra.mxu0 0.0
      %1038 = vmatprep.subr.mxu0 0.0
      %1039 = vmatpush1.msra.mxu0 0.0
      %1040 = vmatprep.subr.mxu0 0.0
      %1041 = vmatpush1.msra.mxu0 0.0
      %1042 = vmatprep.subr.mxu0 0.0
      %1043 = vmatpush1.msra.mxu0 0.0
      %1044 = vmatprep.subr.mxu0 0.0
      %1045 = vmatpush1.msra.mxu0 0.0
      %1046 = vmatprep.subr.mxu0 0.0
      %1047 = vmatpush1.msra.mxu0 0.0
      %1048 = vmatprep.subr.mxu0 0.0
      %1049 = vmatpush1.msra.mxu0 0.0
      %1050 = vmatprep.mubr.f32.mxu0 0.0
      %v1051 = vand.u32 %v239, 4294901760
      %v1052 = vsub.f32 %v239, %v1051
      %v1053 = vand.u32 %v1052, 4294901760
      %1054 = vmatmul.mubr.f32.gmra.mrb[0].mxu0 %v1053
      %v1055 = vpop.f32.mrb[0].mxu0
      %v1056 = vadd.f32 %v894, %v1055
      %v1057 = vpop.f32.mrb[0].mxu0
      %v1058 = vadd.f32 %v896, %v1057
      %1059 = vmatprep.mubr.f32.mxu0 0.0
      %v1060 = vand.u32 %v240, 4294901760
      %v1061 = vsub.f32 %v240, %v1060
      %v1062 = vand.u32 %v1061, 4294901760
      %1063 = vmatmul.mubr.f32.gmra.mrb[0].mxu0 %v1062
      %v1064 = vpop.f32.mrb[0].mxu0
      %v1065 = vadd.f32 %v902, %v1064
      %v1066 = vpop.f32.mrb[0].mxu0
      %v1067 = vadd.f32 %v904, %v1066
      %1068 = vmatprep.mubr.f32.mxu0 0.0
      %v1069 = vand.u32 %v241, 4294901760
      %v1070 = vsub.f32 %v241, %v1069
      %v1071 = vand.u32 %v1070, 4294901760
      %1072 = vmatmul.mubr.f32.gmra.mrb[0].mxu0 %v1071
      %v1073 = vpop.f32.mrb[0].mxu0
      %v1074 = vadd.f32 %v910, %v1073
      %v1075 = vpop.f32.mrb[0].mxu0
      %v1076 = vadd.f32 %v912, %v1075
      %1077 = vmatprep.mubr.f32.mxu0 0.0
      %v1078 = vand.u32 %v242, 4294901760
      %v1079 = vsub.f32 %v242, %v1078
      %v1080 = vand.u32 %v1079, 4294901760
      %1081 = vmatmul.mubr.f32.gmra.mrb[0].mxu0 %v1080
      %v1082 = vpop.f32.mrb[0].mxu0
      %v1083 = vadd.f32 %v918, %v1082
      %v1084 = vpop.f32.mrb[0].mxu0
      %v1085 = vadd.f32 %v920, %v1084
      %1086 = vmatprep.mubr.f32.mxu0 0.0
      %v1087 = vand.u32 %v243, 4294901760
      %v1088 = vsub.f32 %v243, %v1087
      %v1089 = vand.u32 %v1088, 4294901760
      %1090 = vmatmul.mubr.f32.gmra.mrb[0].mxu0 %v1089
      %v1091 = vpop.f32.mrb[0].mxu0
      %v1092 = vadd.f32 %v926, %v1091
      %v1093 = vpop.f32.mrb[0].mxu0
      %v1094 = vadd.f32 %v928, %v1093
      %1095 = vmatprep.mubr.f32.mxu0 0.0
      %v1096 = vand.u32 %v244, 4294901760
      %v1097 = vsub.f32 %v244, %v1096
      %v1098 = vand.u32 %v1097, 4294901760
      %1099 = vmatmul.mubr.f32.gmra.mrb[0].mxu0 %v1098
      %v1100 = vpop.f32.mrb[0].mxu0
      %v1101 = vadd.f32 %v934, %v1100
      %v1102 = vpop.f32.mrb[0].mxu0
      %v1103 = vadd.f32 %v936, %v1102
      %1104 = vmatprep.mubr.f32.mxu0 0.0
      %v1105 = vand.u32 %v245, 4294901760
      %v1106 = vsub.f32 %v245, %v1105
      %v1107 = vand.u32 %v1106, 4294901760
      %1108 = vmatmul.mubr.f32.gmra.mrb[0].mxu0 %v1107
      %v1109 = vpop.f32.mrb[0].mxu0
      %v1110 = vadd.f32 %v942, %v1109
      %v1111 = vpop.f32.mrb[0].mxu0
      %v1112 = vadd.f32 %v944, %v1111
      %1113 = vmatprep.mubr.f32.mxu0 0.0
      %v1114 = vand.u32 %v246, 4294901760
      %v1115 = vsub.f32 %v246, %v1114
      %v1116 = vand.u32 %v1115, 4294901760
      %1117 = vmatmul.mubr.f32.gmra.mrb[0].mxu0 %v1116
      %v1118 = vpop.f32.mrb[0].mxu0
      %v1119 = vadd.f32 %v950, %v1118
      %v1120 = vpop.f32.mrb[0].mxu0
      %v1121 = vadd.f32 %v952, %v1120
      %1122 = vdwg.mxu0
      %v1123 = vand.u32 %v248, 4294901760
      %v1124 = vsub.f32 %v248, %v1123
      %v1125 = vand.u32 %v1124, 4294901760
      %1126 = vmatprep.subr.mxu0 %v1125
      %v1127 = vand.u32 %v247, 4294901760
      %v1128 = vsub.f32 %v247, %v1127
      %v1129 = vand.u32 %v1128, 4294901760
      %1130 = vmatpush1.msra.mxu0 %v1129
      %v1131 = vand.u32 %v251, 4294901760
      %v1132 = vsub.f32 %v251, %v1131
      %v1133 = vand.u32 %v1132, 4294901760
      %1134 = vmatprep.subr.mxu0 %v1133
      %v1135 = vand.u32 %v250, 4294901760
      %v1136 = vsub.f32 %v250, %v1135
      %v1137 = vand.u32 %v1136, 4294901760
      %1138 = vmatpush1.msra.mxu0 %v1137
      %v1139 = vand.u32 %v254, 4294901760
      %v1140 = vsub.f32 %v254, %v1139
      %v1141 = vand.u32 %v1140, 4294901760
      %1142 = vmatprep.subr.mxu0 %v1141
      %v1143 = vand.u32 %v253, 4294901760
      %v1144 = vsub.f32 %v253, %v1143
      %v1145 = vand.u32 %v1144, 4294901760
      %1146 = vmatpush1.msra.mxu0 %v1145
      %v1147 = vand.u32 %v257, 4294901760
      %v1148 = vsub.f32 %v257, %v1147
      %v1149 = vand.u32 %v1148, 4294901760
      %1150 = vmatprep.subr.mxu0 %v1149
      %v1151 = vand.u32 %v256, 4294901760
      %v1152 = vsub.f32 %v256, %v1151
      %v1153 = vand.u32 %v1152, 4294901760
      %1154 = vmatpush1.msra.mxu0 %v1153
      %v1155 = vand.u32 %v260, 4294901760
      %v1156 = vsub.f32 %v260, %v1155
      %v1157 = vand.u32 %v1156, 4294901760
      %1158 = vmatprep.subr.mxu0 %v1157
      %v1159 = vand.u32 %v259, 4294901760
      %v1160 = vsub.f32 %v259, %v1159
      %v1161 = vand.u32 %v1160, 4294901760
      %1162 = vmatpush1.msra.mxu0 %v1161
      %v1163 = vand.u32 %v263, 4294901760
      %v1164 = vsub.f32 %v263, %v1163
      %v1165 = vand.u32 %v1164, 4294901760
      %1166 = vmatprep.subr.mxu0 %v1165
      %v1167 = vand.u32 %v262, 4294901760
      %v1168 = vsub.f32 %v262, %v1167
      %v1169 = vand.u32 %v1168, 4294901760
      %1170 = vmatpush1.msra.mxu0 %v1169
      %v1171 = vand.u32 %v266, 4294901760
      %v1172 = vsub.f32 %v266, %v1171
      %v1173 = vand.u32 %v1172, 4294901760
      %1174 = vmatprep.subr.mxu0 %v1173
      %v1175 = vand.u32 %v265, 4294901760
      %v1176 = vsub.f32 %v265, %v1175
      %v1177 = vand.u32 %v1176, 4294901760
      %1178 = vmatpush1.msra.mxu0 %v1177
      %v1179 = vand.u32 %v269, 4294901760
      %v1180 = vsub.f32 %v269, %v1179
      %v1181 = vand.u32 %v1180, 4294901760
      %1182 = vmatprep.subr.mxu0 %v1181
      %v1183 = vand.u32 %v268, 4294901760
      %v1184 = vsub.f32 %v268, %v1183
      %v1185 = vand.u32 %v1184, 4294901760
      %1186 = vmatpush1.msra.mxu0 %v1185
      %v1187 = vand.u32 %v272, 4294901760
      %v1188 = vsub.f32 %v272, %v1187
      %v1189 = vand.u32 %v1188, 4294901760
      %1190 = vmatprep.subr.mxu0 %v1189
      %v1191 = vand.u32 %v271, 4294901760
      %v1192 = vsub.f32 %v271, %v1191
      %v1193 = vand.u32 %v1192, 4294901760
      %1194 = vmatpush1.msra.mxu0 %v1193
      %v1195 = vand.u32 %v275, 4294901760
      %v1196 = vsub.f32 %v275, %v1195
      %v1197 = vand.u32 %v1196, 4294901760
      %1198 = vmatprep.subr.mxu0 %v1197
      %v1199 = vand.u32 %v274, 4294901760
      %v1200 = vsub.f32 %v274, %v1199
      %v1201 = vand.u32 %v1200, 4294901760
      %1202 = vmatpush1.msra.mxu0 %v1201
      %v1203 = vand.u32 %v278, 4294901760
      %v1204 = vsub.f32 %v278, %v1203
      %v1205 = vand.u32 %v1204, 4294901760
      %1206 = vmatprep.subr.mxu0 %v1205
      %v1207 = vand.u32 %v277, 4294901760
      %v1208 = vsub.f32 %v277, %v1207
      %v1209 = vand.u32 %v1208, 4294901760
      %1210 = vmatpush1.msra.mxu0 %v1209
      %v1211 = vand.u32 %v281, 4294901760
      %v1212 = vsub.f32 %v281, %v1211
      %v1213 = vand.u32 %v1212, 4294901760
      %1214 = vmatprep.subr.mxu0 %v1213
      %v1215 = vand.u32 %v280, 4294901760
      %v1216 = vsub.f32 %v280, %v1215
      %v1217 = vand.u32 %v1216, 4294901760
      %1218 = vmatpush1.msra.mxu0 %v1217
      %v1219 = vand.u32 %v284, 4294901760
      %v1220 = vsub.f32 %v284, %v1219
      %v1221 = vand.u32 %v1220, 4294901760
      %1222 = vmatprep.subr.mxu0 %v1221
      %v1223 = vand.u32 %v283, 4294901760
      %v1224 = vsub.f32 %v283, %v1223
      %v1225 = vand.u32 %v1224, 4294901760
      %1226 = vmatpush1.msra.mxu0 %v1225
      %v1227 = vand.u32 %v287, 4294901760
      %v1228 = vsub.f32 %v287, %v1227
      %v1229 = vand.u32 %v1228, 4294901760
      %1230 = vmatprep.subr.mxu0 %v1229
      %v1231 = vand.u32 %v286, 4294901760
      %v1232 = vsub.f32 %v286, %v1231
      %v1233 = vand.u32 %v1232, 4294901760
      %1234 = vmatpush1.msra.mxu0 %v1233
      %v1235 = vand.u32 %v290, 4294901760
      %v1236 = vsub.f32 %v290, %v1235
      %v1237 = vand.u32 %v1236, 4294901760
      %1238 = vmatprep.subr.mxu0 %v1237
      %v1239 = vand.u32 %v289, 4294901760
      %v1240 = vsub.f32 %v289, %v1239
      %v1241 = vand.u32 %v1240, 4294901760
      %1242 = vmatpush1.msra.mxu0 %v1241
      %v1243 = vand.u32 %v293, 4294901760
      %v1244 = vsub.f32 %v293, %v1243
      %v1245 = vand.u32 %v1244, 4294901760
      %1246 = vmatprep.subr.mxu0 %v1245
      %v1247 = vand.u32 %v292, 4294901760
      %v1248 = vsub.f32 %v292, %v1247
      %v1249 = vand.u32 %v1248, 4294901760
      %1250 = vmatpush1.msra.mxu0 %v1249
      %1251 = vmatprep.subr.mxu0 0.0
      %1252 = vmatpush1.msra.mxu0 0.0
      %1253 = vmatprep.subr.mxu0 0.0
      %1254 = vmatpush1.msra.mxu0 0.0
      %1255 = vmatprep.subr.mxu0 0.0
      %1256 = vmatpush1.msra.mxu0 0.0
      %1257 = vmatprep.subr.mxu0 0.0
      %1258 = vmatpush1.msra.mxu0 0.0
      %1259 = vmatprep.subr.mxu0 0.0
      %1260 = vmatpush1.msra.mxu0 0.0
      %1261 = vmatprep.subr.mxu0 0.0
      %1262 = vmatpush1.msra.mxu0 0.0
      %1263 = vmatprep.subr.mxu0 0.0
      %1264 = vmatpush1.msra.mxu0 0.0
      %1265 = vmatprep.subr.mxu0 0.0
      %1266 = vmatpush1.msra.mxu0 0.0
      %1267 = vmatprep.subr.mxu0 0.0
      %1268 = vmatpush1.msra.mxu0 0.0
      %1269 = vmatprep.subr.mxu0 0.0
      %1270 = vmatpush1.msra.mxu0 0.0
      %1271 = vmatprep.subr.mxu0 0.0
      %1272 = vmatpush1.msra.mxu0 0.0
      %1273 = vmatprep.subr.mxu0 0.0
      %1274 = vmatpush1.msra.mxu0 0.0
      %1275 = vmatprep.subr.mxu0 0.0
      %1276 = vmatpush1.msra.mxu0 0.0
      %1277 = vmatprep.subr.mxu0 0.0
      %1278 = vmatpush1.msra.mxu0 0.0
      %1279 = vmatprep.subr.mxu0 0.0
      %1280 = vmatpush1.msra.mxu0 0.0
      %1281 = vmatprep.subr.mxu0 0.0
      %1282 = vmatpush1.msra.mxu0 0.0
      %1283 = vmatprep.mubr.f32.mxu0 0.0
      %v1284 = vand.u32 %v239, 4294901760
      %1285 = vmatmul.mubr.f32.gmra.mrb[0].mxu0 %v1284
      %v1286 = vpop.f32.mrb[0].mxu0
      %v1287 = vadd.f32 %v1056, %v1286
      %v1288 = vpop.f32.mrb[0].mxu0
      %v1289 = vadd.f32 %v1058, %v1288
      %1290 = vmatprep.mubr.f32.mxu0 0.0
      %v1291 = vand.u32 %v240, 4294901760
      %1292 = vmatmul.mubr.f32.gmra.mrb[0].mxu0 %v1291
      %v1293 = vpop.f32.mrb[0].mxu0
      %v1294 = vadd.f32 %v1065, %v1293
      %v1295 = vpop.f32.mrb[0].mxu0
      %v1296 = vadd.f32 %v1067, %v1295
      %1297 = vmatprep.mubr.f32.mxu0 0.0
      %v1298 = vand.u32 %v241, 4294901760
      %1299 = vmatmul.mubr.f32.gmra.mrb[0].mxu0 %v1298
      %v1300 = vpop.f32.mrb[0].mxu0
      %v1301 = vadd.f32 %v1074, %v1300
      %v1302 = vpop.f32.mrb[0].mxu0
      %v1303 = vadd.f32 %v1076, %v1302
      %1304 = vmatprep.mubr.f32.mxu0 0.0
      %v1305 = vand.u32 %v242, 4294901760
      %1306 = vmatmul.mubr.f32.gmra.mrb[0].mxu0 %v1305
      %v1307 = vpop.f32.mrb[0].mxu0
      %v1308 = vadd.f32 %v1083, %v1307
      %v1309 = vpop.f32.mrb[0].mxu0
      %v1310 = vadd.f32 %v1085, %v1309
      %1311 = vmatprep.mubr.f32.mxu0 0.0
      %v1312 = vand.u32 %v243, 4294901760
      %1313 = vmatmul.mubr.f32.gmra.mrb[0].mxu0 %v1312
      %v1314 = vpop.f32.mrb[0].mxu0
      %v1315 = vadd.f32 %v1092, %v1314
      %v1316 = vpop.f32.mrb[0].mxu0
      %v1317 = vadd.f32 %v1094, %v1316
      %1318 = vmatprep.mubr.f32.mxu0 0.0
      %v1319 = vand.u32 %v244, 4294901760
      %1320 = vmatmul.mubr.f32.gmra.mrb[0].mxu0 %v1319
      %v1321 = vpop.f32.mrb[0].mxu0
      %v1322 = vadd.f32 %v1101, %v1321
      %v1323 = vpop.f32.mrb[0].mxu0
      %v1324 = vadd.f32 %v1103, %v1323
      %1325 = vmatprep.mubr.f32.mxu0 0.0
      %v1326 = vand.u32 %v245, 4294901760
      %1327 = vmatmul.mubr.f32.gmra.mrb[0].mxu0 %v1326
      %v1328 = vpop.f32.mrb[0].mxu0
      %v1329 = vadd.f32 %v1110, %v1328
      %v1330 = vpop.f32.mrb[0].mxu0
      %v1331 = vadd.f32 %v1112, %v1330
      %1332 = vmatprep.mubr.f32.mxu0 0.0
      %v1333 = vand.u32 %v246, 4294901760
      %1334 = vmatmul.mubr.f32.gmra.mrb[0].mxu0 %v1333
      %v1335 = vpop.f32.mrb[0].mxu0
      %v1336 = vadd.f32 %v1119, %v1335
      %v1337 = vpop.f32.mrb[0].mxu0
      %v1338 = vadd.f32 %v1121, %v1337
      %1339 = vdwg.mxu0
      %v1340 = vand.u32 %v248, 4294901760
      %1341 = vmatprep.subr.mxu0 %v1340
      %v1342 = vand.u32 %v247, 4294901760
      %1343 = vmatpush1.msra.mxu0 %v1342
      %v1344 = vand.u32 %v251, 4294901760
      %1345 = vmatprep.subr.mxu0 %v1344
      %v1346 = vand.u32 %v250, 4294901760
      %1347 = vmatpush1.msra.mxu0 %v1346
      %v1348 = vand.u32 %v254, 4294901760
      %1349 = vmatprep.subr.mxu0 %v1348
      %v1350 = vand.u32 %v253, 4294901760
      %1351 = vmatpush1.msra.mxu0 %v1350
      %v1352 = vand.u32 %v257, 4294901760
      %1353 = vmatprep.subr.mxu0 %v1352
      %v1354 = vand.u32 %v256, 4294901760
      %1355 = vmatpush1.msra.mxu0 %v1354
      %v1356 = vand.u32 %v260, 4294901760
      %1357 = vmatprep.subr.mxu0 %v1356
      %v1358 = vand.u32 %v259, 4294901760
      %1359 = vmatpush1.msra.mxu0 %v1358
      %v1360 = vand.u32 %v263, 4294901760
      %1361 = vmatprep.subr.mxu0 %v1360
      %v1362 = vand.u32 %v262, 4294901760
      %1363 = vmatpush1.msra.mxu0 %v1362
      %v1364 = vand.u32 %v266, 4294901760
      %1365 = vmatprep.subr.mxu0 %v1364
      %v1366 = vand.u32 %v265, 4294901760
      %1367 = vmatpush1.msra.mxu0 %v1366
      %v1368 = vand.u32 %v269, 4294901760
      %1369 = vmatprep.subr.mxu0 %v1368
      %v1370 = vand.u32 %v268, 4294901760
      %1371 = vmatpush1.msra.mxu0 %v1370
      %v1372 = vand.u32 %v272, 4294901760
      %1373 = vmatprep.subr.mxu0 %v1372
      %v1374 = vand.u32 %v271, 4294901760
      %1375 = vmatpush1.msra.mxu0 %v1374
      %v1376 = vand.u32 %v275, 4294901760
      %1377 = vmatprep.subr.mxu0 %v1376
      %v1378 = vand.u32 %v274, 4294901760
      %1379 = vmatpush1.msra.mxu0 %v1378
      %v1380 = vand.u32 %v278, 4294901760
      %1381 = vmatprep.subr.mxu0 %v1380
      %v1382 = vand.u32 %v277, 4294901760
      %1383 = vmatpush1.msra.mxu0 %v1382
      %v1384 = vand.u32 %v281, 4294901760
      %1385 = vmatprep.subr.mxu0 %v1384
      %v1386 = vand.u32 %v280, 4294901760
      %1387 = vmatpush1.msra.mxu0 %v1386
      %v1388 = vand.u32 %v284, 4294901760
      %1389 = vmatprep.subr.mxu0 %v1388
      %v1390 = vand.u32 %v283, 4294901760
      %1391 = vmatpush1.msra.mxu0 %v1390
      %v1392 = vand.u32 %v287, 4294901760
      %1393 = vmatprep.subr.mxu0 %v1392
      %v1394 = vand.u32 %v286, 4294901760
      %1395 = vmatpush1.msra.mxu0 %v1394
      %v1396 = vand.u32 %v290, 4294901760
      %1397 = vmatprep.subr.mxu0 %v1396
      %v1398 = vand.u32 %v289, 4294901760
      %1399 = vmatpush1.msra.mxu0 %v1398
      %v1400 = vand.u32 %v293, 4294901760
      %1401 = vmatprep.subr.mxu0 %v1400
      %v1402 = vand.u32 %v292, 4294901760
      %1403 = vmatpush1.msra.mxu0 %v1402
      %1404 = vmatprep.subr.mxu0 0.0
      %1405 = vmatpush1.msra.mxu0 0.0
      %1406 = vmatprep.subr.mxu0 0.0
      %1407 = vmatpush1.msra.mxu0 0.0
      %1408 = vmatprep.subr.mxu0 0.0
      %1409 = vmatpush1.msra.mxu0 0.0
      %1410 = vmatprep.subr.mxu0 0.0
      %1411 = vmatpush1.msra.mxu0 0.0
      %1412 = vmatprep.subr.mxu0 0.0
      %1413 = vmatpush1.msra.mxu0 0.0
      %1414 = vmatprep.subr.mxu0 0.0
      %1415 = vmatpush1.msra.mxu0 0.0
      %1416 = vmatprep.subr.mxu0 0.0
      %1417 = vmatpush1.msra.mxu0 0.0
      %1418 = vmatprep.subr.mxu0 0.0
      %1419 = vmatpush1.msra.mxu0 0.0
      %1420 = vmatprep.subr.mxu0 0.0
      %1421 = vmatpush1.msra.mxu0 0.0
      %1422 = vmatprep.subr.mxu0 0.0
      %1423 = vmatpush1.msra.mxu0 0.0
      %1424 = vmatprep.subr.mxu0 0.0
      %1425 = vmatpush1.msra.mxu0 0.0
      %1426 = vmatprep.subr.mxu0 0.0
      %1427 = vmatpush1.msra.mxu0 0.0
      %1428 = vmatprep.subr.mxu0 0.0
      %1429 = vmatpush1.msra.mxu0 0.0
      %1430 = vmatprep.subr.mxu0 0.0
      %1431 = vmatpush1.msra.mxu0 0.0
      %1432 = vmatprep.subr.mxu0 0.0
      %1433 = vmatpush1.msra.mxu0 0.0
      %1434 = vmatprep.subr.mxu0 0.0
      %1435 = vmatpush1.msra.mxu0 0.0
      %1436 = vmatprep.mubr.f32.mxu0 0.0
      %v1437 = vand.u32 %v239, 4294901760
      %1438 = vmatmul.mubr.f32.gmra.mrb[0].mxu0 %v1437
      %v1439 = vpop.f32.mrb[0].mxu0
      %v1440 = vadd.f32 %v1287, %v1439
      %v1441 = vpop.f32.mrb[0].mxu0
      %v1442 = vadd.f32 %v1289, %v1441
      %1443 = vmatprep.mubr.f32.mxu0 0.0
      %v1444 = vand.u32 %v240, 4294901760
      %1445 = vmatmul.mubr.f32.gmra.mrb[0].mxu0 %v1444
      %v1446 = vpop.f32.mrb[0].mxu0
      %v1447 = vadd.f32 %v1294, %v1446
      %v1448 = vpop.f32.mrb[0].mxu0
      %v1449 = vadd.f32 %v1296, %v1448
      %1450 = vmatprep.mubr.f32.mxu0 0.0
      %v1451 = vand.u32 %v241, 4294901760
      %1452 = vmatmul.mubr.f32.gmra.mrb[0].mxu0 %v1451
      %v1453 = vpop.f32.mrb[0].mxu0
      %v1454 = vadd.f32 %v1301, %v1453
      %v1455 = vpop.f32.mrb[0].mxu0
      %v1456 = vadd.f32 %v1303, %v1455
      %1457 = vmatprep.mubr.f32.mxu0 0.0
      %v1458 = vand.u32 %v242, 4294901760
      %1459 = vmatmul.mubr.f32.gmra.mrb[0].mxu0 %v1458
      %v1460 = vpop.f32.mrb[0].mxu0
      %v1461 = vadd.f32 %v1308, %v1460
      %v1462 = vpop.f32.mrb[0].mxu0
      %v1463 = vadd.f32 %v1310, %v1462
      %1464 = vmatprep.mubr.f32.mxu0 0.0
      %v1465 = vand.u32 %v243, 4294901760
      %1466 = vmatmul.mubr.f32.gmra.mrb[0].mxu0 %v1465
      %v1467 = vpop.f32.mrb[0].mxu0
      %v1468 = vadd.f32 %v1315, %v1467
      %v1469 = vpop.f32.mrb[0].mxu0
      %v1470 = vadd.f32 %v1317, %v1469
      %1471 = vmatprep.mubr.f32.mxu0 0.0
      %v1472 = vand.u32 %v244, 4294901760
      %1473 = vmatmul.mubr.f32.gmra.mrb[0].mxu0 %v1472
      %v1474 = vpop.f32.mrb[0].mxu0
      %v1475 = vadd.f32 %v1322, %v1474
      %v1476 = vpop.f32.mrb[0].mxu0
      %v1477 = vadd.f32 %v1324, %v1476
      %1478 = vmatprep.mubr.f32.mxu0 0.0
      %v1479 = vand.u32 %v245, 4294901760
      %1480 = vmatmul.mubr.f32.gmra.mrb[0].mxu0 %v1479
      %v1481 = vpop.f32.mrb[0].mxu0
      %v1482 = vadd.f32 %v1329, %v1481
      %v1483 = vpop.f32.mrb[0].mxu0
      %v1484 = vadd.f32 %v1331, %v1483
      %1485 = vmatprep.mubr.f32.mxu0 0.0
      %v1486 = vand.u32 %v246, 4294901760
      %1487 = vmatmul.mubr.f32.gmra.mrb[0].mxu0 %v1486
      %v1488 = vpop.f32.mrb[0].mxu0
      %v1489 = vadd.f32 %v1336, %v1488
      %v1490 = vpop.f32.mrb[0].mxu0
      %v1491 = vadd.f32 %v1338, %v1490
      %1492 = vdwg.mxu0
      %1493 = vmatprep.subr.mxu0 0.0
      %v1494 = vand.u32 %v249, 4294901760
      %1495 = vmatpush1.msra.mxu0 %v1494
      %1496 = vmatprep.subr.mxu0 0.0
      %v1497 = vand.u32 %v252, 4294901760
      %1498 = vmatpush1.msra.mxu0 %v1497
      %1499 = vmatprep.subr.mxu0 0.0
      %v1500 = vand.u32 %v255, 4294901760
      %1501 = vmatpush1.msra.mxu0 %v1500
      %1502 = vmatprep.subr.mxu0 0.0
      %v1503 = vand.u32 %v258, 4294901760
      %1504 = vmatpush1.msra.mxu0 %v1503
      %1505 = vmatprep.subr.mxu0 0.0
      %v1506 = vand.u32 %v261, 4294901760
      %1507 = vmatpush1.msra.mxu0 %v1506
      %1508 = vmatprep.subr.mxu0 0.0
      %v1509 = vand.u32 %v264, 4294901760
      %1510 = vmatpush1.msra.mxu0 %v1509
      %1511 = vmatprep.subr.mxu0 0.0
      %v1512 = vand.u32 %v267, 4294901760
      %1513 = vmatpush1.msra.mxu0 %v1512
      %1514 = vmatprep.subr.mxu0 0.0
      %v1515 = vand.u32 %v270, 4294901760
      %1516 = vmatpush1.msra.mxu0 %v1515
      %1517 = vmatprep.subr.mxu0 0.0
      %v1518 = vand.u32 %v273, 4294901760
      %1519 = vmatpush1.msra.mxu0 %v1518
      %1520 = vmatprep.subr.mxu0 0.0
      %v1521 = vand.u32 %v276, 4294901760
      %1522 = vmatpush1.msra.mxu0 %v1521
      %1523 = vmatprep.subr.mxu0 0.0
      %v1524 = vand.u32 %v279, 4294901760
      %1525 = vmatpush1.msra.mxu0 %v1524
      %1526 = vmatprep.subr.mxu0 0.0
      %v1527 = vand.u32 %v282, 4294901760
      %1528 = vmatpush1.msra.mxu0 %v1527
      %1529 = vmatprep.subr.mxu0 0.0
      %v1530 = vand.u32 %v285, 4294901760
      %1531 = vmatpush1.msra.mxu0 %v1530
      %1532 = vmatprep.subr.mxu0 0.0
      %v1533 = vand.u32 %v288, 4294901760
      %1534 = vmatpush1.msra.mxu0 %v1533
      %1535 = vmatprep.subr.mxu0 0.0
      %v1536 = vand.u32 %v291, 4294901760
      %1537 = vmatpush1.msra.mxu0 %v1536
      %1538 = vmatprep.subr.mxu0 0.0
      %v1539 = vand.u32 %v294, 4294901760
      %1540 = vmatpush1.msra.mxu0 %v1539
      %1541 = vmatprep.subr.mxu0 0.0
      %1542 = vmatpush1.msra.mxu0 0.0
      %1543 = vmatprep.subr.mxu0 0.0
      %1544 = vmatpush1.msra.mxu0 0.0
      %1545 = vmatprep.subr.mxu0 0.0
      %1546 = vmatpush1.msra.mxu0 0.0
      %1547 = vmatprep.subr.mxu0 0.0
      %1548 = vmatpush1.msra.mxu0 0.0
      %1549 = vmatprep.subr.mxu0 0.0
      %1550 = vmatpush1.msra.mxu0 0.0
      %1551 = vmatprep.subr.mxu0 0.0
      %1552 = vmatpush1.msra.mxu0 0.0
      %1553 = vmatprep.subr.mxu0 0.0
      %1554 = vmatpush1.msra.mxu0 0.0
      %1555 = vmatprep.subr.mxu0 0.0
      %1556 = vmatpush1.msra.mxu0 0.0
      %1557 = vmatprep.subr.mxu0 0.0
      %1558 = vmatpush1.msra.mxu0 0.0
      %1559 = vmatprep.subr.mxu0 0.0
      %1560 = vmatpush1.msra.mxu0 0.0
      %1561 = vmatprep.subr.mxu0 0.0
      %1562 = vmatpush1.msra.mxu0 0.0
      %1563 = vmatprep.subr.mxu0 0.0
      %1564 = vmatpush1.msra.mxu0 0.0
      %1565 = vmatprep.subr.mxu0 0.0
      %1566 = vmatpush1.msra.mxu0 0.0
      %1567 = vmatprep.subr.mxu0 0.0
      %1568 = vmatpush1.msra.mxu0 0.0
      %1569 = vmatprep.subr.mxu0 0.0
      %1570 = vmatpush1.msra.mxu0 0.0
      %1571 = vmatprep.subr.mxu0 0.0
      %1572 = vmatpush1.msra.mxu0 0.0
      %1573 = vmatprep.mubr.f32.mxu0 0.0
      %v1574 = vand.u32 %v239, 4294901760
      %v1575 = vsub.f32 %v239, %v1574
      %v1576 = vand.u32 %v1575, 4294901760
      %v1577 = vsub.f32 %v1575, %v1576
      %v1578 = vand.u32 %v1577, 4294901760
      %1579 = vmatmul.mubr.f32.gmra.mrb[0].mxu0 %v1578
      %v1580 = vpop.f32.mrb[0].mxu0
      %v1581 = vadd.f32 0.0, %v1580
      %v1582 = vpop.f32.mrb[0].mxu0
      %1583 = vmatprep.mubr.f32.mxu0 0.0
      %v1584 = vand.u32 %v240, 4294901760
      %v1585 = vsub.f32 %v240, %v1584
      %v1586 = vand.u32 %v1585, 4294901760
      %v1587 = vsub.f32 %v1585, %v1586
      %v1588 = vand.u32 %v1587, 4294901760
      %1589 = vmatmul.mubr.f32.gmra.mrb[0].mxu0 %v1588
      %v1590 = vpop.f32.mrb[0].mxu0
      %v1591 = vadd.f32 0.0, %v1590
      %v1592 = vpop.f32.mrb[0].mxu0
      %1593 = vmatprep.mubr.f32.mxu0 0.0
      %v1594 = vand.u32 %v241, 4294901760
      %v1595 = vsub.f32 %v241, %v1594
      %v1596 = vand.u32 %v1595, 4294901760
      %v1597 = vsub.f32 %v1595, %v1596
      %v1598 = vand.u32 %v1597, 4294901760
      %1599 = vmatmul.mubr.f32.gmra.mrb[0].mxu0 %v1598
      %v1600 = vpop.f32.mrb[0].mxu0
      %v1601 = vadd.f32 0.0, %v1600
      %v1602 = vpop.f32.mrb[0].mxu0
      %1603 = vmatprep.mubr.f32.mxu0 0.0
      %v1604 = vand.u32 %v242, 4294901760
      %v1605 = vsub.f32 %v242, %v1604
      %v1606 = vand.u32 %v1605, 4294901760
      %v1607 = vsub.f32 %v1605, %v1606
      %v1608 = vand.u32 %v1607, 4294901760
      %1609 = vmatmul.mubr.f32.gmra.mrb[0].mxu0 %v1608
      %v1610 = vpop.f32.mrb[0].mxu0
      %v1611 = vadd.f32 0.0, %v1610
      %v1612 = vpop.f32.mrb[0].mxu0
      %1613 = vmatprep.mubr.f32.mxu0 0.0
      %v1614 = vand.u32 %v243, 4294901760
      %v1615 = vsub.f32 %v243, %v1614
      %v1616 = vand.u32 %v1615, 4294901760
      %v1617 = vsub.f32 %v1615, %v1616
      %v1618 = vand.u32 %v1617, 4294901760
      %1619 = vmatmul.mubr.f32.gmra.mrb[0].mxu0 %v1618
      %v1620 = vpop.f32.mrb[0].mxu0
      %v1621 = vadd.f32 0.0, %v1620
      %v1622 = vpop.f32.mrb[0].mxu0
      %1623 = vmatprep.mubr.f32.mxu0 0.0
      %v1624 = vand.u32 %v244, 4294901760
      %v1625 = vsub.f32 %v244, %v1624
      %v1626 = vand.u32 %v1625, 4294901760
      %v1627 = vsub.f32 %v1625, %v1626
      %v1628 = vand.u32 %v1627, 4294901760
      %1629 = vmatmul.mubr.f32.gmra.mrb[0].mxu0 %v1628
      %v1630 = vpop.f32.mrb[0].mxu0
      %v1631 = vadd.f32 0.0, %v1630
      %v1632 = vpop.f32.mrb[0].mxu0
      %1633 = vmatprep.mubr.f32.mxu0 0.0
      %v1634 = vand.u32 %v245, 4294901760
      %v1635 = vsub.f32 %v245, %v1634
      %v1636 = vand.u32 %v1635, 4294901760
      %v1637 = vsub.f32 %v1635, %v1636
      %v1638 = vand.u32 %v1637, 4294901760
      %1639 = vmatmul.mubr.f32.gmra.mrb[0].mxu0 %v1638
      %v1640 = vpop.f32.mrb[0].mxu0
      %v1641 = vadd.f32 0.0, %v1640
      %v1642 = vpop.f32.mrb[0].mxu0
      %1643 = vmatprep.mubr.f32.mxu0 0.0
      %v1644 = vand.u32 %v246, 4294901760
      %v1645 = vsub.f32 %v246, %v1644
      %v1646 = vand.u32 %v1645, 4294901760
      %v1647 = vsub.f32 %v1645, %v1646
      %v1648 = vand.u32 %v1647, 4294901760
      %1649 = vmatmul.mubr.f32.gmra.mrb[0].mxu0 %v1648
      %v1650 = vpop.f32.mrb[0].mxu0
      %v1651 = vadd.f32 0.0, %v1650
      %v1652 = vpop.f32.mrb[0].mxu0
      %1653 = vdwg.mxu0
      %1654 = vmatprep.subr.mxu0 0.0
      %v1655 = vand.u32 %v249, 4294901760
      %v1656 = vsub.f32 %v249, %v1655
      %v1657 = vand.u32 %v1656, 4294901760
      %v1658 = vsub.f32 %v1656, %v1657
      %v1659 = vand.u32 %v1658, 4294901760
      %1660 = vmatpush1.msra.mxu0 %v1659
      %1661 = vmatprep.subr.mxu0 0.0
      %v1662 = vand.u32 %v252, 4294901760
      %v1663 = vsub.f32 %v252, %v1662
      %v1664 = vand.u32 %v1663, 4294901760
      %v1665 = vsub.f32 %v1663, %v1664
      %v1666 = vand.u32 %v1665, 4294901760
      %1667 = vmatpush1.msra.mxu0 %v1666
      %1668 = vmatprep.subr.mxu0 0.0
      %v1669 = vand.u32 %v255, 4294901760
      %v1670 = vsub.f32 %v255, %v1669
      %v1671 = vand.u32 %v1670, 4294901760
      %v1672 = vsub.f32 %v1670, %v1671
      %v1673 = vand.u32 %v1672, 4294901760
      %1674 = vmatpush1.msra.mxu0 %v1673
      %1675 = vmatprep.subr.mxu0 0.0
      %v1676 = vand.u32 %v258, 4294901760
      %v1677 = vsub.f32 %v258, %v1676
      %v1678 = vand.u32 %v1677, 4294901760
      %v1679 = vsub.f32 %v1677, %v1678
      %v1680 = vand.u32 %v1679, 4294901760
      %1681 = vmatpush1.msra.mxu0 %v1680
      %1682 = vmatprep.subr.mxu0 0.0
      %v1683 = vand.u32 %v261, 4294901760
      %v1684 = vsub.f32 %v261, %v1683
      %v1685 = vand.u32 %v1684, 4294901760
      %v1686 = vsub.f32 %v1684, %v1685
      %v1687 = vand.u32 %v1686, 4294901760
      %1688 = vmatpush1.msra.mxu0 %v1687
      %1689 = vmatprep.subr.mxu0 0.0
      %v1690 = vand.u32 %v264, 4294901760
      %v1691 = vsub.f32 %v264, %v1690
      %v1692 = vand.u32 %v1691, 4294901760
      %v1693 = vsub.f32 %v1691, %v1692
      %v1694 = vand.u32 %v1693, 4294901760
      %1695 = vmatpush1.msra.mxu0 %v1694
      %1696 = vmatprep.subr.mxu0 0.0
      %v1697 = vand.u32 %v267, 4294901760
      %v1698 = vsub.f32 %v267, %v1697
      %v1699 = vand.u32 %v1698, 4294901760
      %v1700 = vsub.f32 %v1698, %v1699
      %v1701 = vand.u32 %v1700, 4294901760
      %1702 = vmatpush1.msra.mxu0 %v1701
      %1703 = vmatprep.subr.mxu0 0.0
      %v1704 = vand.u32 %v270, 4294901760
      %v1705 = vsub.f32 %v270, %v1704
      %v1706 = vand.u32 %v1705, 4294901760
      %v1707 = vsub.f32 %v1705, %v1706
      %v1708 = vand.u32 %v1707, 4294901760
      %1709 = vmatpush1.msra.mxu0 %v1708
      %1710 = vmatprep.subr.mxu0 0.0
      %v1711 = vand.u32 %v273, 4294901760
      %v1712 = vsub.f32 %v273, %v1711
      %v1713 = vand.u32 %v1712, 4294901760
      %v1714 = vsub.f32 %v1712, %v1713
      %v1715 = vand.u32 %v1714, 4294901760
      %1716 = vmatpush1.msra.mxu0 %v1715
      %1717 = vmatprep.subr.mxu0 0.0
      %v1718 = vand.u32 %v276, 4294901760
      %v1719 = vsub.f32 %v276, %v1718
      %v1720 = vand.u32 %v1719, 4294901760
      %v1721 = vsub.f32 %v1719, %v1720
      %v1722 = vand.u32 %v1721, 4294901760
      %1723 = vmatpush1.msra.mxu0 %v1722
      %1724 = vmatprep.subr.mxu0 0.0
      %v1725 = vand.u32 %v279, 4294901760
      %v1726 = vsub.f32 %v279, %v1725
      %v1727 = vand.u32 %v1726, 4294901760
      %v1728 = vsub.f32 %v1726, %v1727
      %v1729 = vand.u32 %v1728, 4294901760
      %1730 = vmatpush1.msra.mxu0 %v1729
      %1731 = vmatprep.subr.mxu0 0.0
      %v1732 = vand.u32 %v282, 4294901760
      %v1733 = vsub.f32 %v282, %v1732
      %v1734 = vand.u32 %v1733, 4294901760
      %v1735 = vsub.f32 %v1733, %v1734
      %v1736 = vand.u32 %v1735, 4294901760
      %1737 = vmatpush1.msra.mxu0 %v1736
      %1738 = vmatprep.subr.mxu0 0.0
      %v1739 = vand.u32 %v285, 4294901760
      %v1740 = vsub.f32 %v285, %v1739
      %v1741 = vand.u32 %v1740, 4294901760
      %v1742 = vsub.f32 %v1740, %v1741
      %v1743 = vand.u32 %v1742, 4294901760
      %1744 = vmatpush1.msra.mxu0 %v1743
      %1745 = vmatprep.subr.mxu0 0.0
      %v1746 = vand.u32 %v288, 4294901760
      %v1747 = vsub.f32 %v288, %v1746
      %v1748 = vand.u32 %v1747, 4294901760
      %v1749 = vsub.f32 %v1747, %v1748
      %v1750 = vand.u32 %v1749, 4294901760
      %1751 = vmatpush1.msra.mxu0 %v1750
      %1752 = vmatprep.subr.mxu0 0.0
      %v1753 = vand.u32 %v291, 4294901760
      %v1754 = vsub.f32 %v291, %v1753
      %v1755 = vand.u32 %v1754, 4294901760
      %v1756 = vsub.f32 %v1754, %v1755
      %v1757 = vand.u32 %v1756, 4294901760
      %1758 = vmatpush1.msra.mxu0 %v1757
      %1759 = vmatprep.subr.mxu0 0.0
      %v1760 = vand.u32 %v294, 4294901760
      %v1761 = vsub.f32 %v294, %v1760
      %v1762 = vand.u32 %v1761, 4294901760
      %v1763 = vsub.f32 %v1761, %v1762
      %v1764 = vand.u32 %v1763, 4294901760
      %1765 = vmatpush1.msra.mxu0 %v1764
      %1766 = vmatprep.subr.mxu0 0.0
      %1767 = vmatpush1.msra.mxu0 0.0
      %1768 = vmatprep.subr.mxu0 0.0
      %1769 = vmatpush1.msra.mxu0 0.0
      %1770 = vmatprep.subr.mxu0 0.0
      %1771 = vmatpush1.msra.mxu0 0.0
      %1772 = vmatprep.subr.mxu0 0.0
      %1773 = vmatpush1.msra.mxu0 0.0
      %1774 = vmatprep.subr.mxu0 0.0
      %1775 = vmatpush1.msra.mxu0 0.0
      %1776 = vmatprep.subr.mxu0 0.0
      %1777 = vmatpush1.msra.mxu0 0.0
      %1778 = vmatprep.subr.mxu0 0.0
      %1779 = vmatpush1.msra.mxu0 0.0
      %1780 = vmatprep.subr.mxu0 0.0
      %1781 = vmatpush1.msra.mxu0 0.0
      %1782 = vmatprep.subr.mxu0 0.0
      %1783 = vmatpush1.msra.mxu0 0.0
      %1784 = vmatprep.subr.mxu0 0.0
      %1785 = vmatpush1.msra.mxu0 0.0
      %1786 = vmatprep.subr.mxu0 0.0
      %1787 = vmatpush1.msra.mxu0 0.0
      %1788 = vmatprep.subr.mxu0 0.0
      %1789 = vmatpush1.msra.mxu0 0.0
      %1790 = vmatprep.subr.mxu0 0.0
      %1791 = vmatpush1.msra.mxu0 0.0
      %1792 = vmatprep.subr.mxu0 0.0
      %1793 = vmatpush1.msra.mxu0 0.0
      %1794 = vmatprep.subr.mxu0 0.0
      %1795 = vmatpush1.msra.mxu0 0.0
      %1796 = vmatprep.subr.mxu0 0.0
      %1797 = vmatpush1.msra.mxu0 0.0
      %1798 = vmatprep.mubr.f32.mxu0 0.0
      %v1799 = vand.u32 %v239, 4294901760
      %1800 = vmatmul.mubr.f32.gmra.mrb[0].mxu0 %v1799
      %v1801 = vpop.f32.mrb[0].mxu0
      %v1802 = vadd.f32 %v1581, %v1801
      %v1803 = vpop.f32.mrb[0].mxu0
      %1804 = vmatprep.mubr.f32.mxu0 0.0
      %v1805 = vand.u32 %v240, 4294901760
      %1806 = vmatmul.mubr.f32.gmra.mrb[0].mxu0 %v1805
      %v1807 = vpop.f32.mrb[0].mxu0
      %v1808 = vadd.f32 %v1591, %v1807
      %v1809 = vpop.f32.mrb[0].mxu0
      %1810 = vmatprep.mubr.f32.mxu0 0.0
      %v1811 = vand.u32 %v241, 4294901760
      %1812 = vmatmul.mubr.f32.gmra.mrb[0].mxu0 %v1811
      %v1813 = vpop.f32.mrb[0].mxu0
      %v1814 = vadd.f32 %v1601, %v1813
      %v1815 = vpop.f32.mrb[0].mxu0
      %1816 = vmatprep.mubr.f32.mxu0 0.0
      %v1817 = vand.u32 %v242, 4294901760
      %1818 = vmatmul.mubr.f32.gmra.mrb[0].mxu0 %v1817
      %v1819 = vpop.f32.mrb[0].mxu0
      %v1820 = vadd.f32 %v1611, %v1819
      %v1821 = vpop.f32.mrb[0].mxu0
      %1822 = vmatprep.mubr.f32.mxu0 0.0
      %v1823 = vand.u32 %v243, 4294901760
      %1824 = vmatmul.mubr.f32.gmra.mrb[0].mxu0 %v1823
      %v1825 = vpop.f32.mrb[0].mxu0
      %v1826 = vadd.f32 %v1621, %v1825
      %v1827 = vpop.f32.mrb[0].mxu0
      %1828 = vmatprep.mubr.f32.mxu0 0.0
      %v1829 = vand.u32 %v244, 4294901760
      %1830 = vmatmul.mubr.f32.gmra.mrb[0].mxu0 %v1829
      %v1831 = vpop.f32.mrb[0].mxu0
      %v1832 = vadd.f32 %v1631, %v1831
      %v1833 = vpop.f32.mrb[0].mxu0
      %1834 = vmatprep.mubr.f32.mxu0 0.0
      %v1835 = vand.u32 %v245, 4294901760
      %1836 = vmatmul.mubr.f32.gmra.mrb[0].mxu0 %v1835
      %v1837 = vpop.f32.mrb[0].mxu0
      %v1838 = vadd.f32 %v1641, %v1837
      %v1839 = vpop.f32.mrb[0].mxu0
      %1840 = vmatprep.mubr.f32.mxu0 0.0
      %v1841 = vand.u32 %v246, 4294901760
      %1842 = vmatmul.mubr.f32.gmra.mrb[0].mxu0 %v1841
      %v1843 = vpop.f32.mrb[0].mxu0
      %v1844 = vadd.f32 %v1651, %v1843
      %v1845 = vpop.f32.mrb[0].mxu0
      %1846 = vdwg.mxu0
      %1847 = vmatprep.subr.mxu0 0.0
      %v1848 = vand.u32 %v249, 4294901760
      %v1849 = vsub.f32 %v249, %v1848
      %1850 = vmatpush1.msra.mxu0 %v1849
      %1851 = vmatprep.subr.mxu0 0.0
      %v1852 = vand.u32 %v252, 4294901760
      %v1853 = vsub.f32 %v252, %v1852
      %1854 = vmatpush1.msra.mxu0 %v1853
      %1855 = vmatprep.subr.mxu0 0.0
      %v1856 = vand.u32 %v255, 4294901760
      %v1857 = vsub.f32 %v255, %v1856
      %1858 = vmatpush1.msra.mxu0 %v1857
      %1859 = vmatprep.subr.mxu0 0.0
      %v1860 = vand.u32 %v258, 4294901760
      %v1861 = vsub.f32 %v258, %v1860
      %1862 = vmatpush1.msra.mxu0 %v1861
      %1863 = vmatprep.subr.mxu0 0.0
      %v1864 = vand.u32 %v261, 4294901760
      %v1865 = vsub.f32 %v261, %v1864
      %1866 = vmatpush1.msra.mxu0 %v1865
      %1867 = vmatprep.subr.mxu0 0.0
      %v1868 = vand.u32 %v264, 4294901760
      %v1869 = vsub.f32 %v264, %v1868
      %1870 = vmatpush1.msra.mxu0 %v1869
      %1871 = vmatprep.subr.mxu0 0.0
      %v1872 = vand.u32 %v267, 4294901760
      %v1873 = vsub.f32 %v267, %v1872
      %1874 = vmatpush1.msra.mxu0 %v1873
      %1875 = vmatprep.subr.mxu0 0.0
      %v1876 = vand.u32 %v270, 4294901760
      %v1877 = vsub.f32 %v270, %v1876
      %1878 = vmatpush1.msra.mxu0 %v1877
      %1879 = vmatprep.subr.mxu0 0.0
      %v1880 = vand.u32 %v273, 4294901760
      %v1881 = vsub.f32 %v273, %v1880
      %1882 = vmatpush1.msra.mxu0 %v1881
      %1883 = vmatprep.subr.mxu0 0.0
      %v1884 = vand.u32 %v276, 4294901760
      %v1885 = vsub.f32 %v276, %v1884
      %1886 = vmatpush1.msra.mxu0 %v1885
      %1887 = vmatprep.subr.mxu0 0.0
      %v1888 = vand.u32 %v279, 4294901760
      %v1889 = vsub.f32 %v279, %v1888
      %1890 = vmatpush1.msra.mxu0 %v1889
      %1891 = vmatprep.subr.mxu0 0.0
      %v1892 = vand.u32 %v282, 4294901760
      %v1893 = vsub.f32 %v282, %v1892
      %1894 = vmatpush1.msra.mxu0 %v1893
      %1895 = vmatprep.subr.mxu0 0.0
      %v1896 = vand.u32 %v285, 4294901760
      %v1897 = vsub.f32 %v285, %v1896
      %1898 = vmatpush1.msra.mxu0 %v1897
      %1899 = vmatprep.subr.mxu0 0.0
      %v1900 = vand.u32 %v288, 4294901760
      %v1901 = vsub.f32 %v288, %v1900
      %1902 = vmatpush1.msra.mxu0 %v1901
      %1903 = vmatprep.subr.mxu0 0.0
      %v1904 = vand.u32 %v291, 4294901760
      %v1905 = vsub.f32 %v291, %v1904
      %1906 = vmatpush1.msra.mxu0 %v1905
      %1907 = vmatprep.subr.mxu0 0.0
      %v1908 = vand.u32 %v294, 4294901760
      %v1909 = vsub.f32 %v294, %v1908
      %1910 = vmatpush1.msra.mxu0 %v1909
      %1911 = vmatprep.subr.mxu0 0.0
      %1912 = vmatpush1.msra.mxu0 0.0
      %1913 = vmatprep.subr.mxu0 0.0
      %1914 = vmatpush1.msra.mxu0 0.0
      %1915 = vmatprep.subr.mxu0 0.0
      %1916 = vmatpush1.msra.mxu0 0.0
      %1917 = vmatprep.subr.mxu0 0.0
      %1918 = vmatpush1.msra.mxu0 0.0
      %1919 = vmatprep.subr.mxu0 0.0
      %1920 = vmatpush1.msra.mxu0 0.0
      %1921 = vmatprep.subr.mxu0 0.0
      %1922 = vmatpush1.msra.mxu0 0.0
      %1923 = vmatprep.subr.mxu0 0.0
      %1924 = vmatpush1.msra.mxu0 0.0
      %1925 = vmatprep.subr.mxu0 0.0
      %1926 = vmatpush1.msra.mxu0 0.0
      %1927 = vmatprep.subr.mxu0 0.0
      %1928 = vmatpush1.msra.mxu0 0.0
      %1929 = vmatprep.subr.mxu0 0.0
      %1930 = vmatpush1.msra.mxu0 0.0
      %1931 = vmatprep.subr.mxu0 0.0
      %1932 = vmatpush1.msra.mxu0 0.0
      %1933 = vmatprep.subr.mxu0 0.0
      %1934 = vmatpush1.msra.mxu0 0.0
      %1935 = vmatprep.subr.mxu0 0.0
      %1936 = vmatpush1.msra.mxu0 0.0
      %1937 = vmatprep.subr.mxu0 0.0
      %1938 = vmatpush1.msra.mxu0 0.0
      %1939 = vmatprep.subr.mxu0 0.0
      %1940 = vmatpush1.msra.mxu0 0.0
      %1941 = vmatprep.subr.mxu0 0.0
      %1942 = vmatpush1.msra.mxu0 0.0
      %1943 = vmatprep.mubr.f32.mxu0 0.0
      %v1944 = vand.u32 %v239, 4294901760
      %v1945 = vsub.f32 %v239, %v1944
      %1946 = vmatmul.mubr.f32.gmra.mrb[0].mxu0 %v1945
      %v1947 = vpop.f32.mrb[0].mxu0
      %v1948 = vadd.f32 %v1802, %v1947
      %v1949 = vpop.f32.mrb[0].mxu0
      %1950 = vmatprep.mubr.f32.mxu0 0.0
      %v1951 = vand.u32 %v240, 4294901760
      %v1952 = vsub.f32 %v240, %v1951
      %1953 = vmatmul.mubr.f32.gmra.mrb[0].mxu0 %v1952
      %v1954 = vpop.f32.mrb[0].mxu0
      %v1955 = vadd.f32 %v1808, %v1954
      %v1956 = vpop.f32.mrb[0].mxu0
      %1957 = vmatprep.mubr.f32.mxu0 0.0
      %v1958 = vand.u32 %v241, 4294901760
      %v1959 = vsub.f32 %v241, %v1958
      %1960 = vmatmul.mubr.f32.gmra.mrb[0].mxu0 %v1959
      %v1961 = vpop.f32.mrb[0].mxu0
      %v1962 = vadd.f32 %v1814, %v1961
      %v1963 = vpop.f32.mrb[0].mxu0
      %1964 = vmatprep.mubr.f32.mxu0 0.0
      %v1965 = vand.u32 %v242, 4294901760
      %v1966 = vsub.f32 %v242, %v1965
      %1967 = vmatmul.mubr.f32.gmra.mrb[0].mxu0 %v1966
      %v1968 = vpop.f32.mrb[0].mxu0
      %v1969 = vadd.f32 %v1820, %v1968
      %v1970 = vpop.f32.mrb[0].mxu0
      %1971 = vmatprep.mubr.f32.mxu0 0.0
      %v1972 = vand.u32 %v243, 4294901760
      %v1973 = vsub.f32 %v243, %v1972
      %1974 = vmatmul.mubr.f32.gmra.mrb[0].mxu0 %v1973
      %v1975 = vpop.f32.mrb[0].mxu0
      %v1976 = vadd.f32 %v1826, %v1975
      %v1977 = vpop.f32.mrb[0].mxu0
      %1978 = vmatprep.mubr.f32.mxu0 0.0
      %v1979 = vand.u32 %v244, 4294901760
      %v1980 = vsub.f32 %v244, %v1979
      %1981 = vmatmul.mubr.f32.gmra.mrb[0].mxu0 %v1980
      %v1982 = vpop.f32.mrb[0].mxu0
      %v1983 = vadd.f32 %v1832, %v1982
      %v1984 = vpop.f32.mrb[0].mxu0
      %1985 = vmatprep.mubr.f32.mxu0 0.0
      %v1986 = vand.u32 %v245, 4294901760
      %v1987 = vsub.f32 %v245, %v1986
      %1988 = vmatmul.mubr.f32.gmra.mrb[0].mxu0 %v1987
      %v1989 = vpop.f32.mrb[0].mxu0
      %v1990 = vadd.f32 %v1838, %v1989
      %v1991 = vpop.f32.mrb[0].mxu0
      %1992 = vmatprep.mubr.f32.mxu0 0.0
      %v1993 = vand.u32 %v246, 4294901760
      %v1994 = vsub.f32 %v246, %v1993
      %1995 = vmatmul.mubr.f32.gmra.mrb[0].mxu0 %v1994
      %v1996 = vpop.f32.mrb[0].mxu0
      %v1997 = vadd.f32 %v1844, %v1996
      %v1998 = vpop.f32.mrb[0].mxu0
      %1999 = vdwg.mxu0
      %2000 = vmatprep.subr.mxu0 0.0
      %v2001 = vand.u32 %v249, 4294901760
      %2002 = vmatpush1.msra.mxu0 %v2001
      %2003 = vmatprep.subr.mxu0 0.0
      %v2004 = vand.u32 %v252, 4294901760
      %2005 = vmatpush1.msra.mxu0 %v2004
      %2006 = vmatprep.subr.mxu0 0.0
      %v2007 = vand.u32 %v255, 4294901760
      %2008 = vmatpush1.msra.mxu0 %v2007
      %2009 = vmatprep.subr.mxu0 0.0
      %v2010 = vand.u32 %v258, 4294901760
      %2011 = vmatpush1.msra.mxu0 %v2010
      %2012 = vmatprep.subr.mxu0 0.0
      %v2013 = vand.u32 %v261, 4294901760
      %2014 = vmatpush1.msra.mxu0 %v2013
      %2015 = vmatprep.subr.mxu0 0.0
      %v2016 = vand.u32 %v264, 4294901760
      %2017 = vmatpush1.msra.mxu0 %v2016
      %2018 = vmatprep.subr.mxu0 0.0
      %v2019 = vand.u32 %v267, 4294901760
      %2020 = vmatpush1.msra.mxu0 %v2019
      %2021 = vmatprep.subr.mxu0 0.0
      %v2022 = vand.u32 %v270, 4294901760
      %2023 = vmatpush1.msra.mxu0 %v2022
      %2024 = vmatprep.subr.mxu0 0.0
      %v2025 = vand.u32 %v273, 4294901760
      %2026 = vmatpush1.msra.mxu0 %v2025
      %2027 = vmatprep.subr.mxu0 0.0
      %v2028 = vand.u32 %v276, 4294901760
      %2029 = vmatpush1.msra.mxu0 %v2028
      %2030 = vmatprep.subr.mxu0 0.0
      %v2031 = vand.u32 %v279, 4294901760
      %2032 = vmatpush1.msra.mxu0 %v2031
      %2033 = vmatprep.subr.mxu0 0.0
      %v2034 = vand.u32 %v282, 4294901760
      %2035 = vmatpush1.msra.mxu0 %v2034
      %2036 = vmatprep.subr.mxu0 0.0
      %v2037 = vand.u32 %v285, 4294901760
      %2038 = vmatpush1.msra.mxu0 %v2037
      %2039 = vmatprep.subr.mxu0 0.0
      %v2040 = vand.u32 %v288, 4294901760
      %2041 = vmatpush1.msra.mxu0 %v2040
      %2042 = vmatprep.subr.mxu0 0.0
      %v2043 = vand.u32 %v291, 4294901760
      %2044 = vmatpush1.msra.mxu0 %v2043
      %2045 = vmatprep.subr.mxu0 0.0
      %v2046 = vand.u32 %v294, 4294901760
      %2047 = vmatpush1.msra.mxu0 %v2046
      %2048 = vmatprep.subr.mxu0 0.0
      %2049 = vmatpush1.msra.mxu0 0.0
      %2050 = vmatprep.subr.mxu0 0.0
      %2051 = vmatpush1.msra.mxu0 0.0
      %2052 = vmatprep.subr.mxu0 0.0
      %2053 = vmatpush1.msra.mxu0 0.0
      %2054 = vmatprep.subr.mxu0 0.0
      %2055 = vmatpush1.msra.mxu0 0.0
      %2056 = vmatprep.subr.mxu0 0.0
      %2057 = vmatpush1.msra.mxu0 0.0
      %2058 = vmatprep.subr.mxu0 0.0
      %2059 = vmatpush1.msra.mxu0 0.0
      %2060 = vmatprep.subr.mxu0 0.0
      %2061 = vmatpush1.msra.mxu0 0.0
      %2062 = vmatprep.subr.mxu0 0.0
      %2063 = vmatpush1.msra.mxu0 0.0
      %2064 = vmatprep.subr.mxu0 0.0
      %2065 = vmatpush1.msra.mxu0 0.0
      %2066 = vmatprep.subr.mxu0 0.0
      %2067 = vmatpush1.msra.mxu0 0.0
      %2068 = vmatprep.subr.mxu0 0.0
      %2069 = vmatpush1.msra.mxu0 0.0
      %2070 = vmatprep.subr.mxu0 0.0
      %2071 = vmatpush1.msra.mxu0 0.0
      %2072 = vmatprep.subr.mxu0 0.0
      %2073 = vmatpush1.msra.mxu0 0.0
      %2074 = vmatprep.subr.mxu0 0.0
      %2075 = vmatpush1.msra.mxu0 0.0
      %2076 = vmatprep.subr.mxu0 0.0
      %2077 = vmatpush1.msra.mxu0 0.0
      %2078 = vmatprep.subr.mxu0 0.0
      %2079 = vmatpush1.msra.mxu0 0.0
      %2080 = vmatprep.mubr.f32.mxu0 0.0
      %v2081 = vand.u32 %v239, 4294901760
      %v2082 = vsub.f32 %v239, %v2081
      %v2083 = vand.u32 %v2082, 4294901760
      %2084 = vmatmul.mubr.f32.gmra.mrb[0].mxu0 %v2083
      %v2085 = vpop.f32.mrb[0].mxu0
      %v2086 = vadd.f32 %v1948, %v2085
      %v2087 = vpop.f32.mrb[0].mxu0
      %2088 = vmatprep.mubr.f32.mxu0 0.0
      %v2089 = vand.u32 %v240, 4294901760
      %v2090 = vsub.f32 %v240, %v2089
      %v2091 = vand.u32 %v2090, 4294901760
      %2092 = vmatmul.mubr.f32.gmra.mrb[0].mxu0 %v2091
      %v2093 = vpop.f32.mrb[0].mxu0
      %v2094 = vadd.f32 %v1955, %v2093
      %v2095 = vpop.f32.mrb[0].mxu0
      %2096 = vmatprep.mubr.f32.mxu0 0.0
      %v2097 = vand.u32 %v241, 4294901760
      %v2098 = vsub.f32 %v241, %v2097
      %v2099 = vand.u32 %v2098, 4294901760
      %2100 = vmatmul.mubr.f32.gmra.mrb[0].mxu0 %v2099
      %v2101 = vpop.f32.mrb[0].mxu0
      %v2102 = vadd.f32 %v1962, %v2101
      %v2103 = vpop.f32.mrb[0].mxu0
      %2104 = vmatprep.mubr.f32.mxu0 0.0
      %v2105 = vand.u32 %v242, 4294901760
      %v2106 = vsub.f32 %v242, %v2105
      %v2107 = vand.u32 %v2106, 4294901760
      %2108 = vmatmul.mubr.f32.gmra.mrb[0].mxu0 %v2107
      %v2109 = vpop.f32.mrb[0].mxu0
      %v2110 = vadd.f32 %v1969, %v2109
      %v2111 = vpop.f32.mrb[0].mxu0
      %2112 = vmatprep.mubr.f32.mxu0 0.0
      %v2113 = vand.u32 %v243, 4294901760
      %v2114 = vsub.f32 %v243, %v2113
      %v2115 = vand.u32 %v2114, 4294901760
      %2116 = vmatmul.mubr.f32.gmra.mrb[0].mxu0 %v2115
      %v2117 = vpop.f32.mrb[0].mxu0
      %v2118 = vadd.f32 %v1976, %v2117
      %v2119 = vpop.f32.mrb[0].mxu0
      %2120 = vmatprep.mubr.f32.mxu0 0.0
      %v2121 = vand.u32 %v244, 4294901760
      %v2122 = vsub.f32 %v244, %v2121
      %v2123 = vand.u32 %v2122, 4294901760
      %2124 = vmatmul.mubr.f32.gmra.mrb[0].mxu0 %v2123
      %v2125 = vpop.f32.mrb[0].mxu0
      %v2126 = vadd.f32 %v1983, %v2125
      %v2127 = vpop.f32.mrb[0].mxu0
      %2128 = vmatprep.mubr.f32.mxu0 0.0
      %v2129 = vand.u32 %v245, 4294901760
      %v2130 = vsub.f32 %v245, %v2129
      %v2131 = vand.u32 %v2130, 4294901760
      %2132 = vmatmul.mubr.f32.gmra.mrb[0].mxu0 %v2131
      %v2133 = vpop.f32.mrb[0].mxu0
      %v2134 = vadd.f32 %v1990, %v2133
      %v2135 = vpop.f32.mrb[0].mxu0
      %2136 = vmatprep.mubr.f32.mxu0 0.0
      %v2137 = vand.u32 %v246, 4294901760
      %v2138 = vsub.f32 %v246, %v2137
      %v2139 = vand.u32 %v2138, 4294901760
      %2140 = vmatmul.mubr.f32.gmra.mrb[0].mxu0 %v2139
      %v2141 = vpop.f32.mrb[0].mxu0
      %v2142 = vadd.f32 %v1997, %v2141
      %v2143 = vpop.f32.mrb[0].mxu0
      %2144 = vdwg.mxu0
      %2145 = vmatprep.subr.mxu0 0.0
      %v2146 = vand.u32 %v249, 4294901760
      %v2147 = vsub.f32 %v249, %v2146
      %v2148 = vand.u32 %v2147, 4294901760
      %2149 = vmatpush1.msra.mxu0 %v2148
      %2150 = vmatprep.subr.mxu0 0.0
      %v2151 = vand.u32 %v252, 4294901760
      %v2152 = vsub.f32 %v252, %v2151
      %v2153 = vand.u32 %v2152, 4294901760
      %2154 = vmatpush1.msra.mxu0 %v2153
      %2155 = vmatprep.subr.mxu0 0.0
      %v2156 = vand.u32 %v255, 4294901760
      %v2157 = vsub.f32 %v255, %v2156
      %v2158 = vand.u32 %v2157, 4294901760
      %2159 = vmatpush1.msra.mxu0 %v2158
      %2160 = vmatprep.subr.mxu0 0.0
      %v2161 = vand.u32 %v258, 4294901760
      %v2162 = vsub.f32 %v258, %v2161
      %v2163 = vand.u32 %v2162, 4294901760
      %2164 = vmatpush1.msra.mxu0 %v2163
      %2165 = vmatprep.subr.mxu0 0.0
      %v2166 = vand.u32 %v261, 4294901760
      %v2167 = vsub.f32 %v261, %v2166
      %v2168 = vand.u32 %v2167, 4294901760
      %2169 = vmatpush1.msra.mxu0 %v2168
      %2170 = vmatprep.subr.mxu0 0.0
      %v2171 = vand.u32 %v264, 4294901760
      %v2172 = vsub.f32 %v264, %v2171
      %v2173 = vand.u32 %v2172, 4294901760
      %2174 = vmatpush1.msra.mxu0 %v2173
      %2175 = vmatprep.subr.mxu0 0.0
      %v2176 = vand.u32 %v267, 4294901760
      %v2177 = vsub.f32 %v267, %v2176
      %v2178 = vand.u32 %v2177, 4294901760
      %2179 = vmatpush1.msra.mxu0 %v2178
      %2180 = vmatprep.subr.mxu0 0.0
      %v2181 = vand.u32 %v270, 4294901760
      %v2182 = vsub.f32 %v270, %v2181
      %v2183 = vand.u32 %v2182, 4294901760
      %2184 = vmatpush1.msra.mxu0 %v2183
      %2185 = vmatprep.subr.mxu0 0.0
      %v2186 = vand.u32 %v273, 4294901760
      %v2187 = vsub.f32 %v273, %v2186
      %v2188 = vand.u32 %v2187, 4294901760
      %2189 = vmatpush1.msra.mxu0 %v2188
      %2190 = vmatprep.subr.mxu0 0.0
      %v2191 = vand.u32 %v276, 4294901760
      %v2192 = vsub.f32 %v276, %v2191
      %v2193 = vand.u32 %v2192, 4294901760
      %2194 = vmatpush1.msra.mxu0 %v2193
      %2195 = vmatprep.subr.mxu0 0.0
      %v2196 = vand.u32 %v279, 4294901760
      %v2197 = vsub.f32 %v279, %v2196
      %v2198 = vand.u32 %v2197, 4294901760
      %2199 = vmatpush1.msra.mxu0 %v2198
      %2200 = vmatprep.subr.mxu0 0.0
      %v2201 = vand.u32 %v282, 4294901760
      %v2202 = vsub.f32 %v282, %v2201
      %v2203 = vand.u32 %v2202, 4294901760
      %2204 = vmatpush1.msra.mxu0 %v2203
      %2205 = vmatprep.subr.mxu0 0.0
      %v2206 = vand.u32 %v285, 4294901760
      %v2207 = vsub.f32 %v285, %v2206
      %v2208 = vand.u32 %v2207, 4294901760
      %2209 = vmatpush1.msra.mxu0 %v2208
      %2210 = vmatprep.subr.mxu0 0.0
      %v2211 = vand.u32 %v288, 4294901760
      %v2212 = vsub.f32 %v288, %v2211
      %v2213 = vand.u32 %v2212, 4294901760
      %2214 = vmatpush1.msra.mxu0 %v2213
      %2215 = vmatprep.subr.mxu0 0.0
      %v2216 = vand.u32 %v291, 4294901760
      %v2217 = vsub.f32 %v291, %v2216
      %v2218 = vand.u32 %v2217, 4294901760
      %2219 = vmatpush1.msra.mxu0 %v2218
      %2220 = vmatprep.subr.mxu0 0.0
      %v2221 = vand.u32 %v294, 4294901760
      %v2222 = vsub.f32 %v294, %v2221
      %v2223 = vand.u32 %v2222, 4294901760
      %2224 = vmatpush1.msra.mxu0 %v2223
      %2225 = vmatprep.subr.mxu0 0.0
      %2226 = vmatpush1.msra.mxu0 0.0
      %2227 = vmatprep.subr.mxu0 0.0
      %2228 = vmatpush1.msra.mxu0 0.0
      %2229 = vmatprep.subr.mxu0 0.0
      %2230 = vmatpush1.msra.mxu0 0.0
      %2231 = vmatprep.subr.mxu0 0.0
      %2232 = vmatpush1.msra.mxu0 0.0
      %2233 = vmatprep.subr.mxu0 0.0
      %2234 = vmatpush1.msra.mxu0 0.0
      %2235 = vmatprep.subr.mxu0 0.0
      %2236 = vmatpush1.msra.mxu0 0.0
      %2237 = vmatprep.subr.mxu0 0.0
      %2238 = vmatpush1.msra.mxu0 0.0
      %2239 = vmatprep.subr.mxu0 0.0
      %2240 = vmatpush1.msra.mxu0 0.0
      %2241 = vmatprep.subr.mxu0 0.0
      %2242 = vmatpush1.msra.mxu0 0.0
      %2243 = vmatprep.subr.mxu0 0.0
      %2244 = vmatpush1.msra.mxu0 0.0
      %2245 = vmatprep.subr.mxu0 0.0
      %2246 = vmatpush1.msra.mxu0 0.0
      %2247 = vmatprep.subr.mxu0 0.0
      %2248 = vmatpush1.msra.mxu0 0.0
      %2249 = vmatprep.subr.mxu0 0.0
      %2250 = vmatpush1.msra.mxu0 0.0
      %2251 = vmatprep.subr.mxu0 0.0
      %2252 = vmatpush1.msra.mxu0 0.0
      %2253 = vmatprep.subr.mxu0 0.0
      %2254 = vmatpush1.msra.mxu0 0.0
      %2255 = vmatprep.subr.mxu0 0.0
      %2256 = vmatpush1.msra.mxu0 0.0
      %2257 = vmatprep.mubr.f32.mxu0 0.0
      %v2258 = vand.u32 %v239, 4294901760
      %2259 = vmatmul.mubr.f32.gmra.mrb[0].mxu0 %v2258
      %v2260 = vpop.f32.mrb[0].mxu0
      %v2261 = vadd.f32 %v2086, %v2260
      %v2262 = vpop.f32.mrb[0].mxu0
      %2263 = vmatprep.mubr.f32.mxu0 0.0
      %v2264 = vand.u32 %v240, 4294901760
      %2265 = vmatmul.mubr.f32.gmra.mrb[0].mxu0 %v2264
      %v2266 = vpop.f32.mrb[0].mxu0
      %v2267 = vadd.f32 %v2094, %v2266
      %v2268 = vpop.f32.mrb[0].mxu0
      %2269 = vmatprep.mubr.f32.mxu0 0.0
      %v2270 = vand.u32 %v241, 4294901760
      %2271 = vmatmul.mubr.f32.gmra.mrb[0].mxu0 %v2270
      %v2272 = vpop.f32.mrb[0].mxu0
      %v2273 = vadd.f32 %v2102, %v2272
      %v2274 = vpop.f32.mrb[0].mxu0
      %2275 = vmatprep.mubr.f32.mxu0 0.0
      %v2276 = vand.u32 %v242, 4294901760
      %2277 = vmatmul.mubr.f32.gmra.mrb[0].mxu0 %v2276
      %v2278 = vpop.f32.mrb[0].mxu0
      %v2279 = vadd.f32 %v2110, %v2278
      %v2280 = vpop.f32.mrb[0].mxu0
      %2281 = vmatprep.mubr.f32.mxu0 0.0
      %v2282 = vand.u32 %v243, 4294901760
      %2283 = vmatmul.mubr.f32.gmra.mrb[0].mxu0 %v2282
      %v2284 = vpop.f32.mrb[0].mxu0
      %v2285 = vadd.f32 %v2118, %v2284
      %v2286 = vpop.f32.mrb[0].mxu0
      %2287 = vmatprep.mubr.f32.mxu0 0.0
      %v2288 = vand.u32 %v244, 4294901760
      %2289 = vmatmul.mubr.f32.gmra.mrb[0].mxu0 %v2288
      %v2290 = vpop.f32.mrb[0].mxu0
      %v2291 = vadd.f32 %v2126, %v2290
      %v2292 = vpop.f32.mrb[0].mxu0
      %2293 = vmatprep.mubr.f32.mxu0 0.0
      %v2294 = vand.u32 %v245, 4294901760
      %2295 = vmatmul.mubr.f32.gmra.mrb[0].mxu0 %v2294
      %v2296 = vpop.f32.mrb[0].mxu0
      %v2297 = vadd.f32 %v2134, %v2296
      %v2298 = vpop.f32.mrb[0].mxu0
      %2299 = vmatprep.mubr.f32.mxu0 0.0
      %v2300 = vand.u32 %v246, 4294901760
      %2301 = vmatmul.mubr.f32.gmra.mrb[0].mxu0 %v2300
      %v2302 = vpop.f32.mrb[0].mxu0
      %v2303 = vadd.f32 %v2142, %v2302
      %v2304 = vpop.f32.mrb[0].mxu0
      %2305 = vdwg.mxu0
      %2306 = vmatprep.subr.mxu0 0.0
      %v2307 = vand.u32 %v249, 4294901760
      %2308 = vmatpush1.msra.mxu0 %v2307
      %2309 = vmatprep.subr.mxu0 0.0
      %v2310 = vand.u32 %v252, 4294901760
      %2311 = vmatpush1.msra.mxu0 %v2310
      %2312 = vmatprep.subr.mxu0 0.0
      %v2313 = vand.u32 %v255, 4294901760
      %2314 = vmatpush1.msra.mxu0 %v2313
      %2315 = vmatprep.subr.mxu0 0.0
      %v2316 = vand.u32 %v258, 4294901760
      %2317 = vmatpush1.msra.mxu0 %v2316
      %2318 = vmatprep.subr.mxu0 0.0
      %v2319 = vand.u32 %v261, 4294901760
      %2320 = vmatpush1.msra.mxu0 %v2319
      %2321 = vmatprep.subr.mxu0 0.0
      %v2322 = vand.u32 %v264, 4294901760
      %2323 = vmatpush1.msra.mxu0 %v2322
      %2324 = vmatprep.subr.mxu0 0.0
      %v2325 = vand.u32 %v267, 4294901760
      %2326 = vmatpush1.msra.mxu0 %v2325
      %2327 = vmatprep.subr.mxu0 0.0
      %v2328 = vand.u32 %v270, 4294901760
      %2329 = vmatpush1.msra.mxu0 %v2328
      %2330 = vmatprep.subr.mxu0 0.0
      %v2331 = vand.u32 %v273, 4294901760
      %2332 = vmatpush1.msra.mxu0 %v2331
      %2333 = vmatprep.subr.mxu0 0.0
      %v2334 = vand.u32 %v276, 4294901760
      %2335 = vmatpush1.msra.mxu0 %v2334
      %2336 = vmatprep.subr.mxu0 0.0
      %v2337 = vand.u32 %v279, 4294901760
      %2338 = vmatpush1.msra.mxu0 %v2337
      %2339 = vmatprep.subr.mxu0 0.0
      %v2340 = vand.u32 %v282, 4294901760
      %2341 = vmatpush1.msra.mxu0 %v2340
      %2342 = vmatprep.subr.mxu0 0.0
      %v2343 = vand.u32 %v285, 4294901760
      %2344 = vmatpush1.msra.mxu0 %v2343
      %2345 = vmatprep.subr.mxu0 0.0
      %v2346 = vand.u32 %v288, 4294901760
      %2347 = vmatpush1.msra.mxu0 %v2346
      %2348 = vmatprep.subr.mxu0 0.0
      %v2349 = vand.u32 %v291, 4294901760
      %2350 = vmatpush1.msra.mxu0 %v2349
      %2351 = vmatprep.subr.mxu0 0.0
      %v2352 = vand.u32 %v294, 4294901760
      %2353 = vmatpush1.msra.mxu0 %v2352
      %2354 = vmatprep.subr.mxu0 0.0
      %2355 = vmatpush1.msra.mxu0 0.0
      %2356 = vmatprep.subr.mxu0 0.0
      %2357 = vmatpush1.msra.mxu0 0.0
      %2358 = vmatprep.subr.mxu0 0.0
      %2359 = vmatpush1.msra.mxu0 0.0
      %2360 = vmatprep.subr.mxu0 0.0
      %2361 = vmatpush1.msra.mxu0 0.0
      %2362 = vmatprep.subr.mxu0 0.0
      %2363 = vmatpush1.msra.mxu0 0.0
      %2364 = vmatprep.subr.mxu0 0.0
      %2365 = vmatpush1.msra.mxu0 0.0
      %2366 = vmatprep.subr.mxu0 0.0
      %2367 = vmatpush1.msra.mxu0 0.0
      %2368 = vmatprep.subr.mxu0 0.0
      %2369 = vmatpush1.msra.mxu0 0.0
      %2370 = vmatprep.subr.mxu0 0.0
      %2371 = vmatpush1.msra.mxu0 0.0
      %2372 = vmatprep.subr.mxu0 0.0
      %2373 = vmatpush1.msra.mxu0 0.0
      %2374 = vmatprep.subr.mxu0 0.0
      %2375 = vmatpush1.msra.mxu0 0.0
      %2376 = vmatprep.subr.mxu0 0.0
      %2377 = vmatpush1.msra.mxu0 0.0
      %2378 = vmatprep.subr.mxu0 0.0
      %2379 = vmatpush1.msra.mxu0 0.0
      %2380 = vmatprep.subr.mxu0 0.0
      %2381 = vmatpush1.msra.mxu0 0.0
      %2382 = vmatprep.subr.mxu0 0.0
      %2383 = vmatpush1.msra.mxu0 0.0
      %2384 = vmatprep.subr.mxu0 0.0
      %2385 = vmatpush1.msra.mxu0 0.0
      %2386 = vmatprep.mubr.f32.mxu0 0.0
      %v2387 = vand.u32 %v239, 4294901760
      %2388 = vmatmul.mubr.f32.gmra.mrb[0].mxu0 %v2387
      %v2389 = vpop.f32.mrb[0].mxu0
      %v2390 = vadd.f32 %v2261, %v2389
      %v2391 = vpop.f32.mrb[0].mxu0
      %2392 = vmatprep.mubr.f32.mxu0 0.0
      %v2393 = vand.u32 %v240, 4294901760
      %2394 = vmatmul.mubr.f32.gmra.mrb[0].mxu0 %v2393
      %v2395 = vpop.f32.mrb[0].mxu0
      %v2396 = vadd.f32 %v2267, %v2395
      %v2397 = vpop.f32.mrb[0].mxu0
      %2398 = vmatprep.mubr.f32.mxu0 0.0
      %v2399 = vand.u32 %v241, 4294901760
      %2400 = vmatmul.mubr.f32.gmra.mrb[0].mxu0 %v2399
      %v2401 = vpop.f32.mrb[0].mxu0
      %v2402 = vadd.f32 %v2273, %v2401
      %v2403 = vpop.f32.mrb[0].mxu0
      %2404 = vmatprep.mubr.f32.mxu0 0.0
      %v2405 = vand.u32 %v242, 4294901760
      %2406 = vmatmul.mubr.f32.gmra.mrb[0].mxu0 %v2405
      %v2407 = vpop.f32.mrb[0].mxu0
      %v2408 = vadd.f32 %v2279, %v2407
      %v2409 = vpop.f32.mrb[0].mxu0
      %2410 = vmatprep.mubr.f32.mxu0 0.0
      %v2411 = vand.u32 %v243, 4294901760
      %2412 = vmatmul.mubr.f32.gmra.mrb[0].mxu0 %v2411
      %v2413 = vpop.f32.mrb[0].mxu0
      %v2414 = vadd.f32 %v2285, %v2413
      %v2415 = vpop.f32.mrb[0].mxu0
      %2416 = vmatprep.mubr.f32.mxu0 0.0
      %v2417 = vand.u32 %v244, 4294901760
      %2418 = vmatmul.mubr.f32.gmra.mrb[0].mxu0 %v2417
      %v2419 = vpop.f32.mrb[0].mxu0
      %v2420 = vadd.f32 %v2291, %v2419
      %v2421 = vpop.f32.mrb[0].mxu0
      %2422 = vmatprep.mubr.f32.mxu0 0.0
      %v2423 = vand.u32 %v245, 4294901760
      %2424 = vmatmul.mubr.f32.gmra.mrb[0].mxu0 %v2423
      %v2425 = vpop.f32.mrb[0].mxu0
      %v2426 = vadd.f32 %v2297, %v2425
      %v2427 = vpop.f32.mrb[0].mxu0
      %2428 = vmatprep.mubr.f32.mxu0 0.0
      %v2429 = vand.u32 %v246, 4294901760
      %2430 = vmatmul.mubr.f32.gmra.mrb[0].mxu0 %v2429
      %v2431 = vpop.f32.mrb[0].mxu0
      %v2432 = vadd.f32 %v2303, %v2431
      %v2433 = vpop.f32.mrb[0].mxu0
      %2434 = vdwg.mxu0
      %v2435 = vld [vmem:[%s2] sm:$0x7]
      %v2437 = vlaneseq
      %v2438 = vshrl.u32 %v2437, 7
      %v2439 = vsub.s32 0, %v2438
      %v2440 = vrot.slane %v2435, %v2439
      %v2441 = vlaneseq
      %v2442 = vshrl.u32 %v2441, 7
      %v2443 = vsub.s32 1, %v2442
      %v2444 = vrot.slane %v2435, %v2443
      %v2445 = vlaneseq
      %v2446 = vshrl.u32 %v2445, 7
      %v2447 = vsub.s32 2, %v2446
      %v2448 = vrot.slane %v2435, %v2447
      %v2452 = vadd.f32 %v1440, %v2440
      %v2453 = vadd.f32 %v1442, %v2444
      %v2454 = vadd.f32 %v2390, %v2448
      %v2455 = vadd.f32 %v1447, %v2440
      %v2456 = vadd.f32 %v1449, %v2444
      %v2457 = vadd.f32 %v2396, %v2448
      %v2458 = vadd.f32 %v1454, %v2440
      %v2459 = vadd.f32 %v1456, %v2444
      %v2460 = vadd.f32 %v2402, %v2448
      %v2461 = vadd.f32 %v1461, %v2440
      %v2462 = vadd.f32 %v1463, %v2444
      %v2463 = vadd.f32 %v2408, %v2448
      %v2464 = vadd.f32 %v1468, %v2440
      %v2465 = vadd.f32 %v1470, %v2444
      %v2466 = vadd.f32 %v2414, %v2448
      %v2467 = vadd.f32 %v1475, %v2440
      %v2468 = vadd.f32 %v1477, %v2444
      %v2469 = vadd.f32 %v2420, %v2448
      %v2470 = vadd.f32 %v1482, %v2440
      %v2471 = vadd.f32 %v1484, %v2444
      %v2472 = vadd.f32 %v2426, %v2448
      %v2473 = vadd.f32 %v1489, %v2440
      %v2474 = vadd.f32 %v1491, %v2444
      %v2475 = vadd.f32 %v2432, %v2448
      %v2476 = vld [vmem:[%s3] sm:$0xff]
      %v2477 = vld [vmem:[%s3 + $0x8] sm:$0xff]
      %v2478 = vld [vmem:[%s3 + $0x10] sm:$0xff]
      %v2479 = vld [vmem:[%s3 + $0x18] sm:$0xff]
      %v2480 = vld [vmem:[%s3 + $0x20] sm:$0xff]
      %v2481 = vld [vmem:[%s3 + $0x28] sm:$0xff]
      %v2482 = vld [vmem:[%s3 + $0x30] sm:$0xff]
      %v2483 = vld [vmem:[%s3 + $0x38] sm:$0xff]
      %v2484 = vld [vmem:[%s3 + $0x40] sm:$0xff]
      %v2485 = vld [vmem:[%s3 + $0x48] sm:$0xff]
      %v2486 = vld [vmem:[%s3 + $0x50] sm:$0xff]
      %v2487 = vld [vmem:[%s3 + $0x58] sm:$0xff]
      %v2488 = vld [vmem:[%s3 + $0x60] sm:$0xff]
      %v2489 = vld [vmem:[%s3 + $0x68] sm:$0xff]
      %v2490 = vld [vmem:[%s3 + $0x70] sm:$0xff]
      %v2491 = vld [vmem:[%s3 + $0x78] sm:$0xff]
      %2492 = vmatprep.subr.mxu0 0.0
      %v2493 = vand.u32 %v2476, 4294901760
      %2494 = vmatpush1.msra.mxu0 %v2493
      %2495 = vmatprep.subr.mxu0 0.0
      %v2496 = vand.u32 %v2477, 4294901760
      %2497 = vmatpush1.msra.mxu0 %v2496
      %2498 = vmatprep.subr.mxu0 0.0
      %v2499 = vand.u32 %v2478, 4294901760
      %2500 = vmatpush1.msra.mxu0 %v2499
      %2501 = vmatprep.subr.mxu0 0.0
      %v2502 = vand.u32 %v2479, 4294901760
      %2503 = vmatpush1.msra.mxu0 %v2502
      %2504 = vmatprep.subr.mxu0 0.0
      %v2505 = vand.u32 %v2480, 4294901760
      %2506 = vmatpush1.msra.mxu0 %v2505
      %2507 = vmatprep.subr.mxu0 0.0
      %v2508 = vand.u32 %v2481, 4294901760
      %2509 = vmatpush1.msra.mxu0 %v2508
      %2510 = vmatprep.subr.mxu0 0.0
      %v2511 = vand.u32 %v2482, 4294901760
      %2512 = vmatpush1.msra.mxu0 %v2511
      %2513 = vmatprep.subr.mxu0 0.0
      %v2514 = vand.u32 %v2483, 4294901760
      %2515 = vmatpush1.msra.mxu0 %v2514
      %2516 = vmatprep.subr.mxu0 0.0
      %v2517 = vand.u32 %v2484, 4294901760
      %2518 = vmatpush1.msra.mxu0 %v2517
      %2519 = vmatprep.subr.mxu0 0.0
      %v2520 = vand.u32 %v2485, 4294901760
      %2521 = vmatpush1.msra.mxu0 %v2520
      %2522 = vmatprep.subr.mxu0 0.0
      %v2523 = vand.u32 %v2486, 4294901760
      %2524 = vmatpush1.msra.mxu0 %v2523
      %2525 = vmatprep.subr.mxu0 0.0
      %v2526 = vand.u32 %v2487, 4294901760
      %2527 = vmatpush1.msra.mxu0 %v2526
      %2528 = vmatprep.subr.mxu0 0.0
      %v2529 = vand.u32 %v2488, 4294901760
      %2530 = vmatpush1.msra.mxu0 %v2529
      %2531 = vmatprep.subr.mxu0 0.0
      %v2532 = vand.u32 %v2489, 4294901760
      %2533 = vmatpush1.msra.mxu0 %v2532
      %2534 = vmatprep.subr.mxu0 0.0
      %v2535 = vand.u32 %v2490, 4294901760
      %2536 = vmatpush1.msra.mxu0 %v2535
      %2537 = vmatprep.subr.mxu0 0.0
      %v2538 = vand.u32 %v2491, 4294901760
      %2539 = vmatpush1.msra.mxu0 %v2538
      %2540 = vmatprep.subr.mxu0 0.0
      %2541 = vmatpush1.msra.mxu0 0.0
      %2542 = vmatprep.subr.mxu0 0.0
      %2543 = vmatpush1.msra.mxu0 0.0
      %2544 = vmatprep.subr.mxu0 0.0
      %2545 = vmatpush1.msra.mxu0 0.0
      %2546 = vmatprep.subr.mxu0 0.0
      %2547 = vmatpush1.msra.mxu0 0.0
      %2548 = vmatprep.subr.mxu0 0.0
      %2549 = vmatpush1.msra.mxu0 0.0
      %2550 = vmatprep.subr.mxu0 0.0
      %2551 = vmatpush1.msra.mxu0 0.0
      %2552 = vmatprep.subr.mxu0 0.0
      %2553 = vmatpush1.msra.mxu0 0.0
      %2554 = vmatprep.subr.mxu0 0.0
      %2555 = vmatpush1.msra.mxu0 0.0
      %2556 = vmatprep.subr.mxu0 0.0
      %2557 = vmatpush1.msra.mxu0 0.0
      %2558 = vmatprep.subr.mxu0 0.0
      %2559 = vmatpush1.msra.mxu0 0.0
      %2560 = vmatprep.subr.mxu0 0.0
      %2561 = vmatpush1.msra.mxu0 0.0
      %2562 = vmatprep.subr.mxu0 0.0
      %2563 = vmatpush1.msra.mxu0 0.0
      %2564 = vmatprep.subr.mxu0 0.0
      %2565 = vmatpush1.msra.mxu0 0.0
      %2566 = vmatprep.subr.mxu0 0.0
      %2567 = vmatpush1.msra.mxu0 0.0
      %2568 = vmatprep.subr.mxu0 0.0
      %2569 = vmatpush1.msra.mxu0 0.0
      %2570 = vmatprep.subr.mxu0 0.0
      %2571 = vmatpush1.msra.mxu0 0.0
      %2572 = vmatprep.mubr.f32.mxu0 0.0
      %v2573 = vand.u32 %v239, 4294901760
      %v2574 = vsub.f32 %v239, %v2573
      %v2575 = vand.u32 %v2574, 4294901760
      %v2576 = vsub.f32 %v2574, %v2575
      %v2577 = vand.u32 %v2576, 4294901760
      %2578 = vmatmul.mubr.f32.gmra.mrb[0].mxu0 %v2577
      %v2579 = vpop.f32.mrb[0].mxu0
      %v2580 = vadd.f32 0.0, %v2579
      %v2581 = vpop.f32.mrb[0].mxu0
      %2582 = vmatprep.mubr.f32.mxu0 0.0
      %v2583 = vand.u32 %v240, 4294901760
      %v2584 = vsub.f32 %v240, %v2583
      %v2585 = vand.u32 %v2584, 4294901760
      %v2586 = vsub.f32 %v2584, %v2585
      %v2587 = vand.u32 %v2586, 4294901760
      %2588 = vmatmul.mubr.f32.gmra.mrb[0].mxu0 %v2587
      %v2589 = vpop.f32.mrb[0].mxu0
      %v2590 = vadd.f32 0.0, %v2589
      %v2591 = vpop.f32.mrb[0].mxu0
      %2592 = vmatprep.mubr.f32.mxu0 0.0
      %v2593 = vand.u32 %v241, 4294901760
      %v2594 = vsub.f32 %v241, %v2593
      %v2595 = vand.u32 %v2594, 4294901760
      %v2596 = vsub.f32 %v2594, %v2595
      %v2597 = vand.u32 %v2596, 4294901760
      %2598 = vmatmul.mubr.f32.gmra.mrb[0].mxu0 %v2597
      %v2599 = vpop.f32.mrb[0].mxu0
      %v2600 = vadd.f32 0.0, %v2599
      %v2601 = vpop.f32.mrb[0].mxu0
      %2602 = vmatprep.mubr.f32.mxu0 0.0
      %v2603 = vand.u32 %v242, 4294901760
      %v2604 = vsub.f32 %v242, %v2603
      %v2605 = vand.u32 %v2604, 4294901760
      %v2606 = vsub.f32 %v2604, %v2605
      %v2607 = vand.u32 %v2606, 4294901760
      %2608 = vmatmul.mubr.f32.gmra.mrb[0].mxu0 %v2607
      %v2609 = vpop.f32.mrb[0].mxu0
      %v2610 = vadd.f32 0.0, %v2609
      %v2611 = vpop.f32.mrb[0].mxu0
      %2612 = vmatprep.mubr.f32.mxu0 0.0
      %v2613 = vand.u32 %v243, 4294901760
      %v2614 = vsub.f32 %v243, %v2613
      %v2615 = vand.u32 %v2614, 4294901760
      %v2616 = vsub.f32 %v2614, %v2615
      %v2617 = vand.u32 %v2616, 4294901760
      %2618 = vmatmul.mubr.f32.gmra.mrb[0].mxu0 %v2617
      %v2619 = vpop.f32.mrb[0].mxu0
      %v2620 = vadd.f32 0.0, %v2619
      %v2621 = vpop.f32.mrb[0].mxu0
      %2622 = vmatprep.mubr.f32.mxu0 0.0
      %v2623 = vand.u32 %v244, 4294901760
      %v2624 = vsub.f32 %v244, %v2623
      %v2625 = vand.u32 %v2624, 4294901760
      %v2626 = vsub.f32 %v2624, %v2625
      %v2627 = vand.u32 %v2626, 4294901760
      %2628 = vmatmul.mubr.f32.gmra.mrb[0].mxu0 %v2627
      %v2629 = vpop.f32.mrb[0].mxu0
      %v2630 = vadd.f32 0.0, %v2629
      %v2631 = vpop.f32.mrb[0].mxu0
      %2632 = vmatprep.mubr.f32.mxu0 0.0
      %v2633 = vand.u32 %v245, 4294901760
      %v2634 = vsub.f32 %v245, %v2633
      %v2635 = vand.u32 %v2634, 4294901760
      %v2636 = vsub.f32 %v2634, %v2635
      %v2637 = vand.u32 %v2636, 4294901760
      %2638 = vmatmul.mubr.f32.gmra.mrb[0].mxu0 %v2637
      %v2639 = vpop.f32.mrb[0].mxu0
      %v2640 = vadd.f32 0.0, %v2639
      %v2641 = vpop.f32.mrb[0].mxu0
      %2642 = vmatprep.mubr.f32.mxu0 0.0
      %v2643 = vand.u32 %v246, 4294901760
      %v2644 = vsub.f32 %v246, %v2643
      %v2645 = vand.u32 %v2644, 4294901760
      %v2646 = vsub.f32 %v2644, %v2645
      %v2647 = vand.u32 %v2646, 4294901760
      %2648 = vmatmul.mubr.f32.gmra.mrb[0].mxu0 %v2647
      %v2649 = vpop.f32.mrb[0].mxu0
      %v2650 = vadd.f32 0.0, %v2649
      %v2651 = vpop.f32.mrb[0].mxu0
      %2652 = vdwg.mxu0
      %2653 = vmatprep.subr.mxu0 0.0
      %v2654 = vand.u32 %v2476, 4294901760
      %v2655 = vsub.f32 %v2476, %v2654
      %v2656 = vand.u32 %v2655, 4294901760
      %v2657 = vsub.f32 %v2655, %v2656
      %v2658 = vand.u32 %v2657, 4294901760
      %2659 = vmatpush1.msra.mxu0 %v2658
      %2660 = vmatprep.subr.mxu0 0.0
      %v2661 = vand.u32 %v2477, 4294901760
      %v2662 = vsub.f32 %v2477, %v2661
      %v2663 = vand.u32 %v2662, 4294901760
      %v2664 = vsub.f32 %v2662, %v2663
      %v2665 = vand.u32 %v2664, 4294901760
      %2666 = vmatpush1.msra.mxu0 %v2665
      %2667 = vmatprep.subr.mxu0 0.0
      %v2668 = vand.u32 %v2478, 4294901760
      %v2669 = vsub.f32 %v2478, %v2668
      %v2670 = vand.u32 %v2669, 4294901760
      %v2671 = vsub.f32 %v2669, %v2670
      %v2672 = vand.u32 %v2671, 4294901760
      %2673 = vmatpush1.msra.mxu0 %v2672
      %2674 = vmatprep.subr.mxu0 0.0
      %v2675 = vand.u32 %v2479, 4294901760
      %v2676 = vsub.f32 %v2479, %v2675
      %v2677 = vand.u32 %v2676, 4294901760
      %v2678 = vsub.f32 %v2676, %v2677
      %v2679 = vand.u32 %v2678, 4294901760
      %2680 = vmatpush1.msra.mxu0 %v2679
      %2681 = vmatprep.subr.mxu0 0.0
      %v2682 = vand.u32 %v2480, 4294901760
      %v2683 = vsub.f32 %v2480, %v2682
      %v2684 = vand.u32 %v2683, 4294901760
      %v2685 = vsub.f32 %v2683, %v2684
      %v2686 = vand.u32 %v2685, 4294901760
      %2687 = vmatpush1.msra.mxu0 %v2686
      %2688 = vmatprep.subr.mxu0 0.0
      %v2689 = vand.u32 %v2481, 4294901760
      %v2690 = vsub.f32 %v2481, %v2689
      %v2691 = vand.u32 %v2690, 4294901760
      %v2692 = vsub.f32 %v2690, %v2691
      %v2693 = vand.u32 %v2692, 4294901760
      %2694 = vmatpush1.msra.mxu0 %v2693
      %2695 = vmatprep.subr.mxu0 0.0
      %v2696 = vand.u32 %v2482, 4294901760
      %v2697 = vsub.f32 %v2482, %v2696
      %v2698 = vand.u32 %v2697, 4294901760
      %v2699 = vsub.f32 %v2697, %v2698
      %v2700 = vand.u32 %v2699, 4294901760
      %2701 = vmatpush1.msra.mxu0 %v2700
      %2702 = vmatprep.subr.mxu0 0.0
      %v2703 = vand.u32 %v2483, 4294901760
      %v2704 = vsub.f32 %v2483, %v2703
      %v2705 = vand.u32 %v2704, 4294901760
      %v2706 = vsub.f32 %v2704, %v2705
      %v2707 = vand.u32 %v2706, 4294901760
      %2708 = vmatpush1.msra.mxu0 %v2707
      %2709 = vmatprep.subr.mxu0 0.0
      %v2710 = vand.u32 %v2484, 4294901760
      %v2711 = vsub.f32 %v2484, %v2710
      %v2712 = vand.u32 %v2711, 4294901760
      %v2713 = vsub.f32 %v2711, %v2712
      %v2714 = vand.u32 %v2713, 4294901760
      %2715 = vmatpush1.msra.mxu0 %v2714
      %2716 = vmatprep.subr.mxu0 0.0
      %v2717 = vand.u32 %v2485, 4294901760
      %v2718 = vsub.f32 %v2485, %v2717
      %v2719 = vand.u32 %v2718, 4294901760
      %v2720 = vsub.f32 %v2718, %v2719
      %v2721 = vand.u32 %v2720, 4294901760
      %2722 = vmatpush1.msra.mxu0 %v2721
      %2723 = vmatprep.subr.mxu0 0.0
      %v2724 = vand.u32 %v2486, 4294901760
      %v2725 = vsub.f32 %v2486, %v2724
      %v2726 = vand.u32 %v2725, 4294901760
      %v2727 = vsub.f32 %v2725, %v2726
      %v2728 = vand.u32 %v2727, 4294901760
      %2729 = vmatpush1.msra.mxu0 %v2728
      %2730 = vmatprep.subr.mxu0 0.0
      %v2731 = vand.u32 %v2487, 4294901760
      %v2732 = vsub.f32 %v2487, %v2731
      %v2733 = vand.u32 %v2732, 4294901760
      %v2734 = vsub.f32 %v2732, %v2733
      %v2735 = vand.u32 %v2734, 4294901760
      %2736 = vmatpush1.msra.mxu0 %v2735
      %2737 = vmatprep.subr.mxu0 0.0
      %v2738 = vand.u32 %v2488, 4294901760
      %v2739 = vsub.f32 %v2488, %v2738
      %v2740 = vand.u32 %v2739, 4294901760
      %v2741 = vsub.f32 %v2739, %v2740
      %v2742 = vand.u32 %v2741, 4294901760
      %2743 = vmatpush1.msra.mxu0 %v2742
      %2744 = vmatprep.subr.mxu0 0.0
      %v2745 = vand.u32 %v2489, 4294901760
      %v2746 = vsub.f32 %v2489, %v2745
      %v2747 = vand.u32 %v2746, 4294901760
      %v2748 = vsub.f32 %v2746, %v2747
      %v2749 = vand.u32 %v2748, 4294901760
      %2750 = vmatpush1.msra.mxu0 %v2749
      %2751 = vmatprep.subr.mxu0 0.0
      %v2752 = vand.u32 %v2490, 4294901760
      %v2753 = vsub.f32 %v2490, %v2752
      %v2754 = vand.u32 %v2753, 4294901760
      %v2755 = vsub.f32 %v2753, %v2754
      %v2756 = vand.u32 %v2755, 4294901760
      %2757 = vmatpush1.msra.mxu0 %v2756
      %2758 = vmatprep.subr.mxu0 0.0
      %v2759 = vand.u32 %v2491, 4294901760
      %v2760 = vsub.f32 %v2491, %v2759
      %v2761 = vand.u32 %v2760, 4294901760
      %v2762 = vsub.f32 %v2760, %v2761
      %v2763 = vand.u32 %v2762, 4294901760
      %2764 = vmatpush1.msra.mxu0 %v2763
      %2765 = vmatprep.subr.mxu0 0.0
      %2766 = vmatpush1.msra.mxu0 0.0
      %2767 = vmatprep.subr.mxu0 0.0
      %2768 = vmatpush1.msra.mxu0 0.0
      %2769 = vmatprep.subr.mxu0 0.0
      %2770 = vmatpush1.msra.mxu0 0.0
      %2771 = vmatprep.subr.mxu0 0.0
      %2772 = vmatpush1.msra.mxu0 0.0
      %2773 = vmatprep.subr.mxu0 0.0
      %2774 = vmatpush1.msra.mxu0 0.0
      %2775 = vmatprep.subr.mxu0 0.0
      %2776 = vmatpush1.msra.mxu0 0.0
      %2777 = vmatprep.subr.mxu0 0.0
      %2778 = vmatpush1.msra.mxu0 0.0
      %2779 = vmatprep.subr.mxu0 0.0
      %2780 = vmatpush1.msra.mxu0 0.0
      %2781 = vmatprep.subr.mxu0 0.0
      %2782 = vmatpush1.msra.mxu0 0.0
      %2783 = vmatprep.subr.mxu0 0.0
      %2784 = vmatpush1.msra.mxu0 0.0
      %2785 = vmatprep.subr.mxu0 0.0
      %2786 = vmatpush1.msra.mxu0 0.0
      %2787 = vmatprep.subr.mxu0 0.0
      %2788 = vmatpush1.msra.mxu0 0.0
      %2789 = vmatprep.subr.mxu0 0.0
      %2790 = vmatpush1.msra.mxu0 0.0
      %2791 = vmatprep.subr.mxu0 0.0
      %2792 = vmatpush1.msra.mxu0 0.0
      %2793 = vmatprep.subr.mxu0 0.0
      %2794 = vmatpush1.msra.mxu0 0.0
      %2795 = vmatprep.subr.mxu0 0.0
      %2796 = vmatpush1.msra.mxu0 0.0
      %2797 = vmatprep.mubr.f32.mxu0 0.0
      %v2798 = vand.u32 %v239, 4294901760
      %2799 = vmatmul.mubr.f32.gmra.mrb[0].mxu0 %v2798
      %v2800 = vpop.f32.mrb[0].mxu0
      %v2801 = vadd.f32 %v2580, %v2800
      %v2802 = vpop.f32.mrb[0].mxu0
      %2803 = vmatprep.mubr.f32.mxu0 0.0
      %v2804 = vand.u32 %v240, 4294901760
      %2805 = vmatmul.mubr.f32.gmra.mrb[0].mxu0 %v2804
      %v2806 = vpop.f32.mrb[0].mxu0
      %v2807 = vadd.f32 %v2590, %v2806
      %v2808 = vpop.f32.mrb[0].mxu0
      %2809 = vmatprep.mubr.f32.mxu0 0.0
      %v2810 = vand.u32 %v241, 4294901760
      %2811 = vmatmul.mubr.f32.gmra.mrb[0].mxu0 %v2810
      %v2812 = vpop.f32.mrb[0].mxu0
      %v2813 = vadd.f32 %v2600, %v2812
      %v2814 = vpop.f32.mrb[0].mxu0
      %2815 = vmatprep.mubr.f32.mxu0 0.0
      %v2816 = vand.u32 %v242, 4294901760
      %2817 = vmatmul.mubr.f32.gmra.mrb[0].mxu0 %v2816
      %v2818 = vpop.f32.mrb[0].mxu0
      %v2819 = vadd.f32 %v2610, %v2818
      %v2820 = vpop.f32.mrb[0].mxu0
      %2821 = vmatprep.mubr.f32.mxu0 0.0
      %v2822 = vand.u32 %v243, 4294901760
      %2823 = vmatmul.mubr.f32.gmra.mrb[0].mxu0 %v2822
      %v2824 = vpop.f32.mrb[0].mxu0
      %v2825 = vadd.f32 %v2620, %v2824
      %v2826 = vpop.f32.mrb[0].mxu0
      %2827 = vmatprep.mubr.f32.mxu0 0.0
      %v2828 = vand.u32 %v244, 4294901760
      %2829 = vmatmul.mubr.f32.gmra.mrb[0].mxu0 %v2828
      %v2830 = vpop.f32.mrb[0].mxu0
      %v2831 = vadd.f32 %v2630, %v2830
      %v2832 = vpop.f32.mrb[0].mxu0
      %2833 = vmatprep.mubr.f32.mxu0 0.0
      %v2834 = vand.u32 %v245, 4294901760
      %2835 = vmatmul.mubr.f32.gmra.mrb[0].mxu0 %v2834
      %v2836 = vpop.f32.mrb[0].mxu0
      %v2837 = vadd.f32 %v2640, %v2836
      %v2838 = vpop.f32.mrb[0].mxu0
      %2839 = vmatprep.mubr.f32.mxu0 0.0
      %v2840 = vand.u32 %v246, 4294901760
      %2841 = vmatmul.mubr.f32.gmra.mrb[0].mxu0 %v2840
      %v2842 = vpop.f32.mrb[0].mxu0
      %v2843 = vadd.f32 %v2650, %v2842
      %v2844 = vpop.f32.mrb[0].mxu0
      %2845 = vdwg.mxu0
      %2846 = vmatprep.subr.mxu0 0.0
      %v2847 = vand.u32 %v2476, 4294901760
      %v2848 = vsub.f32 %v2476, %v2847
      %2849 = vmatpush1.msra.mxu0 %v2848
      %2850 = vmatprep.subr.mxu0 0.0
      %v2851 = vand.u32 %v2477, 4294901760
      %v2852 = vsub.f32 %v2477, %v2851
      %2853 = vmatpush1.msra.mxu0 %v2852
      %2854 = vmatprep.subr.mxu0 0.0
      %v2855 = vand.u32 %v2478, 4294901760
      %v2856 = vsub.f32 %v2478, %v2855
      %2857 = vmatpush1.msra.mxu0 %v2856
      %2858 = vmatprep.subr.mxu0 0.0
      %v2859 = vand.u32 %v2479, 4294901760
      %v2860 = vsub.f32 %v2479, %v2859
      %2861 = vmatpush1.msra.mxu0 %v2860
      %2862 = vmatprep.subr.mxu0 0.0
      %v2863 = vand.u32 %v2480, 4294901760
      %v2864 = vsub.f32 %v2480, %v2863
      %2865 = vmatpush1.msra.mxu0 %v2864
      %2866 = vmatprep.subr.mxu0 0.0
      %v2867 = vand.u32 %v2481, 4294901760
      %v2868 = vsub.f32 %v2481, %v2867
      %2869 = vmatpush1.msra.mxu0 %v2868
      %2870 = vmatprep.subr.mxu0 0.0
      %v2871 = vand.u32 %v2482, 4294901760
      %v2872 = vsub.f32 %v2482, %v2871
      %2873 = vmatpush1.msra.mxu0 %v2872
      %2874 = vmatprep.subr.mxu0 0.0
      %v2875 = vand.u32 %v2483, 4294901760
      %v2876 = vsub.f32 %v2483, %v2875
      %2877 = vmatpush1.msra.mxu0 %v2876
      %2878 = vmatprep.subr.mxu0 0.0
      %v2879 = vand.u32 %v2484, 4294901760
      %v2880 = vsub.f32 %v2484, %v2879
      %2881 = vmatpush1.msra.mxu0 %v2880
      %2882 = vmatprep.subr.mxu0 0.0
      %v2883 = vand.u32 %v2485, 4294901760
      %v2884 = vsub.f32 %v2485, %v2883
      %2885 = vmatpush1.msra.mxu0 %v2884
      %2886 = vmatprep.subr.mxu0 0.0
      %v2887 = vand.u32 %v2486, 4294901760
      %v2888 = vsub.f32 %v2486, %v2887
      %2889 = vmatpush1.msra.mxu0 %v2888
      %2890 = vmatprep.subr.mxu0 0.0
      %v2891 = vand.u32 %v2487, 4294901760
      %v2892 = vsub.f32 %v2487, %v2891
      %2893 = vmatpush1.msra.mxu0 %v2892
      %2894 = vmatprep.subr.mxu0 0.0
      %v2895 = vand.u32 %v2488, 4294901760
      %v2896 = vsub.f32 %v2488, %v2895
      %2897 = vmatpush1.msra.mxu0 %v2896
      %2898 = vmatprep.subr.mxu0 0.0
      %v2899 = vand.u32 %v2489, 4294901760
      %v2900 = vsub.f32 %v2489, %v2899
      %2901 = vmatpush1.msra.mxu0 %v2900
      %2902 = vmatprep.subr.mxu0 0.0
      %v2903 = vand.u32 %v2490, 4294901760
      %v2904 = vsub.f32 %v2490, %v2903
      %2905 = vmatpush1.msra.mxu0 %v2904
      %2906 = vmatprep.subr.mxu0 0.0
      %v2907 = vand.u32 %v2491, 4294901760
      %v2908 = vsub.f32 %v2491, %v2907
      %2909 = vmatpush1.msra.mxu0 %v2908
      %2910 = vmatprep.subr.mxu0 0.0
      %2911 = vmatpush1.msra.mxu0 0.0
      %2912 = vmatprep.subr.mxu0 0.0
      %2913 = vmatpush1.msra.mxu0 0.0
      %2914 = vmatprep.subr.mxu0 0.0
      %2915 = vmatpush1.msra.mxu0 0.0
      %2916 = vmatprep.subr.mxu0 0.0
      %2917 = vmatpush1.msra.mxu0 0.0
      %2918 = vmatprep.subr.mxu0 0.0
      %2919 = vmatpush1.msra.mxu0 0.0
      %2920 = vmatprep.subr.mxu0 0.0
      %2921 = vmatpush1.msra.mxu0 0.0
      %2922 = vmatprep.subr.mxu0 0.0
      %2923 = vmatpush1.msra.mxu0 0.0
      %2924 = vmatprep.subr.mxu0 0.0
      %2925 = vmatpush1.msra.mxu0 0.0
      %2926 = vmatprep.subr.mxu0 0.0
      %2927 = vmatpush1.msra.mxu0 0.0
      %2928 = vmatprep.subr.mxu0 0.0
      %2929 = vmatpush1.msra.mxu0 0.0
      %2930 = vmatprep.subr.mxu0 0.0
      %2931 = vmatpush1.msra.mxu0 0.0
      %2932 = vmatprep.subr.mxu0 0.0
      %2933 = vmatpush1.msra.mxu0 0.0
      %2934 = vmatprep.subr.mxu0 0.0
      %2935 = vmatpush1.msra.mxu0 0.0
      %2936 = vmatprep.subr.mxu0 0.0
      %2937 = vmatpush1.msra.mxu0 0.0
      %2938 = vmatprep.subr.mxu0 0.0
      %2939 = vmatpush1.msra.mxu0 0.0
      %2940 = vmatprep.subr.mxu0 0.0
      %2941 = vmatpush1.msra.mxu0 0.0
      %2942 = vmatprep.mubr.f32.mxu0 0.0
      %v2943 = vand.u32 %v239, 4294901760
      %v2944 = vsub.f32 %v239, %v2943
      %2945 = vmatmul.mubr.f32.gmra.mrb[0].mxu0 %v2944
      %v2946 = vpop.f32.mrb[0].mxu0
      %v2947 = vadd.f32 %v2801, %v2946
      %v2948 = vpop.f32.mrb[0].mxu0
      %2949 = vmatprep.mubr.f32.mxu0 0.0
      %v2950 = vand.u32 %v240, 4294901760
      %v2951 = vsub.f32 %v240, %v2950
      %2952 = vmatmul.mubr.f32.gmra.mrb[0].mxu0 %v2951
      %v2953 = vpop.f32.mrb[0].mxu0
      %v2954 = vadd.f32 %v2807, %v2953
      %v2955 = vpop.f32.mrb[0].mxu0
      %2956 = vmatprep.mubr.f32.mxu0 0.0
      %v2957 = vand.u32 %v241, 4294901760
      %v2958 = vsub.f32 %v241, %v2957
      %2959 = vmatmul.mubr.f32.gmra.mrb[0].mxu0 %v2958
      %v2960 = vpop.f32.mrb[0].mxu0
      %v2961 = vadd.f32 %v2813, %v2960
      %v2962 = vpop.f32.mrb[0].mxu0
      %2963 = vmatprep.mubr.f32.mxu0 0.0
      %v2964 = vand.u32 %v242, 4294901760
      %v2965 = vsub.f32 %v242, %v2964
      %2966 = vmatmul.mubr.f32.gmra.mrb[0].mxu0 %v2965
      %v2967 = vpop.f32.mrb[0].mxu0
      %v2968 = vadd.f32 %v2819, %v2967
      %v2969 = vpop.f32.mrb[0].mxu0
      %2970 = vmatprep.mubr.f32.mxu0 0.0
      %v2971 = vand.u32 %v243, 4294901760
      %v2972 = vsub.f32 %v243, %v2971
      %2973 = vmatmul.mubr.f32.gmra.mrb[0].mxu0 %v2972
      %v2974 = vpop.f32.mrb[0].mxu0
      %v2975 = vadd.f32 %v2825, %v2974
      %v2976 = vpop.f32.mrb[0].mxu0
      %2977 = vmatprep.mubr.f32.mxu0 0.0
      %v2978 = vand.u32 %v244, 4294901760
      %v2979 = vsub.f32 %v244, %v2978
      %2980 = vmatmul.mubr.f32.gmra.mrb[0].mxu0 %v2979
      %v2981 = vpop.f32.mrb[0].mxu0
      %v2982 = vadd.f32 %v2831, %v2981
      %v2983 = vpop.f32.mrb[0].mxu0
      %2984 = vmatprep.mubr.f32.mxu0 0.0
      %v2985 = vand.u32 %v245, 4294901760
      %v2986 = vsub.f32 %v245, %v2985
      %2987 = vmatmul.mubr.f32.gmra.mrb[0].mxu0 %v2986
      %v2988 = vpop.f32.mrb[0].mxu0
      %v2989 = vadd.f32 %v2837, %v2988
      %v2990 = vpop.f32.mrb[0].mxu0
      %2991 = vmatprep.mubr.f32.mxu0 0.0
      %v2992 = vand.u32 %v246, 4294901760
      %v2993 = vsub.f32 %v246, %v2992
      %2994 = vmatmul.mubr.f32.gmra.mrb[0].mxu0 %v2993
      %v2995 = vpop.f32.mrb[0].mxu0
      %v2996 = vadd.f32 %v2843, %v2995
      %v2997 = vpop.f32.mrb[0].mxu0
      %2998 = vdwg.mxu0
      %2999 = vmatprep.subr.mxu0 0.0
      %v3000 = vand.u32 %v2476, 4294901760
      %3001 = vmatpush1.msra.mxu0 %v3000
      %3002 = vmatprep.subr.mxu0 0.0
      %v3003 = vand.u32 %v2477, 4294901760
      %3004 = vmatpush1.msra.mxu0 %v3003
      %3005 = vmatprep.subr.mxu0 0.0
      %v3006 = vand.u32 %v2478, 4294901760
      %3007 = vmatpush1.msra.mxu0 %v3006
      %3008 = vmatprep.subr.mxu0 0.0
      %v3009 = vand.u32 %v2479, 4294901760
      %3010 = vmatpush1.msra.mxu0 %v3009
      %3011 = vmatprep.subr.mxu0 0.0
      %v3012 = vand.u32 %v2480, 4294901760
      %3013 = vmatpush1.msra.mxu0 %v3012
      %3014 = vmatprep.subr.mxu0 0.0
      %v3015 = vand.u32 %v2481, 4294901760
      %3016 = vmatpush1.msra.mxu0 %v3015
      %3017 = vmatprep.subr.mxu0 0.0
      %v3018 = vand.u32 %v2482, 4294901760
      %3019 = vmatpush1.msra.mxu0 %v3018
      %3020 = vmatprep.subr.mxu0 0.0
      %v3021 = vand.u32 %v2483, 4294901760
      %3022 = vmatpush1.msra.mxu0 %v3021
      %3023 = vmatprep.subr.mxu0 0.0
      %v3024 = vand.u32 %v2484, 4294901760
      %3025 = vmatpush1.msra.mxu0 %v3024
      %3026 = vmatprep.subr.mxu0 0.0
      %v3027 = vand.u32 %v2485, 4294901760
      %3028 = vmatpush1.msra.mxu0 %v3027
      %3029 = vmatprep.subr.mxu0 0.0
      %v3030 = vand.u32 %v2486, 4294901760
      %3031 = vmatpush1.msra.mxu0 %v3030
      %3032 = vmatprep.subr.mxu0 0.0
      %v3033 = vand.u32 %v2487, 4294901760
      %3034 = vmatpush1.msra.mxu0 %v3033
      %3035 = vmatprep.subr.mxu0 0.0
      %v3036 = vand.u32 %v2488, 4294901760
      %3037 = vmatpush1.msra.mxu0 %v3036
      %3038 = vmatprep.subr.mxu0 0.0
      %v3039 = vand.u32 %v2489, 4294901760
      %3040 = vmatpush1.msra.mxu0 %v3039
      %3041 = vmatprep.subr.mxu0 0.0
      %v3042 = vand.u32 %v2490, 4294901760
      %3043 = vmatpush1.msra.mxu0 %v3042
      %3044 = vmatprep.subr.mxu0 0.0
      %v3045 = vand.u32 %v2491, 4294901760
      %3046 = vmatpush1.msra.mxu0 %v3045
      %3047 = vmatprep.subr.mxu0 0.0
      %3048 = vmatpush1.msra.mxu0 0.0
      %3049 = vmatprep.subr.mxu0 0.0
      %3050 = vmatpush1.msra.mxu0 0.0
      %3051 = vmatprep.subr.mxu0 0.0
      %3052 = vmatpush1.msra.mxu0 0.0
      %3053 = vmatprep.subr.mxu0 0.0
      %3054 = vmatpush1.msra.mxu0 0.0
      %3055 = vmatprep.subr.mxu0 0.0
      %3056 = vmatpush1.msra.mxu0 0.0
      %3057 = vmatprep.subr.mxu0 0.0
      %3058 = vmatpush1.msra.mxu0 0.0
      %3059 = vmatprep.subr.mxu0 0.0
      %3060 = vmatpush1.msra.mxu0 0.0
      %3061 = vmatprep.subr.mxu0 0.0
      %3062 = vmatpush1.msra.mxu0 0.0
      %3063 = vmatprep.subr.mxu0 0.0
      %3064 = vmatpush1.msra.mxu0 0.0
      %3065 = vmatprep.subr.mxu0 0.0
      %3066 = vmatpush1.msra.mxu0 0.0
      %3067 = vmatprep.subr.mxu0 0.0
      %3068 = vmatpush1.msra.mxu0 0.0
      %3069 = vmatprep.subr.mxu0 0.0
      %3070 = vmatpush1.msra.mxu0 0.0
      %3071 = vmatprep.subr.mxu0 0.0
      %3072 = vmatpush1.msra.mxu0 0.0
      %3073 = vmatprep.subr.mxu0 0.0
      %3074 = vmatpush1.msra.mxu0 0.0
      %3075 = vmatprep.subr.mxu0 0.0
      %3076 = vmatpush1.msra.mxu0 0.0
      %3077 = vmatprep.subr.mxu0 0.0
      %3078 = vmatpush1.msra.mxu0 0.0
      %3079 = vmatprep.mubr.f32.mxu0 0.0
      %v3080 = vand.u32 %v239, 4294901760
      %v3081 = vsub.f32 %v239, %v3080
      %v3082 = vand.u32 %v3081, 4294901760
      %3083 = vmatmul.mubr.f32.gmra.mrb[0].mxu0 %v3082
      %v3084 = vpop.f32.mrb[0].mxu0
      %v3085 = vadd.f32 %v2947, %v3084
      %v3086 = vpop.f32.mrb[0].mxu0
      %3087 = vmatprep.mubr.f32.mxu0 0.0
      %v3088 = vand.u32 %v240, 4294901760
      %v3089 = vsub.f32 %v240, %v3088
      %v3090 = vand.u32 %v3089, 4294901760
      %3091 = vmatmul.mubr.f32.gmra.mrb[0].mxu0 %v3090
      %v3092 = vpop.f32.mrb[0].mxu0
      %v3093 = vadd.f32 %v2954, %v3092
      %v3094 = vpop.f32.mrb[0].mxu0
      %3095 = vmatprep.mubr.f32.mxu0 0.0
      %v3096 = vand.u32 %v241, 4294901760
      %v3097 = vsub.f32 %v241, %v3096
      %v3098 = vand.u32 %v3097, 4294901760
      %3099 = vmatmul.mubr.f32.gmra.mrb[0].mxu0 %v3098
      %v3100 = vpop.f32.mrb[0].mxu0
      %v3101 = vadd.f32 %v2961, %v3100
      %v3102 = vpop.f32.mrb[0].mxu0
      %3103 = vmatprep.mubr.f32.mxu0 0.0
      %v3104 = vand.u32 %v242, 4294901760
      %v3105 = vsub.f32 %v242, %v3104
      %v3106 = vand.u32 %v3105, 4294901760
      %3107 = vmatmul.mubr.f32.gmra.mrb[0].mxu0 %v3106
      %v3108 = vpop.f32.mrb[0].mxu0
      %v3109 = vadd.f32 %v2968, %v3108
      %v3110 = vpop.f32.mrb[0].mxu0
      %3111 = vmatprep.mubr.f32.mxu0 0.0
      %v3112 = vand.u32 %v243, 4294901760
      %v3113 = vsub.f32 %v243, %v3112
      %v3114 = vand.u32 %v3113, 4294901760
      %3115 = vmatmul.mubr.f32.gmra.mrb[0].mxu0 %v3114
      %v3116 = vpop.f32.mrb[0].mxu0
      %v3117 = vadd.f32 %v2975, %v3116
      %v3118 = vpop.f32.mrb[0].mxu0
      %3119 = vmatprep.mubr.f32.mxu0 0.0
      %v3120 = vand.u32 %v244, 4294901760
      %v3121 = vsub.f32 %v244, %v3120
      %v3122 = vand.u32 %v3121, 4294901760
      %3123 = vmatmul.mubr.f32.gmra.mrb[0].mxu0 %v3122
      %v3124 = vpop.f32.mrb[0].mxu0
      %v3125 = vadd.f32 %v2982, %v3124
      %v3126 = vpop.f32.mrb[0].mxu0
      %3127 = vmatprep.mubr.f32.mxu0 0.0
      %v3128 = vand.u32 %v245, 4294901760
      %v3129 = vsub.f32 %v245, %v3128
      %v3130 = vand.u32 %v3129, 4294901760
      %3131 = vmatmul.mubr.f32.gmra.mrb[0].mxu0 %v3130
      %v3132 = vpop.f32.mrb[0].mxu0
      %v3133 = vadd.f32 %v2989, %v3132
      %v3134 = vpop.f32.mrb[0].mxu0
      %3135 = vmatprep.mubr.f32.mxu0 0.0
      %v3136 = vand.u32 %v246, 4294901760
      %v3137 = vsub.f32 %v246, %v3136
      %v3138 = vand.u32 %v3137, 4294901760
      %3139 = vmatmul.mubr.f32.gmra.mrb[0].mxu0 %v3138
      %v3140 = vpop.f32.mrb[0].mxu0
      %v3141 = vadd.f32 %v2996, %v3140
      %v3142 = vpop.f32.mrb[0].mxu0
      %3143 = vdwg.mxu0
      %3144 = vmatprep.subr.mxu0 0.0
      %v3145 = vand.u32 %v2476, 4294901760
      %v3146 = vsub.f32 %v2476, %v3145
      %v3147 = vand.u32 %v3146, 4294901760
      %3148 = vmatpush1.msra.mxu0 %v3147
      %3149 = vmatprep.subr.mxu0 0.0
      %v3150 = vand.u32 %v2477, 4294901760
      %v3151 = vsub.f32 %v2477, %v3150
      %v3152 = vand.u32 %v3151, 4294901760
      %3153 = vmatpush1.msra.mxu0 %v3152
      %3154 = vmatprep.subr.mxu0 0.0
      %v3155 = vand.u32 %v2478, 4294901760
      %v3156 = vsub.f32 %v2478, %v3155
      %v3157 = vand.u32 %v3156, 4294901760
      %3158 = vmatpush1.msra.mxu0 %v3157
      %3159 = vmatprep.subr.mxu0 0.0
      %v3160 = vand.u32 %v2479, 4294901760
      %v3161 = vsub.f32 %v2479, %v3160
      %v3162 = vand.u32 %v3161, 4294901760
      %3163 = vmatpush1.msra.mxu0 %v3162
      %3164 = vmatprep.subr.mxu0 0.0
      %v3165 = vand.u32 %v2480, 4294901760
      %v3166 = vsub.f32 %v2480, %v3165
      %v3167 = vand.u32 %v3166, 4294901760
      %3168 = vmatpush1.msra.mxu0 %v3167
      %3169 = vmatprep.subr.mxu0 0.0
      %v3170 = vand.u32 %v2481, 4294901760
      %v3171 = vsub.f32 %v2481, %v3170
      %v3172 = vand.u32 %v3171, 4294901760
      %3173 = vmatpush1.msra.mxu0 %v3172
      %3174 = vmatprep.subr.mxu0 0.0
      %v3175 = vand.u32 %v2482, 4294901760
      %v3176 = vsub.f32 %v2482, %v3175
      %v3177 = vand.u32 %v3176, 4294901760
      %3178 = vmatpush1.msra.mxu0 %v3177
      %3179 = vmatprep.subr.mxu0 0.0
      %v3180 = vand.u32 %v2483, 4294901760
      %v3181 = vsub.f32 %v2483, %v3180
      %v3182 = vand.u32 %v3181, 4294901760
      %3183 = vmatpush1.msra.mxu0 %v3182
      %3184 = vmatprep.subr.mxu0 0.0
      %v3185 = vand.u32 %v2484, 4294901760
      %v3186 = vsub.f32 %v2484, %v3185
      %v3187 = vand.u32 %v3186, 4294901760
      %3188 = vmatpush1.msra.mxu0 %v3187
      %3189 = vmatprep.subr.mxu0 0.0
      %v3190 = vand.u32 %v2485, 4294901760
      %v3191 = vsub.f32 %v2485, %v3190
      %v3192 = vand.u32 %v3191, 4294901760
      %3193 = vmatpush1.msra.mxu0 %v3192
      %3194 = vmatprep.subr.mxu0 0.0
      %v3195 = vand.u32 %v2486, 4294901760
      %v3196 = vsub.f32 %v2486, %v3195
      %v3197 = vand.u32 %v3196, 4294901760
      %3198 = vmatpush1.msra.mxu0 %v3197
      %3199 = vmatprep.subr.mxu0 0.0
      %v3200 = vand.u32 %v2487, 4294901760
      %v3201 = vsub.f32 %v2487, %v3200
      %v3202 = vand.u32 %v3201, 4294901760
      %3203 = vmatpush1.msra.mxu0 %v3202
      %3204 = vmatprep.subr.mxu0 0.0
      %v3205 = vand.u32 %v2488, 4294901760
      %v3206 = vsub.f32 %v2488, %v3205
      %v3207 = vand.u32 %v3206, 4294901760
      %3208 = vmatpush1.msra.mxu0 %v3207
      %3209 = vmatprep.subr.mxu0 0.0
      %v3210 = vand.u32 %v2489, 4294901760
      %v3211 = vsub.f32 %v2489, %v3210
      %v3212 = vand.u32 %v3211, 4294901760
      %3213 = vmatpush1.msra.mxu0 %v3212
      %3214 = vmatprep.subr.mxu0 0.0
      %v3215 = vand.u32 %v2490, 4294901760
      %v3216 = vsub.f32 %v2490, %v3215
      %v3217 = vand.u32 %v3216, 4294901760
      %3218 = vmatpush1.msra.mxu0 %v3217
      %3219 = vmatprep.subr.mxu0 0.0
      %v3220 = vand.u32 %v2491, 4294901760
      %v3221 = vsub.f32 %v2491, %v3220
      %v3222 = vand.u32 %v3221, 4294901760
      %3223 = vmatpush1.msra.mxu0 %v3222
      %3224 = vmatprep.subr.mxu0 0.0
      %3225 = vmatpush1.msra.mxu0 0.0
      %3226 = vmatprep.subr.mxu0 0.0
      %3227 = vmatpush1.msra.mxu0 0.0
      %3228 = vmatprep.subr.mxu0 0.0
      %3229 = vmatpush1.msra.mxu0 0.0
      %3230 = vmatprep.subr.mxu0 0.0
      %3231 = vmatpush1.msra.mxu0 0.0
      %3232 = vmatprep.subr.mxu0 0.0
      %3233 = vmatpush1.msra.mxu0 0.0
      %3234 = vmatprep.subr.mxu0 0.0
      %3235 = vmatpush1.msra.mxu0 0.0
      %3236 = vmatprep.subr.mxu0 0.0
      %3237 = vmatpush1.msra.mxu0 0.0
      %3238 = vmatprep.subr.mxu0 0.0
      %3239 = vmatpush1.msra.mxu0 0.0
      %3240 = vmatprep.subr.mxu0 0.0
      %3241 = vmatpush1.msra.mxu0 0.0
      %3242 = vmatprep.subr.mxu0 0.0
      %3243 = vmatpush1.msra.mxu0 0.0
      %3244 = vmatprep.subr.mxu0 0.0
      %3245 = vmatpush1.msra.mxu0 0.0
      %3246 = vmatprep.subr.mxu0 0.0
      %3247 = vmatpush1.msra.mxu0 0.0
      %3248 = vmatprep.subr.mxu0 0.0
      %3249 = vmatpush1.msra.mxu0 0.0
      %3250 = vmatprep.subr.mxu0 0.0
      %3251 = vmatpush1.msra.mxu0 0.0
      %3252 = vmatprep.subr.mxu0 0.0
      %3253 = vmatpush1.msra.mxu0 0.0
      %3254 = vmatprep.subr.mxu0 0.0
      %3255 = vmatpush1.msra.mxu0 0.0
      %3256 = vmatprep.mubr.f32.mxu0 0.0
      %v3257 = vand.u32 %v239, 4294901760
      %3258 = vmatmul.mubr.f32.gmra.mrb[0].mxu0 %v3257
      %v3259 = vpop.f32.mrb[0].mxu0
      %v3260 = vadd.f32 %v3085, %v3259
      %v3261 = vpop.f32.mrb[0].mxu0
      %3262 = vmatprep.mubr.f32.mxu0 0.0
      %v3263 = vand.u32 %v240, 4294901760
      %3264 = vmatmul.mubr.f32.gmra.mrb[0].mxu0 %v3263
      %v3265 = vpop.f32.mrb[0].mxu0
      %v3266 = vadd.f32 %v3093, %v3265
      %v3267 = vpop.f32.mrb[0].mxu0
      %3268 = vmatprep.mubr.f32.mxu0 0.0
      %v3269 = vand.u32 %v241, 4294901760
      %3270 = vmatmul.mubr.f32.gmra.mrb[0].mxu0 %v3269
      %v3271 = vpop.f32.mrb[0].mxu0
      %v3272 = vadd.f32 %v3101, %v3271
      %v3273 = vpop.f32.mrb[0].mxu0
      %3274 = vmatprep.mubr.f32.mxu0 0.0
      %v3275 = vand.u32 %v242, 4294901760
      %3276 = vmatmul.mubr.f32.gmra.mrb[0].mxu0 %v3275
      %v3277 = vpop.f32.mrb[0].mxu0
      %v3278 = vadd.f32 %v3109, %v3277
      %v3279 = vpop.f32.mrb[0].mxu0
      %3280 = vmatprep.mubr.f32.mxu0 0.0
      %v3281 = vand.u32 %v243, 4294901760
      %3282 = vmatmul.mubr.f32.gmra.mrb[0].mxu0 %v3281
      %v3283 = vpop.f32.mrb[0].mxu0
      %v3284 = vadd.f32 %v3117, %v3283
      %v3285 = vpop.f32.mrb[0].mxu0
      %3286 = vmatprep.mubr.f32.mxu0 0.0
      %v3287 = vand.u32 %v244, 4294901760
      %3288 = vmatmul.mubr.f32.gmra.mrb[0].mxu0 %v3287
      %v3289 = vpop.f32.mrb[0].mxu0
      %v3290 = vadd.f32 %v3125, %v3289
      %v3291 = vpop.f32.mrb[0].mxu0
      %3292 = vmatprep.mubr.f32.mxu0 0.0
      %v3293 = vand.u32 %v245, 4294901760
      %3294 = vmatmul.mubr.f32.gmra.mrb[0].mxu0 %v3293
      %v3295 = vpop.f32.mrb[0].mxu0
      %v3296 = vadd.f32 %v3133, %v3295
      %v3297 = vpop.f32.mrb[0].mxu0
      %3298 = vmatprep.mubr.f32.mxu0 0.0
      %v3299 = vand.u32 %v246, 4294901760
      %3300 = vmatmul.mubr.f32.gmra.mrb[0].mxu0 %v3299
      %v3301 = vpop.f32.mrb[0].mxu0
      %v3302 = vadd.f32 %v3141, %v3301
      %v3303 = vpop.f32.mrb[0].mxu0
      %3304 = vdwg.mxu0
      %3305 = vmatprep.subr.mxu0 0.0
      %v3306 = vand.u32 %v2476, 4294901760
      %3307 = vmatpush1.msra.mxu0 %v3306
      %3308 = vmatprep.subr.mxu0 0.0
      %v3309 = vand.u32 %v2477, 4294901760
      %3310 = vmatpush1.msra.mxu0 %v3309
      %3311 = vmatprep.subr.mxu0 0.0
      %v3312 = vand.u32 %v2478, 4294901760
      %3313 = vmatpush1.msra.mxu0 %v3312
      %3314 = vmatprep.subr.mxu0 0.0
      %v3315 = vand.u32 %v2479, 4294901760
      %3316 = vmatpush1.msra.mxu0 %v3315
      %3317 = vmatprep.subr.mxu0 0.0
      %v3318 = vand.u32 %v2480, 4294901760
      %3319 = vmatpush1.msra.mxu0 %v3318
      %3320 = vmatprep.subr.mxu0 0.0
      %v3321 = vand.u32 %v2481, 4294901760
      %3322 = vmatpush1.msra.mxu0 %v3321
      %3323 = vmatprep.subr.mxu0 0.0
      %v3324 = vand.u32 %v2482, 4294901760
      %3325 = vmatpush1.msra.mxu0 %v3324
      %3326 = vmatprep.subr.mxu0 0.0
      %v3327 = vand.u32 %v2483, 4294901760
      %3328 = vmatpush1.msra.mxu0 %v3327
      %3329 = vmatprep.subr.mxu0 0.0
      %v3330 = vand.u32 %v2484, 4294901760
      %3331 = vmatpush1.msra.mxu0 %v3330
      %3332 = vmatprep.subr.mxu0 0.0
      %v3333 = vand.u32 %v2485, 4294901760
      %3334 = vmatpush1.msra.mxu0 %v3333
      %3335 = vmatprep.subr.mxu0 0.0
      %v3336 = vand.u32 %v2486, 4294901760
      %3337 = vmatpush1.msra.mxu0 %v3336
      %3338 = vmatprep.subr.mxu0 0.0
      %v3339 = vand.u32 %v2487, 4294901760
      %3340 = vmatpush1.msra.mxu0 %v3339
      %3341 = vmatprep.subr.mxu0 0.0
      %v3342 = vand.u32 %v2488, 4294901760
      %3343 = vmatpush1.msra.mxu0 %v3342
      %3344 = vmatprep.subr.mxu0 0.0
      %v3345 = vand.u32 %v2489, 4294901760
      %3346 = vmatpush1.msra.mxu0 %v3345
      %3347 = vmatprep.subr.mxu0 0.0
      %v3348 = vand.u32 %v2490, 4294901760
      %3349 = vmatpush1.msra.mxu0 %v3348
      %3350 = vmatprep.subr.mxu0 0.0
      %v3351 = vand.u32 %v2491, 4294901760
      %3352 = vmatpush1.msra.mxu0 %v3351
      %3353 = vmatprep.subr.mxu0 0.0
      %3354 = vmatpush1.msra.mxu0 0.0
      %3355 = vmatprep.subr.mxu0 0.0
      %3356 = vmatpush1.msra.mxu0 0.0
      %3357 = vmatprep.subr.mxu0 0.0
      %3358 = vmatpush1.msra.mxu0 0.0
      %3359 = vmatprep.subr.mxu0 0.0
      %3360 = vmatpush1.msra.mxu0 0.0
      %3361 = vmatprep.subr.mxu0 0.0
      %3362 = vmatpush1.msra.mxu0 0.0
      %3363 = vmatprep.subr.mxu0 0.0
      %3364 = vmatpush1.msra.mxu0 0.0
      %3365 = vmatprep.subr.mxu0 0.0
      %3366 = vmatpush1.msra.mxu0 0.0
      %3367 = vmatprep.subr.mxu0 0.0
      %3368 = vmatpush1.msra.mxu0 0.0
      %3369 = vmatprep.subr.mxu0 0.0
      %3370 = vmatpush1.msra.mxu0 0.0
      %3371 = vmatprep.subr.mxu0 0.0
      %3372 = vmatpush1.msra.mxu0 0.0
      %3373 = vmatprep.subr.mxu0 0.0
      %3374 = vmatpush1.msra.mxu0 0.0
      %3375 = vmatprep.subr.mxu0 0.0
      %3376 = vmatpush1.msra.mxu0 0.0
      %3377 = vmatprep.subr.mxu0 0.0
      %3378 = vmatpush1.msra.mxu0 0.0
      %3379 = vmatprep.subr.mxu0 0.0
      %3380 = vmatpush1.msra.mxu0 0.0
      %3381 = vmatprep.subr.mxu0 0.0
      %3382 = vmatpush1.msra.mxu0 0.0
      %3383 = vmatprep.subr.mxu0 0.0
      %3384 = vmatpush1.msra.mxu0 0.0
      %3385 = vmatprep.mubr.f32.mxu0 0.0
      %v3386 = vand.u32 %v239, 4294901760
      %3387 = vmatmul.mubr.f32.gmra.mrb[0].mxu0 %v3386
      %v3388 = vpop.f32.mrb[0].mxu0
      %v3389 = vadd.f32 %v3260, %v3388
      %v3390 = vpop.f32.mrb[0].mxu0
      %3391 = vmatprep.mubr.f32.mxu0 0.0
      %v3392 = vand.u32 %v240, 4294901760
      %3393 = vmatmul.mubr.f32.gmra.mrb[0].mxu0 %v3392
      %v3394 = vpop.f32.mrb[0].mxu0
      %v3395 = vadd.f32 %v3266, %v3394
      %v3396 = vpop.f32.mrb[0].mxu0
      %3397 = vmatprep.mubr.f32.mxu0 0.0
      %v3398 = vand.u32 %v241, 4294901760
      %3399 = vmatmul.mubr.f32.gmra.mrb[0].mxu0 %v3398
      %v3400 = vpop.f32.mrb[0].mxu0
      %v3401 = vadd.f32 %v3272, %v3400
      %v3402 = vpop.f32.mrb[0].mxu0
      %3403 = vmatprep.mubr.f32.mxu0 0.0
      %v3404 = vand.u32 %v242, 4294901760
      %3405 = vmatmul.mubr.f32.gmra.mrb[0].mxu0 %v3404
      %v3406 = vpop.f32.mrb[0].mxu0
      %v3407 = vadd.f32 %v3278, %v3406
      %v3408 = vpop.f32.mrb[0].mxu0
      %3409 = vmatprep.mubr.f32.mxu0 0.0
      %v3410 = vand.u32 %v243, 4294901760
      %3411 = vmatmul.mubr.f32.gmra.mrb[0].mxu0 %v3410
      %v3412 = vpop.f32.mrb[0].mxu0
      %v3413 = vadd.f32 %v3284, %v3412
      %v3414 = vpop.f32.mrb[0].mxu0
      %3415 = vmatprep.mubr.f32.mxu0 0.0
      %v3416 = vand.u32 %v244, 4294901760
      %3417 = vmatmul.mubr.f32.gmra.mrb[0].mxu0 %v3416
      %v3418 = vpop.f32.mrb[0].mxu0
      %v3419 = vadd.f32 %v3290, %v3418
      %v3420 = vpop.f32.mrb[0].mxu0
      %3421 = vmatprep.mubr.f32.mxu0 0.0
      %v3422 = vand.u32 %v245, 4294901760
      %3423 = vmatmul.mubr.f32.gmra.mrb[0].mxu0 %v3422
      %v3424 = vpop.f32.mrb[0].mxu0
      %v3425 = vadd.f32 %v3296, %v3424
      %v3426 = vpop.f32.mrb[0].mxu0
      %3427 = vmatprep.mubr.f32.mxu0 0.0
      %v3428 = vand.u32 %v246, 4294901760
      %3429 = vmatmul.mubr.f32.gmra.mrb[0].mxu0 %v3428
      %v3430 = vpop.f32.mrb[0].mxu0
      %v3431 = vadd.f32 %v3302, %v3430
      %v3432 = vpop.f32.mrb[0].mxu0
      %3433 = vdwg.mxu0
      %v3434 = vld [vmem:[%s4] sm:$0x1]
      %v3436 = vlaneseq
      %v3437 = vshrl.u32 %v3436, 7
      %v3438 = vsub.s32 0, %v3437
      %v3439 = vrot.slane %v3434, %v3438
      %v3441 = vadd.f32 %v3389, %v3439
      %v3442 = vadd.f32 %v3395, %v3439
      %v3443 = vadd.f32 %v3401, %v3439
      %v3444 = vadd.f32 %v3407, %v3439
      %v3445 = vadd.f32 %v3413, %v3439
      %v3446 = vadd.f32 %v3419, %v3439
      %v3447 = vadd.f32 %v3425, %v3439
      %v3448 = vadd.f32 %v3431, %v3439
      %v3449 = vand.u32 2147483647, %v2452
      %vm3450 = vcmp.le.f32.partialorder %v3449, 0.7853982
      %vm3451 = vcmp.lt.s32.totalorder %v2452, 0
      %v3452 = vand.u32 %v2452, 2139095040
      %v3453 = vshrl.u32 %v3452, 23
      %v3454 = vsub.s32 %v3453, 127
      %v3455 = vand.u32 2147483647, %v2452
      %v3456 = vand.u32 %v3455, 8388607
      %v3457 = vor.u32 %v3456, 8388608
      %v3458 = vsub.s32 0, %v3457
      %v3459 = vadd.s32 %v3454, 1
      %vm3460 = vcmp.gt.s32.totalorder %v3459, 0
      %v3461 = vsel %vm3460, %v3459, 0
      %v3462 = vshrl.u32 %v3461, 5
      %v3463 = vand.u32 %v3461, 31
      %v3464 = vsub.s32 32, %v3463
      %v3465 = vshrl.u32 683565275, %v3464
      %v3466 = vshll.u32 683565275, %v3463
      %v3467 = vshrl.u32 2475754826, %v3464
      %v3468 = vor.u32 %v3466, %v3467
      %v3469 = vshll.u32 2475754826, %v3463
      %v3470 = vshrl.u32 2131351028, %v3464
      %v3471 = vor.u32 %v3469, %v3470
      %v3472 = vshll.u32 2131351028, %v3463
      %v3473 = vshrl.u32 2102212464, %v3464
      %v3474 = vor.u32 %v3472, %v3473
      %v3475 = vshll.u32 2102212464, %v3463
      %v3476 = vshrl.u32 920167782, %v3464
      %v3477 = vor.u32 %v3475, %v3476
      %v3478 = vshll.u32 920167782, %v3463
      %v3479 = vshrl.u32 1326507024, %v3464
      %v3480 = vor.u32 %v3478, %v3479
      %vm3481 = vcmp.lt.s32.totalorder %v3462, 1
      %vm3482 = vcmp.lt.s32.totalorder %v3462, 2
      %vm3483 = vcmp.lt.s32.totalorder %v3462, 3
      %vm3484 = vcmp.lt.s32.totalorder %v3462, 4
      %v3485 = vsel %vm3481, %v3465, %v3468
      %v3486 = vsel %vm3484, %v3474, 2102212464
      %v3487 = vsel %vm3483, %v3471, %v3486
      %v3488 = vsel %vm3482, %v3485, %v3487
      %v3489 = vsel %vm3481, %v3468, %v3471
      %v3490 = vsel %vm3484, %v3477, 920167782
      %v3491 = vsel %vm3483, %v3474, %v3490
      %v3492 = vsel %vm3482, %v3489, %v3491
      %v3493 = vsel %vm3481, %v3471, %v3474
      %v3494 = vsel %vm3484, %v3480, 1326507024
      %v3495 = vsel %vm3483, %v3477, %v3494
      %v3496 = vsel %vm3482, %v3493, %v3495
      %v3497 = vshll.u32 %v3457, 8
      %v3498 = vmul.u32.u64.compose %v3497, %v3496
      %v3499 = vextract.low.u32 %v3498
      %v3500 = vextract.high.u32 %v3498
      %v3501 = vmul.u32.u64.compose %v3497, %v3492
      %v3502 = vextract.low.u32 %v3501
      %v3503 = vextract.high.u32 %v3501
      %v3504 = vmul.u32 %v3497, %v3488
      %v3505 = vadd.s32 %v3500, %v3502
      %vm3506 = vc.u32 %v3500, %v3502
      %v3507 = vadd.s32 %v3503, 1
      %v3508 = vsel %vm3506, %v3507, %v3503
      %v3509 = vadd.s32 %v3504, %v3508
      %v3510 = vadd.s32 %v3509, 536870912
      %v3511 = vshrl.u32 %v3510, 30
      %v3512 = vshll.u32 %v3511, 30
      %v3513 = vsub.s32 %v3509, %v3512
      %vm3514 = vcmp.lt.s32.totalorder %v3513, 0
      %v3515 = vsub.s32 0, %v3513
      %v3516 = vsel %vm3514, %v3515, %v3513
      %v3517 = vclz %v3516
      %v3518 = vsub.s32 %v3517, 2
      %vm3519 = vcmp.gt.s32.totalorder 0, %v3518
      %v3520 = vsel %vm3519, 0, %v3518
      %v3521 = vsub.s32 32, %v3520
      %v3522 = vshll.u32 %v3513, %v3520
      %v3523 = vshrl.u32 %v3505, %v3521
      %v3524 = vor.u32 %v3522, %v3523
      %v3525 = vsub.s32 4294967266, %v3520
      %v3526 = vadd.s32 %v3525, 127
      %v3527 = vshll.u32 %v3526, 23
      %v3528 = vor.u32 4788187, %v3527
      %v3529 = vand.u32 2147483647, %v3528
      %v3531 = vcvt.s32.f32 %v3524
      %v3532 = vmul.f32 %v3531, %v3529
      %v3533 = vxor.u32 %v3532, 2147483648
      %v3534 = vsel %vm3451, %v3533, %v3532
      %v3535 = vsub.s32 4, %v3511
      %v3536 = vsel %vm3451, %v3535, %v3511
      %v3537 = vsel %vm3450, %v2452, %v3534
      %v3538 = vsel %vm3450, 0, %v3536
      %v3539 = vcosq.f32.pop %v3537
      %v3540 = vsinq.f32.pop %v3537
      %vm3541 = vweird.f32 %v2452
      %v3542 = vadd.s32 %v3538, 3
      %v3543 = vand.u32 %v3542, 3
      %vm3544 = vcmp.lt.s32.totalorder %v3543, 2
      %vm3545 = vcmp.eq.s32.totalorder %v3543, 0
      %v3546 = vxor.u32 %v3540, 2147483648
      %v3547 = vsel %vm3545, %v3539, %v3546
      %vm3548 = vcmp.eq.s32.totalorder %v3543, 2
      %v3549 = vxor.u32 %v3539, 2147483648
      %v3550 = vsel %vm3548, %v3549, %v3540
      %v3551 = vsel %vm3544, %v3547, %v3550
      %v3552 = vsel %vm3541, nan, %v3551
      %v3553 = vand.u32 2147483647, %v2453
      %vm3554 = vcmp.le.f32.partialorder %v3553, 0.7853982
      %vm3555 = vcmp.lt.s32.totalorder %v2453, 0
      %v3556 = vand.u32 %v2453, 2139095040
      %v3557 = vshrl.u32 %v3556, 23
      %v3558 = vsub.s32 %v3557, 127
      %v3559 = vand.u32 2147483647, %v2453
      %v3560 = vand.u32 %v3559, 8388607
      %v3561 = vor.u32 %v3560, 8388608
      %v3562 = vsub.s32 0, %v3561
      %v3563 = vadd.s32 %v3558, 1
      %vm3564 = vcmp.gt.s32.totalorder %v3563, 0
      %v3565 = vsel %vm3564, %v3563, 0
      %v3566 = vshrl.u32 %v3565, 5
      %v3567 = vand.u32 %v3565, 31
      %v3568 = vsub.s32 32, %v3567
      %v3569 = vshrl.u32 683565275, %v3568
      %v3570 = vshll.u32 683565275, %v3567
      %v3571 = vshrl.u32 2475754826, %v3568
      %v3572 = vor.u32 %v3570, %v3571
      %v3573 = vshll.u32 2475754826, %v3567
      %v3574 = vshrl.u32 2131351028, %v3568
      %v3575 = vor.u32 %v3573, %v3574
      %v3576 = vshll.u32 2131351028, %v3567
      %v3577 = vshrl.u32 2102212464, %v3568
      %v3578 = vor.u32 %v3576, %v3577
      %v3579 = vshll.u32 2102212464, %v3567
      %v3580 = vshrl.u32 920167782, %v3568
      %v3581 = vor.u32 %v3579, %v3580
      %v3582 = vshll.u32 920167782, %v3567
      %v3583 = vshrl.u32 1326507024, %v3568
      %v3584 = vor.u32 %v3582, %v3583
      %vm3585 = vcmp.lt.s32.totalorder %v3566, 1
      %vm3586 = vcmp.lt.s32.totalorder %v3566, 2
      %vm3587 = vcmp.lt.s32.totalorder %v3566, 3
      %vm3588 = vcmp.lt.s32.totalorder %v3566, 4
      %v3589 = vsel %vm3585, %v3569, %v3572
      %v3590 = vsel %vm3588, %v3578, 2102212464
      %v3591 = vsel %vm3587, %v3575, %v3590
      %v3592 = vsel %vm3586, %v3589, %v3591
      %v3593 = vsel %vm3585, %v3572, %v3575
      %v3594 = vsel %vm3588, %v3581, 920167782
      %v3595 = vsel %vm3587, %v3578, %v3594
      %v3596 = vsel %vm3586, %v3593, %v3595
      %v3597 = vsel %vm3585, %v3575, %v3578
      %v3598 = vsel %vm3588, %v3584, 1326507024
      %v3599 = vsel %vm3587, %v3581, %v3598
      %v3600 = vsel %vm3586, %v3597, %v3599
      %v3601 = vshll.u32 %v3561, 8
      %v3602 = vmul.u32.u64.compose %v3601, %v3600
      %v3603 = vextract.low.u32 %v3602
      %v3604 = vextract.high.u32 %v3602
      %v3605 = vmul.u32.u64.compose %v3601, %v3596
      %v3606 = vextract.low.u32 %v3605
      %v3607 = vextract.high.u32 %v3605
      %v3608 = vmul.u32 %v3601, %v3592
      %v3609 = vadd.s32 %v3604, %v3606
      %vm3610 = vc.u32 %v3604, %v3606
      %v3611 = vadd.s32 %v3607, 1
      %v3612 = vsel %vm3610, %v3611, %v3607
      %v3613 = vadd.s32 %v3608, %v3612
      %v3614 = vadd.s32 %v3613, 536870912
      %v3615 = vshrl.u32 %v3614, 30
      %v3616 = vshll.u32 %v3615, 30
      %v3617 = vsub.s32 %v3613, %v3616
      %vm3618 = vcmp.lt.s32.totalorder %v3617, 0
      %v3619 = vsub.s32 0, %v3617
      %v3620 = vsel %vm3618, %v3619, %v3617
      %v3621 = vclz %v3620
      %v3622 = vsub.s32 %v3621, 2
      %vm3623 = vcmp.gt.s32.totalorder 0, %v3622
      %v3624 = vsel %vm3623, 0, %v3622
      %v3625 = vsub.s32 32, %v3624
      %v3626 = vshll.u32 %v3617, %v3624
      %v3627 = vshrl.u32 %v3609, %v3625
      %v3628 = vor.u32 %v3626, %v3627
      %v3629 = vsub.s32 4294967266, %v3624
      %v3630 = vadd.s32 %v3629, 127
      %v3631 = vshll.u32 %v3630, 23
      %v3632 = vor.u32 4788187, %v3631
      %v3633 = vand.u32 2147483647, %v3632
      %v3635 = vcvt.s32.f32 %v3628
      %v3636 = vmul.f32 %v3635, %v3633
      %v3637 = vxor.u32 %v3636, 2147483648
      %v3638 = vsel %vm3555, %v3637, %v3636
      %v3639 = vsub.s32 4, %v3615
      %v3640 = vsel %vm3555, %v3639, %v3615
      %v3641 = vsel %vm3554, %v2453, %v3638
      %v3642 = vsel %vm3554, 0, %v3640
      %v3643 = vcosq.f32.pop %v3641
      %v3644 = vsinq.f32.pop %v3641
      %vm3645 = vweird.f32 %v2453
      %v3646 = vadd.s32 %v3642, 3
      %v3647 = vand.u32 %v3646, 3
      %vm3648 = vcmp.lt.s32.totalorder %v3647, 2
      %vm3649 = vcmp.eq.s32.totalorder %v3647, 0
      %v3650 = vxor.u32 %v3644, 2147483648
      %v3651 = vsel %vm3649, %v3643, %v3650
      %vm3652 = vcmp.eq.s32.totalorder %v3647, 2
      %v3653 = vxor.u32 %v3643, 2147483648
      %v3654 = vsel %vm3652, %v3653, %v3644
      %v3655 = vsel %vm3648, %v3651, %v3654
      %v3656 = vsel %vm3645, nan, %v3655
      %v3657 = vand.u32 2147483647, %v2454
      %vm3658 = vcmp.le.f32.partialorder %v3657, 0.7853982
      %vm3659 = vcmp.lt.s32.totalorder %v2454, 0
      %v3660 = vand.u32 %v2454, 2139095040
      %v3661 = vshrl.u32 %v3660, 23
      %v3662 = vsub.s32 %v3661, 127
      %v3663 = vand.u32 2147483647, %v2454
      %v3664 = vand.u32 %v3663, 8388607
      %v3665 = vor.u32 %v3664, 8388608
      %v3666 = vsub.s32 0, %v3665
      %v3667 = vadd.s32 %v3662, 1
      %vm3668 = vcmp.gt.s32.totalorder %v3667, 0
      %v3669 = vsel %vm3668, %v3667, 0
      %v3670 = vshrl.u32 %v3669, 5
      %v3671 = vand.u32 %v3669, 31
      %v3672 = vsub.s32 32, %v3671
      %v3673 = vshrl.u32 683565275, %v3672
      %v3674 = vshll.u32 683565275, %v3671
      %v3675 = vshrl.u32 2475754826, %v3672
      %v3676 = vor.u32 %v3674, %v3675
      %v3677 = vshll.u32 2475754826, %v3671
      %v3678 = vshrl.u32 2131351028, %v3672
      %v3679 = vor.u32 %v3677, %v3678
      %v3680 = vshll.u32 2131351028, %v3671
      %v3681 = vshrl.u32 2102212464, %v3672
      %v3682 = vor.u32 %v3680, %v3681
      %v3683 = vshll.u32 2102212464, %v3671
      %v3684 = vshrl.u32 920167782, %v3672
      %v3685 = vor.u32 %v3683, %v3684
      %v3686 = vshll.u32 920167782, %v3671
      %v3687 = vshrl.u32 1326507024, %v3672
      %v3688 = vor.u32 %v3686, %v3687
      %vm3689 = vcmp.lt.s32.totalorder %v3670, 1
      %vm3690 = vcmp.lt.s32.totalorder %v3670, 2
      %vm3691 = vcmp.lt.s32.totalorder %v3670, 3
      %vm3692 = vcmp.lt.s32.totalorder %v3670, 4
      %v3693 = vsel %vm3689, %v3673, %v3676
      %v3694 = vsel %vm3692, %v3682, 2102212464
      %v3695 = vsel %vm3691, %v3679, %v3694
      %v3696 = vsel %vm3690, %v3693, %v3695
      %v3697 = vsel %vm3689, %v3676, %v3679
      %v3698 = vsel %vm3692, %v3685, 920167782
      %v3699 = vsel %vm3691, %v3682, %v3698
      %v3700 = vsel %vm3690, %v3697, %v3699
      %v3701 = vsel %vm3689, %v3679, %v3682
      %v3702 = vsel %vm3692, %v3688, 1326507024
      %v3703 = vsel %vm3691, %v3685, %v3702
      %v3704 = vsel %vm3690, %v3701, %v3703
      %v3705 = vshll.u32 %v3665, 8
      %v3706 = vmul.u32.u64.compose %v3705, %v3704
      %v3707 = vextract.low.u32 %v3706
      %v3708 = vextract.high.u32 %v3706
      %v3709 = vmul.u32.u64.compose %v3705, %v3700
      %v3710 = vextract.low.u32 %v3709
      %v3711 = vextract.high.u32 %v3709
      %v3712 = vmul.u32 %v3705, %v3696
      %v3713 = vadd.s32 %v3708, %v3710
      %vm3714 = vc.u32 %v3708, %v3710
      %v3715 = vadd.s32 %v3711, 1
      %v3716 = vsel %vm3714, %v3715, %v3711
      %v3717 = vadd.s32 %v3712, %v3716
      %v3718 = vadd.s32 %v3717, 536870912
      %v3719 = vshrl.u32 %v3718, 30
      %v3720 = vshll.u32 %v3719, 30
      %v3721 = vsub.s32 %v3717, %v3720
      %vm3722 = vcmp.lt.s32.totalorder %v3721, 0
      %v3723 = vsub.s32 0, %v3721
      %v3724 = vsel %vm3722, %v3723, %v3721
      %v3725 = vclz %v3724
      %v3726 = vsub.s32 %v3725, 2
      %vm3727 = vcmp.gt.s32.totalorder 0, %v3726
      %v3728 = vsel %vm3727, 0, %v3726
      %v3729 = vsub.s32 32, %v3728
      %v3730 = vshll.u32 %v3721, %v3728
      %v3731 = vshrl.u32 %v3713, %v3729
      %v3732 = vor.u32 %v3730, %v3731
      %v3733 = vsub.s32 4294967266, %v3728
      %v3734 = vadd.s32 %v3733, 127
      %v3735 = vshll.u32 %v3734, 23
      %v3736 = vor.u32 4788187, %v3735
      %v3737 = vand.u32 2147483647, %v3736
      %v3739 = vcvt.s32.f32 %v3732
      %v3740 = vmul.f32 %v3739, %v3737
      %v3741 = vxor.u32 %v3740, 2147483648
      %v3742 = vsel %vm3659, %v3741, %v3740
      %v3743 = vsub.s32 4, %v3719
      %v3744 = vsel %vm3659, %v3743, %v3719
      %v3745 = vsel %vm3658, %v2454, %v3742
      %v3746 = vsel %vm3658, 0, %v3744
      %v3747 = vcosq.f32.pop %v3745
      %v3748 = vsinq.f32.pop %v3745
      %vm3749 = vweird.f32 %v2454
      %v3750 = vadd.s32 %v3746, 3
      %v3751 = vand.u32 %v3750, 3
      %vm3752 = vcmp.lt.s32.totalorder %v3751, 2
      %vm3753 = vcmp.eq.s32.totalorder %v3751, 0
      %v3754 = vxor.u32 %v3748, 2147483648
      %v3755 = vsel %vm3753, %v3747, %v3754
      %vm3756 = vcmp.eq.s32.totalorder %v3751, 2
      %v3757 = vxor.u32 %v3747, 2147483648
      %v3758 = vsel %vm3756, %v3757, %v3748
      %v3759 = vsel %vm3752, %v3755, %v3758
      %v3760 = vsel %vm3749, nan, %v3759
      %v3761 = vand.u32 2147483647, %v2455
      %vm3762 = vcmp.le.f32.partialorder %v3761, 0.7853982
      %vm3763 = vcmp.lt.s32.totalorder %v2455, 0
      %v3764 = vand.u32 %v2455, 2139095040
      %v3765 = vshrl.u32 %v3764, 23
      %v3766 = vsub.s32 %v3765, 127
      %v3767 = vand.u32 2147483647, %v2455
      %v3768 = vand.u32 %v3767, 8388607
      %v3769 = vor.u32 %v3768, 8388608
      %v3770 = vsub.s32 0, %v3769
      %v3771 = vadd.s32 %v3766, 1
      %vm3772 = vcmp.gt.s32.totalorder %v3771, 0
      %v3773 = vsel %vm3772, %v3771, 0
      %v3774 = vshrl.u32 %v3773, 5
      %v3775 = vand.u32 %v3773, 31
      %v3776 = vsub.s32 32, %v3775
      %v3777 = vshrl.u32 683565275, %v3776
      %v3778 = vshll.u32 683565275, %v3775
      %v3779 = vshrl.u32 2475754826, %v3776
      %v3780 = vor.u32 %v3778, %v3779
      %v3781 = vshll.u32 2475754826, %v3775
      %v3782 = vshrl.u32 2131351028, %v3776
      %v3783 = vor.u32 %v3781, %v3782
      %v3784 = vshll.u32 2131351028, %v3775
      %v3785 = vshrl.u32 2102212464, %v3776
      %v3786 = vor.u32 %v3784, %v3785
      %v3787 = vshll.u32 2102212464, %v3775
      %v3788 = vshrl.u32 920167782, %v3776
      %v3789 = vor.u32 %v3787, %v3788
      %v3790 = vshll.u32 920167782, %v3775
      %v3791 = vshrl.u32 1326507024, %v3776
      %v3792 = vor.u32 %v3790, %v3791
      %vm3793 = vcmp.lt.s32.totalorder %v3774, 1
      %vm3794 = vcmp.lt.s32.totalorder %v3774, 2
      %vm3795 = vcmp.lt.s32.totalorder %v3774, 3
      %vm3796 = vcmp.lt.s32.totalorder %v3774, 4
      %v3797 = vsel %vm3793, %v3777, %v3780
      %v3798 = vsel %vm3796, %v3786, 2102212464
      %v3799 = vsel %vm3795, %v3783, %v3798
      %v3800 = vsel %vm3794, %v3797, %v3799
      %v3801 = vsel %vm3793, %v3780, %v3783
      %v3802 = vsel %vm3796, %v3789, 920167782
      %v3803 = vsel %vm3795, %v3786, %v3802
      %v3804 = vsel %vm3794, %v3801, %v3803
      %v3805 = vsel %vm3793, %v3783, %v3786
      %v3806 = vsel %vm3796, %v3792, 1326507024
      %v3807 = vsel %vm3795, %v3789, %v3806
      %v3808 = vsel %vm3794, %v3805, %v3807
      %v3809 = vshll.u32 %v3769, 8
      %v3810 = vmul.u32.u64.compose %v3809, %v3808
      %v3811 = vextract.low.u32 %v3810
      %v3812 = vextract.high.u32 %v3810
      %v3813 = vmul.u32.u64.compose %v3809, %v3804
      %v3814 = vextract.low.u32 %v3813
      %v3815 = vextract.high.u32 %v3813
      %v3816 = vmul.u32 %v3809, %v3800
      %v3817 = vadd.s32 %v3812, %v3814
      %vm3818 = vc.u32 %v3812, %v3814
      %v3819 = vadd.s32 %v3815, 1
      %v3820 = vsel %vm3818, %v3819, %v3815
      %v3821 = vadd.s32 %v3816, %v3820
      %v3822 = vadd.s32 %v3821, 536870912
      %v3823 = vshrl.u32 %v3822, 30
      %v3824 = vshll.u32 %v3823, 30
      %v3825 = vsub.s32 %v3821, %v3824
      %vm3826 = vcmp.lt.s32.totalorder %v3825, 0
      %v3827 = vsub.s32 0, %v3825
      %v3828 = vsel %vm3826, %v3827, %v3825
      %v3829 = vclz %v3828
      %v3830 = vsub.s32 %v3829, 2
      %vm3831 = vcmp.gt.s32.totalorder 0, %v3830
      %v3832 = vsel %vm3831, 0, %v3830
      %v3833 = vsub.s32 32, %v3832
      %v3834 = vshll.u32 %v3825, %v3832
      %v3835 = vshrl.u32 %v3817, %v3833
      %v3836 = vor.u32 %v3834, %v3835
      %v3837 = vsub.s32 4294967266, %v3832
      %v3838 = vadd.s32 %v3837, 127
      %v3839 = vshll.u32 %v3838, 23
      %v3840 = vor.u32 4788187, %v3839
      %v3841 = vand.u32 2147483647, %v3840
      %v3843 = vcvt.s32.f32 %v3836
      %v3844 = vmul.f32 %v3843, %v3841
      %v3845 = vxor.u32 %v3844, 2147483648
      %v3846 = vsel %vm3763, %v3845, %v3844
      %v3847 = vsub.s32 4, %v3823
      %v3848 = vsel %vm3763, %v3847, %v3823
      %v3849 = vsel %vm3762, %v2455, %v3846
      %v3850 = vsel %vm3762, 0, %v3848
      %v3851 = vcosq.f32.pop %v3849
      %v3852 = vsinq.f32.pop %v3849
      %vm3853 = vweird.f32 %v2455
      %v3854 = vadd.s32 %v3850, 3
      %v3855 = vand.u32 %v3854, 3
      %vm3856 = vcmp.lt.s32.totalorder %v3855, 2
      %vm3857 = vcmp.eq.s32.totalorder %v3855, 0
      %v3858 = vxor.u32 %v3852, 2147483648
      %v3859 = vsel %vm3857, %v3851, %v3858
      %vm3860 = vcmp.eq.s32.totalorder %v3855, 2
      %v3861 = vxor.u32 %v3851, 2147483648
      %v3862 = vsel %vm3860, %v3861, %v3852
      %v3863 = vsel %vm3856, %v3859, %v3862
      %v3864 = vsel %vm3853, nan, %v3863
      %v3865 = vand.u32 2147483647, %v2456
      %vm3866 = vcmp.le.f32.partialorder %v3865, 0.7853982
      %vm3867 = vcmp.lt.s32.totalorder %v2456, 0
      %v3868 = vand.u32 %v2456, 2139095040
      %v3869 = vshrl.u32 %v3868, 23
      %v3870 = vsub.s32 %v3869, 127
      %v3871 = vand.u32 2147483647, %v2456
      %v3872 = vand.u32 %v3871, 8388607
      %v3873 = vor.u32 %v3872, 8388608
      %v3874 = vsub.s32 0, %v3873
      %v3875 = vadd.s32 %v3870, 1
      %vm3876 = vcmp.gt.s32.totalorder %v3875, 0
      %v3877 = vsel %vm3876, %v3875, 0
      %v3878 = vshrl.u32 %v3877, 5
      %v3879 = vand.u32 %v3877, 31
      %v3880 = vsub.s32 32, %v3879
      %v3881 = vshrl.u32 683565275, %v3880
      %v3882 = vshll.u32 683565275, %v3879
      %v3883 = vshrl.u32 2475754826, %v3880
      %v3884 = vor.u32 %v3882, %v3883
      %v3885 = vshll.u32 2475754826, %v3879
      %v3886 = vshrl.u32 2131351028, %v3880
      %v3887 = vor.u32 %v3885, %v3886
      %v3888 = vshll.u32 2131351028, %v3879
      %v3889 = vshrl.u32 2102212464, %v3880
      %v3890 = vor.u32 %v3888, %v3889
      %v3891 = vshll.u32 2102212464, %v3879
      %v3892 = vshrl.u32 920167782, %v3880
      %v3893 = vor.u32 %v3891, %v3892
      %v3894 = vshll.u32 920167782, %v3879
      %v3895 = vshrl.u32 1326507024, %v3880
      %v3896 = vor.u32 %v3894, %v3895
      %vm3897 = vcmp.lt.s32.totalorder %v3878, 1
      %vm3898 = vcmp.lt.s32.totalorder %v3878, 2
      %vm3899 = vcmp.lt.s32.totalorder %v3878, 3
      %vm3900 = vcmp.lt.s32.totalorder %v3878, 4
      %v3901 = vsel %vm3897, %v3881, %v3884
      %v3902 = vsel %vm3900, %v3890, 2102212464
      %v3903 = vsel %vm3899, %v3887, %v3902
      %v3904 = vsel %vm3898, %v3901, %v3903
      %v3905 = vsel %vm3897, %v3884, %v3887
      %v3906 = vsel %vm3900, %v3893, 920167782
      %v3907 = vsel %vm3899, %v3890, %v3906
      %v3908 = vsel %vm3898, %v3905, %v3907
      %v3909 = vsel %vm3897, %v3887, %v3890
      %v3910 = vsel %vm3900, %v3896, 1326507024
      %v3911 = vsel %vm3899, %v3893, %v3910
      %v3912 = vsel %vm3898, %v3909, %v3911
      %v3913 = vshll.u32 %v3873, 8
      %v3914 = vmul.u32.u64.compose %v3913, %v3912
      %v3915 = vextract.low.u32 %v3914
      %v3916 = vextract.high.u32 %v3914
      %v3917 = vmul.u32.u64.compose %v3913, %v3908
      %v3918 = vextract.low.u32 %v3917
      %v3919 = vextract.high.u32 %v3917
      %v3920 = vmul.u32 %v3913, %v3904
      %v3921 = vadd.s32 %v3916, %v3918
      %vm3922 = vc.u32 %v3916, %v3918
      %v3923 = vadd.s32 %v3919, 1
      %v3924 = vsel %vm3922, %v3923, %v3919
      %v3925 = vadd.s32 %v3920, %v3924
      %v3926 = vadd.s32 %v3925, 536870912
      %v3927 = vshrl.u32 %v3926, 30
      %v3928 = vshll.u32 %v3927, 30
      %v3929 = vsub.s32 %v3925, %v3928
      %vm3930 = vcmp.lt.s32.totalorder %v3929, 0
      %v3931 = vsub.s32 0, %v3929
      %v3932 = vsel %vm3930, %v3931, %v3929
      %v3933 = vclz %v3932
      %v3934 = vsub.s32 %v3933, 2
      %vm3935 = vcmp.gt.s32.totalorder 0, %v3934
      %v3936 = vsel %vm3935, 0, %v3934
      %v3937 = vsub.s32 32, %v3936
      %v3938 = vshll.u32 %v3929, %v3936
      %v3939 = vshrl.u32 %v3921, %v3937
      %v3940 = vor.u32 %v3938, %v3939
      %v3941 = vsub.s32 4294967266, %v3936
      %v3942 = vadd.s32 %v3941, 127
      %v3943 = vshll.u32 %v3942, 23
      %v3944 = vor.u32 4788187, %v3943
      %v3945 = vand.u32 2147483647, %v3944
      %v3947 = vcvt.s32.f32 %v3940
      %v3948 = vmul.f32 %v3947, %v3945
      %v3949 = vxor.u32 %v3948, 2147483648
      %v3950 = vsel %vm3867, %v3949, %v3948
      %v3951 = vsub.s32 4, %v3927
      %v3952 = vsel %vm3867, %v3951, %v3927
      %v3953 = vsel %vm3866, %v2456, %v3950
      %v3954 = vsel %vm3866, 0, %v3952
      %v3955 = vcosq.f32.pop %v3953
      %v3956 = vsinq.f32.pop %v3953
      %vm3957 = vweird.f32 %v2456
      %v3958 = vadd.s32 %v3954, 3
      %v3959 = vand.u32 %v3958, 3
      %vm3960 = vcmp.lt.s32.totalorder %v3959, 2
      %vm3961 = vcmp.eq.s32.totalorder %v3959, 0
      %v3962 = vxor.u32 %v3956, 2147483648
      %v3963 = vsel %vm3961, %v3955, %v3962
      %vm3964 = vcmp.eq.s32.totalorder %v3959, 2
      %v3965 = vxor.u32 %v3955, 2147483648
      %v3966 = vsel %vm3964, %v3965, %v3956
      %v3967 = vsel %vm3960, %v3963, %v3966
      %v3968 = vsel %vm3957, nan, %v3967
      %v3969 = vand.u32 2147483647, %v2457
      %vm3970 = vcmp.le.f32.partialorder %v3969, 0.7853982
      %vm3971 = vcmp.lt.s32.totalorder %v2457, 0
      %v3972 = vand.u32 %v2457, 2139095040
      %v3973 = vshrl.u32 %v3972, 23
      %v3974 = vsub.s32 %v3973, 127
      %v3975 = vand.u32 2147483647, %v2457
      %v3976 = vand.u32 %v3975, 8388607
      %v3977 = vor.u32 %v3976, 8388608
      %v3978 = vsub.s32 0, %v3977
      %v3979 = vadd.s32 %v3974, 1
      %vm3980 = vcmp.gt.s32.totalorder %v3979, 0
      %v3981 = vsel %vm3980, %v3979, 0
      %v3982 = vshrl.u32 %v3981, 5
      %v3983 = vand.u32 %v3981, 31
      %v3984 = vsub.s32 32, %v3983
      %v3985 = vshrl.u32 683565275, %v3984
      %v3986 = vshll.u32 683565275, %v3983
      %v3987 = vshrl.u32 2475754826, %v3984
      %v3988 = vor.u32 %v3986, %v3987
      %v3989 = vshll.u32 2475754826, %v3983
      %v3990 = vshrl.u32 2131351028, %v3984
      %v3991 = vor.u32 %v3989, %v3990
      %v3992 = vshll.u32 2131351028, %v3983
      %v3993 = vshrl.u32 2102212464, %v3984
      %v3994 = vor.u32 %v3992, %v3993
      %v3995 = vshll.u32 2102212464, %v3983
      %v3996 = vshrl.u32 920167782, %v3984
      %v3997 = vor.u32 %v3995, %v3996
      %v3998 = vshll.u32 920167782, %v3983
      %v3999 = vshrl.u32 1326507024, %v3984
      %v4000 = vor.u32 %v3998, %v3999
      %vm4001 = vcmp.lt.s32.totalorder %v3982, 1
      %vm4002 = vcmp.lt.s32.totalorder %v3982, 2
      %vm4003 = vcmp.lt.s32.totalorder %v3982, 3
      %vm4004 = vcmp.lt.s32.totalorder %v3982, 4
      %v4005 = vsel %vm4001, %v3985, %v3988
      %v4006 = vsel %vm4004, %v3994, 2102212464
      %v4007 = vsel %vm4003, %v3991, %v4006
      %v4008 = vsel %vm4002, %v4005, %v4007
      %v4009 = vsel %vm4001, %v3988, %v3991
      %v4010 = vsel %vm4004, %v3997, 920167782
      %v4011 = vsel %vm4003, %v3994, %v4010
      %v4012 = vsel %vm4002, %v4009, %v4011
      %v4013 = vsel %vm4001, %v3991, %v3994
      %v4014 = vsel %vm4004, %v4000, 1326507024
      %v4015 = vsel %vm4003, %v3997, %v4014
      %v4016 = vsel %vm4002, %v4013, %v4015
      %v4017 = vshll.u32 %v3977, 8
      %v4018 = vmul.u32.u64.compose %v4017, %v4016
      %v4019 = vextract.low.u32 %v4018
      %v4020 = vextract.high.u32 %v4018
      %v4021 = vmul.u32.u64.compose %v4017, %v4012
      %v4022 = vextract.low.u32 %v4021
      %v4023 = vextract.high.u32 %v4021
      %v4024 = vmul.u32 %v4017, %v4008
      %v4025 = vadd.s32 %v4020, %v4022
      %vm4026 = vc.u32 %v4020, %v4022
      %v4027 = vadd.s32 %v4023, 1
      %v4028 = vsel %vm4026, %v4027, %v4023
      %v4029 = vadd.s32 %v4024, %v4028
      %v4030 = vadd.s32 %v4029, 536870912
      %v4031 = vshrl.u32 %v4030, 30
      %v4032 = vshll.u32 %v4031, 30
      %v4033 = vsub.s32 %v4029, %v4032
      %vm4034 = vcmp.lt.s32.totalorder %v4033, 0
      %v4035 = vsub.s32 0, %v4033
      %v4036 = vsel %vm4034, %v4035, %v4033
      %v4037 = vclz %v4036
      %v4038 = vsub.s32 %v4037, 2
      %vm4039 = vcmp.gt.s32.totalorder 0, %v4038
      %v4040 = vsel %vm4039, 0, %v4038
      %v4041 = vsub.s32 32, %v4040
      %v4042 = vshll.u32 %v4033, %v4040
      %v4043 = vshrl.u32 %v4025, %v4041
      %v4044 = vor.u32 %v4042, %v4043
      %v4045 = vsub.s32 4294967266, %v4040
      %v4046 = vadd.s32 %v4045, 127
      %v4047 = vshll.u32 %v4046, 23
      %v4048 = vor.u32 4788187, %v4047
      %v4049 = vand.u32 2147483647, %v4048
      %v4051 = vcvt.s32.f32 %v4044
      %v4052 = vmul.f32 %v4051, %v4049
      %v4053 = vxor.u32 %v4052, 2147483648
      %v4054 = vsel %vm3971, %v4053, %v4052
      %v4055 = vsub.s32 4, %v4031
      %v4056 = vsel %vm3971, %v4055, %v4031
      %v4057 = vsel %vm3970, %v2457, %v4054
      %v4058 = vsel %vm3970, 0, %v4056
      %v4059 = vcosq.f32.pop %v4057
      %v4060 = vsinq.f32.pop %v4057
      %vm4061 = vweird.f32 %v2457
      %v4062 = vadd.s32 %v4058, 3
      %v4063 = vand.u32 %v4062, 3
      %vm4064 = vcmp.lt.s32.totalorder %v4063, 2
      %vm4065 = vcmp.eq.s32.totalorder %v4063, 0
      %v4066 = vxor.u32 %v4060, 2147483648
      %v4067 = vsel %vm4065, %v4059, %v4066
      %vm4068 = vcmp.eq.s32.totalorder %v4063, 2
      %v4069 = vxor.u32 %v4059, 2147483648
      %v4070 = vsel %vm4068, %v4069, %v4060
      %v4071 = vsel %vm4064, %v4067, %v4070
      %v4072 = vsel %vm4061, nan, %v4071
      %v4073 = vand.u32 2147483647, %v2458
      %vm4074 = vcmp.le.f32.partialorder %v4073, 0.7853982
      %vm4075 = vcmp.lt.s32.totalorder %v2458, 0
      %v4076 = vand.u32 %v2458, 2139095040
      %v4077 = vshrl.u32 %v4076, 23
      %v4078 = vsub.s32 %v4077, 127
      %v4079 = vand.u32 2147483647, %v2458
      %v4080 = vand.u32 %v4079, 8388607
      %v4081 = vor.u32 %v4080, 8388608
      %v4082 = vsub.s32 0, %v4081
      %v4083 = vadd.s32 %v4078, 1
      %vm4084 = vcmp.gt.s32.totalorder %v4083, 0
      %v4085 = vsel %vm4084, %v4083, 0
      %v4086 = vshrl.u32 %v4085, 5
      %v4087 = vand.u32 %v4085, 31
      %v4088 = vsub.s32 32, %v4087
      %v4089 = vshrl.u32 683565275, %v4088
      %v4090 = vshll.u32 683565275, %v4087
      %v4091 = vshrl.u32 2475754826, %v4088
      %v4092 = vor.u32 %v4090, %v4091
      %v4093 = vshll.u32 2475754826, %v4087
      %v4094 = vshrl.u32 2131351028, %v4088
      %v4095 = vor.u32 %v4093, %v4094
      %v4096 = vshll.u32 2131351028, %v4087
      %v4097 = vshrl.u32 2102212464, %v4088
      %v4098 = vor.u32 %v4096, %v4097
      %v4099 = vshll.u32 2102212464, %v4087
      %v4100 = vshrl.u32 920167782, %v4088
      %v4101 = vor.u32 %v4099, %v4100
      %v4102 = vshll.u32 920167782, %v4087
      %v4103 = vshrl.u32 1326507024, %v4088
      %v4104 = vor.u32 %v4102, %v4103
      %vm4105 = vcmp.lt.s32.totalorder %v4086, 1
      %vm4106 = vcmp.lt.s32.totalorder %v4086, 2
      %vm4107 = vcmp.lt.s32.totalorder %v4086, 3
      %vm4108 = vcmp.lt.s32.totalorder %v4086, 4
      %v4109 = vsel %vm4105, %v4089, %v4092
      %v4110 = vsel %vm4108, %v4098, 2102212464
      %v4111 = vsel %vm4107, %v4095, %v4110
      %v4112 = vsel %vm4106, %v4109, %v4111
      %v4113 = vsel %vm4105, %v4092, %v4095
      %v4114 = vsel %vm4108, %v4101, 920167782
      %v4115 = vsel %vm4107, %v4098, %v4114
      %v4116 = vsel %vm4106, %v4113, %v4115
      %v4117 = vsel %vm4105, %v4095, %v4098
      %v4118 = vsel %vm4108, %v4104, 1326507024
      %v4119 = vsel %vm4107, %v4101, %v4118
      %v4120 = vsel %vm4106, %v4117, %v4119
      %v4121 = vshll.u32 %v4081, 8
      %v4122 = vmul.u32.u64.compose %v4121, %v4120
      %v4123 = vextract.low.u32 %v4122
      %v4124 = vextract.high.u32 %v4122
      %v4125 = vmul.u32.u64.compose %v4121, %v4116
      %v4126 = vextract.low.u32 %v4125
      %v4127 = vextract.high.u32 %v4125
      %v4128 = vmul.u32 %v4121, %v4112
      %v4129 = vadd.s32 %v4124, %v4126
      %vm4130 = vc.u32 %v4124, %v4126
      %v4131 = vadd.s32 %v4127, 1
      %v4132 = vsel %vm4130, %v4131, %v4127
      %v4133 = vadd.s32 %v4128, %v4132
      %v4134 = vadd.s32 %v4133, 536870912
      %v4135 = vshrl.u32 %v4134, 30
      %v4136 = vshll.u32 %v4135, 30
      %v4137 = vsub.s32 %v4133, %v4136
      %vm4138 = vcmp.lt.s32.totalorder %v4137, 0
      %v4139 = vsub.s32 0, %v4137
      %v4140 = vsel %vm4138, %v4139, %v4137
      %v4141 = vclz %v4140
      %v4142 = vsub.s32 %v4141, 2
      %vm4143 = vcmp.gt.s32.totalorder 0, %v4142
      %v4144 = vsel %vm4143, 0, %v4142
      %v4145 = vsub.s32 32, %v4144
      %v4146 = vshll.u32 %v4137, %v4144
      %v4147 = vshrl.u32 %v4129, %v4145
      %v4148 = vor.u32 %v4146, %v4147
      %v4149 = vsub.s32 4294967266, %v4144
      %v4150 = vadd.s32 %v4149, 127
      %v4151 = vshll.u32 %v4150, 23
      %v4152 = vor.u32 4788187, %v4151
      %v4153 = vand.u32 2147483647, %v4152
      %v4155 = vcvt.s32.f32 %v4148
      %v4156 = vmul.f32 %v4155, %v4153
      %v4157 = vxor.u32 %v4156, 2147483648
      %v4158 = vsel %vm4075, %v4157, %v4156
      %v4159 = vsub.s32 4, %v4135
      %v4160 = vsel %vm4075, %v4159, %v4135
      %v4161 = vsel %vm4074, %v2458, %v4158
      %v4162 = vsel %vm4074, 0, %v4160
      %v4163 = vcosq.f32.pop %v4161
      %v4164 = vsinq.f32.pop %v4161
      %vm4165 = vweird.f32 %v2458
      %v4166 = vadd.s32 %v4162, 3
      %v4167 = vand.u32 %v4166, 3
      %vm4168 = vcmp.lt.s32.totalorder %v4167, 2
      %vm4169 = vcmp.eq.s32.totalorder %v4167, 0
      %v4170 = vxor.u32 %v4164, 2147483648
      %v4171 = vsel %vm4169, %v4163, %v4170
      %vm4172 = vcmp.eq.s32.totalorder %v4167, 2
      %v4173 = vxor.u32 %v4163, 2147483648
      %v4174 = vsel %vm4172, %v4173, %v4164
      %v4175 = vsel %vm4168, %v4171, %v4174
      %v4176 = vsel %vm4165, nan, %v4175
      %v4177 = vand.u32 2147483647, %v2459
      %vm4178 = vcmp.le.f32.partialorder %v4177, 0.7853982
      %vm4179 = vcmp.lt.s32.totalorder %v2459, 0
      %v4180 = vand.u32 %v2459, 2139095040
      %v4181 = vshrl.u32 %v4180, 23
      %v4182 = vsub.s32 %v4181, 127
      %v4183 = vand.u32 2147483647, %v2459
      %v4184 = vand.u32 %v4183, 8388607
      %v4185 = vor.u32 %v4184, 8388608
      %v4186 = vsub.s32 0, %v4185
      %v4187 = vadd.s32 %v4182, 1
      %vm4188 = vcmp.gt.s32.totalorder %v4187, 0
      %v4189 = vsel %vm4188, %v4187, 0
      %v4190 = vshrl.u32 %v4189, 5
      %v4191 = vand.u32 %v4189, 31
      %v4192 = vsub.s32 32, %v4191
      %v4193 = vshrl.u32 683565275, %v4192
      %v4194 = vshll.u32 683565275, %v4191
      %v4195 = vshrl.u32 2475754826, %v4192
      %v4196 = vor.u32 %v4194, %v4195
      %v4197 = vshll.u32 2475754826, %v4191
      %v4198 = vshrl.u32 2131351028, %v4192
      %v4199 = vor.u32 %v4197, %v4198
      %v4200 = vshll.u32 2131351028, %v4191
      %v4201 = vshrl.u32 2102212464, %v4192
      %v4202 = vor.u32 %v4200, %v4201
      %v4203 = vshll.u32 2102212464, %v4191
      %v4204 = vshrl.u32 920167782, %v4192
      %v4205 = vor.u32 %v4203, %v4204
      %v4206 = vshll.u32 920167782, %v4191
      %v4207 = vshrl.u32 1326507024, %v4192
      %v4208 = vor.u32 %v4206, %v4207
      %vm4209 = vcmp.lt.s32.totalorder %v4190, 1
      %vm4210 = vcmp.lt.s32.totalorder %v4190, 2
      %vm4211 = vcmp.lt.s32.totalorder %v4190, 3
      %vm4212 = vcmp.lt.s32.totalorder %v4190, 4
      %v4213 = vsel %vm4209, %v4193, %v4196
      %v4214 = vsel %vm4212, %v4202, 2102212464
      %v4215 = vsel %vm4211, %v4199, %v4214
      %v4216 = vsel %vm4210, %v4213, %v4215
      %v4217 = vsel %vm4209, %v4196, %v4199
      %v4218 = vsel %vm4212, %v4205, 920167782
      %v4219 = vsel %vm4211, %v4202, %v4218
      %v4220 = vsel %vm4210, %v4217, %v4219
      %v4221 = vsel %vm4209, %v4199, %v4202
      %v4222 = vsel %vm4212, %v4208, 1326507024
      %v4223 = vsel %vm4211, %v4205, %v4222
      %v4224 = vsel %vm4210, %v4221, %v4223
      %v4225 = vshll.u32 %v4185, 8
      %v4226 = vmul.u32.u64.compose %v4225, %v4224
      %v4227 = vextract.low.u32 %v4226
      %v4228 = vextract.high.u32 %v4226
      %v4229 = vmul.u32.u64.compose %v4225, %v4220
      %v4230 = vextract.low.u32 %v4229
      %v4231 = vextract.high.u32 %v4229
      %v4232 = vmul.u32 %v4225, %v4216
      %v4233 = vadd.s32 %v4228, %v4230
      %vm4234 = vc.u32 %v4228, %v4230
      %v4235 = vadd.s32 %v4231, 1
      %v4236 = vsel %vm4234, %v4235, %v4231
      %v4237 = vadd.s32 %v4232, %v4236
      %v4238 = vadd.s32 %v4237, 536870912
      %v4239 = vshrl.u32 %v4238, 30
      %v4240 = vshll.u32 %v4239, 30
      %v4241 = vsub.s32 %v4237, %v4240
      %vm4242 = vcmp.lt.s32.totalorder %v4241, 0
      %v4243 = vsub.s32 0, %v4241
      %v4244 = vsel %vm4242, %v4243, %v4241
      %v4245 = vclz %v4244
      %v4246 = vsub.s32 %v4245, 2
      %vm4247 = vcmp.gt.s32.totalorder 0, %v4246
      %v4248 = vsel %vm4247, 0, %v4246
      %v4249 = vsub.s32 32, %v4248
      %v4250 = vshll.u32 %v4241, %v4248
      %v4251 = vshrl.u32 %v4233, %v4249
      %v4252 = vor.u32 %v4250, %v4251
      %v4253 = vsub.s32 4294967266, %v4248
      %v4254 = vadd.s32 %v4253, 127
      %v4255 = vshll.u32 %v4254, 23
      %v4256 = vor.u32 4788187, %v4255
      %v4257 = vand.u32 2147483647, %v4256
      %v4259 = vcvt.s32.f32 %v4252
      %v4260 = vmul.f32 %v4259, %v4257
      %v4261 = vxor.u32 %v4260, 2147483648
      %v4262 = vsel %vm4179, %v4261, %v4260
      %v4263 = vsub.s32 4, %v4239
      %v4264 = vsel %vm4179, %v4263, %v4239
      %v4265 = vsel %vm4178, %v2459, %v4262
      %v4266 = vsel %vm4178, 0, %v4264
      %v4267 = vcosq.f32.pop %v4265
      %v4268 = vsinq.f32.pop %v4265
      %vm4269 = vweird.f32 %v2459
      %v4270 = vadd.s32 %v4266, 3
      %v4271 = vand.u32 %v4270, 3
      %vm4272 = vcmp.lt.s32.totalorder %v4271, 2
      %vm4273 = vcmp.eq.s32.totalorder %v4271, 0
      %v4274 = vxor.u32 %v4268, 2147483648
      %v4275 = vsel %vm4273, %v4267, %v4274
      %vm4276 = vcmp.eq.s32.totalorder %v4271, 2
      %v4277 = vxor.u32 %v4267, 2147483648
      %v4278 = vsel %vm4276, %v4277, %v4268
      %v4279 = vsel %vm4272, %v4275, %v4278
      %v4280 = vsel %vm4269, nan, %v4279
      %v4281 = vand.u32 2147483647, %v2460
      %vm4282 = vcmp.le.f32.partialorder %v4281, 0.7853982
      %vm4283 = vcmp.lt.s32.totalorder %v2460, 0
      %v4284 = vand.u32 %v2460, 2139095040
      %v4285 = vshrl.u32 %v4284, 23
      %v4286 = vsub.s32 %v4285, 127
      %v4287 = vand.u32 2147483647, %v2460
      %v4288 = vand.u32 %v4287, 8388607
      %v4289 = vor.u32 %v4288, 8388608
      %v4290 = vsub.s32 0, %v4289
      %v4291 = vadd.s32 %v4286, 1
      %vm4292 = vcmp.gt.s32.totalorder %v4291, 0
      %v4293 = vsel %vm4292, %v4291, 0
      %v4294 = vshrl.u32 %v4293, 5
      %v4295 = vand.u32 %v4293, 31
      %v4296 = vsub.s32 32, %v4295
      %v4297 = vshrl.u32 683565275, %v4296
      %v4298 = vshll.u32 683565275, %v4295
      %v4299 = vshrl.u32 2475754826, %v4296
      %v4300 = vor.u32 %v4298, %v4299
      %v4301 = vshll.u32 2475754826, %v4295
      %v4302 = vshrl.u32 2131351028, %v4296
      %v4303 = vor.u32 %v4301, %v4302
      %v4304 = vshll.u32 2131351028, %v4295
      %v4305 = vshrl.u32 2102212464, %v4296
      %v4306 = vor.u32 %v4304, %v4305
      %v4307 = vshll.u32 2102212464, %v4295
      %v4308 = vshrl.u32 920167782, %v4296
      %v4309 = vor.u32 %v4307, %v4308
      %v4310 = vshll.u32 920167782, %v4295
      %v4311 = vshrl.u32 1326507024, %v4296
      %v4312 = vor.u32 %v4310, %v4311
      %vm4313 = vcmp.lt.s32.totalorder %v4294, 1
      %vm4314 = vcmp.lt.s32.totalorder %v4294, 2
      %vm4315 = vcmp.lt.s32.totalorder %v4294, 3
      %vm4316 = vcmp.lt.s32.totalorder %v4294, 4
      %v4317 = vsel %vm4313, %v4297, %v4300
      %v4318 = vsel %vm4316, %v4306, 2102212464
      %v4319 = vsel %vm4315, %v4303, %v4318
      %v4320 = vsel %vm4314, %v4317, %v4319
      %v4321 = vsel %vm4313, %v4300, %v4303
      %v4322 = vsel %vm4316, %v4309, 920167782
      %v4323 = vsel %vm4315, %v4306, %v4322
      %v4324 = vsel %vm4314, %v4321, %v4323
      %v4325 = vsel %vm4313, %v4303, %v4306
      %v4326 = vsel %vm4316, %v4312, 1326507024
      %v4327 = vsel %vm4315, %v4309, %v4326
      %v4328 = vsel %vm4314, %v4325, %v4327
      %v4329 = vshll.u32 %v4289, 8
      %v4330 = vmul.u32.u64.compose %v4329, %v4328
      %v4331 = vextract.low.u32 %v4330
      %v4332 = vextract.high.u32 %v4330
      %v4333 = vmul.u32.u64.compose %v4329, %v4324
      %v4334 = vextract.low.u32 %v4333
      %v4335 = vextract.high.u32 %v4333
      %v4336 = vmul.u32 %v4329, %v4320
      %v4337 = vadd.s32 %v4332, %v4334
      %vm4338 = vc.u32 %v4332, %v4334
      %v4339 = vadd.s32 %v4335, 1
      %v4340 = vsel %vm4338, %v4339, %v4335
      %v4341 = vadd.s32 %v4336, %v4340
      %v4342 = vadd.s32 %v4341, 536870912
      %v4343 = vshrl.u32 %v4342, 30
      %v4344 = vshll.u32 %v4343, 30
      %v4345 = vsub.s32 %v4341, %v4344
      %vm4346 = vcmp.lt.s32.totalorder %v4345, 0
      %v4347 = vsub.s32 0, %v4345
      %v4348 = vsel %vm4346, %v4347, %v4345
      %v4349 = vclz %v4348
      %v4350 = vsub.s32 %v4349, 2
      %vm4351 = vcmp.gt.s32.totalorder 0, %v4350
      %v4352 = vsel %vm4351, 0, %v4350
      %v4353 = vsub.s32 32, %v4352
      %v4354 = vshll.u32 %v4345, %v4352
      %v4355 = vshrl.u32 %v4337, %v4353
      %v4356 = vor.u32 %v4354, %v4355
      %v4357 = vsub.s32 4294967266, %v4352
      %v4358 = vadd.s32 %v4357, 127
      %v4359 = vshll.u32 %v4358, 23
      %v4360 = vor.u32 4788187, %v4359
      %v4361 = vand.u32 2147483647, %v4360
      %v4363 = vcvt.s32.f32 %v4356
      %v4364 = vmul.f32 %v4363, %v4361
      %v4365 = vxor.u32 %v4364, 2147483648
      %v4366 = vsel %vm4283, %v4365, %v4364
      %v4367 = vsub.s32 4, %v4343
      %v4368 = vsel %vm4283, %v4367, %v4343
      %v4369 = vsel %vm4282, %v2460, %v4366
      %v4370 = vsel %vm4282, 0, %v4368
      %v4371 = vcosq.f32.pop %v4369
      %v4372 = vsinq.f32.pop %v4369
      %vm4373 = vweird.f32 %v2460
      %v4374 = vadd.s32 %v4370, 3
      %v4375 = vand.u32 %v4374, 3
      %vm4376 = vcmp.lt.s32.totalorder %v4375, 2
      %vm4377 = vcmp.eq.s32.totalorder %v4375, 0
      %v4378 = vxor.u32 %v4372, 2147483648
      %v4379 = vsel %vm4377, %v4371, %v4378
      %vm4380 = vcmp.eq.s32.totalorder %v4375, 2
      %v4381 = vxor.u32 %v4371, 2147483648
      %v4382 = vsel %vm4380, %v4381, %v4372
      %v4383 = vsel %vm4376, %v4379, %v4382
      %v4384 = vsel %vm4373, nan, %v4383
      %v4385 = vand.u32 2147483647, %v2461
      %vm4386 = vcmp.le.f32.partialorder %v4385, 0.7853982
      %vm4387 = vcmp.lt.s32.totalorder %v2461, 0
      %v4388 = vand.u32 %v2461, 2139095040
      %v4389 = vshrl.u32 %v4388, 23
      %v4390 = vsub.s32 %v4389, 127
      %v4391 = vand.u32 2147483647, %v2461
      %v4392 = vand.u32 %v4391, 8388607
      %v4393 = vor.u32 %v4392, 8388608
      %v4394 = vsub.s32 0, %v4393
      %v4395 = vadd.s32 %v4390, 1
      %vm4396 = vcmp.gt.s32.totalorder %v4395, 0
      %v4397 = vsel %vm4396, %v4395, 0
      %v4398 = vshrl.u32 %v4397, 5
      %v4399 = vand.u32 %v4397, 31
      %v4400 = vsub.s32 32, %v4399
      %v4401 = vshrl.u32 683565275, %v4400
      %v4402 = vshll.u32 683565275, %v4399
      %v4403 = vshrl.u32 2475754826, %v4400
      %v4404 = vor.u32 %v4402, %v4403
      %v4405 = vshll.u32 2475754826, %v4399
      %v4406 = vshrl.u32 2131351028, %v4400
      %v4407 = vor.u32 %v4405, %v4406
      %v4408 = vshll.u32 2131351028, %v4399
      %v4409 = vshrl.u32 2102212464, %v4400
      %v4410 = vor.u32 %v4408, %v4409
      %v4411 = vshll.u32 2102212464, %v4399
      %v4412 = vshrl.u32 920167782, %v4400
      %v4413 = vor.u32 %v4411, %v4412
      %v4414 = vshll.u32 920167782, %v4399
      %v4415 = vshrl.u32 1326507024, %v4400
      %v4416 = vor.u32 %v4414, %v4415
      %vm4417 = vcmp.lt.s32.totalorder %v4398, 1
      %vm4418 = vcmp.lt.s32.totalorder %v4398, 2
      %vm4419 = vcmp.lt.s32.totalorder %v4398, 3
      %vm4420 = vcmp.lt.s32.totalorder %v4398, 4
      %v4421 = vsel %vm4417, %v4401, %v4404
      %v4422 = vsel %vm4420, %v4410, 2102212464
      %v4423 = vsel %vm4419, %v4407, %v4422
      %v4424 = vsel %vm4418, %v4421, %v4423
      %v4425 = vsel %vm4417, %v4404, %v4407
      %v4426 = vsel %vm4420, %v4413, 920167782
      %v4427 = vsel %vm4419, %v4410, %v4426
      %v4428 = vsel %vm4418, %v4425, %v4427
      %v4429 = vsel %vm4417, %v4407, %v4410
      %v4430 = vsel %vm4420, %v4416, 1326507024
      %v4431 = vsel %vm4419, %v4413, %v4430
      %v4432 = vsel %vm4418, %v4429, %v4431
      %v4433 = vshll.u32 %v4393, 8
      %v4434 = vmul.u32.u64.compose %v4433, %v4432
      %v4435 = vextract.low.u32 %v4434
      %v4436 = vextract.high.u32 %v4434
      %v4437 = vmul.u32.u64.compose %v4433, %v4428
      %v4438 = vextract.low.u32 %v4437
      %v4439 = vextract.high.u32 %v4437
      %v4440 = vmul.u32 %v4433, %v4424
      %v4441 = vadd.s32 %v4436, %v4438
      %vm4442 = vc.u32 %v4436, %v4438
      %v4443 = vadd.s32 %v4439, 1
      %v4444 = vsel %vm4442, %v4443, %v4439
      %v4445 = vadd.s32 %v4440, %v4444
      %v4446 = vadd.s32 %v4445, 536870912
      %v4447 = vshrl.u32 %v4446, 30
      %v4448 = vshll.u32 %v4447, 30
      %v4449 = vsub.s32 %v4445, %v4448
      %vm4450 = vcmp.lt.s32.totalorder %v4449, 0
      %v4451 = vsub.s32 0, %v4449
      %v4452 = vsel %vm4450, %v4451, %v4449
      %v4453 = vclz %v4452
      %v4454 = vsub.s32 %v4453, 2
      %vm4455 = vcmp.gt.s32.totalorder 0, %v4454
      %v4456 = vsel %vm4455, 0, %v4454
      %v4457 = vsub.s32 32, %v4456
      %v4458 = vshll.u32 %v4449, %v4456
      %v4459 = vshrl.u32 %v4441, %v4457
      %v4460 = vor.u32 %v4458, %v4459
      %v4461 = vsub.s32 4294967266, %v4456
      %v4462 = vadd.s32 %v4461, 127
      %v4463 = vshll.u32 %v4462, 23
      %v4464 = vor.u32 4788187, %v4463
      %v4465 = vand.u32 2147483647, %v4464
      %v4467 = vcvt.s32.f32 %v4460
      %v4468 = vmul.f32 %v4467, %v4465
      %v4469 = vxor.u32 %v4468, 2147483648
      %v4470 = vsel %vm4387, %v4469, %v4468
      %v4471 = vsub.s32 4, %v4447
      %v4472 = vsel %vm4387, %v4471, %v4447
      %v4473 = vsel %vm4386, %v2461, %v4470
      %v4474 = vsel %vm4386, 0, %v4472
      %v4475 = vcosq.f32.pop %v4473
      %v4476 = vsinq.f32.pop %v4473
      %vm4477 = vweird.f32 %v2461
      %v4478 = vadd.s32 %v4474, 3
      %v4479 = vand.u32 %v4478, 3
      %vm4480 = vcmp.lt.s32.totalorder %v4479, 2
      %vm4481 = vcmp.eq.s32.totalorder %v4479, 0
      %v4482 = vxor.u32 %v4476, 2147483648
      %v4483 = vsel %vm4481, %v4475, %v4482
      %vm4484 = vcmp.eq.s32.totalorder %v4479, 2
      %v4485 = vxor.u32 %v4475, 2147483648
      %v4486 = vsel %vm4484, %v4485, %v4476
      %v4487 = vsel %vm4480, %v4483, %v4486
      %v4488 = vsel %vm4477, nan, %v4487
      %v4489 = vand.u32 2147483647, %v2462
      %vm4490 = vcmp.le.f32.partialorder %v4489, 0.7853982
      %vm4491 = vcmp.lt.s32.totalorder %v2462, 0
      %v4492 = vand.u32 %v2462, 2139095040
      %v4493 = vshrl.u32 %v4492, 23
      %v4494 = vsub.s32 %v4493, 127
      %v4495 = vand.u32 2147483647, %v2462
      %v4496 = vand.u32 %v4495, 8388607
      %v4497 = vor.u32 %v4496, 8388608
      %v4498 = vsub.s32 0, %v4497
      %v4499 = vadd.s32 %v4494, 1
      %vm4500 = vcmp.gt.s32.totalorder %v4499, 0
      %v4501 = vsel %vm4500, %v4499, 0
      %v4502 = vshrl.u32 %v4501, 5
      %v4503 = vand.u32 %v4501, 31
      %v4504 = vsub.s32 32, %v4503
      %v4505 = vshrl.u32 683565275, %v4504
      %v4506 = vshll.u32 683565275, %v4503
      %v4507 = vshrl.u32 2475754826, %v4504
      %v4508 = vor.u32 %v4506, %v4507
      %v4509 = vshll.u32 2475754826, %v4503
      %v4510 = vshrl.u32 2131351028, %v4504
      %v4511 = vor.u32 %v4509, %v4510
      %v4512 = vshll.u32 2131351028, %v4503
      %v4513 = vshrl.u32 2102212464, %v4504
      %v4514 = vor.u32 %v4512, %v4513
      %v4515 = vshll.u32 2102212464, %v4503
      %v4516 = vshrl.u32 920167782, %v4504
      %v4517 = vor.u32 %v4515, %v4516
      %v4518 = vshll.u32 920167782, %v4503
      %v4519 = vshrl.u32 1326507024, %v4504
      %v4520 = vor.u32 %v4518, %v4519
      %vm4521 = vcmp.lt.s32.totalorder %v4502, 1
      %vm4522 = vcmp.lt.s32.totalorder %v4502, 2
      %vm4523 = vcmp.lt.s32.totalorder %v4502, 3
      %vm4524 = vcmp.lt.s32.totalorder %v4502, 4
      %v4525 = vsel %vm4521, %v4505, %v4508
      %v4526 = vsel %vm4524, %v4514, 2102212464
      %v4527 = vsel %vm4523, %v4511, %v4526
      %v4528 = vsel %vm4522, %v4525, %v4527
      %v4529 = vsel %vm4521, %v4508, %v4511
      %v4530 = vsel %vm4524, %v4517, 920167782
      %v4531 = vsel %vm4523, %v4514, %v4530
      %v4532 = vsel %vm4522, %v4529, %v4531
      %v4533 = vsel %vm4521, %v4511, %v4514
      %v4534 = vsel %vm4524, %v4520, 1326507024
      %v4535 = vsel %vm4523, %v4517, %v4534
      %v4536 = vsel %vm4522, %v4533, %v4535
      %v4537 = vshll.u32 %v4497, 8
      %v4538 = vmul.u32.u64.compose %v4537, %v4536
      %v4539 = vextract.low.u32 %v4538
      %v4540 = vextract.high.u32 %v4538
      %v4541 = vmul.u32.u64.compose %v4537, %v4532
      %v4542 = vextract.low.u32 %v4541
      %v4543 = vextract.high.u32 %v4541
      %v4544 = vmul.u32 %v4537, %v4528
      %v4545 = vadd.s32 %v4540, %v4542
      %vm4546 = vc.u32 %v4540, %v4542
      %v4547 = vadd.s32 %v4543, 1
      %v4548 = vsel %vm4546, %v4547, %v4543
      %v4549 = vadd.s32 %v4544, %v4548
      %v4550 = vadd.s32 %v4549, 536870912
      %v4551 = vshrl.u32 %v4550, 30
      %v4552 = vshll.u32 %v4551, 30
      %v4553 = vsub.s32 %v4549, %v4552
      %vm4554 = vcmp.lt.s32.totalorder %v4553, 0
      %v4555 = vsub.s32 0, %v4553
      %v4556 = vsel %vm4554, %v4555, %v4553
      %v4557 = vclz %v4556
      %v4558 = vsub.s32 %v4557, 2
      %vm4559 = vcmp.gt.s32.totalorder 0, %v4558
      %v4560 = vsel %vm4559, 0, %v4558
      %v4561 = vsub.s32 32, %v4560
      %v4562 = vshll.u32 %v4553, %v4560
      %v4563 = vshrl.u32 %v4545, %v4561
      %v4564 = vor.u32 %v4562, %v4563
      %v4565 = vsub.s32 4294967266, %v4560
      %v4566 = vadd.s32 %v4565, 127
      %v4567 = vshll.u32 %v4566, 23
      %v4568 = vor.u32 4788187, %v4567
      %v4569 = vand.u32 2147483647, %v4568
      %v4571 = vcvt.s32.f32 %v4564
      %v4572 = vmul.f32 %v4571, %v4569
      %v4573 = vxor.u32 %v4572, 2147483648
      %v4574 = vsel %vm4491, %v4573, %v4572
      %v4575 = vsub.s32 4, %v4551
      %v4576 = vsel %vm4491, %v4575, %v4551
      %v4577 = vsel %vm4490, %v2462, %v4574
      %v4578 = vsel %vm4490, 0, %v4576
      %v4579 = vcosq.f32.pop %v4577
      %v4580 = vsinq.f32.pop %v4577
      %vm4581 = vweird.f32 %v2462
      %v4582 = vadd.s32 %v4578, 3
      %v4583 = vand.u32 %v4582, 3
      %vm4584 = vcmp.lt.s32.totalorder %v4583, 2
      %vm4585 = vcmp.eq.s32.totalorder %v4583, 0
      %v4586 = vxor.u32 %v4580, 2147483648
      %v4587 = vsel %vm4585, %v4579, %v4586
      %vm4588 = vcmp.eq.s32.totalorder %v4583, 2
      %v4589 = vxor.u32 %v4579, 2147483648
      %v4590 = vsel %vm4588, %v4589, %v4580
      %v4591 = vsel %vm4584, %v4587, %v4590
      %v4592 = vsel %vm4581, nan, %v4591
      %v4593 = vand.u32 2147483647, %v2463
      %vm4594 = vcmp.le.f32.partialorder %v4593, 0.7853982
      %vm4595 = vcmp.lt.s32.totalorder %v2463, 0
      %v4596 = vand.u32 %v2463, 2139095040
      %v4597 = vshrl.u32 %v4596, 23
      %v4598 = vsub.s32 %v4597, 127
      %v4599 = vand.u32 2147483647, %v2463
      %v4600 = vand.u32 %v4599, 8388607
      %v4601 = vor.u32 %v4600, 8388608
      %v4602 = vsub.s32 0, %v4601
      %v4603 = vadd.s32 %v4598, 1
      %vm4604 = vcmp.gt.s32.totalorder %v4603, 0
      %v4605 = vsel %vm4604, %v4603, 0
      %v4606 = vshrl.u32 %v4605, 5
      %v4607 = vand.u32 %v4605, 31
      %v4608 = vsub.s32 32, %v4607
      %v4609 = vshrl.u32 683565275, %v4608
      %v4610 = vshll.u32 683565275, %v4607
      %v4611 = vshrl.u32 2475754826, %v4608
      %v4612 = vor.u32 %v4610, %v4611
      %v4613 = vshll.u32 2475754826, %v4607
      %v4614 = vshrl.u32 2131351028, %v4608
      %v4615 = vor.u32 %v4613, %v4614
      %v4616 = vshll.u32 2131351028, %v4607
      %v4617 = vshrl.u32 2102212464, %v4608
      %v4618 = vor.u32 %v4616, %v4617
      %v4619 = vshll.u32 2102212464, %v4607
      %v4620 = vshrl.u32 920167782, %v4608
      %v4621 = vor.u32 %v4619, %v4620
      %v4622 = vshll.u32 920167782, %v4607
      %v4623 = vshrl.u32 1326507024, %v4608
      %v4624 = vor.u32 %v4622, %v4623
      %vm4625 = vcmp.lt.s32.totalorder %v4606, 1
      %vm4626 = vcmp.lt.s32.totalorder %v4606, 2
      %vm4627 = vcmp.lt.s32.totalorder %v4606, 3
      %vm4628 = vcmp.lt.s32.totalorder %v4606, 4
      %v4629 = vsel %vm4625, %v4609, %v4612
      %v4630 = vsel %vm4628, %v4618, 2102212464
      %v4631 = vsel %vm4627, %v4615, %v4630
      %v4632 = vsel %vm4626, %v4629, %v4631
      %v4633 = vsel %vm4625, %v4612, %v4615
      %v4634 = vsel %vm4628, %v4621, 920167782
      %v4635 = vsel %vm4627, %v4618, %v4634
      %v4636 = vsel %vm4626, %v4633, %v4635
      %v4637 = vsel %vm4625, %v4615, %v4618
      %v4638 = vsel %vm4628, %v4624, 1326507024
      %v4639 = vsel %vm4627, %v4621, %v4638
      %v4640 = vsel %vm4626, %v4637, %v4639
      %v4641 = vshll.u32 %v4601, 8
      %v4642 = vmul.u32.u64.compose %v4641, %v4640
      %v4643 = vextract.low.u32 %v4642
      %v4644 = vextract.high.u32 %v4642
      %v4645 = vmul.u32.u64.compose %v4641, %v4636
      %v4646 = vextract.low.u32 %v4645
      %v4647 = vextract.high.u32 %v4645
      %v4648 = vmul.u32 %v4641, %v4632
      %v4649 = vadd.s32 %v4644, %v4646
      %vm4650 = vc.u32 %v4644, %v4646
      %v4651 = vadd.s32 %v4647, 1
      %v4652 = vsel %vm4650, %v4651, %v4647
      %v4653 = vadd.s32 %v4648, %v4652
      %v4654 = vadd.s32 %v4653, 536870912
      %v4655 = vshrl.u32 %v4654, 30
      %v4656 = vshll.u32 %v4655, 30
      %v4657 = vsub.s32 %v4653, %v4656
      %vm4658 = vcmp.lt.s32.totalorder %v4657, 0
      %v4659 = vsub.s32 0, %v4657
      %v4660 = vsel %vm4658, %v4659, %v4657
      %v4661 = vclz %v4660
      %v4662 = vsub.s32 %v4661, 2
      %vm4663 = vcmp.gt.s32.totalorder 0, %v4662
      %v4664 = vsel %vm4663, 0, %v4662
      %v4665 = vsub.s32 32, %v4664
      %v4666 = vshll.u32 %v4657, %v4664
      %v4667 = vshrl.u32 %v4649, %v4665
      %v4668 = vor.u32 %v4666, %v4667
      %v4669 = vsub.s32 4294967266, %v4664
      %v4670 = vadd.s32 %v4669, 127
      %v4671 = vshll.u32 %v4670, 23
      %v4672 = vor.u32 4788187, %v4671
      %v4673 = vand.u32 2147483647, %v4672
      %v4675 = vcvt.s32.f32 %v4668
      %v4676 = vmul.f32 %v4675, %v4673
      %v4677 = vxor.u32 %v4676, 2147483648
      %v4678 = vsel %vm4595, %v4677, %v4676
      %v4679 = vsub.s32 4, %v4655
      %v4680 = vsel %vm4595, %v4679, %v4655
      %v4681 = vsel %vm4594, %v2463, %v4678
      %v4682 = vsel %vm4594, 0, %v4680
      %v4683 = vcosq.f32.pop %v4681
      %v4684 = vsinq.f32.pop %v4681
      %vm4685 = vweird.f32 %v2463
      %v4686 = vadd.s32 %v4682, 3
      %v4687 = vand.u32 %v4686, 3
      %vm4688 = vcmp.lt.s32.totalorder %v4687, 2
      %vm4689 = vcmp.eq.s32.totalorder %v4687, 0
      %v4690 = vxor.u32 %v4684, 2147483648
      %v4691 = vsel %vm4689, %v4683, %v4690
      %vm4692 = vcmp.eq.s32.totalorder %v4687, 2
      %v4693 = vxor.u32 %v4683, 2147483648
      %v4694 = vsel %vm4692, %v4693, %v4684
      %v4695 = vsel %vm4688, %v4691, %v4694
      %v4696 = vsel %vm4685, nan, %v4695
      %v4697 = vand.u32 2147483647, %v2464
      %vm4698 = vcmp.le.f32.partialorder %v4697, 0.7853982
      %vm4699 = vcmp.lt.s32.totalorder %v2464, 0
      %v4700 = vand.u32 %v2464, 2139095040
      %v4701 = vshrl.u32 %v4700, 23
      %v4702 = vsub.s32 %v4701, 127
      %v4703 = vand.u32 2147483647, %v2464
      %v4704 = vand.u32 %v4703, 8388607
      %v4705 = vor.u32 %v4704, 8388608
      %v4706 = vsub.s32 0, %v4705
      %v4707 = vadd.s32 %v4702, 1
      %vm4708 = vcmp.gt.s32.totalorder %v4707, 0
      %v4709 = vsel %vm4708, %v4707, 0
      %v4710 = vshrl.u32 %v4709, 5
      %v4711 = vand.u32 %v4709, 31
      %v4712 = vsub.s32 32, %v4711
      %v4713 = vshrl.u32 683565275, %v4712
      %v4714 = vshll.u32 683565275, %v4711
      %v4715 = vshrl.u32 2475754826, %v4712
      %v4716 = vor.u32 %v4714, %v4715
      %v4717 = vshll.u32 2475754826, %v4711
      %v4718 = vshrl.u32 2131351028, %v4712
      %v4719 = vor.u32 %v4717, %v4718
      %v4720 = vshll.u32 2131351028, %v4711
      %v4721 = vshrl.u32 2102212464, %v4712
      %v4722 = vor.u32 %v4720, %v4721
      %v4723 = vshll.u32 2102212464, %v4711
      %v4724 = vshrl.u32 920167782, %v4712
      %v4725 = vor.u32 %v4723, %v4724
      %v4726 = vshll.u32 920167782, %v4711
      %v4727 = vshrl.u32 1326507024, %v4712
      %v4728 = vor.u32 %v4726, %v4727
      %vm4729 = vcmp.lt.s32.totalorder %v4710, 1
      %vm4730 = vcmp.lt.s32.totalorder %v4710, 2
      %vm4731 = vcmp.lt.s32.totalorder %v4710, 3
      %vm4732 = vcmp.lt.s32.totalorder %v4710, 4
      %v4733 = vsel %vm4729, %v4713, %v4716
      %v4734 = vsel %vm4732, %v4722, 2102212464
      %v4735 = vsel %vm4731, %v4719, %v4734
      %v4736 = vsel %vm4730, %v4733, %v4735
      %v4737 = vsel %vm4729, %v4716, %v4719
      %v4738 = vsel %vm4732, %v4725, 920167782
      %v4739 = vsel %vm4731, %v4722, %v4738
      %v4740 = vsel %vm4730, %v4737, %v4739
      %v4741 = vsel %vm4729, %v4719, %v4722
      %v4742 = vsel %vm4732, %v4728, 1326507024
      %v4743 = vsel %vm4731, %v4725, %v4742
      %v4744 = vsel %vm4730, %v4741, %v4743
      %v4745 = vshll.u32 %v4705, 8
      %v4746 = vmul.u32.u64.compose %v4745, %v4744
      %v4747 = vextract.low.u32 %v4746
      %v4748 = vextract.high.u32 %v4746
      %v4749 = vmul.u32.u64.compose %v4745, %v4740
      %v4750 = vextract.low.u32 %v4749
      %v4751 = vextract.high.u32 %v4749
      %v4752 = vmul.u32 %v4745, %v4736
      %v4753 = vadd.s32 %v4748, %v4750
      %vm4754 = vc.u32 %v4748, %v4750
      %v4755 = vadd.s32 %v4751, 1
      %v4756 = vsel %vm4754, %v4755, %v4751
      %v4757 = vadd.s32 %v4752, %v4756
      %v4758 = vadd.s32 %v4757, 536870912
      %v4759 = vshrl.u32 %v4758, 30
      %v4760 = vshll.u32 %v4759, 30
      %v4761 = vsub.s32 %v4757, %v4760
      %vm4762 = vcmp.lt.s32.totalorder %v4761, 0
      %v4763 = vsub.s32 0, %v4761
      %v4764 = vsel %vm4762, %v4763, %v4761
      %v4765 = vclz %v4764
      %v4766 = vsub.s32 %v4765, 2
      %vm4767 = vcmp.gt.s32.totalorder 0, %v4766
      %v4768 = vsel %vm4767, 0, %v4766
      %v4769 = vsub.s32 32, %v4768
      %v4770 = vshll.u32 %v4761, %v4768
      %v4771 = vshrl.u32 %v4753, %v4769
      %v4772 = vor.u32 %v4770, %v4771
      %v4773 = vsub.s32 4294967266, %v4768
      %v4774 = vadd.s32 %v4773, 127
      %v4775 = vshll.u32 %v4774, 23
      %v4776 = vor.u32 4788187, %v4775
      %v4777 = vand.u32 2147483647, %v4776
      %v4779 = vcvt.s32.f32 %v4772
      %v4780 = vmul.f32 %v4779, %v4777
      %v4781 = vxor.u32 %v4780, 2147483648
      %v4782 = vsel %vm4699, %v4781, %v4780
      %v4783 = vsub.s32 4, %v4759
      %v4784 = vsel %vm4699, %v4783, %v4759
      %v4785 = vsel %vm4698, %v2464, %v4782
      %v4786 = vsel %vm4698, 0, %v4784
      %v4787 = vcosq.f32.pop %v4785
      %v4788 = vsinq.f32.pop %v4785
      %vm4789 = vweird.f32 %v2464
      %v4790 = vadd.s32 %v4786, 3
      %v4791 = vand.u32 %v4790, 3
      %vm4792 = vcmp.lt.s32.totalorder %v4791, 2
      %vm4793 = vcmp.eq.s32.totalorder %v4791, 0
      %v4794 = vxor.u32 %v4788, 2147483648
      %v4795 = vsel %vm4793, %v4787, %v4794
      %vm4796 = vcmp.eq.s32.totalorder %v4791, 2
      %v4797 = vxor.u32 %v4787, 2147483648
      %v4798 = vsel %vm4796, %v4797, %v4788
      %v4799 = vsel %vm4792, %v4795, %v4798
      %v4800 = vsel %vm4789, nan, %v4799
      %v4801 = vand.u32 2147483647, %v2465
      %vm4802 = vcmp.le.f32.partialorder %v4801, 0.7853982
      %vm4803 = vcmp.lt.s32.totalorder %v2465, 0
      %v4804 = vand.u32 %v2465, 2139095040
      %v4805 = vshrl.u32 %v4804, 23
      %v4806 = vsub.s32 %v4805, 127
      %v4807 = vand.u32 2147483647, %v2465
      %v4808 = vand.u32 %v4807, 8388607
      %v4809 = vor.u32 %v4808, 8388608
      %v4810 = vsub.s32 0, %v4809
      %v4811 = vadd.s32 %v4806, 1
      %vm4812 = vcmp.gt.s32.totalorder %v4811, 0
      %v4813 = vsel %vm4812, %v4811, 0
      %v4814 = vshrl.u32 %v4813, 5
      %v4815 = vand.u32 %v4813, 31
      %v4816 = vsub.s32 32, %v4815
      %v4817 = vshrl.u32 683565275, %v4816
      %v4818 = vshll.u32 683565275, %v4815
      %v4819 = vshrl.u32 2475754826, %v4816
      %v4820 = vor.u32 %v4818, %v4819
      %v4821 = vshll.u32 2475754826, %v4815
      %v4822 = vshrl.u32 2131351028, %v4816
      %v4823 = vor.u32 %v4821, %v4822
      %v4824 = vshll.u32 2131351028, %v4815
      %v4825 = vshrl.u32 2102212464, %v4816
      %v4826 = vor.u32 %v4824, %v4825
      %v4827 = vshll.u32 2102212464, %v4815
      %v4828 = vshrl.u32 920167782, %v4816
      %v4829 = vor.u32 %v4827, %v4828
      %v4830 = vshll.u32 920167782, %v4815
      %v4831 = vshrl.u32 1326507024, %v4816
      %v4832 = vor.u32 %v4830, %v4831
      %vm4833 = vcmp.lt.s32.totalorder %v4814, 1
      %vm4834 = vcmp.lt.s32.totalorder %v4814, 2
      %vm4835 = vcmp.lt.s32.totalorder %v4814, 3
      %vm4836 = vcmp.lt.s32.totalorder %v4814, 4
      %v4837 = vsel %vm4833, %v4817, %v4820
      %v4838 = vsel %vm4836, %v4826, 2102212464
      %v4839 = vsel %vm4835, %v4823, %v4838
      %v4840 = vsel %vm4834, %v4837, %v4839
      %v4841 = vsel %vm4833, %v4820, %v4823
      %v4842 = vsel %vm4836, %v4829, 920167782
      %v4843 = vsel %vm4835, %v4826, %v4842
      %v4844 = vsel %vm4834, %v4841, %v4843
      %v4845 = vsel %vm4833, %v4823, %v4826
      %v4846 = vsel %vm4836, %v4832, 1326507024
      %v4847 = vsel %vm4835, %v4829, %v4846
      %v4848 = vsel %vm4834, %v4845, %v4847
      %v4849 = vshll.u32 %v4809, 8
      %v4850 = vmul.u32.u64.compose %v4849, %v4848
      %v4851 = vextract.low.u32 %v4850
      %v4852 = vextract.high.u32 %v4850
      %v4853 = vmul.u32.u64.compose %v4849, %v4844
      %v4854 = vextract.low.u32 %v4853
      %v4855 = vextract.high.u32 %v4853
      %v4856 = vmul.u32 %v4849, %v4840
      %v4857 = vadd.s32 %v4852, %v4854
      %vm4858 = vc.u32 %v4852, %v4854
      %v4859 = vadd.s32 %v4855, 1
      %v4860 = vsel %vm4858, %v4859, %v4855
      %v4861 = vadd.s32 %v4856, %v4860
      %v4862 = vadd.s32 %v4861, 536870912
      %v4863 = vshrl.u32 %v4862, 30
      %v4864 = vshll.u32 %v4863, 30
      %v4865 = vsub.s32 %v4861, %v4864
      %vm4866 = vcmp.lt.s32.totalorder %v4865, 0
      %v4867 = vsub.s32 0, %v4865
      %v4868 = vsel %vm4866, %v4867, %v4865
      %v4869 = vclz %v4868
      %v4870 = vsub.s32 %v4869, 2
      %vm4871 = vcmp.gt.s32.totalorder 0, %v4870
      %v4872 = vsel %vm4871, 0, %v4870
      %v4873 = vsub.s32 32, %v4872
      %v4874 = vshll.u32 %v4865, %v4872
      %v4875 = vshrl.u32 %v4857, %v4873
      %v4876 = vor.u32 %v4874, %v4875
      %v4877 = vsub.s32 4294967266, %v4872
      %v4878 = vadd.s32 %v4877, 127
      %v4879 = vshll.u32 %v4878, 23
      %v4880 = vor.u32 4788187, %v4879
      %v4881 = vand.u32 2147483647, %v4880
      %v4883 = vcvt.s32.f32 %v4876
      %v4884 = vmul.f32 %v4883, %v4881
      %v4885 = vxor.u32 %v4884, 2147483648
      %v4886 = vsel %vm4803, %v4885, %v4884
      %v4887 = vsub.s32 4, %v4863
      %v4888 = vsel %vm4803, %v4887, %v4863
      %v4889 = vsel %vm4802, %v2465, %v4886
      %v4890 = vsel %vm4802, 0, %v4888
      %v4891 = vcosq.f32.pop %v4889
      %v4892 = vsinq.f32.pop %v4889
      %vm4893 = vweird.f32 %v2465
      %v4894 = vadd.s32 %v4890, 3
      %v4895 = vand.u32 %v4894, 3
      %vm4896 = vcmp.lt.s32.totalorder %v4895, 2
      %vm4897 = vcmp.eq.s32.totalorder %v4895, 0
      %v4898 = vxor.u32 %v4892, 2147483648
      %v4899 = vsel %vm4897, %v4891, %v4898
      %vm4900 = vcmp.eq.s32.totalorder %v4895, 2
      %v4901 = vxor.u32 %v4891, 2147483648
      %v4902 = vsel %vm4900, %v4901, %v4892
      %v4903 = vsel %vm4896, %v4899, %v4902
      %v4904 = vsel %vm4893, nan, %v4903
      %v4905 = vand.u32 2147483647, %v2466
      %vm4906 = vcmp.le.f32.partialorder %v4905, 0.7853982
      %vm4907 = vcmp.lt.s32.totalorder %v2466, 0
      %v4908 = vand.u32 %v2466, 2139095040
      %v4909 = vshrl.u32 %v4908, 23
      %v4910 = vsub.s32 %v4909, 127
      %v4911 = vand.u32 2147483647, %v2466
      %v4912 = vand.u32 %v4911, 8388607
      %v4913 = vor.u32 %v4912, 8388608
      %v4914 = vsub.s32 0, %v4913
      %v4915 = vadd.s32 %v4910, 1
      %vm4916 = vcmp.gt.s32.totalorder %v4915, 0
      %v4917 = vsel %vm4916, %v4915, 0
      %v4918 = vshrl.u32 %v4917, 5
      %v4919 = vand.u32 %v4917, 31
      %v4920 = vsub.s32 32, %v4919
      %v4921 = vshrl.u32 683565275, %v4920
      %v4922 = vshll.u32 683565275, %v4919
      %v4923 = vshrl.u32 2475754826, %v4920
      %v4924 = vor.u32 %v4922, %v4923
      %v4925 = vshll.u32 2475754826, %v4919
      %v4926 = vshrl.u32 2131351028, %v4920
      %v4927 = vor.u32 %v4925, %v4926
      %v4928 = vshll.u32 2131351028, %v4919
      %v4929 = vshrl.u32 2102212464, %v4920
      %v4930 = vor.u32 %v4928, %v4929
      %v4931 = vshll.u32 2102212464, %v4919
      %v4932 = vshrl.u32 920167782, %v4920
      %v4933 = vor.u32 %v4931, %v4932
      %v4934 = vshll.u32 920167782, %v4919
      %v4935 = vshrl.u32 1326507024, %v4920
      %v4936 = vor.u32 %v4934, %v4935
      %vm4937 = vcmp.lt.s32.totalorder %v4918, 1
      %vm4938 = vcmp.lt.s32.totalorder %v4918, 2
      %vm4939 = vcmp.lt.s32.totalorder %v4918, 3
      %vm4940 = vcmp.lt.s32.totalorder %v4918, 4
      %v4941 = vsel %vm4937, %v4921, %v4924
      %v4942 = vsel %vm4940, %v4930, 2102212464
      %v4943 = vsel %vm4939, %v4927, %v4942
      %v4944 = vsel %vm4938, %v4941, %v4943
      %v4945 = vsel %vm4937, %v4924, %v4927
      %v4946 = vsel %vm4940, %v4933, 920167782
      %v4947 = vsel %vm4939, %v4930, %v4946
      %v4948 = vsel %vm4938, %v4945, %v4947
      %v4949 = vsel %vm4937, %v4927, %v4930
      %v4950 = vsel %vm4940, %v4936, 1326507024
      %v4951 = vsel %vm4939, %v4933, %v4950
      %v4952 = vsel %vm4938, %v4949, %v4951
      %v4953 = vshll.u32 %v4913, 8
      %v4954 = vmul.u32.u64.compose %v4953, %v4952
      %v4955 = vextract.low.u32 %v4954
      %v4956 = vextract.high.u32 %v4954
      %v4957 = vmul.u32.u64.compose %v4953, %v4948
      %v4958 = vextract.low.u32 %v4957
      %v4959 = vextract.high.u32 %v4957
      %v4960 = vmul.u32 %v4953, %v4944
      %v4961 = vadd.s32 %v4956, %v4958
      %vm4962 = vc.u32 %v4956, %v4958
      %v4963 = vadd.s32 %v4959, 1
      %v4964 = vsel %vm4962, %v4963, %v4959
      %v4965 = vadd.s32 %v4960, %v4964
      %v4966 = vadd.s32 %v4965, 536870912
      %v4967 = vshrl.u32 %v4966, 30
      %v4968 = vshll.u32 %v4967, 30
      %v4969 = vsub.s32 %v4965, %v4968
      %vm4970 = vcmp.lt.s32.totalorder %v4969, 0
      %v4971 = vsub.s32 0, %v4969
      %v4972 = vsel %vm4970, %v4971, %v4969
      %v4973 = vclz %v4972
      %v4974 = vsub.s32 %v4973, 2
      %vm4975 = vcmp.gt.s32.totalorder 0, %v4974
      %v4976 = vsel %vm4975, 0, %v4974
      %v4977 = vsub.s32 32, %v4976
      %v4978 = vshll.u32 %v4969, %v4976
      %v4979 = vshrl.u32 %v4961, %v4977
      %v4980 = vor.u32 %v4978, %v4979
      %v4981 = vsub.s32 4294967266, %v4976
      %v4982 = vadd.s32 %v4981, 127
      %v4983 = vshll.u32 %v4982, 23
      %v4984 = vor.u32 4788187, %v4983
      %v4985 = vand.u32 2147483647, %v4984
      %v4987 = vcvt.s32.f32 %v4980
      %v4988 = vmul.f32 %v4987, %v4985
      %v4989 = vxor.u32 %v4988, 2147483648
      %v4990 = vsel %vm4907, %v4989, %v4988
      %v4991 = vsub.s32 4, %v4967
      %v4992 = vsel %vm4907, %v4991, %v4967
      %v4993 = vsel %vm4906, %v2466, %v4990
      %v4994 = vsel %vm4906, 0, %v4992
      %v4995 = vcosq.f32.pop %v4993
      %v4996 = vsinq.f32.pop %v4993
      %vm4997 = vweird.f32 %v2466
      %v4998 = vadd.s32 %v4994, 3
      %v4999 = vand.u32 %v4998, 3
      %vm5000 = vcmp.lt.s32.totalorder %v4999, 2
      %vm5001 = vcmp.eq.s32.totalorder %v4999, 0
      %v5002 = vxor.u32 %v4996, 2147483648
      %v5003 = vsel %vm5001, %v4995, %v5002
      %vm5004 = vcmp.eq.s32.totalorder %v4999, 2
      %v5005 = vxor.u32 %v4995, 2147483648
      %v5006 = vsel %vm5004, %v5005, %v4996
      %v5007 = vsel %vm5000, %v5003, %v5006
      %v5008 = vsel %vm4997, nan, %v5007
      %v5009 = vand.u32 2147483647, %v2467
      %vm5010 = vcmp.le.f32.partialorder %v5009, 0.7853982
      %vm5011 = vcmp.lt.s32.totalorder %v2467, 0
      %v5012 = vand.u32 %v2467, 2139095040
      %v5013 = vshrl.u32 %v5012, 23
      %v5014 = vsub.s32 %v5013, 127
      %v5015 = vand.u32 2147483647, %v2467
      %v5016 = vand.u32 %v5015, 8388607
      %v5017 = vor.u32 %v5016, 8388608
      %v5018 = vsub.s32 0, %v5017
      %v5019 = vadd.s32 %v5014, 1
      %vm5020 = vcmp.gt.s32.totalorder %v5019, 0
      %v5021 = vsel %vm5020, %v5019, 0
      %v5022 = vshrl.u32 %v5021, 5
      %v5023 = vand.u32 %v5021, 31
      %v5024 = vsub.s32 32, %v5023
      %v5025 = vshrl.u32 683565275, %v5024
      %v5026 = vshll.u32 683565275, %v5023
      %v5027 = vshrl.u32 2475754826, %v5024
      %v5028 = vor.u32 %v5026, %v5027
      %v5029 = vshll.u32 2475754826, %v5023
      %v5030 = vshrl.u32 2131351028, %v5024
      %v5031 = vor.u32 %v5029, %v5030
      %v5032 = vshll.u32 2131351028, %v5023
      %v5033 = vshrl.u32 2102212464, %v5024
      %v5034 = vor.u32 %v5032, %v5033
      %v5035 = vshll.u32 2102212464, %v5023
      %v5036 = vshrl.u32 920167782, %v5024
      %v5037 = vor.u32 %v5035, %v5036
      %v5038 = vshll.u32 920167782, %v5023
      %v5039 = vshrl.u32 1326507024, %v5024
      %v5040 = vor.u32 %v5038, %v5039
      %vm5041 = vcmp.lt.s32.totalorder %v5022, 1
      %vm5042 = vcmp.lt.s32.totalorder %v5022, 2
      %vm5043 = vcmp.lt.s32.totalorder %v5022, 3
      %vm5044 = vcmp.lt.s32.totalorder %v5022, 4
      %v5045 = vsel %vm5041, %v5025, %v5028
      %v5046 = vsel %vm5044, %v5034, 2102212464
      %v5047 = vsel %vm5043, %v5031, %v5046
      %v5048 = vsel %vm5042, %v5045, %v5047
      %v5049 = vsel %vm5041, %v5028, %v5031
      %v5050 = vsel %vm5044, %v5037, 920167782
      %v5051 = vsel %vm5043, %v5034, %v5050
      %v5052 = vsel %vm5042, %v5049, %v5051
      %v5053 = vsel %vm5041, %v5031, %v5034
      %v5054 = vsel %vm5044, %v5040, 1326507024
      %v5055 = vsel %vm5043, %v5037, %v5054
      %v5056 = vsel %vm5042, %v5053, %v5055
      %v5057 = vshll.u32 %v5017, 8
      %v5058 = vmul.u32.u64.compose %v5057, %v5056
      %v5059 = vextract.low.u32 %v5058
      %v5060 = vextract.high.u32 %v5058
      %v5061 = vmul.u32.u64.compose %v5057, %v5052
      %v5062 = vextract.low.u32 %v5061
      %v5063 = vextract.high.u32 %v5061
      %v5064 = vmul.u32 %v5057, %v5048
      %v5065 = vadd.s32 %v5060, %v5062
      %vm5066 = vc.u32 %v5060, %v5062
      %v5067 = vadd.s32 %v5063, 1
      %v5068 = vsel %vm5066, %v5067, %v5063
      %v5069 = vadd.s32 %v5064, %v5068
      %v5070 = vadd.s32 %v5069, 536870912
      %v5071 = vshrl.u32 %v5070, 30
      %v5072 = vshll.u32 %v5071, 30
      %v5073 = vsub.s32 %v5069, %v5072
      %vm5074 = vcmp.lt.s32.totalorder %v5073, 0
      %v5075 = vsub.s32 0, %v5073
      %v5076 = vsel %vm5074, %v5075, %v5073
      %v5077 = vclz %v5076
      %v5078 = vsub.s32 %v5077, 2
      %vm5079 = vcmp.gt.s32.totalorder 0, %v5078
      %v5080 = vsel %vm5079, 0, %v5078
      %v5081 = vsub.s32 32, %v5080
      %v5082 = vshll.u32 %v5073, %v5080
      %v5083 = vshrl.u32 %v5065, %v5081
      %v5084 = vor.u32 %v5082, %v5083
      %v5085 = vsub.s32 4294967266, %v5080
      %v5086 = vadd.s32 %v5085, 127
      %v5087 = vshll.u32 %v5086, 23
      %v5088 = vor.u32 4788187, %v5087
      %v5089 = vand.u32 2147483647, %v5088
      %v5091 = vcvt.s32.f32 %v5084
      %v5092 = vmul.f32 %v5091, %v5089
      %v5093 = vxor.u32 %v5092, 2147483648
      %v5094 = vsel %vm5011, %v5093, %v5092
      %v5095 = vsub.s32 4, %v5071
      %v5096 = vsel %vm5011, %v5095, %v5071
      %v5097 = vsel %vm5010, %v2467, %v5094
      %v5098 = vsel %vm5010, 0, %v5096
      %v5099 = vcosq.f32.pop %v5097
      %v5100 = vsinq.f32.pop %v5097
      %vm5101 = vweird.f32 %v2467
      %v5102 = vadd.s32 %v5098, 3
      %v5103 = vand.u32 %v5102, 3
      %vm5104 = vcmp.lt.s32.totalorder %v5103, 2
      %vm5105 = vcmp.eq.s32.totalorder %v5103, 0
      %v5106 = vxor.u32 %v5100, 2147483648
      %v5107 = vsel %vm5105, %v5099, %v5106
      %vm5108 = vcmp.eq.s32.totalorder %v5103, 2
      %v5109 = vxor.u32 %v5099, 2147483648
      %v5110 = vsel %vm5108, %v5109, %v5100
      %v5111 = vsel %vm5104, %v5107, %v5110
      %v5112 = vsel %vm5101, nan, %v5111
      %v5113 = vand.u32 2147483647, %v2468
      %vm5114 = vcmp.le.f32.partialorder %v5113, 0.7853982
      %vm5115 = vcmp.lt.s32.totalorder %v2468, 0
      %v5116 = vand.u32 %v2468, 2139095040
      %v5117 = vshrl.u32 %v5116, 23
      %v5118 = vsub.s32 %v5117, 127
      %v5119 = vand.u32 2147483647, %v2468
      %v5120 = vand.u32 %v5119, 8388607
      %v5121 = vor.u32 %v5120, 8388608
      %v5122 = vsub.s32 0, %v5121
      %v5123 = vadd.s32 %v5118, 1
      %vm5124 = vcmp.gt.s32.totalorder %v5123, 0
      %v5125 = vsel %vm5124, %v5123, 0
      %v5126 = vshrl.u32 %v5125, 5
      %v5127 = vand.u32 %v5125, 31
      %v5128 = vsub.s32 32, %v5127
      %v5129 = vshrl.u32 683565275, %v5128
      %v5130 = vshll.u32 683565275, %v5127
      %v5131 = vshrl.u32 2475754826, %v5128
      %v5132 = vor.u32 %v5130, %v5131
      %v5133 = vshll.u32 2475754826, %v5127
      %v5134 = vshrl.u32 2131351028, %v5128
      %v5135 = vor.u32 %v5133, %v5134
      %v5136 = vshll.u32 2131351028, %v5127
      %v5137 = vshrl.u32 2102212464, %v5128
      %v5138 = vor.u32 %v5136, %v5137
      %v5139 = vshll.u32 2102212464, %v5127
      %v5140 = vshrl.u32 920167782, %v5128
      %v5141 = vor.u32 %v5139, %v5140
      %v5142 = vshll.u32 920167782, %v5127
      %v5143 = vshrl.u32 1326507024, %v5128
      %v5144 = vor.u32 %v5142, %v5143
      %vm5145 = vcmp.lt.s32.totalorder %v5126, 1
      %vm5146 = vcmp.lt.s32.totalorder %v5126, 2
      %vm5147 = vcmp.lt.s32.totalorder %v5126, 3
      %vm5148 = vcmp.lt.s32.totalorder %v5126, 4
      %v5149 = vsel %vm5145, %v5129, %v5132
      %v5150 = vsel %vm5148, %v5138, 2102212464
      %v5151 = vsel %vm5147, %v5135, %v5150
      %v5152 = vsel %vm5146, %v5149, %v5151
      %v5153 = vsel %vm5145, %v5132, %v5135
      %v5154 = vsel %vm5148, %v5141, 920167782
      %v5155 = vsel %vm5147, %v5138, %v5154
      %v5156 = vsel %vm5146, %v5153, %v5155
      %v5157 = vsel %vm5145, %v5135, %v5138
      %v5158 = vsel %vm5148, %v5144, 1326507024
      %v5159 = vsel %vm5147, %v5141, %v5158
      %v5160 = vsel %vm5146, %v5157, %v5159
      %v5161 = vshll.u32 %v5121, 8
      %v5162 = vmul.u32.u64.compose %v5161, %v5160
      %v5163 = vextract.low.u32 %v5162
      %v5164 = vextract.high.u32 %v5162
      %v5165 = vmul.u32.u64.compose %v5161, %v5156
      %v5166 = vextract.low.u32 %v5165
      %v5167 = vextract.high.u32 %v5165
      %v5168 = vmul.u32 %v5161, %v5152
      %v5169 = vadd.s32 %v5164, %v5166
      %vm5170 = vc.u32 %v5164, %v5166
      %v5171 = vadd.s32 %v5167, 1
      %v5172 = vsel %vm5170, %v5171, %v5167
      %v5173 = vadd.s32 %v5168, %v5172
      %v5174 = vadd.s32 %v5173, 536870912
      %v5175 = vshrl.u32 %v5174, 30
      %v5176 = vshll.u32 %v5175, 30
      %v5177 = vsub.s32 %v5173, %v5176
      %vm5178 = vcmp.lt.s32.totalorder %v5177, 0
      %v5179 = vsub.s32 0, %v5177
      %v5180 = vsel %vm5178, %v5179, %v5177
      %v5181 = vclz %v5180
      %v5182 = vsub.s32 %v5181, 2
      %vm5183 = vcmp.gt.s32.totalorder 0, %v5182
      %v5184 = vsel %vm5183, 0, %v5182
      %v5185 = vsub.s32 32, %v5184
      %v5186 = vshll.u32 %v5177, %v5184
      %v5187 = vshrl.u32 %v5169, %v5185
      %v5188 = vor.u32 %v5186, %v5187
      %v5189 = vsub.s32 4294967266, %v5184
      %v5190 = vadd.s32 %v5189, 127
      %v5191 = vshll.u32 %v5190, 23
      %v5192 = vor.u32 4788187, %v5191
      %v5193 = vand.u32 2147483647, %v5192
      %v5195 = vcvt.s32.f32 %v5188
      %v5196 = vmul.f32 %v5195, %v5193
      %v5197 = vxor.u32 %v5196, 2147483648
      %v5198 = vsel %vm5115, %v5197, %v5196
      %v5199 = vsub.s32 4, %v5175
      %v5200 = vsel %vm5115, %v5199, %v5175
      %v5201 = vsel %vm5114, %v2468, %v5198
      %v5202 = vsel %vm5114, 0, %v5200
      %v5203 = vcosq.f32.pop %v5201
      %v5204 = vsinq.f32.pop %v5201
      %vm5205 = vweird.f32 %v2468
      %v5206 = vadd.s32 %v5202, 3
      %v5207 = vand.u32 %v5206, 3
      %vm5208 = vcmp.lt.s32.totalorder %v5207, 2
      %vm5209 = vcmp.eq.s32.totalorder %v5207, 0
      %v5210 = vxor.u32 %v5204, 2147483648
      %v5211 = vsel %vm5209, %v5203, %v5210
      %vm5212 = vcmp.eq.s32.totalorder %v5207, 2
      %v5213 = vxor.u32 %v5203, 2147483648
      %v5214 = vsel %vm5212, %v5213, %v5204
      %v5215 = vsel %vm5208, %v5211, %v5214
      %v5216 = vsel %vm5205, nan, %v5215
      %v5217 = vand.u32 2147483647, %v2469
      %vm5218 = vcmp.le.f32.partialorder %v5217, 0.7853982
      %vm5219 = vcmp.lt.s32.totalorder %v2469, 0
      %v5220 = vand.u32 %v2469, 2139095040
      %v5221 = vshrl.u32 %v5220, 23
      %v5222 = vsub.s32 %v5221, 127
      %v5223 = vand.u32 2147483647, %v2469
      %v5224 = vand.u32 %v5223, 8388607
      %v5225 = vor.u32 %v5224, 8388608
      %v5226 = vsub.s32 0, %v5225
      %v5227 = vadd.s32 %v5222, 1
      %vm5228 = vcmp.gt.s32.totalorder %v5227, 0
      %v5229 = vsel %vm5228, %v5227, 0
      %v5230 = vshrl.u32 %v5229, 5
      %v5231 = vand.u32 %v5229, 31
      %v5232 = vsub.s32 32, %v5231
      %v5233 = vshrl.u32 683565275, %v5232
      %v5234 = vshll.u32 683565275, %v5231
      %v5235 = vshrl.u32 2475754826, %v5232
      %v5236 = vor.u32 %v5234, %v5235
      %v5237 = vshll.u32 2475754826, %v5231
      %v5238 = vshrl.u32 2131351028, %v5232
      %v5239 = vor.u32 %v5237, %v5238
      %v5240 = vshll.u32 2131351028, %v5231
      %v5241 = vshrl.u32 2102212464, %v5232
      %v5242 = vor.u32 %v5240, %v5241
      %v5243 = vshll.u32 2102212464, %v5231
      %v5244 = vshrl.u32 920167782, %v5232
      %v5245 = vor.u32 %v5243, %v5244
      %v5246 = vshll.u32 920167782, %v5231
      %v5247 = vshrl.u32 1326507024, %v5232
      %v5248 = vor.u32 %v5246, %v5247
      %vm5249 = vcmp.lt.s32.totalorder %v5230, 1
      %vm5250 = vcmp.lt.s32.totalorder %v5230, 2
      %vm5251 = vcmp.lt.s32.totalorder %v5230, 3
      %vm5252 = vcmp.lt.s32.totalorder %v5230, 4
      %v5253 = vsel %vm5249, %v5233, %v5236
      %v5254 = vsel %vm5252, %v5242, 2102212464
      %v5255 = vsel %vm5251, %v5239, %v5254
      %v5256 = vsel %vm5250, %v5253, %v5255
      %v5257 = vsel %vm5249, %v5236, %v5239
      %v5258 = vsel %vm5252, %v5245, 920167782
      %v5259 = vsel %vm5251, %v5242, %v5258
      %v5260 = vsel %vm5250, %v5257, %v5259
      %v5261 = vsel %vm5249, %v5239, %v5242
      %v5262 = vsel %vm5252, %v5248, 1326507024
      %v5263 = vsel %vm5251, %v5245, %v5262
      %v5264 = vsel %vm5250, %v5261, %v5263
      %v5265 = vshll.u32 %v5225, 8
      %v5266 = vmul.u32.u64.compose %v5265, %v5264
      %v5267 = vextract.low.u32 %v5266
      %v5268 = vextract.high.u32 %v5266
      %v5269 = vmul.u32.u64.compose %v5265, %v5260
      %v5270 = vextract.low.u32 %v5269
      %v5271 = vextract.high.u32 %v5269
      %v5272 = vmul.u32 %v5265, %v5256
      %v5273 = vadd.s32 %v5268, %v5270
      %vm5274 = vc.u32 %v5268, %v5270
      %v5275 = vadd.s32 %v5271, 1
      %v5276 = vsel %vm5274, %v5275, %v5271
      %v5277 = vadd.s32 %v5272, %v5276
      %v5278 = vadd.s32 %v5277, 536870912
      %v5279 = vshrl.u32 %v5278, 30
      %v5280 = vshll.u32 %v5279, 30
      %v5281 = vsub.s32 %v5277, %v5280
      %vm5282 = vcmp.lt.s32.totalorder %v5281, 0
      %v5283 = vsub.s32 0, %v5281
      %v5284 = vsel %vm5282, %v5283, %v5281
      %v5285 = vclz %v5284
      %v5286 = vsub.s32 %v5285, 2
      %vm5287 = vcmp.gt.s32.totalorder 0, %v5286
      %v5288 = vsel %vm5287, 0, %v5286
      %v5289 = vsub.s32 32, %v5288
      %v5290 = vshll.u32 %v5281, %v5288
      %v5291 = vshrl.u32 %v5273, %v5289
      %v5292 = vor.u32 %v5290, %v5291
      %v5293 = vsub.s32 4294967266, %v5288
      %v5294 = vadd.s32 %v5293, 127
      %v5295 = vshll.u32 %v5294, 23
      %v5296 = vor.u32 4788187, %v5295
      %v5297 = vand.u32 2147483647, %v5296
      %v5299 = vcvt.s32.f32 %v5292
      %v5300 = vmul.f32 %v5299, %v5297
      %v5301 = vxor.u32 %v5300, 2147483648
      %v5302 = vsel %vm5219, %v5301, %v5300
      %v5303 = vsub.s32 4, %v5279
      %v5304 = vsel %vm5219, %v5303, %v5279
      %v5305 = vsel %vm5218, %v2469, %v5302
      %v5306 = vsel %vm5218, 0, %v5304
      %v5307 = vcosq.f32.pop %v5305
      %v5308 = vsinq.f32.pop %v5305
      %vm5309 = vweird.f32 %v2469
      %v5310 = vadd.s32 %v5306, 3
      %v5311 = vand.u32 %v5310, 3
      %vm5312 = vcmp.lt.s32.totalorder %v5311, 2
      %vm5313 = vcmp.eq.s32.totalorder %v5311, 0
      %v5314 = vxor.u32 %v5308, 2147483648
      %v5315 = vsel %vm5313, %v5307, %v5314
      %vm5316 = vcmp.eq.s32.totalorder %v5311, 2
      %v5317 = vxor.u32 %v5307, 2147483648
      %v5318 = vsel %vm5316, %v5317, %v5308
      %v5319 = vsel %vm5312, %v5315, %v5318
      %v5320 = vsel %vm5309, nan, %v5319
      %v5321 = vand.u32 2147483647, %v2470
      %vm5322 = vcmp.le.f32.partialorder %v5321, 0.7853982
      %vm5323 = vcmp.lt.s32.totalorder %v2470, 0
      %v5324 = vand.u32 %v2470, 2139095040
      %v5325 = vshrl.u32 %v5324, 23
      %v5326 = vsub.s32 %v5325, 127
      %v5327 = vand.u32 2147483647, %v2470
      %v5328 = vand.u32 %v5327, 8388607
      %v5329 = vor.u32 %v5328, 8388608
      %v5330 = vsub.s32 0, %v5329
      %v5331 = vadd.s32 %v5326, 1
      %vm5332 = vcmp.gt.s32.totalorder %v5331, 0
      %v5333 = vsel %vm5332, %v5331, 0
      %v5334 = vshrl.u32 %v5333, 5
      %v5335 = vand.u32 %v5333, 31
      %v5336 = vsub.s32 32, %v5335
      %v5337 = vshrl.u32 683565275, %v5336
      %v5338 = vshll.u32 683565275, %v5335
      %v5339 = vshrl.u32 2475754826, %v5336
      %v5340 = vor.u32 %v5338, %v5339
      %v5341 = vshll.u32 2475754826, %v5335
      %v5342 = vshrl.u32 2131351028, %v5336
      %v5343 = vor.u32 %v5341, %v5342
      %v5344 = vshll.u32 2131351028, %v5335
      %v5345 = vshrl.u32 2102212464, %v5336
      %v5346 = vor.u32 %v5344, %v5345
      %v5347 = vshll.u32 2102212464, %v5335
      %v5348 = vshrl.u32 920167782, %v5336
      %v5349 = vor.u32 %v5347, %v5348
      %v5350 = vshll.u32 920167782, %v5335
      %v5351 = vshrl.u32 1326507024, %v5336
      %v5352 = vor.u32 %v5350, %v5351
      %vm5353 = vcmp.lt.s32.totalorder %v5334, 1
      %vm5354 = vcmp.lt.s32.totalorder %v5334, 2
      %vm5355 = vcmp.lt.s32.totalorder %v5334, 3
      %vm5356 = vcmp.lt.s32.totalorder %v5334, 4
      %v5357 = vsel %vm5353, %v5337, %v5340
      %v5358 = vsel %vm5356, %v5346, 2102212464
      %v5359 = vsel %vm5355, %v5343, %v5358
      %v5360 = vsel %vm5354, %v5357, %v5359
      %v5361 = vsel %vm5353, %v5340, %v5343
      %v5362 = vsel %vm5356, %v5349, 920167782
      %v5363 = vsel %vm5355, %v5346, %v5362
      %v5364 = vsel %vm5354, %v5361, %v5363
      %v5365 = vsel %vm5353, %v5343, %v5346
      %v5366 = vsel %vm5356, %v5352, 1326507024
      %v5367 = vsel %vm5355, %v5349, %v5366
      %v5368 = vsel %vm5354, %v5365, %v5367
      %v5369 = vshll.u32 %v5329, 8
      %v5370 = vmul.u32.u64.compose %v5369, %v5368
      %v5371 = vextract.low.u32 %v5370
      %v5372 = vextract.high.u32 %v5370
      %v5373 = vmul.u32.u64.compose %v5369, %v5364
      %v5374 = vextract.low.u32 %v5373
      %v5375 = vextract.high.u32 %v5373
      %v5376 = vmul.u32 %v5369, %v5360
      %v5377 = vadd.s32 %v5372, %v5374
      %vm5378 = vc.u32 %v5372, %v5374
      %v5379 = vadd.s32 %v5375, 1
      %v5380 = vsel %vm5378, %v5379, %v5375
      %v5381 = vadd.s32 %v5376, %v5380
      %v5382 = vadd.s32 %v5381, 536870912
      %v5383 = vshrl.u32 %v5382, 30
      %v5384 = vshll.u32 %v5383, 30
      %v5385 = vsub.s32 %v5381, %v5384
      %vm5386 = vcmp.lt.s32.totalorder %v5385, 0
      %v5387 = vsub.s32 0, %v5385
      %v5388 = vsel %vm5386, %v5387, %v5385
      %v5389 = vclz %v5388
      %v5390 = vsub.s32 %v5389, 2
      %vm5391 = vcmp.gt.s32.totalorder 0, %v5390
      %v5392 = vsel %vm5391, 0, %v5390
      %v5393 = vsub.s32 32, %v5392
      %v5394 = vshll.u32 %v5385, %v5392
      %v5395 = vshrl.u32 %v5377, %v5393
      %v5396 = vor.u32 %v5394, %v5395
      %v5397 = vsub.s32 4294967266, %v5392
      %v5398 = vadd.s32 %v5397, 127
      %v5399 = vshll.u32 %v5398, 23
      %v5400 = vor.u32 4788187, %v5399
      %v5401 = vand.u32 2147483647, %v5400
      %v5403 = vcvt.s32.f32 %v5396
      %v5404 = vmul.f32 %v5403, %v5401
      %v5405 = vxor.u32 %v5404, 2147483648
      %v5406 = vsel %vm5323, %v5405, %v5404
      %v5407 = vsub.s32 4, %v5383
      %v5408 = vsel %vm5323, %v5407, %v5383
      %v5409 = vsel %vm5322, %v2470, %v5406
      %v5410 = vsel %vm5322, 0, %v5408
      %v5411 = vcosq.f32.pop %v5409
      %v5412 = vsinq.f32.pop %v5409
      %vm5413 = vweird.f32 %v2470
      %v5414 = vadd.s32 %v5410, 3
      %v5415 = vand.u32 %v5414, 3
      %vm5416 = vcmp.lt.s32.totalorder %v5415, 2
      %vm5417 = vcmp.eq.s32.totalorder %v5415, 0
      %v5418 = vxor.u32 %v5412, 2147483648
      %v5419 = vsel %vm5417, %v5411, %v5418
      %vm5420 = vcmp.eq.s32.totalorder %v5415, 2
      %v5421 = vxor.u32 %v5411, 2147483648
      %v5422 = vsel %vm5420, %v5421, %v5412
      %v5423 = vsel %vm5416, %v5419, %v5422
      %v5424 = vsel %vm5413, nan, %v5423
      %v5425 = vand.u32 2147483647, %v2471
      %vm5426 = vcmp.le.f32.partialorder %v5425, 0.7853982
      %vm5427 = vcmp.lt.s32.totalorder %v2471, 0
      %v5428 = vand.u32 %v2471, 2139095040
      %v5429 = vshrl.u32 %v5428, 23
      %v5430 = vsub.s32 %v5429, 127
      %v5431 = vand.u32 2147483647, %v2471
      %v5432 = vand.u32 %v5431, 8388607
      %v5433 = vor.u32 %v5432, 8388608
      %v5434 = vsub.s32 0, %v5433
      %v5435 = vadd.s32 %v5430, 1
      %vm5436 = vcmp.gt.s32.totalorder %v5435, 0
      %v5437 = vsel %vm5436, %v5435, 0
      %v5438 = vshrl.u32 %v5437, 5
      %v5439 = vand.u32 %v5437, 31
      %v5440 = vsub.s32 32, %v5439
      %v5441 = vshrl.u32 683565275, %v5440
      %v5442 = vshll.u32 683565275, %v5439
      %v5443 = vshrl.u32 2475754826, %v5440
      %v5444 = vor.u32 %v5442, %v5443
      %v5445 = vshll.u32 2475754826, %v5439
      %v5446 = vshrl.u32 2131351028, %v5440
      %v5447 = vor.u32 %v5445, %v5446
      %v5448 = vshll.u32 2131351028, %v5439
      %v5449 = vshrl.u32 2102212464, %v5440
      %v5450 = vor.u32 %v5448, %v5449
      %v5451 = vshll.u32 2102212464, %v5439
      %v5452 = vshrl.u32 920167782, %v5440
      %v5453 = vor.u32 %v5451, %v5452
      %v5454 = vshll.u32 920167782, %v5439
      %v5455 = vshrl.u32 1326507024, %v5440
      %v5456 = vor.u32 %v5454, %v5455
      %vm5457 = vcmp.lt.s32.totalorder %v5438, 1
      %vm5458 = vcmp.lt.s32.totalorder %v5438, 2
      %vm5459 = vcmp.lt.s32.totalorder %v5438, 3
      %vm5460 = vcmp.lt.s32.totalorder %v5438, 4
      %v5461 = vsel %vm5457, %v5441, %v5444
      %v5462 = vsel %vm5460, %v5450, 2102212464
      %v5463 = vsel %vm5459, %v5447, %v5462
      %v5464 = vsel %vm5458, %v5461, %v5463
      %v5465 = vsel %vm5457, %v5444, %v5447
      %v5466 = vsel %vm5460, %v5453, 920167782
      %v5467 = vsel %vm5459, %v5450, %v5466
      %v5468 = vsel %vm5458, %v5465, %v5467
      %v5469 = vsel %vm5457, %v5447, %v5450
      %v5470 = vsel %vm5460, %v5456, 1326507024
      %v5471 = vsel %vm5459, %v5453, %v5470
      %v5472 = vsel %vm5458, %v5469, %v5471
      %v5473 = vshll.u32 %v5433, 8
      %v5474 = vmul.u32.u64.compose %v5473, %v5472
      %v5475 = vextract.low.u32 %v5474
      %v5476 = vextract.high.u32 %v5474
      %v5477 = vmul.u32.u64.compose %v5473, %v5468
      %v5478 = vextract.low.u32 %v5477
      %v5479 = vextract.high.u32 %v5477
      %v5480 = vmul.u32 %v5473, %v5464
      %v5481 = vadd.s32 %v5476, %v5478
      %vm5482 = vc.u32 %v5476, %v5478
      %v5483 = vadd.s32 %v5479, 1
      %v5484 = vsel %vm5482, %v5483, %v5479
      %v5485 = vadd.s32 %v5480, %v5484
      %v5486 = vadd.s32 %v5485, 536870912
      %v5487 = vshrl.u32 %v5486, 30
      %v5488 = vshll.u32 %v5487, 30
      %v5489 = vsub.s32 %v5485, %v5488
      %vm5490 = vcmp.lt.s32.totalorder %v5489, 0
      %v5491 = vsub.s32 0, %v5489
      %v5492 = vsel %vm5490, %v5491, %v5489
      %v5493 = vclz %v5492
      %v5494 = vsub.s32 %v5493, 2
      %vm5495 = vcmp.gt.s32.totalorder 0, %v5494
      %v5496 = vsel %vm5495, 0, %v5494
      %v5497 = vsub.s32 32, %v5496
      %v5498 = vshll.u32 %v5489, %v5496
      %v5499 = vshrl.u32 %v5481, %v5497
      %v5500 = vor.u32 %v5498, %v5499
      %v5501 = vsub.s32 4294967266, %v5496
      %v5502 = vadd.s32 %v5501, 127
      %v5503 = vshll.u32 %v5502, 23
      %v5504 = vor.u32 4788187, %v5503
      %v5505 = vand.u32 2147483647, %v5504
      %v5507 = vcvt.s32.f32 %v5500
      %v5508 = vmul.f32 %v5507, %v5505
      %v5509 = vxor.u32 %v5508, 2147483648
      %v5510 = vsel %vm5427, %v5509, %v5508
      %v5511 = vsub.s32 4, %v5487
      %v5512 = vsel %vm5427, %v5511, %v5487
      %v5513 = vsel %vm5426, %v2471, %v5510
      %v5514 = vsel %vm5426, 0, %v5512
      %v5515 = vcosq.f32.pop %v5513
      %v5516 = vsinq.f32.pop %v5513
      %vm5517 = vweird.f32 %v2471
      %v5518 = vadd.s32 %v5514, 3
      %v5519 = vand.u32 %v5518, 3
      %vm5520 = vcmp.lt.s32.totalorder %v5519, 2
      %vm5521 = vcmp.eq.s32.totalorder %v5519, 0
      %v5522 = vxor.u32 %v5516, 2147483648
      %v5523 = vsel %vm5521, %v5515, %v5522
      %vm5524 = vcmp.eq.s32.totalorder %v5519, 2
      %v5525 = vxor.u32 %v5515, 2147483648
      %v5526 = vsel %vm5524, %v5525, %v5516
      %v5527 = vsel %vm5520, %v5523, %v5526
      %v5528 = vsel %vm5517, nan, %v5527
      %v5529 = vand.u32 2147483647, %v2472
      %vm5530 = vcmp.le.f32.partialorder %v5529, 0.7853982
      %vm5531 = vcmp.lt.s32.totalorder %v2472, 0
      %v5532 = vand.u32 %v2472, 2139095040
      %v5533 = vshrl.u32 %v5532, 23
      %v5534 = vsub.s32 %v5533, 127
      %v5535 = vand.u32 2147483647, %v2472
      %v5536 = vand.u32 %v5535, 8388607
      %v5537 = vor.u32 %v5536, 8388608
      %v5538 = vsub.s32 0, %v5537
      %v5539 = vadd.s32 %v5534, 1
      %vm5540 = vcmp.gt.s32.totalorder %v5539, 0
      %v5541 = vsel %vm5540, %v5539, 0
      %v5542 = vshrl.u32 %v5541, 5
      %v5543 = vand.u32 %v5541, 31
      %v5544 = vsub.s32 32, %v5543
      %v5545 = vshrl.u32 683565275, %v5544
      %v5546 = vshll.u32 683565275, %v5543
      %v5547 = vshrl.u32 2475754826, %v5544
      %v5548 = vor.u32 %v5546, %v5547
      %v5549 = vshll.u32 2475754826, %v5543
      %v5550 = vshrl.u32 2131351028, %v5544
      %v5551 = vor.u32 %v5549, %v5550
      %v5552 = vshll.u32 2131351028, %v5543
      %v5553 = vshrl.u32 2102212464, %v5544
      %v5554 = vor.u32 %v5552, %v5553
      %v5555 = vshll.u32 2102212464, %v5543
      %v5556 = vshrl.u32 920167782, %v5544
      %v5557 = vor.u32 %v5555, %v5556
      %v5558 = vshll.u32 920167782, %v5543
      %v5559 = vshrl.u32 1326507024, %v5544
      %v5560 = vor.u32 %v5558, %v5559
      %vm5561 = vcmp.lt.s32.totalorder %v5542, 1
      %vm5562 = vcmp.lt.s32.totalorder %v5542, 2
      %vm5563 = vcmp.lt.s32.totalorder %v5542, 3
      %vm5564 = vcmp.lt.s32.totalorder %v5542, 4
      %v5565 = vsel %vm5561, %v5545, %v5548
      %v5566 = vsel %vm5564, %v5554, 2102212464
      %v5567 = vsel %vm5563, %v5551, %v5566
      %v5568 = vsel %vm5562, %v5565, %v5567
      %v5569 = vsel %vm5561, %v5548, %v5551
      %v5570 = vsel %vm5564, %v5557, 920167782
      %v5571 = vsel %vm5563, %v5554, %v5570
      %v5572 = vsel %vm5562, %v5569, %v5571
      %v5573 = vsel %vm5561, %v5551, %v5554
      %v5574 = vsel %vm5564, %v5560, 1326507024
      %v5575 = vsel %vm5563, %v5557, %v5574
      %v5576 = vsel %vm5562, %v5573, %v5575
      %v5577 = vshll.u32 %v5537, 8
      %v5578 = vmul.u32.u64.compose %v5577, %v5576
      %v5579 = vextract.low.u32 %v5578
      %v5580 = vextract.high.u32 %v5578
      %v5581 = vmul.u32.u64.compose %v5577, %v5572
      %v5582 = vextract.low.u32 %v5581
      %v5583 = vextract.high.u32 %v5581
      %v5584 = vmul.u32 %v5577, %v5568
      %v5585 = vadd.s32 %v5580, %v5582
      %vm5586 = vc.u32 %v5580, %v5582
      %v5587 = vadd.s32 %v5583, 1
      %v5588 = vsel %vm5586, %v5587, %v5583
      %v5589 = vadd.s32 %v5584, %v5588
      %v5590 = vadd.s32 %v5589, 536870912
      %v5591 = vshrl.u32 %v5590, 30
      %v5592 = vshll.u32 %v5591, 30
      %v5593 = vsub.s32 %v5589, %v5592
      %vm5594 = vcmp.lt.s32.totalorder %v5593, 0
      %v5595 = vsub.s32 0, %v5593
      %v5596 = vsel %vm5594, %v5595, %v5593
      %v5597 = vclz %v5596
      %v5598 = vsub.s32 %v5597, 2
      %vm5599 = vcmp.gt.s32.totalorder 0, %v5598
      %v5600 = vsel %vm5599, 0, %v5598
      %v5601 = vsub.s32 32, %v5600
      %v5602 = vshll.u32 %v5593, %v5600
      %v5603 = vshrl.u32 %v5585, %v5601
      %v5604 = vor.u32 %v5602, %v5603
      %v5605 = vsub.s32 4294967266, %v5600
      %v5606 = vadd.s32 %v5605, 127
      %v5607 = vshll.u32 %v5606, 23
      %v5608 = vor.u32 4788187, %v5607
      %v5609 = vand.u32 2147483647, %v5608
      %v5611 = vcvt.s32.f32 %v5604
      %v5612 = vmul.f32 %v5611, %v5609
      %v5613 = vxor.u32 %v5612, 2147483648
      %v5614 = vsel %vm5531, %v5613, %v5612
      %v5615 = vsub.s32 4, %v5591
      %v5616 = vsel %vm5531, %v5615, %v5591
      %v5617 = vsel %vm5530, %v2472, %v5614
      %v5618 = vsel %vm5530, 0, %v5616
      %v5619 = vcosq.f32.pop %v5617
      %v5620 = vsinq.f32.pop %v5617
      %vm5621 = vweird.f32 %v2472
      %v5622 = vadd.s32 %v5618, 3
      %v5623 = vand.u32 %v5622, 3
      %vm5624 = vcmp.lt.s32.totalorder %v5623, 2
      %vm5625 = vcmp.eq.s32.totalorder %v5623, 0
      %v5626 = vxor.u32 %v5620, 2147483648
      %v5627 = vsel %vm5625, %v5619, %v5626
      %vm5628 = vcmp.eq.s32.totalorder %v5623, 2
      %v5629 = vxor.u32 %v5619, 2147483648
      %v5630 = vsel %vm5628, %v5629, %v5620
      %v5631 = vsel %vm5624, %v5627, %v5630
      %v5632 = vsel %vm5621, nan, %v5631
      %v5633 = vand.u32 2147483647, %v2473
      %vm5634 = vcmp.le.f32.partialorder %v5633, 0.7853982
      %vm5635 = vcmp.lt.s32.totalorder %v2473, 0
      %v5636 = vand.u32 %v2473, 2139095040
      %v5637 = vshrl.u32 %v5636, 23
      %v5638 = vsub.s32 %v5637, 127
      %v5639 = vand.u32 2147483647, %v2473
      %v5640 = vand.u32 %v5639, 8388607
      %v5641 = vor.u32 %v5640, 8388608
      %v5642 = vsub.s32 0, %v5641
      %v5643 = vadd.s32 %v5638, 1
      %vm5644 = vcmp.gt.s32.totalorder %v5643, 0
      %v5645 = vsel %vm5644, %v5643, 0
      %v5646 = vshrl.u32 %v5645, 5
      %v5647 = vand.u32 %v5645, 31
      %v5648 = vsub.s32 32, %v5647
      %v5649 = vshrl.u32 683565275, %v5648
      %v5650 = vshll.u32 683565275, %v5647
      %v5651 = vshrl.u32 2475754826, %v5648
      %v5652 = vor.u32 %v5650, %v5651
      %v5653 = vshll.u32 2475754826, %v5647
      %v5654 = vshrl.u32 2131351028, %v5648
      %v5655 = vor.u32 %v5653, %v5654
      %v5656 = vshll.u32 2131351028, %v5647
      %v5657 = vshrl.u32 2102212464, %v5648
      %v5658 = vor.u32 %v5656, %v5657
      %v5659 = vshll.u32 2102212464, %v5647
      %v5660 = vshrl.u32 920167782, %v5648
      %v5661 = vor.u32 %v5659, %v5660
      %v5662 = vshll.u32 920167782, %v5647
      %v5663 = vshrl.u32 1326507024, %v5648
      %v5664 = vor.u32 %v5662, %v5663
      %vm5665 = vcmp.lt.s32.totalorder %v5646, 1
      %vm5666 = vcmp.lt.s32.totalorder %v5646, 2
      %vm5667 = vcmp.lt.s32.totalorder %v5646, 3
      %vm5668 = vcmp.lt.s32.totalorder %v5646, 4
      %v5669 = vsel %vm5665, %v5649, %v5652
      %v5670 = vsel %vm5668, %v5658, 2102212464
      %v5671 = vsel %vm5667, %v5655, %v5670
      %v5672 = vsel %vm5666, %v5669, %v5671
      %v5673 = vsel %vm5665, %v5652, %v5655
      %v5674 = vsel %vm5668, %v5661, 920167782
      %v5675 = vsel %vm5667, %v5658, %v5674
      %v5676 = vsel %vm5666, %v5673, %v5675
      %v5677 = vsel %vm5665, %v5655, %v5658
      %v5678 = vsel %vm5668, %v5664, 1326507024
      %v5679 = vsel %vm5667, %v5661, %v5678
      %v5680 = vsel %vm5666, %v5677, %v5679
      %v5681 = vshll.u32 %v5641, 8
      %v5682 = vmul.u32.u64.compose %v5681, %v5680
      %v5683 = vextract.low.u32 %v5682
      %v5684 = vextract.high.u32 %v5682
      %v5685 = vmul.u32.u64.compose %v5681, %v5676
      %v5686 = vextract.low.u32 %v5685
      %v5687 = vextract.high.u32 %v5685
      %v5688 = vmul.u32 %v5681, %v5672
      %v5689 = vadd.s32 %v5684, %v5686
      %vm5690 = vc.u32 %v5684, %v5686
      %v5691 = vadd.s32 %v5687, 1
      %v5692 = vsel %vm5690, %v5691, %v5687
      %v5693 = vadd.s32 %v5688, %v5692
      %v5694 = vadd.s32 %v5693, 536870912
      %v5695 = vshrl.u32 %v5694, 30
      %v5696 = vshll.u32 %v5695, 30
      %v5697 = vsub.s32 %v5693, %v5696
      %vm5698 = vcmp.lt.s32.totalorder %v5697, 0
      %v5699 = vsub.s32 0, %v5697
      %v5700 = vsel %vm5698, %v5699, %v5697
      %v5701 = vclz %v5700
      %v5702 = vsub.s32 %v5701, 2
      %vm5703 = vcmp.gt.s32.totalorder 0, %v5702
      %v5704 = vsel %vm5703, 0, %v5702
      %v5705 = vsub.s32 32, %v5704
      %v5706 = vshll.u32 %v5697, %v5704
      %v5707 = vshrl.u32 %v5689, %v5705
      %v5708 = vor.u32 %v5706, %v5707
      %v5709 = vsub.s32 4294967266, %v5704
      %v5710 = vadd.s32 %v5709, 127
      %v5711 = vshll.u32 %v5710, 23
      %v5712 = vor.u32 4788187, %v5711
      %v5713 = vand.u32 2147483647, %v5712
      %v5715 = vcvt.s32.f32 %v5708
      %v5716 = vmul.f32 %v5715, %v5713
      %v5717 = vxor.u32 %v5716, 2147483648
      %v5718 = vsel %vm5635, %v5717, %v5716
      %v5719 = vsub.s32 4, %v5695
      %v5720 = vsel %vm5635, %v5719, %v5695
      %v5721 = vsel %vm5634, %v2473, %v5718
      %v5722 = vsel %vm5634, 0, %v5720
      %v5723 = vcosq.f32.pop %v5721
      %v5724 = vsinq.f32.pop %v5721
      %vm5725 = vweird.f32 %v2473
      %v5726 = vadd.s32 %v5722, 3
      %v5727 = vand.u32 %v5726, 3
      %vm5728 = vcmp.lt.s32.totalorder %v5727, 2
      %vm5729 = vcmp.eq.s32.totalorder %v5727, 0
      %v5730 = vxor.u32 %v5724, 2147483648
      %v5731 = vsel %vm5729, %v5723, %v5730
      %vm5732 = vcmp.eq.s32.totalorder %v5727, 2
      %v5733 = vxor.u32 %v5723, 2147483648
      %v5734 = vsel %vm5732, %v5733, %v5724
      %v5735 = vsel %vm5728, %v5731, %v5734
      %v5736 = vsel %vm5725, nan, %v5735
      %v5737 = vand.u32 2147483647, %v2474
      %vm5738 = vcmp.le.f32.partialorder %v5737, 0.7853982
      %vm5739 = vcmp.lt.s32.totalorder %v2474, 0
      %v5740 = vand.u32 %v2474, 2139095040
      %v5741 = vshrl.u32 %v5740, 23
      %v5742 = vsub.s32 %v5741, 127
      %v5743 = vand.u32 2147483647, %v2474
      %v5744 = vand.u32 %v5743, 8388607
      %v5745 = vor.u32 %v5744, 8388608
      %v5746 = vsub.s32 0, %v5745
      %v5747 = vadd.s32 %v5742, 1
      %vm5748 = vcmp.gt.s32.totalorder %v5747, 0
      %v5749 = vsel %vm5748, %v5747, 0
      %v5750 = vshrl.u32 %v5749, 5
      %v5751 = vand.u32 %v5749, 31
      %v5752 = vsub.s32 32, %v5751
      %v5753 = vshrl.u32 683565275, %v5752
      %v5754 = vshll.u32 683565275, %v5751
      %v5755 = vshrl.u32 2475754826, %v5752
      %v5756 = vor.u32 %v5754, %v5755
      %v5757 = vshll.u32 2475754826, %v5751
      %v5758 = vshrl.u32 2131351028, %v5752
      %v5759 = vor.u32 %v5757, %v5758
      %v5760 = vshll.u32 2131351028, %v5751
      %v5761 = vshrl.u32 2102212464, %v5752
      %v5762 = vor.u32 %v5760, %v5761
      %v5763 = vshll.u32 2102212464, %v5751
      %v5764 = vshrl.u32 920167782, %v5752
      %v5765 = vor.u32 %v5763, %v5764
      %v5766 = vshll.u32 920167782, %v5751
      %v5767 = vshrl.u32 1326507024, %v5752
      %v5768 = vor.u32 %v5766, %v5767
      %vm5769 = vcmp.lt.s32.totalorder %v5750, 1
      %vm5770 = vcmp.lt.s32.totalorder %v5750, 2
      %vm5771 = vcmp.lt.s32.totalorder %v5750, 3
      %vm5772 = vcmp.lt.s32.totalorder %v5750, 4
      %v5773 = vsel %vm5769, %v5753, %v5756
      %v5774 = vsel %vm5772, %v5762, 2102212464
      %v5775 = vsel %vm5771, %v5759, %v5774
      %v5776 = vsel %vm5770, %v5773, %v5775
      %v5777 = vsel %vm5769, %v5756, %v5759
      %v5778 = vsel %vm5772, %v5765, 920167782
      %v5779 = vsel %vm5771, %v5762, %v5778
      %v5780 = vsel %vm5770, %v5777, %v5779
      %v5781 = vsel %vm5769, %v5759, %v5762
      %v5782 = vsel %vm5772, %v5768, 1326507024
      %v5783 = vsel %vm5771, %v5765, %v5782
      %v5784 = vsel %vm5770, %v5781, %v5783
      %v5785 = vshll.u32 %v5745, 8
      %v5786 = vmul.u32.u64.compose %v5785, %v5784
      %v5787 = vextract.low.u32 %v5786
      %v5788 = vextract.high.u32 %v5786
      %v5789 = vmul.u32.u64.compose %v5785, %v5780
      %v5790 = vextract.low.u32 %v5789
      %v5791 = vextract.high.u32 %v5789
      %v5792 = vmul.u32 %v5785, %v5776
      %v5793 = vadd.s32 %v5788, %v5790
      %vm5794 = vc.u32 %v5788, %v5790
      %v5795 = vadd.s32 %v5791, 1
      %v5796 = vsel %vm5794, %v5795, %v5791
      %v5797 = vadd.s32 %v5792, %v5796
      %v5798 = vadd.s32 %v5797, 536870912
      %v5799 = vshrl.u32 %v5798, 30
      %v5800 = vshll.u32 %v5799, 30
      %v5801 = vsub.s32 %v5797, %v5800
      %vm5802 = vcmp.lt.s32.totalorder %v5801, 0
      %v5803 = vsub.s32 0, %v5801
      %v5804 = vsel %vm5802, %v5803, %v5801
      %v5805 = vclz %v5804
      %v5806 = vsub.s32 %v5805, 2
      %vm5807 = vcmp.gt.s32.totalorder 0, %v5806
      %v5808 = vsel %vm5807, 0, %v5806
      %v5809 = vsub.s32 32, %v5808
      %v5810 = vshll.u32 %v5801, %v5808
      %v5811 = vshrl.u32 %v5793, %v5809
      %v5812 = vor.u32 %v5810, %v5811
      %v5813 = vsub.s32 4294967266, %v5808
      %v5814 = vadd.s32 %v5813, 127
      %v5815 = vshll.u32 %v5814, 23
      %v5816 = vor.u32 4788187, %v5815
      %v5817 = vand.u32 2147483647, %v5816
      %v5819 = vcvt.s32.f32 %v5812
      %v5820 = vmul.f32 %v5819, %v5817
      %v5821 = vxor.u32 %v5820, 2147483648
      %v5822 = vsel %vm5739, %v5821, %v5820
      %v5823 = vsub.s32 4, %v5799
      %v5824 = vsel %vm5739, %v5823, %v5799
      %v5825 = vsel %vm5738, %v2474, %v5822
      %v5826 = vsel %vm5738, 0, %v5824
      %v5827 = vcosq.f32.pop %v5825
      %v5828 = vsinq.f32.pop %v5825
      %vm5829 = vweird.f32 %v2474
      %v5830 = vadd.s32 %v5826, 3
      %v5831 = vand.u32 %v5830, 3
      %vm5832 = vcmp.lt.s32.totalorder %v5831, 2
      %vm5833 = vcmp.eq.s32.totalorder %v5831, 0
      %v5834 = vxor.u32 %v5828, 2147483648
      %v5835 = vsel %vm5833, %v5827, %v5834
      %vm5836 = vcmp.eq.s32.totalorder %v5831, 2
      %v5837 = vxor.u32 %v5827, 2147483648
      %v5838 = vsel %vm5836, %v5837, %v5828
      %v5839 = vsel %vm5832, %v5835, %v5838
      %v5840 = vsel %vm5829, nan, %v5839
      %v5841 = vand.u32 2147483647, %v2475
      %vm5842 = vcmp.le.f32.partialorder %v5841, 0.7853982
      %vm5843 = vcmp.lt.s32.totalorder %v2475, 0
      %v5844 = vand.u32 %v2475, 2139095040
      %v5845 = vshrl.u32 %v5844, 23
      %v5846 = vsub.s32 %v5845, 127
      %v5847 = vand.u32 2147483647, %v2475
      %v5848 = vand.u32 %v5847, 8388607
      %v5849 = vor.u32 %v5848, 8388608
      %v5850 = vsub.s32 0, %v5849
      %v5851 = vadd.s32 %v5846, 1
      %vm5852 = vcmp.gt.s32.totalorder %v5851, 0
      %v5853 = vsel %vm5852, %v5851, 0
      %v5854 = vshrl.u32 %v5853, 5
      %v5855 = vand.u32 %v5853, 31
      %v5856 = vsub.s32 32, %v5855
      %v5857 = vshrl.u32 683565275, %v5856
      %v5858 = vshll.u32 683565275, %v5855
      %v5859 = vshrl.u32 2475754826, %v5856
      %v5860 = vor.u32 %v5858, %v5859
      %v5861 = vshll.u32 2475754826, %v5855
      %v5862 = vshrl.u32 2131351028, %v5856
      %v5863 = vor.u32 %v5861, %v5862
      %v5864 = vshll.u32 2131351028, %v5855
      %v5865 = vshrl.u32 2102212464, %v5856
      %v5866 = vor.u32 %v5864, %v5865
      %v5867 = vshll.u32 2102212464, %v5855
      %v5868 = vshrl.u32 920167782, %v5856
      %v5869 = vor.u32 %v5867, %v5868
      %v5870 = vshll.u32 920167782, %v5855
      %v5871 = vshrl.u32 1326507024, %v5856
      %v5872 = vor.u32 %v5870, %v5871
      %vm5873 = vcmp.lt.s32.totalorder %v5854, 1
      %vm5874 = vcmp.lt.s32.totalorder %v5854, 2
      %vm5875 = vcmp.lt.s32.totalorder %v5854, 3
      %vm5876 = vcmp.lt.s32.totalorder %v5854, 4
      %v5877 = vsel %vm5873, %v5857, %v5860
      %v5878 = vsel %vm5876, %v5866, 2102212464
      %v5879 = vsel %vm5875, %v5863, %v5878
      %v5880 = vsel %vm5874, %v5877, %v5879
      %v5881 = vsel %vm5873, %v5860, %v5863
      %v5882 = vsel %vm5876, %v5869, 920167782
      %v5883 = vsel %vm5875, %v5866, %v5882
      %v5884 = vsel %vm5874, %v5881, %v5883
      %v5885 = vsel %vm5873, %v5863, %v5866
      %v5886 = vsel %vm5876, %v5872, 1326507024
      %v5887 = vsel %vm5875, %v5869, %v5886
      %v5888 = vsel %vm5874, %v5885, %v5887
      %v5889 = vshll.u32 %v5849, 8
      %v5890 = vmul.u32.u64.compose %v5889, %v5888
      %v5891 = vextract.low.u32 %v5890
      %v5892 = vextract.high.u32 %v5890
      %v5893 = vmul.u32.u64.compose %v5889, %v5884
      %v5894 = vextract.low.u32 %v5893
      %v5895 = vextract.high.u32 %v5893
      %v5896 = vmul.u32 %v5889, %v5880
      %v5897 = vadd.s32 %v5892, %v5894
      %vm5898 = vc.u32 %v5892, %v5894
      %v5899 = vadd.s32 %v5895, 1
      %v5900 = vsel %vm5898, %v5899, %v5895
      %v5901 = vadd.s32 %v5896, %v5900
      %v5902 = vadd.s32 %v5901, 536870912
      %v5903 = vshrl.u32 %v5902, 30
      %v5904 = vshll.u32 %v5903, 30
      %v5905 = vsub.s32 %v5901, %v5904
      %vm5906 = vcmp.lt.s32.totalorder %v5905, 0
      %v5907 = vsub.s32 0, %v5905
      %v5908 = vsel %vm5906, %v5907, %v5905
      %v5909 = vclz %v5908
      %v5910 = vsub.s32 %v5909, 2
      %vm5911 = vcmp.gt.s32.totalorder 0, %v5910
      %v5912 = vsel %vm5911, 0, %v5910
      %v5913 = vsub.s32 32, %v5912
      %v5914 = vshll.u32 %v5905, %v5912
      %v5915 = vshrl.u32 %v5897, %v5913
      %v5916 = vor.u32 %v5914, %v5915
      %v5917 = vsub.s32 4294967266, %v5912
      %v5918 = vadd.s32 %v5917, 127
      %v5919 = vshll.u32 %v5918, 23
      %v5920 = vor.u32 4788187, %v5919
      %v5921 = vand.u32 2147483647, %v5920
      %v5923 = vcvt.s32.f32 %v5916
      %v5924 = vmul.f32 %v5923, %v5921
      %v5925 = vxor.u32 %v5924, 2147483648
      %v5926 = vsel %vm5843, %v5925, %v5924
      %v5927 = vsub.s32 4, %v5903
      %v5928 = vsel %vm5843, %v5927, %v5903
      %v5929 = vsel %vm5842, %v2475, %v5926
      %v5930 = vsel %vm5842, 0, %v5928
      %v5931 = vcosq.f32.pop %v5929
      %v5932 = vsinq.f32.pop %v5929
      %vm5933 = vweird.f32 %v2475
      %v5934 = vadd.s32 %v5930, 3
      %v5935 = vand.u32 %v5934, 3
      %vm5936 = vcmp.lt.s32.totalorder %v5935, 2
      %vm5937 = vcmp.eq.s32.totalorder %v5935, 0
      %v5938 = vxor.u32 %v5932, 2147483648
      %v5939 = vsel %vm5937, %v5931, %v5938
      %vm5940 = vcmp.eq.s32.totalorder %v5935, 2
      %v5941 = vxor.u32 %v5931, 2147483648
      %v5942 = vsel %vm5940, %v5941, %v5932
      %v5943 = vsel %vm5936, %v5939, %v5942
      %v5944 = vsel %vm5933, nan, %v5943
      %v5945 = vand.u32 2147483647, %v2452
      %vm5946 = vcmp.le.f32.partialorder %v5945, 0.7853982
      %vm5947 = vcmp.lt.s32.totalorder %v2452, 0
      %v5948 = vand.u32 %v2452, 2139095040
      %v5949 = vshrl.u32 %v5948, 23
      %v5950 = vsub.s32 %v5949, 127
      %v5951 = vand.u32 2147483647, %v2452
      %v5952 = vand.u32 %v5951, 8388607
      %v5953 = vor.u32 %v5952, 8388608
      %v5954 = vsub.s32 0, %v5953
      %v5955 = vadd.s32 %v5950, 1
      %vm5956 = vcmp.gt.s32.totalorder %v5955, 0
      %v5957 = vsel %vm5956, %v5955, 0
      %v5958 = vshrl.u32 %v5957, 5
      %v5959 = vand.u32 %v5957, 31
      %v5960 = vsub.s32 32, %v5959
      %v5961 = vshrl.u32 683565275, %v5960
      %v5962 = vshll.u32 683565275, %v5959
      %v5963 = vshrl.u32 2475754826, %v5960
      %v5964 = vor.u32 %v5962, %v5963
      %v5965 = vshll.u32 2475754826, %v5959
      %v5966 = vshrl.u32 2131351028, %v5960
      %v5967 = vor.u32 %v5965, %v5966
      %v5968 = vshll.u32 2131351028, %v5959
      %v5969 = vshrl.u32 2102212464, %v5960
      %v5970 = vor.u32 %v5968, %v5969
      %v5971 = vshll.u32 2102212464, %v5959
      %v5972 = vshrl.u32 920167782, %v5960
      %v5973 = vor.u32 %v5971, %v5972
      %v5974 = vshll.u32 920167782, %v5959
      %v5975 = vshrl.u32 1326507024, %v5960
      %v5976 = vor.u32 %v5974, %v5975
      %vm5977 = vcmp.lt.s32.totalorder %v5958, 1
      %vm5978 = vcmp.lt.s32.totalorder %v5958, 2
      %vm5979 = vcmp.lt.s32.totalorder %v5958, 3
      %vm5980 = vcmp.lt.s32.totalorder %v5958, 4
      %v5981 = vsel %vm5977, %v5961, %v5964
      %v5982 = vsel %vm5980, %v5970, 2102212464
      %v5983 = vsel %vm5979, %v5967, %v5982
      %v5984 = vsel %vm5978, %v5981, %v5983
      %v5985 = vsel %vm5977, %v5964, %v5967
      %v5986 = vsel %vm5980, %v5973, 920167782
      %v5987 = vsel %vm5979, %v5970, %v5986
      %v5988 = vsel %vm5978, %v5985, %v5987
      %v5989 = vsel %vm5977, %v5967, %v5970
      %v5990 = vsel %vm5980, %v5976, 1326507024
      %v5991 = vsel %vm5979, %v5973, %v5990
      %v5992 = vsel %vm5978, %v5989, %v5991
      %v5993 = vshll.u32 %v5953, 8
      %v5994 = vmul.u32.u64.compose %v5993, %v5992
      %v5995 = vextract.low.u32 %v5994
      %v5996 = vextract.high.u32 %v5994
      %v5997 = vmul.u32.u64.compose %v5993, %v5988
      %v5998 = vextract.low.u32 %v5997
      %v5999 = vextract.high.u32 %v5997
      %v6000 = vmul.u32 %v5993, %v5984
      %v6001 = vadd.s32 %v5996, %v5998
      %vm6002 = vc.u32 %v5996, %v5998
      %v6003 = vadd.s32 %v5999, 1
      %v6004 = vsel %vm6002, %v6003, %v5999
      %v6005 = vadd.s32 %v6000, %v6004
      %v6006 = vadd.s32 %v6005, 536870912
      %v6007 = vshrl.u32 %v6006, 30
      %v6008 = vshll.u32 %v6007, 30
      %v6009 = vsub.s32 %v6005, %v6008
      %vm6010 = vcmp.lt.s32.totalorder %v6009, 0
      %v6011 = vsub.s32 0, %v6009
      %v6012 = vsel %vm6010, %v6011, %v6009
      %v6013 = vclz %v6012
      %v6014 = vsub.s32 %v6013, 2
      %vm6015 = vcmp.gt.s32.totalorder 0, %v6014
      %v6016 = vsel %vm6015, 0, %v6014
      %v6017 = vsub.s32 32, %v6016
      %v6018 = vshll.u32 %v6009, %v6016
      %v6019 = vshrl.u32 %v6001, %v6017
      %v6020 = vor.u32 %v6018, %v6019
      %v6021 = vsub.s32 4294967266, %v6016
      %v6022 = vadd.s32 %v6021, 127
      %v6023 = vshll.u32 %v6022, 23
      %v6024 = vor.u32 4788187, %v6023
      %v6025 = vand.u32 2147483647, %v6024
      %v6027 = vcvt.s32.f32 %v6020
      %v6028 = vmul.f32 %v6027, %v6025
      %v6029 = vxor.u32 %v6028, 2147483648
      %v6030 = vsel %vm5947, %v6029, %v6028
      %v6031 = vsub.s32 4, %v6007
      %v6032 = vsel %vm5947, %v6031, %v6007
      %v6033 = vsel %vm5946, %v2452, %v6030
      %v6034 = vsel %vm5946, 0, %v6032
      %v6035 = vcosq.f32.pop %v6033
      %v6036 = vsinq.f32.pop %v6033
      %vm6037 = vweird.f32 %v2452
      %v6038 = vand.u32 %v6034, 3
      %vm6039 = vcmp.lt.s32.totalorder %v6038, 2
      %vm6040 = vcmp.eq.s32.totalorder %v6038, 0
      %v6041 = vxor.u32 %v6036, 2147483648
      %v6042 = vsel %vm6040, %v6035, %v6041
      %vm6043 = vcmp.eq.s32.totalorder %v6038, 2
      %v6044 = vxor.u32 %v6035, 2147483648
      %v6045 = vsel %vm6043, %v6044, %v6036
      %v6046 = vsel %vm6039, %v6042, %v6045
      %v6047 = vsel %vm6037, nan, %v6046
      %v6048 = vand.u32 2147483647, %v2453
      %vm6049 = vcmp.le.f32.partialorder %v6048, 0.7853982
      %vm6050 = vcmp.lt.s32.totalorder %v2453, 0
      %v6051 = vand.u32 %v2453, 2139095040
      %v6052 = vshrl.u32 %v6051, 23
      %v6053 = vsub.s32 %v6052, 127
      %v6054 = vand.u32 2147483647, %v2453
      %v6055 = vand.u32 %v6054, 8388607
      %v6056 = vor.u32 %v6055, 8388608
      %v6057 = vsub.s32 0, %v6056
      %v6058 = vadd.s32 %v6053, 1
      %vm6059 = vcmp.gt.s32.totalorder %v6058, 0
      %v6060 = vsel %vm6059, %v6058, 0
      %v6061 = vshrl.u32 %v6060, 5
      %v6062 = vand.u32 %v6060, 31
      %v6063 = vsub.s32 32, %v6062
      %v6064 = vshrl.u32 683565275, %v6063
      %v6065 = vshll.u32 683565275, %v6062
      %v6066 = vshrl.u32 2475754826, %v6063
      %v6067 = vor.u32 %v6065, %v6066
      %v6068 = vshll.u32 2475754826, %v6062
      %v6069 = vshrl.u32 2131351028, %v6063
      %v6070 = vor.u32 %v6068, %v6069
      %v6071 = vshll.u32 2131351028, %v6062
      %v6072 = vshrl.u32 2102212464, %v6063
      %v6073 = vor.u32 %v6071, %v6072
      %v6074 = vshll.u32 2102212464, %v6062
      %v6075 = vshrl.u32 920167782, %v6063
      %v6076 = vor.u32 %v6074, %v6075
      %v6077 = vshll.u32 920167782, %v6062
      %v6078 = vshrl.u32 1326507024, %v6063
      %v6079 = vor.u32 %v6077, %v6078
      %vm6080 = vcmp.lt.s32.totalorder %v6061, 1
      %vm6081 = vcmp.lt.s32.totalorder %v6061, 2
      %vm6082 = vcmp.lt.s32.totalorder %v6061, 3
      %vm6083 = vcmp.lt.s32.totalorder %v6061, 4
      %v6084 = vsel %vm6080, %v6064, %v6067
      %v6085 = vsel %vm6083, %v6073, 2102212464
      %v6086 = vsel %vm6082, %v6070, %v6085
      %v6087 = vsel %vm6081, %v6084, %v6086
      %v6088 = vsel %vm6080, %v6067, %v6070
      %v6089 = vsel %vm6083, %v6076, 920167782
      %v6090 = vsel %vm6082, %v6073, %v6089
      %v6091 = vsel %vm6081, %v6088, %v6090
      %v6092 = vsel %vm6080, %v6070, %v6073
      %v6093 = vsel %vm6083, %v6079, 1326507024
      %v6094 = vsel %vm6082, %v6076, %v6093
      %v6095 = vsel %vm6081, %v6092, %v6094
      %v6096 = vshll.u32 %v6056, 8
      %v6097 = vmul.u32.u64.compose %v6096, %v6095
      %v6098 = vextract.low.u32 %v6097
      %v6099 = vextract.high.u32 %v6097
      %v6100 = vmul.u32.u64.compose %v6096, %v6091
      %v6101 = vextract.low.u32 %v6100
      %v6102 = vextract.high.u32 %v6100
      %v6103 = vmul.u32 %v6096, %v6087
      %v6104 = vadd.s32 %v6099, %v6101
      %vm6105 = vc.u32 %v6099, %v6101
      %v6106 = vadd.s32 %v6102, 1
      %v6107 = vsel %vm6105, %v6106, %v6102
      %v6108 = vadd.s32 %v6103, %v6107
      %v6109 = vadd.s32 %v6108, 536870912
      %v6110 = vshrl.u32 %v6109, 30
      %v6111 = vshll.u32 %v6110, 30
      %v6112 = vsub.s32 %v6108, %v6111
      %vm6113 = vcmp.lt.s32.totalorder %v6112, 0
      %v6114 = vsub.s32 0, %v6112
      %v6115 = vsel %vm6113, %v6114, %v6112
      %v6116 = vclz %v6115
      %v6117 = vsub.s32 %v6116, 2
      %vm6118 = vcmp.gt.s32.totalorder 0, %v6117
      %v6119 = vsel %vm6118, 0, %v6117
      %v6120 = vsub.s32 32, %v6119
      %v6121 = vshll.u32 %v6112, %v6119
      %v6122 = vshrl.u32 %v6104, %v6120
      %v6123 = vor.u32 %v6121, %v6122
      %v6124 = vsub.s32 4294967266, %v6119
      %v6125 = vadd.s32 %v6124, 127
      %v6126 = vshll.u32 %v6125, 23
      %v6127 = vor.u32 4788187, %v6126
      %v6128 = vand.u32 2147483647, %v6127
      %v6130 = vcvt.s32.f32 %v6123
      %v6131 = vmul.f32 %v6130, %v6128
      %v6132 = vxor.u32 %v6131, 2147483648
      %v6133 = vsel %vm6050, %v6132, %v6131
      %v6134 = vsub.s32 4, %v6110
      %v6135 = vsel %vm6050, %v6134, %v6110
      %v6136 = vsel %vm6049, %v2453, %v6133
      %v6137 = vsel %vm6049, 0, %v6135
      %v6138 = vcosq.f32.pop %v6136
      %v6139 = vsinq.f32.pop %v6136
      %vm6140 = vweird.f32 %v2453
      %v6141 = vand.u32 %v6137, 3
      %vm6142 = vcmp.lt.s32.totalorder %v6141, 2
      %vm6143 = vcmp.eq.s32.totalorder %v6141, 0
      %v6144 = vxor.u32 %v6139, 2147483648
      %v6145 = vsel %vm6143, %v6138, %v6144
      %vm6146 = vcmp.eq.s32.totalorder %v6141, 2
      %v6147 = vxor.u32 %v6138, 2147483648
      %v6148 = vsel %vm6146, %v6147, %v6139
      %v6149 = vsel %vm6142, %v6145, %v6148
      %v6150 = vsel %vm6140, nan, %v6149
      %v6151 = vand.u32 2147483647, %v2454
      %vm6152 = vcmp.le.f32.partialorder %v6151, 0.7853982
      %vm6153 = vcmp.lt.s32.totalorder %v2454, 0
      %v6154 = vand.u32 %v2454, 2139095040
      %v6155 = vshrl.u32 %v6154, 23
      %v6156 = vsub.s32 %v6155, 127
      %v6157 = vand.u32 2147483647, %v2454
      %v6158 = vand.u32 %v6157, 8388607
      %v6159 = vor.u32 %v6158, 8388608
      %v6160 = vsub.s32 0, %v6159
      %v6161 = vadd.s32 %v6156, 1
      %vm6162 = vcmp.gt.s32.totalorder %v6161, 0
      %v6163 = vsel %vm6162, %v6161, 0
      %v6164 = vshrl.u32 %v6163, 5
      %v6165 = vand.u32 %v6163, 31
      %v6166 = vsub.s32 32, %v6165
      %v6167 = vshrl.u32 683565275, %v6166
      %v6168 = vshll.u32 683565275, %v6165
      %v6169 = vshrl.u32 2475754826, %v6166
      %v6170 = vor.u32 %v6168, %v6169
      %v6171 = vshll.u32 2475754826, %v6165
      %v6172 = vshrl.u32 2131351028, %v6166
      %v6173 = vor.u32 %v6171, %v6172
      %v6174 = vshll.u32 2131351028, %v6165
      %v6175 = vshrl.u32 2102212464, %v6166
      %v6176 = vor.u32 %v6174, %v6175
      %v6177 = vshll.u32 2102212464, %v6165
      %v6178 = vshrl.u32 920167782, %v6166
      %v6179 = vor.u32 %v6177, %v6178
      %v6180 = vshll.u32 920167782, %v6165
      %v6181 = vshrl.u32 1326507024, %v6166
      %v6182 = vor.u32 %v6180, %v6181
      %vm6183 = vcmp.lt.s32.totalorder %v6164, 1
      %vm6184 = vcmp.lt.s32.totalorder %v6164, 2
      %vm6185 = vcmp.lt.s32.totalorder %v6164, 3
      %vm6186 = vcmp.lt.s32.totalorder %v6164, 4
      %v6187 = vsel %vm6183, %v6167, %v6170
      %v6188 = vsel %vm6186, %v6176, 2102212464
      %v6189 = vsel %vm6185, %v6173, %v6188
      %v6190 = vsel %vm6184, %v6187, %v6189
      %v6191 = vsel %vm6183, %v6170, %v6173
      %v6192 = vsel %vm6186, %v6179, 920167782
      %v6193 = vsel %vm6185, %v6176, %v6192
      %v6194 = vsel %vm6184, %v6191, %v6193
      %v6195 = vsel %vm6183, %v6173, %v6176
      %v6196 = vsel %vm6186, %v6182, 1326507024
      %v6197 = vsel %vm6185, %v6179, %v6196
      %v6198 = vsel %vm6184, %v6195, %v6197
      %v6199 = vshll.u32 %v6159, 8
      %v6200 = vmul.u32.u64.compose %v6199, %v6198
      %v6201 = vextract.low.u32 %v6200
      %v6202 = vextract.high.u32 %v6200
      %v6203 = vmul.u32.u64.compose %v6199, %v6194
      %v6204 = vextract.low.u32 %v6203
      %v6205 = vextract.high.u32 %v6203
      %v6206 = vmul.u32 %v6199, %v6190
      %v6207 = vadd.s32 %v6202, %v6204
      %vm6208 = vc.u32 %v6202, %v6204
      %v6209 = vadd.s32 %v6205, 1
      %v6210 = vsel %vm6208, %v6209, %v6205
      %v6211 = vadd.s32 %v6206, %v6210
      %v6212 = vadd.s32 %v6211, 536870912
      %v6213 = vshrl.u32 %v6212, 30
      %v6214 = vshll.u32 %v6213, 30
      %v6215 = vsub.s32 %v6211, %v6214
      %vm6216 = vcmp.lt.s32.totalorder %v6215, 0
      %v6217 = vsub.s32 0, %v6215
      %v6218 = vsel %vm6216, %v6217, %v6215
      %v6219 = vclz %v6218
      %v6220 = vsub.s32 %v6219, 2
      %vm6221 = vcmp.gt.s32.totalorder 0, %v6220
      %v6222 = vsel %vm6221, 0, %v6220
      %v6223 = vsub.s32 32, %v6222
      %v6224 = vshll.u32 %v6215, %v6222
      %v6225 = vshrl.u32 %v6207, %v6223
      %v6226 = vor.u32 %v6224, %v6225
      %v6227 = vsub.s32 4294967266, %v6222
      %v6228 = vadd.s32 %v6227, 127
      %v6229 = vshll.u32 %v6228, 23
      %v6230 = vor.u32 4788187, %v6229
      %v6231 = vand.u32 2147483647, %v6230
      %v6233 = vcvt.s32.f32 %v6226
      %v6234 = vmul.f32 %v6233, %v6231
      %v6235 = vxor.u32 %v6234, 2147483648
      %v6236 = vsel %vm6153, %v6235, %v6234
      %v6237 = vsub.s32 4, %v6213
      %v6238 = vsel %vm6153, %v6237, %v6213
      %v6239 = vsel %vm6152, %v2454, %v6236
      %v6240 = vsel %vm6152, 0, %v6238
      %v6241 = vcosq.f32.pop %v6239
      %v6242 = vsinq.f32.pop %v6239
      %vm6243 = vweird.f32 %v2454
      %v6244 = vand.u32 %v6240, 3
      %vm6245 = vcmp.lt.s32.totalorder %v6244, 2
      %vm6246 = vcmp.eq.s32.totalorder %v6244, 0
      %v6247 = vxor.u32 %v6242, 2147483648
      %v6248 = vsel %vm6246, %v6241, %v6247
      %vm6249 = vcmp.eq.s32.totalorder %v6244, 2
      %v6250 = vxor.u32 %v6241, 2147483648
      %v6251 = vsel %vm6249, %v6250, %v6242
      %v6252 = vsel %vm6245, %v6248, %v6251
      %v6253 = vsel %vm6243, nan, %v6252
      %v6254 = vand.u32 2147483647, %v2455
      %vm6255 = vcmp.le.f32.partialorder %v6254, 0.7853982
      %vm6256 = vcmp.lt.s32.totalorder %v2455, 0
      %v6257 = vand.u32 %v2455, 2139095040
      %v6258 = vshrl.u32 %v6257, 23
      %v6259 = vsub.s32 %v6258, 127
      %v6260 = vand.u32 2147483647, %v2455
      %v6261 = vand.u32 %v6260, 8388607
      %v6262 = vor.u32 %v6261, 8388608
      %v6263 = vsub.s32 0, %v6262
      %v6264 = vadd.s32 %v6259, 1
      %vm6265 = vcmp.gt.s32.totalorder %v6264, 0
      %v6266 = vsel %vm6265, %v6264, 0
      %v6267 = vshrl.u32 %v6266, 5
      %v6268 = vand.u32 %v6266, 31
      %v6269 = vsub.s32 32, %v6268
      %v6270 = vshrl.u32 683565275, %v6269
      %v6271 = vshll.u32 683565275, %v6268
      %v6272 = vshrl.u32 2475754826, %v6269
      %v6273 = vor.u32 %v6271, %v6272
      %v6274 = vshll.u32 2475754826, %v6268
      %v6275 = vshrl.u32 2131351028, %v6269
      %v6276 = vor.u32 %v6274, %v6275
      %v6277 = vshll.u32 2131351028, %v6268
      %v6278 = vshrl.u32 2102212464, %v6269
      %v6279 = vor.u32 %v6277, %v6278
      %v6280 = vshll.u32 2102212464, %v6268
      %v6281 = vshrl.u32 920167782, %v6269
      %v6282 = vor.u32 %v6280, %v6281
      %v6283 = vshll.u32 920167782, %v6268
      %v6284 = vshrl.u32 1326507024, %v6269
      %v6285 = vor.u32 %v6283, %v6284
      %vm6286 = vcmp.lt.s32.totalorder %v6267, 1
      %vm6287 = vcmp.lt.s32.totalorder %v6267, 2
      %vm6288 = vcmp.lt.s32.totalorder %v6267, 3
      %vm6289 = vcmp.lt.s32.totalorder %v6267, 4
      %v6290 = vsel %vm6286, %v6270, %v6273
      %v6291 = vsel %vm6289, %v6279, 2102212464
      %v6292 = vsel %vm6288, %v6276, %v6291
      %v6293 = vsel %vm6287, %v6290, %v6292
      %v6294 = vsel %vm6286, %v6273, %v6276
      %v6295 = vsel %vm6289, %v6282, 920167782
      %v6296 = vsel %vm6288, %v6279, %v6295
      %v6297 = vsel %vm6287, %v6294, %v6296
      %v6298 = vsel %vm6286, %v6276, %v6279
      %v6299 = vsel %vm6289, %v6285, 1326507024
      %v6300 = vsel %vm6288, %v6282, %v6299
      %v6301 = vsel %vm6287, %v6298, %v6300
      %v6302 = vshll.u32 %v6262, 8
      %v6303 = vmul.u32.u64.compose %v6302, %v6301
      %v6304 = vextract.low.u32 %v6303
      %v6305 = vextract.high.u32 %v6303
      %v6306 = vmul.u32.u64.compose %v6302, %v6297
      %v6307 = vextract.low.u32 %v6306
      %v6308 = vextract.high.u32 %v6306
      %v6309 = vmul.u32 %v6302, %v6293
      %v6310 = vadd.s32 %v6305, %v6307
      %vm6311 = vc.u32 %v6305, %v6307
      %v6312 = vadd.s32 %v6308, 1
      %v6313 = vsel %vm6311, %v6312, %v6308
      %v6314 = vadd.s32 %v6309, %v6313
      %v6315 = vadd.s32 %v6314, 536870912
      %v6316 = vshrl.u32 %v6315, 30
      %v6317 = vshll.u32 %v6316, 30
      %v6318 = vsub.s32 %v6314, %v6317
      %vm6319 = vcmp.lt.s32.totalorder %v6318, 0
      %v6320 = vsub.s32 0, %v6318
      %v6321 = vsel %vm6319, %v6320, %v6318
      %v6322 = vclz %v6321
      %v6323 = vsub.s32 %v6322, 2
      %vm6324 = vcmp.gt.s32.totalorder 0, %v6323
      %v6325 = vsel %vm6324, 0, %v6323
      %v6326 = vsub.s32 32, %v6325
      %v6327 = vshll.u32 %v6318, %v6325
      %v6328 = vshrl.u32 %v6310, %v6326
      %v6329 = vor.u32 %v6327, %v6328
      %v6330 = vsub.s32 4294967266, %v6325
      %v6331 = vadd.s32 %v6330, 127
      %v6332 = vshll.u32 %v6331, 23
      %v6333 = vor.u32 4788187, %v6332
      %v6334 = vand.u32 2147483647, %v6333
      %v6336 = vcvt.s32.f32 %v6329
      %v6337 = vmul.f32 %v6336, %v6334
      %v6338 = vxor.u32 %v6337, 2147483648
      %v6339 = vsel %vm6256, %v6338, %v6337
      %v6340 = vsub.s32 4, %v6316
      %v6341 = vsel %vm6256, %v6340, %v6316
      %v6342 = vsel %vm6255, %v2455, %v6339
      %v6343 = vsel %vm6255, 0, %v6341
      %v6344 = vcosq.f32.pop %v6342
      %v6345 = vsinq.f32.pop %v6342
      %vm6346 = vweird.f32 %v2455
      %v6347 = vand.u32 %v6343, 3
      %vm6348 = vcmp.lt.s32.totalorder %v6347, 2
      %vm6349 = vcmp.eq.s32.totalorder %v6347, 0
      %v6350 = vxor.u32 %v6345, 2147483648
      %v6351 = vsel %vm6349, %v6344, %v6350
      %vm6352 = vcmp.eq.s32.totalorder %v6347, 2
      %v6353 = vxor.u32 %v6344, 2147483648
      %v6354 = vsel %vm6352, %v6353, %v6345
      %v6355 = vsel %vm6348, %v6351, %v6354
      %v6356 = vsel %vm6346, nan, %v6355
      %v6357 = vand.u32 2147483647, %v2456
      %vm6358 = vcmp.le.f32.partialorder %v6357, 0.7853982
      %vm6359 = vcmp.lt.s32.totalorder %v2456, 0
      %v6360 = vand.u32 %v2456, 2139095040
      %v6361 = vshrl.u32 %v6360, 23
      %v6362 = vsub.s32 %v6361, 127
      %v6363 = vand.u32 2147483647, %v2456
      %v6364 = vand.u32 %v6363, 8388607
      %v6365 = vor.u32 %v6364, 8388608
      %v6366 = vsub.s32 0, %v6365
      %v6367 = vadd.s32 %v6362, 1
      %vm6368 = vcmp.gt.s32.totalorder %v6367, 0
      %v6369 = vsel %vm6368, %v6367, 0
      %v6370 = vshrl.u32 %v6369, 5
      %v6371 = vand.u32 %v6369, 31
      %v6372 = vsub.s32 32, %v6371
      %v6373 = vshrl.u32 683565275, %v6372
      %v6374 = vshll.u32 683565275, %v6371
      %v6375 = vshrl.u32 2475754826, %v6372
      %v6376 = vor.u32 %v6374, %v6375
      %v6377 = vshll.u32 2475754826, %v6371
      %v6378 = vshrl.u32 2131351028, %v6372
      %v6379 = vor.u32 %v6377, %v6378
      %v6380 = vshll.u32 2131351028, %v6371
      %v6381 = vshrl.u32 2102212464, %v6372
      %v6382 = vor.u32 %v6380, %v6381
      %v6383 = vshll.u32 2102212464, %v6371
      %v6384 = vshrl.u32 920167782, %v6372
      %v6385 = vor.u32 %v6383, %v6384
      %v6386 = vshll.u32 920167782, %v6371
      %v6387 = vshrl.u32 1326507024, %v6372
      %v6388 = vor.u32 %v6386, %v6387
      %vm6389 = vcmp.lt.s32.totalorder %v6370, 1
      %vm6390 = vcmp.lt.s32.totalorder %v6370, 2
      %vm6391 = vcmp.lt.s32.totalorder %v6370, 3
      %vm6392 = vcmp.lt.s32.totalorder %v6370, 4
      %v6393 = vsel %vm6389, %v6373, %v6376
      %v6394 = vsel %vm6392, %v6382, 2102212464
      %v6395 = vsel %vm6391, %v6379, %v6394
      %v6396 = vsel %vm6390, %v6393, %v6395
      %v6397 = vsel %vm6389, %v6376, %v6379
      %v6398 = vsel %vm6392, %v6385, 920167782
      %v6399 = vsel %vm6391, %v6382, %v6398
      %v6400 = vsel %vm6390, %v6397, %v6399
      %v6401 = vsel %vm6389, %v6379, %v6382
      %v6402 = vsel %vm6392, %v6388, 1326507024
      %v6403 = vsel %vm6391, %v6385, %v6402
      %v6404 = vsel %vm6390, %v6401, %v6403
      %v6405 = vshll.u32 %v6365, 8
      %v6406 = vmul.u32.u64.compose %v6405, %v6404
      %v6407 = vextract.low.u32 %v6406
      %v6408 = vextract.high.u32 %v6406
      %v6409 = vmul.u32.u64.compose %v6405, %v6400
      %v6410 = vextract.low.u32 %v6409
      %v6411 = vextract.high.u32 %v6409
      %v6412 = vmul.u32 %v6405, %v6396
      %v6413 = vadd.s32 %v6408, %v6410
      %vm6414 = vc.u32 %v6408, %v6410
      %v6415 = vadd.s32 %v6411, 1
      %v6416 = vsel %vm6414, %v6415, %v6411
      %v6417 = vadd.s32 %v6412, %v6416
      %v6418 = vadd.s32 %v6417, 536870912
      %v6419 = vshrl.u32 %v6418, 30
      %v6420 = vshll.u32 %v6419, 30
      %v6421 = vsub.s32 %v6417, %v6420
      %vm6422 = vcmp.lt.s32.totalorder %v6421, 0
      %v6423 = vsub.s32 0, %v6421
      %v6424 = vsel %vm6422, %v6423, %v6421
      %v6425 = vclz %v6424
      %v6426 = vsub.s32 %v6425, 2
      %vm6427 = vcmp.gt.s32.totalorder 0, %v6426
      %v6428 = vsel %vm6427, 0, %v6426
      %v6429 = vsub.s32 32, %v6428
      %v6430 = vshll.u32 %v6421, %v6428
      %v6431 = vshrl.u32 %v6413, %v6429
      %v6432 = vor.u32 %v6430, %v6431
      %v6433 = vsub.s32 4294967266, %v6428
      %v6434 = vadd.s32 %v6433, 127
      %v6435 = vshll.u32 %v6434, 23
      %v6436 = vor.u32 4788187, %v6435
      %v6437 = vand.u32 2147483647, %v6436
      %v6439 = vcvt.s32.f32 %v6432
      %v6440 = vmul.f32 %v6439, %v6437
      %v6441 = vxor.u32 %v6440, 2147483648
      %v6442 = vsel %vm6359, %v6441, %v6440
      %v6443 = vsub.s32 4, %v6419
      %v6444 = vsel %vm6359, %v6443, %v6419
      %v6445 = vsel %vm6358, %v2456, %v6442
      %v6446 = vsel %vm6358, 0, %v6444
      %v6447 = vcosq.f32.pop %v6445
      %v6448 = vsinq.f32.pop %v6445
      %vm6449 = vweird.f32 %v2456
      %v6450 = vand.u32 %v6446, 3
      %vm6451 = vcmp.lt.s32.totalorder %v6450, 2
      %vm6452 = vcmp.eq.s32.totalorder %v6450, 0
      %v6453 = vxor.u32 %v6448, 2147483648
      %v6454 = vsel %vm6452, %v6447, %v6453
      %vm6455 = vcmp.eq.s32.totalorder %v6450, 2
      %v6456 = vxor.u32 %v6447, 2147483648
      %v6457 = vsel %vm6455, %v6456, %v6448
      %v6458 = vsel %vm6451, %v6454, %v6457
      %v6459 = vsel %vm6449, nan, %v6458
      %v6460 = vand.u32 2147483647, %v2457
      %vm6461 = vcmp.le.f32.partialorder %v6460, 0.7853982
      %vm6462 = vcmp.lt.s32.totalorder %v2457, 0
      %v6463 = vand.u32 %v2457, 2139095040
      %v6464 = vshrl.u32 %v6463, 23
      %v6465 = vsub.s32 %v6464, 127
      %v6466 = vand.u32 2147483647, %v2457
      %v6467 = vand.u32 %v6466, 8388607
      %v6468 = vor.u32 %v6467, 8388608
      %v6469 = vsub.s32 0, %v6468
      %v6470 = vadd.s32 %v6465, 1
      %vm6471 = vcmp.gt.s32.totalorder %v6470, 0
      %v6472 = vsel %vm6471, %v6470, 0
      %v6473 = vshrl.u32 %v6472, 5
      %v6474 = vand.u32 %v6472, 31
      %v6475 = vsub.s32 32, %v6474
      %v6476 = vshrl.u32 683565275, %v6475
      %v6477 = vshll.u32 683565275, %v6474
      %v6478 = vshrl.u32 2475754826, %v6475
      %v6479 = vor.u32 %v6477, %v6478
      %v6480 = vshll.u32 2475754826, %v6474
      %v6481 = vshrl.u32 2131351028, %v6475
      %v6482 = vor.u32 %v6480, %v6481
      %v6483 = vshll.u32 2131351028, %v6474
      %v6484 = vshrl.u32 2102212464, %v6475
      %v6485 = vor.u32 %v6483, %v6484
      %v6486 = vshll.u32 2102212464, %v6474
      %v6487 = vshrl.u32 920167782, %v6475
      %v6488 = vor.u32 %v6486, %v6487
      %v6489 = vshll.u32 920167782, %v6474
      %v6490 = vshrl.u32 1326507024, %v6475
      %v6491 = vor.u32 %v6489, %v6490
      %vm6492 = vcmp.lt.s32.totalorder %v6473, 1
      %vm6493 = vcmp.lt.s32.totalorder %v6473, 2
      %vm6494 = vcmp.lt.s32.totalorder %v6473, 3
      %vm6495 = vcmp.lt.s32.totalorder %v6473, 4
      %v6496 = vsel %vm6492, %v6476, %v6479
      %v6497 = vsel %vm6495, %v6485, 2102212464
      %v6498 = vsel %vm6494, %v6482, %v6497
      %v6499 = vsel %vm6493, %v6496, %v6498
      %v6500 = vsel %vm6492, %v6479, %v6482
      %v6501 = vsel %vm6495, %v6488, 920167782
      %v6502 = vsel %vm6494, %v6485, %v6501
      %v6503 = vsel %vm6493, %v6500, %v6502
      %v6504 = vsel %vm6492, %v6482, %v6485
      %v6505 = vsel %vm6495, %v6491, 1326507024
      %v6506 = vsel %vm6494, %v6488, %v6505
      %v6507 = vsel %vm6493, %v6504, %v6506
      %v6508 = vshll.u32 %v6468, 8
      %v6509 = vmul.u32.u64.compose %v6508, %v6507
      %v6510 = vextract.low.u32 %v6509
      %v6511 = vextract.high.u32 %v6509
      %v6512 = vmul.u32.u64.compose %v6508, %v6503
      %v6513 = vextract.low.u32 %v6512
      %v6514 = vextract.high.u32 %v6512
      %v6515 = vmul.u32 %v6508, %v6499
      %v6516 = vadd.s32 %v6511, %v6513
      %vm6517 = vc.u32 %v6511, %v6513
      %v6518 = vadd.s32 %v6514, 1
      %v6519 = vsel %vm6517, %v6518, %v6514
      %v6520 = vadd.s32 %v6515, %v6519
      %v6521 = vadd.s32 %v6520, 536870912
      %v6522 = vshrl.u32 %v6521, 30
      %v6523 = vshll.u32 %v6522, 30
      %v6524 = vsub.s32 %v6520, %v6523
      %vm6525 = vcmp.lt.s32.totalorder %v6524, 0
      %v6526 = vsub.s32 0, %v6524
      %v6527 = vsel %vm6525, %v6526, %v6524
      %v6528 = vclz %v6527
      %v6529 = vsub.s32 %v6528, 2
      %vm6530 = vcmp.gt.s32.totalorder 0, %v6529
      %v6531 = vsel %vm6530, 0, %v6529
      %v6532 = vsub.s32 32, %v6531
      %v6533 = vshll.u32 %v6524, %v6531
      %v6534 = vshrl.u32 %v6516, %v6532
      %v6535 = vor.u32 %v6533, %v6534
      %v6536 = vsub.s32 4294967266, %v6531
      %v6537 = vadd.s32 %v6536, 127
      %v6538 = vshll.u32 %v6537, 23
      %v6539 = vor.u32 4788187, %v6538
      %v6540 = vand.u32 2147483647, %v6539
      %v6542 = vcvt.s32.f32 %v6535
      %v6543 = vmul.f32 %v6542, %v6540
      %v6544 = vxor.u32 %v6543, 2147483648
      %v6545 = vsel %vm6462, %v6544, %v6543
      %v6546 = vsub.s32 4, %v6522
      %v6547 = vsel %vm6462, %v6546, %v6522
      %v6548 = vsel %vm6461, %v2457, %v6545
      %v6549 = vsel %vm6461, 0, %v6547
      %v6550 = vcosq.f32.pop %v6548
      %v6551 = vsinq.f32.pop %v6548
      %vm6552 = vweird.f32 %v2457
      %v6553 = vand.u32 %v6549, 3
      %vm6554 = vcmp.lt.s32.totalorder %v6553, 2
      %vm6555 = vcmp.eq.s32.totalorder %v6553, 0
      %v6556 = vxor.u32 %v6551, 2147483648
      %v6557 = vsel %vm6555, %v6550, %v6556
      %vm6558 = vcmp.eq.s32.totalorder %v6553, 2
      %v6559 = vxor.u32 %v6550, 2147483648
      %v6560 = vsel %vm6558, %v6559, %v6551
      %v6561 = vsel %vm6554, %v6557, %v6560
      %v6562 = vsel %vm6552, nan, %v6561
      %v6563 = vand.u32 2147483647, %v2458
      %vm6564 = vcmp.le.f32.partialorder %v6563, 0.7853982
      %vm6565 = vcmp.lt.s32.totalorder %v2458, 0
      %v6566 = vand.u32 %v2458, 2139095040
      %v6567 = vshrl.u32 %v6566, 23
      %v6568 = vsub.s32 %v6567, 127
      %v6569 = vand.u32 2147483647, %v2458
      %v6570 = vand.u32 %v6569, 8388607
      %v6571 = vor.u32 %v6570, 8388608
      %v6572 = vsub.s32 0, %v6571
      %v6573 = vadd.s32 %v6568, 1
      %vm6574 = vcmp.gt.s32.totalorder %v6573, 0
      %v6575 = vsel %vm6574, %v6573, 0
      %v6576 = vshrl.u32 %v6575, 5
      %v6577 = vand.u32 %v6575, 31
      %v6578 = vsub.s32 32, %v6577
      %v6579 = vshrl.u32 683565275, %v6578
      %v6580 = vshll.u32 683565275, %v6577
      %v6581 = vshrl.u32 2475754826, %v6578
      %v6582 = vor.u32 %v6580, %v6581
      %v6583 = vshll.u32 2475754826, %v6577
      %v6584 = vshrl.u32 2131351028, %v6578
      %v6585 = vor.u32 %v6583, %v6584
      %v6586 = vshll.u32 2131351028, %v6577
      %v6587 = vshrl.u32 2102212464, %v6578
      %v6588 = vor.u32 %v6586, %v6587
      %v6589 = vshll.u32 2102212464, %v6577
      %v6590 = vshrl.u32 920167782, %v6578
      %v6591 = vor.u32 %v6589, %v6590
      %v6592 = vshll.u32 920167782, %v6577
      %v6593 = vshrl.u32 1326507024, %v6578
      %v6594 = vor.u32 %v6592, %v6593
      %vm6595 = vcmp.lt.s32.totalorder %v6576, 1
      %vm6596 = vcmp.lt.s32.totalorder %v6576, 2
      %vm6597 = vcmp.lt.s32.totalorder %v6576, 3
      %vm6598 = vcmp.lt.s32.totalorder %v6576, 4
      %v6599 = vsel %vm6595, %v6579, %v6582
      %v6600 = vsel %vm6598, %v6588, 2102212464
      %v6601 = vsel %vm6597, %v6585, %v6600
      %v6602 = vsel %vm6596, %v6599, %v6601
      %v6603 = vsel %vm6595, %v6582, %v6585
      %v6604 = vsel %vm6598, %v6591, 920167782
      %v6605 = vsel %vm6597, %v6588, %v6604
      %v6606 = vsel %vm6596, %v6603, %v6605
      %v6607 = vsel %vm6595, %v6585, %v6588
      %v6608 = vsel %vm6598, %v6594, 1326507024
      %v6609 = vsel %vm6597, %v6591, %v6608
      %v6610 = vsel %vm6596, %v6607, %v6609
      %v6611 = vshll.u32 %v6571, 8
      %v6612 = vmul.u32.u64.compose %v6611, %v6610
      %v6613 = vextract.low.u32 %v6612
      %v6614 = vextract.high.u32 %v6612
      %v6615 = vmul.u32.u64.compose %v6611, %v6606
      %v6616 = vextract.low.u32 %v6615
      %v6617 = vextract.high.u32 %v6615
      %v6618 = vmul.u32 %v6611, %v6602
      %v6619 = vadd.s32 %v6614, %v6616
      %vm6620 = vc.u32 %v6614, %v6616
      %v6621 = vadd.s32 %v6617, 1
      %v6622 = vsel %vm6620, %v6621, %v6617
      %v6623 = vadd.s32 %v6618, %v6622
      %v6624 = vadd.s32 %v6623, 536870912
      %v6625 = vshrl.u32 %v6624, 30
      %v6626 = vshll.u32 %v6625, 30
      %v6627 = vsub.s32 %v6623, %v6626
      %vm6628 = vcmp.lt.s32.totalorder %v6627, 0
      %v6629 = vsub.s32 0, %v6627
      %v6630 = vsel %vm6628, %v6629, %v6627
      %v6631 = vclz %v6630
      %v6632 = vsub.s32 %v6631, 2
      %vm6633 = vcmp.gt.s32.totalorder 0, %v6632
      %v6634 = vsel %vm6633, 0, %v6632
      %v6635 = vsub.s32 32, %v6634
      %v6636 = vshll.u32 %v6627, %v6634
      %v6637 = vshrl.u32 %v6619, %v6635
      %v6638 = vor.u32 %v6636, %v6637
      %v6639 = vsub.s32 4294967266, %v6634
      %v6640 = vadd.s32 %v6639, 127
      %v6641 = vshll.u32 %v6640, 23
      %v6642 = vor.u32 4788187, %v6641
      %v6643 = vand.u32 2147483647, %v6642
      %v6645 = vcvt.s32.f32 %v6638
      %v6646 = vmul.f32 %v6645, %v6643
      %v6647 = vxor.u32 %v6646, 2147483648
      %v6648 = vsel %vm6565, %v6647, %v6646
      %v6649 = vsub.s32 4, %v6625
      %v6650 = vsel %vm6565, %v6649, %v6625
      %v6651 = vsel %vm6564, %v2458, %v6648
      %v6652 = vsel %vm6564, 0, %v6650
      %v6653 = vcosq.f32.pop %v6651
      %v6654 = vsinq.f32.pop %v6651
      %vm6655 = vweird.f32 %v2458
      %v6656 = vand.u32 %v6652, 3
      %vm6657 = vcmp.lt.s32.totalorder %v6656, 2
      %vm6658 = vcmp.eq.s32.totalorder %v6656, 0
      %v6659 = vxor.u32 %v6654, 2147483648
      %v6660 = vsel %vm6658, %v6653, %v6659
      %vm6661 = vcmp.eq.s32.totalorder %v6656, 2
      %v6662 = vxor.u32 %v6653, 2147483648
      %v6663 = vsel %vm6661, %v6662, %v6654
      %v6664 = vsel %vm6657, %v6660, %v6663
      %v6665 = vsel %vm6655, nan, %v6664
      %v6666 = vand.u32 2147483647, %v2459
      %vm6667 = vcmp.le.f32.partialorder %v6666, 0.7853982
      %vm6668 = vcmp.lt.s32.totalorder %v2459, 0
      %v6669 = vand.u32 %v2459, 2139095040
      %v6670 = vshrl.u32 %v6669, 23
      %v6671 = vsub.s32 %v6670, 127
      %v6672 = vand.u32 2147483647, %v2459
      %v6673 = vand.u32 %v6672, 8388607
      %v6674 = vor.u32 %v6673, 8388608
      %v6675 = vsub.s32 0, %v6674
      %v6676 = vadd.s32 %v6671, 1
      %vm6677 = vcmp.gt.s32.totalorder %v6676, 0
      %v6678 = vsel %vm6677, %v6676, 0
      %v6679 = vshrl.u32 %v6678, 5
      %v6680 = vand.u32 %v6678, 31
      %v6681 = vsub.s32 32, %v6680
      %v6682 = vshrl.u32 683565275, %v6681
      %v6683 = vshll.u32 683565275, %v6680
      %v6684 = vshrl.u32 2475754826, %v6681
      %v6685 = vor.u32 %v6683, %v6684
      %v6686 = vshll.u32 2475754826, %v6680
      %v6687 = vshrl.u32 2131351028, %v6681
      %v6688 = vor.u32 %v6686, %v6687
      %v6689 = vshll.u32 2131351028, %v6680
      %v6690 = vshrl.u32 2102212464, %v6681
      %v6691 = vor.u32 %v6689, %v6690
      %v6692 = vshll.u32 2102212464, %v6680
      %v6693 = vshrl.u32 920167782, %v6681
      %v6694 = vor.u32 %v6692, %v6693
      %v6695 = vshll.u32 920167782, %v6680
      %v6696 = vshrl.u32 1326507024, %v6681
      %v6697 = vor.u32 %v6695, %v6696
      %vm6698 = vcmp.lt.s32.totalorder %v6679, 1
      %vm6699 = vcmp.lt.s32.totalorder %v6679, 2
      %vm6700 = vcmp.lt.s32.totalorder %v6679, 3
      %vm6701 = vcmp.lt.s32.totalorder %v6679, 4
      %v6702 = vsel %vm6698, %v6682, %v6685
      %v6703 = vsel %vm6701, %v6691, 2102212464
      %v6704 = vsel %vm6700, %v6688, %v6703
      %v6705 = vsel %vm6699, %v6702, %v6704
      %v6706 = vsel %vm6698, %v6685, %v6688
      %v6707 = vsel %vm6701, %v6694, 920167782
      %v6708 = vsel %vm6700, %v6691, %v6707
      %v6709 = vsel %vm6699, %v6706, %v6708
      %v6710 = vsel %vm6698, %v6688, %v6691
      %v6711 = vsel %vm6701, %v6697, 1326507024
      %v6712 = vsel %vm6700, %v6694, %v6711
      %v6713 = vsel %vm6699, %v6710, %v6712
      %v6714 = vshll.u32 %v6674, 8
      %v6715 = vmul.u32.u64.compose %v6714, %v6713
      %v6716 = vextract.low.u32 %v6715
      %v6717 = vextract.high.u32 %v6715
      %v6718 = vmul.u32.u64.compose %v6714, %v6709
      %v6719 = vextract.low.u32 %v6718
      %v6720 = vextract.high.u32 %v6718
      %v6721 = vmul.u32 %v6714, %v6705
      %v6722 = vadd.s32 %v6717, %v6719
      %vm6723 = vc.u32 %v6717, %v6719
      %v6724 = vadd.s32 %v6720, 1
      %v6725 = vsel %vm6723, %v6724, %v6720
      %v6726 = vadd.s32 %v6721, %v6725
      %v6727 = vadd.s32 %v6726, 536870912
      %v6728 = vshrl.u32 %v6727, 30
      %v6729 = vshll.u32 %v6728, 30
      %v6730 = vsub.s32 %v6726, %v6729
      %vm6731 = vcmp.lt.s32.totalorder %v6730, 0
      %v6732 = vsub.s32 0, %v6730
      %v6733 = vsel %vm6731, %v6732, %v6730
      %v6734 = vclz %v6733
      %v6735 = vsub.s32 %v6734, 2
      %vm6736 = vcmp.gt.s32.totalorder 0, %v6735
      %v6737 = vsel %vm6736, 0, %v6735
      %v6738 = vsub.s32 32, %v6737
      %v6739 = vshll.u32 %v6730, %v6737
      %v6740 = vshrl.u32 %v6722, %v6738
      %v6741 = vor.u32 %v6739, %v6740
      %v6742 = vsub.s32 4294967266, %v6737
      %v6743 = vadd.s32 %v6742, 127
      %v6744 = vshll.u32 %v6743, 23
      %v6745 = vor.u32 4788187, %v6744
      %v6746 = vand.u32 2147483647, %v6745
      %v6748 = vcvt.s32.f32 %v6741
      %v6749 = vmul.f32 %v6748, %v6746
      %v6750 = vxor.u32 %v6749, 2147483648
      %v6751 = vsel %vm6668, %v6750, %v6749
      %v6752 = vsub.s32 4, %v6728
      %v6753 = vsel %vm6668, %v6752, %v6728
      %v6754 = vsel %vm6667, %v2459, %v6751
      %v6755 = vsel %vm6667, 0, %v6753
      %v6756 = vcosq.f32.pop %v6754
      %v6757 = vsinq.f32.pop %v6754
      %vm6758 = vweird.f32 %v2459
      %v6759 = vand.u32 %v6755, 3
      %vm6760 = vcmp.lt.s32.totalorder %v6759, 2
      %vm6761 = vcmp.eq.s32.totalorder %v6759, 0
      %v6762 = vxor.u32 %v6757, 2147483648
      %v6763 = vsel %vm6761, %v6756, %v6762
      %vm6764 = vcmp.eq.s32.totalorder %v6759, 2
      %v6765 = vxor.u32 %v6756, 2147483648
      %v6766 = vsel %vm6764, %v6765, %v6757
      %v6767 = vsel %vm6760, %v6763, %v6766
      %v6768 = vsel %vm6758, nan, %v6767
      %v6769 = vand.u32 2147483647, %v2460
      %vm6770 = vcmp.le.f32.partialorder %v6769, 0.7853982
      %vm6771 = vcmp.lt.s32.totalorder %v2460, 0
      %v6772 = vand.u32 %v2460, 2139095040
      %v6773 = vshrl.u32 %v6772, 23
      %v6774 = vsub.s32 %v6773, 127
      %v6775 = vand.u32 2147483647, %v2460
      %v6776 = vand.u32 %v6775, 8388607
      %v6777 = vor.u32 %v6776, 8388608
      %v6778 = vsub.s32 0, %v6777
      %v6779 = vadd.s32 %v6774, 1
      %vm6780 = vcmp.gt.s32.totalorder %v6779, 0
      %v6781 = vsel %vm6780, %v6779, 0
      %v6782 = vshrl.u32 %v6781, 5
      %v6783 = vand.u32 %v6781, 31
      %v6784 = vsub.s32 32, %v6783
      %v6785 = vshrl.u32 683565275, %v6784
      %v6786 = vshll.u32 683565275, %v6783
      %v6787 = vshrl.u32 2475754826, %v6784
      %v6788 = vor.u32 %v6786, %v6787
      %v6789 = vshll.u32 2475754826, %v6783
      %v6790 = vshrl.u32 2131351028, %v6784
      %v6791 = vor.u32 %v6789, %v6790
      %v6792 = vshll.u32 2131351028, %v6783
      %v6793 = vshrl.u32 2102212464, %v6784
      %v6794 = vor.u32 %v6792, %v6793
      %v6795 = vshll.u32 2102212464, %v6783
      %v6796 = vshrl.u32 920167782, %v6784
      %v6797 = vor.u32 %v6795, %v6796
      %v6798 = vshll.u32 920167782, %v6783
      %v6799 = vshrl.u32 1326507024, %v6784
      %v6800 = vor.u32 %v6798, %v6799
      %vm6801 = vcmp.lt.s32.totalorder %v6782, 1
      %vm6802 = vcmp.lt.s32.totalorder %v6782, 2
      %vm6803 = vcmp.lt.s32.totalorder %v6782, 3
      %vm6804 = vcmp.lt.s32.totalorder %v6782, 4
      %v6805 = vsel %vm6801, %v6785, %v6788
      %v6806 = vsel %vm6804, %v6794, 2102212464
      %v6807 = vsel %vm6803, %v6791, %v6806
      %v6808 = vsel %vm6802, %v6805, %v6807
      %v6809 = vsel %vm6801, %v6788, %v6791
      %v6810 = vsel %vm6804, %v6797, 920167782
      %v6811 = vsel %vm6803, %v6794, %v6810
      %v6812 = vsel %vm6802, %v6809, %v6811
      %v6813 = vsel %vm6801, %v6791, %v6794
      %v6814 = vsel %vm6804, %v6800, 1326507024
      %v6815 = vsel %vm6803, %v6797, %v6814
      %v6816 = vsel %vm6802, %v6813, %v6815
      %v6817 = vshll.u32 %v6777, 8
      %v6818 = vmul.u32.u64.compose %v6817, %v6816
      %v6819 = vextract.low.u32 %v6818
      %v6820 = vextract.high.u32 %v6818
      %v6821 = vmul.u32.u64.compose %v6817, %v6812
      %v6822 = vextract.low.u32 %v6821
      %v6823 = vextract.high.u32 %v6821
      %v6824 = vmul.u32 %v6817, %v6808
      %v6825 = vadd.s32 %v6820, %v6822
      %vm6826 = vc.u32 %v6820, %v6822
      %v6827 = vadd.s32 %v6823, 1
      %v6828 = vsel %vm6826, %v6827, %v6823
      %v6829 = vadd.s32 %v6824, %v6828
      %v6830 = vadd.s32 %v6829, 536870912
      %v6831 = vshrl.u32 %v6830, 30
      %v6832 = vshll.u32 %v6831, 30
      %v6833 = vsub.s32 %v6829, %v6832
      %vm6834 = vcmp.lt.s32.totalorder %v6833, 0
      %v6835 = vsub.s32 0, %v6833
      %v6836 = vsel %vm6834, %v6835, %v6833
      %v6837 = vclz %v6836
      %v6838 = vsub.s32 %v6837, 2
      %vm6839 = vcmp.gt.s32.totalorder 0, %v6838
      %v6840 = vsel %vm6839, 0, %v6838
      %v6841 = vsub.s32 32, %v6840
      %v6842 = vshll.u32 %v6833, %v6840
      %v6843 = vshrl.u32 %v6825, %v6841
      %v6844 = vor.u32 %v6842, %v6843
      %v6845 = vsub.s32 4294967266, %v6840
      %v6846 = vadd.s32 %v6845, 127
      %v6847 = vshll.u32 %v6846, 23
      %v6848 = vor.u32 4788187, %v6847
      %v6849 = vand.u32 2147483647, %v6848
      %v6851 = vcvt.s32.f32 %v6844
      %v6852 = vmul.f32 %v6851, %v6849
      %v6853 = vxor.u32 %v6852, 2147483648
      %v6854 = vsel %vm6771, %v6853, %v6852
      %v6855 = vsub.s32 4, %v6831
      %v6856 = vsel %vm6771, %v6855, %v6831
      %v6857 = vsel %vm6770, %v2460, %v6854
      %v6858 = vsel %vm6770, 0, %v6856
      %v6859 = vcosq.f32.pop %v6857
      %v6860 = vsinq.f32.pop %v6857
      %vm6861 = vweird.f32 %v2460
      %v6862 = vand.u32 %v6858, 3
      %vm6863 = vcmp.lt.s32.totalorder %v6862, 2
      %vm6864 = vcmp.eq.s32.totalorder %v6862, 0
      %v6865 = vxor.u32 %v6860, 2147483648
      %v6866 = vsel %vm6864, %v6859, %v6865
      %vm6867 = vcmp.eq.s32.totalorder %v6862, 2
      %v6868 = vxor.u32 %v6859, 2147483648
      %v6869 = vsel %vm6867, %v6868, %v6860
      %v6870 = vsel %vm6863, %v6866, %v6869
      %v6871 = vsel %vm6861, nan, %v6870
      %v6872 = vand.u32 2147483647, %v2461
      %vm6873 = vcmp.le.f32.partialorder %v6872, 0.7853982
      %vm6874 = vcmp.lt.s32.totalorder %v2461, 0
      %v6875 = vand.u32 %v2461, 2139095040
      %v6876 = vshrl.u32 %v6875, 23
      %v6877 = vsub.s32 %v6876, 127
      %v6878 = vand.u32 2147483647, %v2461
      %v6879 = vand.u32 %v6878, 8388607
      %v6880 = vor.u32 %v6879, 8388608
      %v6881 = vsub.s32 0, %v6880
      %v6882 = vadd.s32 %v6877, 1
      %vm6883 = vcmp.gt.s32.totalorder %v6882, 0
      %v6884 = vsel %vm6883, %v6882, 0
      %v6885 = vshrl.u32 %v6884, 5
      %v6886 = vand.u32 %v6884, 31
      %v6887 = vsub.s32 32, %v6886
      %v6888 = vshrl.u32 683565275, %v6887
      %v6889 = vshll.u32 683565275, %v6886
      %v6890 = vshrl.u32 2475754826, %v6887
      %v6891 = vor.u32 %v6889, %v6890
      %v6892 = vshll.u32 2475754826, %v6886
      %v6893 = vshrl.u32 2131351028, %v6887
      %v6894 = vor.u32 %v6892, %v6893
      %v6895 = vshll.u32 2131351028, %v6886
      %v6896 = vshrl.u32 2102212464, %v6887
      %v6897 = vor.u32 %v6895, %v6896
      %v6898 = vshll.u32 2102212464, %v6886
      %v6899 = vshrl.u32 920167782, %v6887
      %v6900 = vor.u32 %v6898, %v6899
      %v6901 = vshll.u32 920167782, %v6886
      %v6902 = vshrl.u32 1326507024, %v6887
      %v6903 = vor.u32 %v6901, %v6902
      %vm6904 = vcmp.lt.s32.totalorder %v6885, 1
      %vm6905 = vcmp.lt.s32.totalorder %v6885, 2
      %vm6906 = vcmp.lt.s32.totalorder %v6885, 3
      %vm6907 = vcmp.lt.s32.totalorder %v6885, 4
      %v6908 = vsel %vm6904, %v6888, %v6891
      %v6909 = vsel %vm6907, %v6897, 2102212464
      %v6910 = vsel %vm6906, %v6894, %v6909
      %v6911 = vsel %vm6905, %v6908, %v6910
      %v6912 = vsel %vm6904, %v6891, %v6894
      %v6913 = vsel %vm6907, %v6900, 920167782
      %v6914 = vsel %vm6906, %v6897, %v6913
      %v6915 = vsel %vm6905, %v6912, %v6914
      %v6916 = vsel %vm6904, %v6894, %v6897
      %v6917 = vsel %vm6907, %v6903, 1326507024
      %v6918 = vsel %vm6906, %v6900, %v6917
      %v6919 = vsel %vm6905, %v6916, %v6918
      %v6920 = vshll.u32 %v6880, 8
      %v6921 = vmul.u32.u64.compose %v6920, %v6919
      %v6922 = vextract.low.u32 %v6921
      %v6923 = vextract.high.u32 %v6921
      %v6924 = vmul.u32.u64.compose %v6920, %v6915
      %v6925 = vextract.low.u32 %v6924
      %v6926 = vextract.high.u32 %v6924
      %v6927 = vmul.u32 %v6920, %v6911
      %v6928 = vadd.s32 %v6923, %v6925
      %vm6929 = vc.u32 %v6923, %v6925
      %v6930 = vadd.s32 %v6926, 1
      %v6931 = vsel %vm6929, %v6930, %v6926
      %v6932 = vadd.s32 %v6927, %v6931
      %v6933 = vadd.s32 %v6932, 536870912
      %v6934 = vshrl.u32 %v6933, 30
      %v6935 = vshll.u32 %v6934, 30
      %v6936 = vsub.s32 %v6932, %v6935
      %vm6937 = vcmp.lt.s32.totalorder %v6936, 0
      %v6938 = vsub.s32 0, %v6936
      %v6939 = vsel %vm6937, %v6938, %v6936
      %v6940 = vclz %v6939
      %v6941 = vsub.s32 %v6940, 2
      %vm6942 = vcmp.gt.s32.totalorder 0, %v6941
      %v6943 = vsel %vm6942, 0, %v6941
      %v6944 = vsub.s32 32, %v6943
      %v6945 = vshll.u32 %v6936, %v6943
      %v6946 = vshrl.u32 %v6928, %v6944
      %v6947 = vor.u32 %v6945, %v6946
      %v6948 = vsub.s32 4294967266, %v6943
      %v6949 = vadd.s32 %v6948, 127
      %v6950 = vshll.u32 %v6949, 23
      %v6951 = vor.u32 4788187, %v6950
      %v6952 = vand.u32 2147483647, %v6951
      %v6954 = vcvt.s32.f32 %v6947
      %v6955 = vmul.f32 %v6954, %v6952
      %v6956 = vxor.u32 %v6955, 2147483648
      %v6957 = vsel %vm6874, %v6956, %v6955
      %v6958 = vsub.s32 4, %v6934
      %v6959 = vsel %vm6874, %v6958, %v6934
      %v6960 = vsel %vm6873, %v2461, %v6957
      %v6961 = vsel %vm6873, 0, %v6959
      %v6962 = vcosq.f32.pop %v6960
      %v6963 = vsinq.f32.pop %v6960
      %vm6964 = vweird.f32 %v2461
      %v6965 = vand.u32 %v6961, 3
      %vm6966 = vcmp.lt.s32.totalorder %v6965, 2
      %vm6967 = vcmp.eq.s32.totalorder %v6965, 0
      %v6968 = vxor.u32 %v6963, 2147483648
      %v6969 = vsel %vm6967, %v6962, %v6968
      %vm6970 = vcmp.eq.s32.totalorder %v6965, 2
      %v6971 = vxor.u32 %v6962, 2147483648
      %v6972 = vsel %vm6970, %v6971, %v6963
      %v6973 = vsel %vm6966, %v6969, %v6972
      %v6974 = vsel %vm6964, nan, %v6973
      %v6975 = vand.u32 2147483647, %v2462
      %vm6976 = vcmp.le.f32.partialorder %v6975, 0.7853982
      %vm6977 = vcmp.lt.s32.totalorder %v2462, 0
      %v6978 = vand.u32 %v2462, 2139095040
      %v6979 = vshrl.u32 %v6978, 23
      %v6980 = vsub.s32 %v6979, 127
      %v6981 = vand.u32 2147483647, %v2462
      %v6982 = vand.u32 %v6981, 8388607
      %v6983 = vor.u32 %v6982, 8388608
      %v6984 = vsub.s32 0, %v6983
      %v6985 = vadd.s32 %v6980, 1
      %vm6986 = vcmp.gt.s32.totalorder %v6985, 0
      %v6987 = vsel %vm6986, %v6985, 0
      %v6988 = vshrl.u32 %v6987, 5
      %v6989 = vand.u32 %v6987, 31
      %v6990 = vsub.s32 32, %v6989
      %v6991 = vshrl.u32 683565275, %v6990
      %v6992 = vshll.u32 683565275, %v6989
      %v6993 = vshrl.u32 2475754826, %v6990
      %v6994 = vor.u32 %v6992, %v6993
      %v6995 = vshll.u32 2475754826, %v6989
      %v6996 = vshrl.u32 2131351028, %v6990
      %v6997 = vor.u32 %v6995, %v6996
      %v6998 = vshll.u32 2131351028, %v6989
      %v6999 = vshrl.u32 2102212464, %v6990
      %v7000 = vor.u32 %v6998, %v6999
      %v7001 = vshll.u32 2102212464, %v6989
      %v7002 = vshrl.u32 920167782, %v6990
      %v7003 = vor.u32 %v7001, %v7002
      %v7004 = vshll.u32 920167782, %v6989
      %v7005 = vshrl.u32 1326507024, %v6990
      %v7006 = vor.u32 %v7004, %v7005
      %vm7007 = vcmp.lt.s32.totalorder %v6988, 1
      %vm7008 = vcmp.lt.s32.totalorder %v6988, 2
      %vm7009 = vcmp.lt.s32.totalorder %v6988, 3
      %vm7010 = vcmp.lt.s32.totalorder %v6988, 4
      %v7011 = vsel %vm7007, %v6991, %v6994
      %v7012 = vsel %vm7010, %v7000, 2102212464
      %v7013 = vsel %vm7009, %v6997, %v7012
      %v7014 = vsel %vm7008, %v7011, %v7013
      %v7015 = vsel %vm7007, %v6994, %v6997
      %v7016 = vsel %vm7010, %v7003, 920167782
      %v7017 = vsel %vm7009, %v7000, %v7016
      %v7018 = vsel %vm7008, %v7015, %v7017
      %v7019 = vsel %vm7007, %v6997, %v7000
      %v7020 = vsel %vm7010, %v7006, 1326507024
      %v7021 = vsel %vm7009, %v7003, %v7020
      %v7022 = vsel %vm7008, %v7019, %v7021
      %v7023 = vshll.u32 %v6983, 8
      %v7024 = vmul.u32.u64.compose %v7023, %v7022
      %v7025 = vextract.low.u32 %v7024
      %v7026 = vextract.high.u32 %v7024
      %v7027 = vmul.u32.u64.compose %v7023, %v7018
      %v7028 = vextract.low.u32 %v7027
      %v7029 = vextract.high.u32 %v7027
      %v7030 = vmul.u32 %v7023, %v7014
      %v7031 = vadd.s32 %v7026, %v7028
      %vm7032 = vc.u32 %v7026, %v7028
      %v7033 = vadd.s32 %v7029, 1
      %v7034 = vsel %vm7032, %v7033, %v7029
      %v7035 = vadd.s32 %v7030, %v7034
      %v7036 = vadd.s32 %v7035, 536870912
      %v7037 = vshrl.u32 %v7036, 30
      %v7038 = vshll.u32 %v7037, 30
      %v7039 = vsub.s32 %v7035, %v7038
      %vm7040 = vcmp.lt.s32.totalorder %v7039, 0
      %v7041 = vsub.s32 0, %v7039
      %v7042 = vsel %vm7040, %v7041, %v7039
      %v7043 = vclz %v7042
      %v7044 = vsub.s32 %v7043, 2
      %vm7045 = vcmp.gt.s32.totalorder 0, %v7044
      %v7046 = vsel %vm7045, 0, %v7044
      %v7047 = vsub.s32 32, %v7046
      %v7048 = vshll.u32 %v7039, %v7046
      %v7049 = vshrl.u32 %v7031, %v7047
      %v7050 = vor.u32 %v7048, %v7049
      %v7051 = vsub.s32 4294967266, %v7046
      %v7052 = vadd.s32 %v7051, 127
      %v7053 = vshll.u32 %v7052, 23
      %v7054 = vor.u32 4788187, %v7053
      %v7055 = vand.u32 2147483647, %v7054
      %v7057 = vcvt.s32.f32 %v7050
      %v7058 = vmul.f32 %v7057, %v7055
      %v7059 = vxor.u32 %v7058, 2147483648
      %v7060 = vsel %vm6977, %v7059, %v7058
      %v7061 = vsub.s32 4, %v7037
      %v7062 = vsel %vm6977, %v7061, %v7037
      %v7063 = vsel %vm6976, %v2462, %v7060
      %v7064 = vsel %vm6976, 0, %v7062
      %v7065 = vcosq.f32.pop %v7063
      %v7066 = vsinq.f32.pop %v7063
      %vm7067 = vweird.f32 %v2462
      %v7068 = vand.u32 %v7064, 3
      %vm7069 = vcmp.lt.s32.totalorder %v7068, 2
      %vm7070 = vcmp.eq.s32.totalorder %v7068, 0
      %v7071 = vxor.u32 %v7066, 2147483648
      %v7072 = vsel %vm7070, %v7065, %v7071
      %vm7073 = vcmp.eq.s32.totalorder %v7068, 2
      %v7074 = vxor.u32 %v7065, 2147483648
      %v7075 = vsel %vm7073, %v7074, %v7066
      %v7076 = vsel %vm7069, %v7072, %v7075
      %v7077 = vsel %vm7067, nan, %v7076
      %v7078 = vand.u32 2147483647, %v2463
      %vm7079 = vcmp.le.f32.partialorder %v7078, 0.7853982
      %vm7080 = vcmp.lt.s32.totalorder %v2463, 0
      %v7081 = vand.u32 %v2463, 2139095040
      %v7082 = vshrl.u32 %v7081, 23
      %v7083 = vsub.s32 %v7082, 127
      %v7084 = vand.u32 2147483647, %v2463
      %v7085 = vand.u32 %v7084, 8388607
      %v7086 = vor.u32 %v7085, 8388608
      %v7087 = vsub.s32 0, %v7086
      %v7088 = vadd.s32 %v7083, 1
      %vm7089 = vcmp.gt.s32.totalorder %v7088, 0
      %v7090 = vsel %vm7089, %v7088, 0
      %v7091 = vshrl.u32 %v7090, 5
      %v7092 = vand.u32 %v7090, 31
      %v7093 = vsub.s32 32, %v7092
      %v7094 = vshrl.u32 683565275, %v7093
      %v7095 = vshll.u32 683565275, %v7092
      %v7096 = vshrl.u32 2475754826, %v7093
      %v7097 = vor.u32 %v7095, %v7096
      %v7098 = vshll.u32 2475754826, %v7092
      %v7099 = vshrl.u32 2131351028, %v7093
      %v7100 = vor.u32 %v7098, %v7099
      %v7101 = vshll.u32 2131351028, %v7092
      %v7102 = vshrl.u32 2102212464, %v7093
      %v7103 = vor.u32 %v7101, %v7102
      %v7104 = vshll.u32 2102212464, %v7092
      %v7105 = vshrl.u32 920167782, %v7093
      %v7106 = vor.u32 %v7104, %v7105
      %v7107 = vshll.u32 920167782, %v7092
      %v7108 = vshrl.u32 1326507024, %v7093
      %v7109 = vor.u32 %v7107, %v7108
      %vm7110 = vcmp.lt.s32.totalorder %v7091, 1
      %vm7111 = vcmp.lt.s32.totalorder %v7091, 2
      %vm7112 = vcmp.lt.s32.totalorder %v7091, 3
      %vm7113 = vcmp.lt.s32.totalorder %v7091, 4
      %v7114 = vsel %vm7110, %v7094, %v7097
      %v7115 = vsel %vm7113, %v7103, 2102212464
      %v7116 = vsel %vm7112, %v7100, %v7115
      %v7117 = vsel %vm7111, %v7114, %v7116
      %v7118 = vsel %vm7110, %v7097, %v7100
      %v7119 = vsel %vm7113, %v7106, 920167782
      %v7120 = vsel %vm7112, %v7103, %v7119
      %v7121 = vsel %vm7111, %v7118, %v7120
      %v7122 = vsel %vm7110, %v7100, %v7103
      %v7123 = vsel %vm7113, %v7109, 1326507024
      %v7124 = vsel %vm7112, %v7106, %v7123
      %v7125 = vsel %vm7111, %v7122, %v7124
      %v7126 = vshll.u32 %v7086, 8
      %v7127 = vmul.u32.u64.compose %v7126, %v7125
      %v7128 = vextract.low.u32 %v7127
      %v7129 = vextract.high.u32 %v7127
      %v7130 = vmul.u32.u64.compose %v7126, %v7121
      %v7131 = vextract.low.u32 %v7130
      %v7132 = vextract.high.u32 %v7130
      %v7133 = vmul.u32 %v7126, %v7117
      %v7134 = vadd.s32 %v7129, %v7131
      %vm7135 = vc.u32 %v7129, %v7131
      %v7136 = vadd.s32 %v7132, 1
      %v7137 = vsel %vm7135, %v7136, %v7132
      %v7138 = vadd.s32 %v7133, %v7137
      %v7139 = vadd.s32 %v7138, 536870912
      %v7140 = vshrl.u32 %v7139, 30
      %v7141 = vshll.u32 %v7140, 30
      %v7142 = vsub.s32 %v7138, %v7141
      %vm7143 = vcmp.lt.s32.totalorder %v7142, 0
      %v7144 = vsub.s32 0, %v7142
      %v7145 = vsel %vm7143, %v7144, %v7142
      %v7146 = vclz %v7145
      %v7147 = vsub.s32 %v7146, 2
      %vm7148 = vcmp.gt.s32.totalorder 0, %v7147
      %v7149 = vsel %vm7148, 0, %v7147
      %v7150 = vsub.s32 32, %v7149
      %v7151 = vshll.u32 %v7142, %v7149
      %v7152 = vshrl.u32 %v7134, %v7150
      %v7153 = vor.u32 %v7151, %v7152
      %v7154 = vsub.s32 4294967266, %v7149
      %v7155 = vadd.s32 %v7154, 127
      %v7156 = vshll.u32 %v7155, 23
      %v7157 = vor.u32 4788187, %v7156
      %v7158 = vand.u32 2147483647, %v7157
      %v7160 = vcvt.s32.f32 %v7153
      %v7161 = vmul.f32 %v7160, %v7158
      %v7162 = vxor.u32 %v7161, 2147483648
      %v7163 = vsel %vm7080, %v7162, %v7161
      %v7164 = vsub.s32 4, %v7140
      %v7165 = vsel %vm7080, %v7164, %v7140
      %v7166 = vsel %vm7079, %v2463, %v7163
      %v7167 = vsel %vm7079, 0, %v7165
      %v7168 = vcosq.f32.pop %v7166
      %v7169 = vsinq.f32.pop %v7166
      %vm7170 = vweird.f32 %v2463
      %v7171 = vand.u32 %v7167, 3
      %vm7172 = vcmp.lt.s32.totalorder %v7171, 2
      %vm7173 = vcmp.eq.s32.totalorder %v7171, 0
      %v7174 = vxor.u32 %v7169, 2147483648
      %v7175 = vsel %vm7173, %v7168, %v7174
      %vm7176 = vcmp.eq.s32.totalorder %v7171, 2
      %v7177 = vxor.u32 %v7168, 2147483648
      %v7178 = vsel %vm7176, %v7177, %v7169
      %v7179 = vsel %vm7172, %v7175, %v7178
      %v7180 = vsel %vm7170, nan, %v7179
      %v7181 = vand.u32 2147483647, %v2464
      %vm7182 = vcmp.le.f32.partialorder %v7181, 0.7853982
      %vm7183 = vcmp.lt.s32.totalorder %v2464, 0
      %v7184 = vand.u32 %v2464, 2139095040
      %v7185 = vshrl.u32 %v7184, 23
      %v7186 = vsub.s32 %v7185, 127
      %v7187 = vand.u32 2147483647, %v2464
      %v7188 = vand.u32 %v7187, 8388607
      %v7189 = vor.u32 %v7188, 8388608
      %v7190 = vsub.s32 0, %v7189
      %v7191 = vadd.s32 %v7186, 1
      %vm7192 = vcmp.gt.s32.totalorder %v7191, 0
      %v7193 = vsel %vm7192, %v7191, 0
      %v7194 = vshrl.u32 %v7193, 5
      %v7195 = vand.u32 %v7193, 31
      %v7196 = vsub.s32 32, %v7195
      %v7197 = vshrl.u32 683565275, %v7196
      %v7198 = vshll.u32 683565275, %v7195
      %v7199 = vshrl.u32 2475754826, %v7196
      %v7200 = vor.u32 %v7198, %v7199
      %v7201 = vshll.u32 2475754826, %v7195
      %v7202 = vshrl.u32 2131351028, %v7196
      %v7203 = vor.u32 %v7201, %v7202
      %v7204 = vshll.u32 2131351028, %v7195
      %v7205 = vshrl.u32 2102212464, %v7196
      %v7206 = vor.u32 %v7204, %v7205
      %v7207 = vshll.u32 2102212464, %v7195
      %v7208 = vshrl.u32 920167782, %v7196
      %v7209 = vor.u32 %v7207, %v7208
      %v7210 = vshll.u32 920167782, %v7195
      %v7211 = vshrl.u32 1326507024, %v7196
      %v7212 = vor.u32 %v7210, %v7211
      %vm7213 = vcmp.lt.s32.totalorder %v7194, 1
      %vm7214 = vcmp.lt.s32.totalorder %v7194, 2
      %vm7215 = vcmp.lt.s32.totalorder %v7194, 3
      %vm7216 = vcmp.lt.s32.totalorder %v7194, 4
      %v7217 = vsel %vm7213, %v7197, %v7200
      %v7218 = vsel %vm7216, %v7206, 2102212464
      %v7219 = vsel %vm7215, %v7203, %v7218
      %v7220 = vsel %vm7214, %v7217, %v7219
      %v7221 = vsel %vm7213, %v7200, %v7203
      %v7222 = vsel %vm7216, %v7209, 920167782
      %v7223 = vsel %vm7215, %v7206, %v7222
      %v7224 = vsel %vm7214, %v7221, %v7223
      %v7225 = vsel %vm7213, %v7203, %v7206
      %v7226 = vsel %vm7216, %v7212, 1326507024
      %v7227 = vsel %vm7215, %v7209, %v7226
      %v7228 = vsel %vm7214, %v7225, %v7227
      %v7229 = vshll.u32 %v7189, 8
      %v7230 = vmul.u32.u64.compose %v7229, %v7228
      %v7231 = vextract.low.u32 %v7230
      %v7232 = vextract.high.u32 %v7230
      %v7233 = vmul.u32.u64.compose %v7229, %v7224
      %v7234 = vextract.low.u32 %v7233
      %v7235 = vextract.high.u32 %v7233
      %v7236 = vmul.u32 %v7229, %v7220
      %v7237 = vadd.s32 %v7232, %v7234
      %vm7238 = vc.u32 %v7232, %v7234
      %v7239 = vadd.s32 %v7235, 1
      %v7240 = vsel %vm7238, %v7239, %v7235
      %v7241 = vadd.s32 %v7236, %v7240
      %v7242 = vadd.s32 %v7241, 536870912
      %v7243 = vshrl.u32 %v7242, 30
      %v7244 = vshll.u32 %v7243, 30
      %v7245 = vsub.s32 %v7241, %v7244
      %vm7246 = vcmp.lt.s32.totalorder %v7245, 0
      %v7247 = vsub.s32 0, %v7245
      %v7248 = vsel %vm7246, %v7247, %v7245
      %v7249 = vclz %v7248
      %v7250 = vsub.s32 %v7249, 2
      %vm7251 = vcmp.gt.s32.totalorder 0, %v7250
      %v7252 = vsel %vm7251, 0, %v7250
      %v7253 = vsub.s32 32, %v7252
      %v7254 = vshll.u32 %v7245, %v7252
      %v7255 = vshrl.u32 %v7237, %v7253
      %v7256 = vor.u32 %v7254, %v7255
      %v7257 = vsub.s32 4294967266, %v7252
      %v7258 = vadd.s32 %v7257, 127
      %v7259 = vshll.u32 %v7258, 23
      %v7260 = vor.u32 4788187, %v7259
      %v7261 = vand.u32 2147483647, %v7260
      %v7263 = vcvt.s32.f32 %v7256
      %v7264 = vmul.f32 %v7263, %v7261
      %v7265 = vxor.u32 %v7264, 2147483648
      %v7266 = vsel %vm7183, %v7265, %v7264
      %v7267 = vsub.s32 4, %v7243
      %v7268 = vsel %vm7183, %v7267, %v7243
      %v7269 = vsel %vm7182, %v2464, %v7266
      %v7270 = vsel %vm7182, 0, %v7268
      %v7271 = vcosq.f32.pop %v7269
      %v7272 = vsinq.f32.pop %v7269
      %vm7273 = vweird.f32 %v2464
      %v7274 = vand.u32 %v7270, 3
      %vm7275 = vcmp.lt.s32.totalorder %v7274, 2
      %vm7276 = vcmp.eq.s32.totalorder %v7274, 0
      %v7277 = vxor.u32 %v7272, 2147483648
      %v7278 = vsel %vm7276, %v7271, %v7277
      %vm7279 = vcmp.eq.s32.totalorder %v7274, 2
      %v7280 = vxor.u32 %v7271, 2147483648
      %v7281 = vsel %vm7279, %v7280, %v7272
      %v7282 = vsel %vm7275, %v7278, %v7281
      %v7283 = vsel %vm7273, nan, %v7282
      %v7284 = vand.u32 2147483647, %v2465
      %vm7285 = vcmp.le.f32.partialorder %v7284, 0.7853982
      %vm7286 = vcmp.lt.s32.totalorder %v2465, 0
      %v7287 = vand.u32 %v2465, 2139095040
      %v7288 = vshrl.u32 %v7287, 23
      %v7289 = vsub.s32 %v7288, 127
      %v7290 = vand.u32 2147483647, %v2465
      %v7291 = vand.u32 %v7290, 8388607
      %v7292 = vor.u32 %v7291, 8388608
      %v7293 = vsub.s32 0, %v7292
      %v7294 = vadd.s32 %v7289, 1
      %vm7295 = vcmp.gt.s32.totalorder %v7294, 0
      %v7296 = vsel %vm7295, %v7294, 0
      %v7297 = vshrl.u32 %v7296, 5
      %v7298 = vand.u32 %v7296, 31
      %v7299 = vsub.s32 32, %v7298
      %v7300 = vshrl.u32 683565275, %v7299
      %v7301 = vshll.u32 683565275, %v7298
      %v7302 = vshrl.u32 2475754826, %v7299
      %v7303 = vor.u32 %v7301, %v7302
      %v7304 = vshll.u32 2475754826, %v7298
      %v7305 = vshrl.u32 2131351028, %v7299
      %v7306 = vor.u32 %v7304, %v7305
      %v7307 = vshll.u32 2131351028, %v7298
      %v7308 = vshrl.u32 2102212464, %v7299
      %v7309 = vor.u32 %v7307, %v7308
      %v7310 = vshll.u32 2102212464, %v7298
      %v7311 = vshrl.u32 920167782, %v7299
      %v7312 = vor.u32 %v7310, %v7311
      %v7313 = vshll.u32 920167782, %v7298
      %v7314 = vshrl.u32 1326507024, %v7299
      %v7315 = vor.u32 %v7313, %v7314
      %vm7316 = vcmp.lt.s32.totalorder %v7297, 1
      %vm7317 = vcmp.lt.s32.totalorder %v7297, 2
      %vm7318 = vcmp.lt.s32.totalorder %v7297, 3
      %vm7319 = vcmp.lt.s32.totalorder %v7297, 4
      %v7320 = vsel %vm7316, %v7300, %v7303
      %v7321 = vsel %vm7319, %v7309, 2102212464
      %v7322 = vsel %vm7318, %v7306, %v7321
      %v7323 = vsel %vm7317, %v7320, %v7322
      %v7324 = vsel %vm7316, %v7303, %v7306
      %v7325 = vsel %vm7319, %v7312, 920167782
      %v7326 = vsel %vm7318, %v7309, %v7325
      %v7327 = vsel %vm7317, %v7324, %v7326
      %v7328 = vsel %vm7316, %v7306, %v7309
      %v7329 = vsel %vm7319, %v7315, 1326507024
      %v7330 = vsel %vm7318, %v7312, %v7329
      %v7331 = vsel %vm7317, %v7328, %v7330
      %v7332 = vshll.u32 %v7292, 8
      %v7333 = vmul.u32.u64.compose %v7332, %v7331
      %v7334 = vextract.low.u32 %v7333
      %v7335 = vextract.high.u32 %v7333
      %v7336 = vmul.u32.u64.compose %v7332, %v7327
      %v7337 = vextract.low.u32 %v7336
      %v7338 = vextract.high.u32 %v7336
      %v7339 = vmul.u32 %v7332, %v7323
      %v7340 = vadd.s32 %v7335, %v7337
      %vm7341 = vc.u32 %v7335, %v7337
      %v7342 = vadd.s32 %v7338, 1
      %v7343 = vsel %vm7341, %v7342, %v7338
      %v7344 = vadd.s32 %v7339, %v7343
      %v7345 = vadd.s32 %v7344, 536870912
      %v7346 = vshrl.u32 %v7345, 30
      %v7347 = vshll.u32 %v7346, 30
      %v7348 = vsub.s32 %v7344, %v7347
      %vm7349 = vcmp.lt.s32.totalorder %v7348, 0
      %v7350 = vsub.s32 0, %v7348
      %v7351 = vsel %vm7349, %v7350, %v7348
      %v7352 = vclz %v7351
      %v7353 = vsub.s32 %v7352, 2
      %vm7354 = vcmp.gt.s32.totalorder 0, %v7353
      %v7355 = vsel %vm7354, 0, %v7353
      %v7356 = vsub.s32 32, %v7355
      %v7357 = vshll.u32 %v7348, %v7355
      %v7358 = vshrl.u32 %v7340, %v7356
      %v7359 = vor.u32 %v7357, %v7358
      %v7360 = vsub.s32 4294967266, %v7355
      %v7361 = vadd.s32 %v7360, 127
      %v7362 = vshll.u32 %v7361, 23
      %v7363 = vor.u32 4788187, %v7362
      %v7364 = vand.u32 2147483647, %v7363
      %v7366 = vcvt.s32.f32 %v7359
      %v7367 = vmul.f32 %v7366, %v7364
      %v7368 = vxor.u32 %v7367, 2147483648
      %v7369 = vsel %vm7286, %v7368, %v7367
      %v7370 = vsub.s32 4, %v7346
      %v7371 = vsel %vm7286, %v7370, %v7346
      %v7372 = vsel %vm7285, %v2465, %v7369
      %v7373 = vsel %vm7285, 0, %v7371
      %v7374 = vcosq.f32.pop %v7372
      %v7375 = vsinq.f32.pop %v7372
      %vm7376 = vweird.f32 %v2465
      %v7377 = vand.u32 %v7373, 3
      %vm7378 = vcmp.lt.s32.totalorder %v7377, 2
      %vm7379 = vcmp.eq.s32.totalorder %v7377, 0
      %v7380 = vxor.u32 %v7375, 2147483648
      %v7381 = vsel %vm7379, %v7374, %v7380
      %vm7382 = vcmp.eq.s32.totalorder %v7377, 2
      %v7383 = vxor.u32 %v7374, 2147483648
      %v7384 = vsel %vm7382, %v7383, %v7375
      %v7385 = vsel %vm7378, %v7381, %v7384
      %v7386 = vsel %vm7376, nan, %v7385
      %v7387 = vand.u32 2147483647, %v2466
      %vm7388 = vcmp.le.f32.partialorder %v7387, 0.7853982
      %vm7389 = vcmp.lt.s32.totalorder %v2466, 0
      %v7390 = vand.u32 %v2466, 2139095040
      %v7391 = vshrl.u32 %v7390, 23
      %v7392 = vsub.s32 %v7391, 127
      %v7393 = vand.u32 2147483647, %v2466
      %v7394 = vand.u32 %v7393, 8388607
      %v7395 = vor.u32 %v7394, 8388608
      %v7396 = vsub.s32 0, %v7395
      %v7397 = vadd.s32 %v7392, 1
      %vm7398 = vcmp.gt.s32.totalorder %v7397, 0
      %v7399 = vsel %vm7398, %v7397, 0
      %v7400 = vshrl.u32 %v7399, 5
      %v7401 = vand.u32 %v7399, 31
      %v7402 = vsub.s32 32, %v7401
      %v7403 = vshrl.u32 683565275, %v7402
      %v7404 = vshll.u32 683565275, %v7401
      %v7405 = vshrl.u32 2475754826, %v7402
      %v7406 = vor.u32 %v7404, %v7405
      %v7407 = vshll.u32 2475754826, %v7401
      %v7408 = vshrl.u32 2131351028, %v7402
      %v7409 = vor.u32 %v7407, %v7408
      %v7410 = vshll.u32 2131351028, %v7401
      %v7411 = vshrl.u32 2102212464, %v7402
      %v7412 = vor.u32 %v7410, %v7411
      %v7413 = vshll.u32 2102212464, %v7401
      %v7414 = vshrl.u32 920167782, %v7402
      %v7415 = vor.u32 %v7413, %v7414
      %v7416 = vshll.u32 920167782, %v7401
      %v7417 = vshrl.u32 1326507024, %v7402
      %v7418 = vor.u32 %v7416, %v7417
      %vm7419 = vcmp.lt.s32.totalorder %v7400, 1
      %vm7420 = vcmp.lt.s32.totalorder %v7400, 2
      %vm7421 = vcmp.lt.s32.totalorder %v7400, 3
      %vm7422 = vcmp.lt.s32.totalorder %v7400, 4
      %v7423 = vsel %vm7419, %v7403, %v7406
      %v7424 = vsel %vm7422, %v7412, 2102212464
      %v7425 = vsel %vm7421, %v7409, %v7424
      %v7426 = vsel %vm7420, %v7423, %v7425
      %v7427 = vsel %vm7419, %v7406, %v7409
      %v7428 = vsel %vm7422, %v7415, 920167782
      %v7429 = vsel %vm7421, %v7412, %v7428
      %v7430 = vsel %vm7420, %v7427, %v7429
      %v7431 = vsel %vm7419, %v7409, %v7412
      %v7432 = vsel %vm7422, %v7418, 1326507024
      %v7433 = vsel %vm7421, %v7415, %v7432
      %v7434 = vsel %vm7420, %v7431, %v7433
      %v7435 = vshll.u32 %v7395, 8
      %v7436 = vmul.u32.u64.compose %v7435, %v7434
      %v7437 = vextract.low.u32 %v7436
      %v7438 = vextract.high.u32 %v7436
      %v7439 = vmul.u32.u64.compose %v7435, %v7430
      %v7440 = vextract.low.u32 %v7439
      %v7441 = vextract.high.u32 %v7439
      %v7442 = vmul.u32 %v7435, %v7426
      %v7443 = vadd.s32 %v7438, %v7440
      %vm7444 = vc.u32 %v7438, %v7440
      %v7445 = vadd.s32 %v7441, 1
      %v7446 = vsel %vm7444, %v7445, %v7441
      %v7447 = vadd.s32 %v7442, %v7446
      %v7448 = vadd.s32 %v7447, 536870912
      %v7449 = vshrl.u32 %v7448, 30
      %v7450 = vshll.u32 %v7449, 30
      %v7451 = vsub.s32 %v7447, %v7450
      %vm7452 = vcmp.lt.s32.totalorder %v7451, 0
      %v7453 = vsub.s32 0, %v7451
      %v7454 = vsel %vm7452, %v7453, %v7451
      %v7455 = vclz %v7454
      %v7456 = vsub.s32 %v7455, 2
      %vm7457 = vcmp.gt.s32.totalorder 0, %v7456
      %v7458 = vsel %vm7457, 0, %v7456
      %v7459 = vsub.s32 32, %v7458
      %v7460 = vshll.u32 %v7451, %v7458
      %v7461 = vshrl.u32 %v7443, %v7459
      %v7462 = vor.u32 %v7460, %v7461
      %v7463 = vsub.s32 4294967266, %v7458
      %v7464 = vadd.s32 %v7463, 127
      %v7465 = vshll.u32 %v7464, 23
      %v7466 = vor.u32 4788187, %v7465
      %v7467 = vand.u32 2147483647, %v7466
      %v7469 = vcvt.s32.f32 %v7462
      %v7470 = vmul.f32 %v7469, %v7467
      %v7471 = vxor.u32 %v7470, 2147483648
      %v7472 = vsel %vm7389, %v7471, %v7470
      %v7473 = vsub.s32 4, %v7449
      %v7474 = vsel %vm7389, %v7473, %v7449
      %v7475 = vsel %vm7388, %v2466, %v7472
      %v7476 = vsel %vm7388, 0, %v7474
      %v7477 = vcosq.f32.pop %v7475
      %v7478 = vsinq.f32.pop %v7475
      %vm7479 = vweird.f32 %v2466
      %v7480 = vand.u32 %v7476, 3
      %vm7481 = vcmp.lt.s32.totalorder %v7480, 2
      %vm7482 = vcmp.eq.s32.totalorder %v7480, 0
      %v7483 = vxor.u32 %v7478, 2147483648
      %v7484 = vsel %vm7482, %v7477, %v7483
      %vm7485 = vcmp.eq.s32.totalorder %v7480, 2
      %v7486 = vxor.u32 %v7477, 2147483648
      %v7487 = vsel %vm7485, %v7486, %v7478
      %v7488 = vsel %vm7481, %v7484, %v7487
      %v7489 = vsel %vm7479, nan, %v7488
      %v7490 = vand.u32 2147483647, %v2467
      %vm7491 = vcmp.le.f32.partialorder %v7490, 0.7853982
      %vm7492 = vcmp.lt.s32.totalorder %v2467, 0
      %v7493 = vand.u32 %v2467, 2139095040
      %v7494 = vshrl.u32 %v7493, 23
      %v7495 = vsub.s32 %v7494, 127
      %v7496 = vand.u32 2147483647, %v2467
      %v7497 = vand.u32 %v7496, 8388607
      %v7498 = vor.u32 %v7497, 8388608
      %v7499 = vsub.s32 0, %v7498
      %v7500 = vadd.s32 %v7495, 1
      %vm7501 = vcmp.gt.s32.totalorder %v7500, 0
      %v7502 = vsel %vm7501, %v7500, 0
      %v7503 = vshrl.u32 %v7502, 5
      %v7504 = vand.u32 %v7502, 31
      %v7505 = vsub.s32 32, %v7504
      %v7506 = vshrl.u32 683565275, %v7505
      %v7507 = vshll.u32 683565275, %v7504
      %v7508 = vshrl.u32 2475754826, %v7505
      %v7509 = vor.u32 %v7507, %v7508
      %v7510 = vshll.u32 2475754826, %v7504
      %v7511 = vshrl.u32 2131351028, %v7505
      %v7512 = vor.u32 %v7510, %v7511
      %v7513 = vshll.u32 2131351028, %v7504
      %v7514 = vshrl.u32 2102212464, %v7505
      %v7515 = vor.u32 %v7513, %v7514
      %v7516 = vshll.u32 2102212464, %v7504
      %v7517 = vshrl.u32 920167782, %v7505
      %v7518 = vor.u32 %v7516, %v7517
      %v7519 = vshll.u32 920167782, %v7504
      %v7520 = vshrl.u32 1326507024, %v7505
      %v7521 = vor.u32 %v7519, %v7520
      %vm7522 = vcmp.lt.s32.totalorder %v7503, 1
      %vm7523 = vcmp.lt.s32.totalorder %v7503, 2
      %vm7524 = vcmp.lt.s32.totalorder %v7503, 3
      %vm7525 = vcmp.lt.s32.totalorder %v7503, 4
      %v7526 = vsel %vm7522, %v7506, %v7509
      %v7527 = vsel %vm7525, %v7515, 2102212464
      %v7528 = vsel %vm7524, %v7512, %v7527
      %v7529 = vsel %vm7523, %v7526, %v7528
      %v7530 = vsel %vm7522, %v7509, %v7512
      %v7531 = vsel %vm7525, %v7518, 920167782
      %v7532 = vsel %vm7524, %v7515, %v7531
      %v7533 = vsel %vm7523, %v7530, %v7532
      %v7534 = vsel %vm7522, %v7512, %v7515
      %v7535 = vsel %vm7525, %v7521, 1326507024
      %v7536 = vsel %vm7524, %v7518, %v7535
      %v7537 = vsel %vm7523, %v7534, %v7536
      %v7538 = vshll.u32 %v7498, 8
      %v7539 = vmul.u32.u64.compose %v7538, %v7537
      %v7540 = vextract.low.u32 %v7539
      %v7541 = vextract.high.u32 %v7539
      %v7542 = vmul.u32.u64.compose %v7538, %v7533
      %v7543 = vextract.low.u32 %v7542
      %v7544 = vextract.high.u32 %v7542
      %v7545 = vmul.u32 %v7538, %v7529
      %v7546 = vadd.s32 %v7541, %v7543
      %vm7547 = vc.u32 %v7541, %v7543
      %v7548 = vadd.s32 %v7544, 1
      %v7549 = vsel %vm7547, %v7548, %v7544
      %v7550 = vadd.s32 %v7545, %v7549
      %v7551 = vadd.s32 %v7550, 536870912
      %v7552 = vshrl.u32 %v7551, 30
      %v7553 = vshll.u32 %v7552, 30
      %v7554 = vsub.s32 %v7550, %v7553
      %vm7555 = vcmp.lt.s32.totalorder %v7554, 0
      %v7556 = vsub.s32 0, %v7554
      %v7557 = vsel %vm7555, %v7556, %v7554
      %v7558 = vclz %v7557
      %v7559 = vsub.s32 %v7558, 2
      %vm7560 = vcmp.gt.s32.totalorder 0, %v7559
      %v7561 = vsel %vm7560, 0, %v7559
      %v7562 = vsub.s32 32, %v7561
      %v7563 = vshll.u32 %v7554, %v7561
      %v7564 = vshrl.u32 %v7546, %v7562
      %v7565 = vor.u32 %v7563, %v7564
      %v7566 = vsub.s32 4294967266, %v7561
      %v7567 = vadd.s32 %v7566, 127
      %v7568 = vshll.u32 %v7567, 23
      %v7569 = vor.u32 4788187, %v7568
      %v7570 = vand.u32 2147483647, %v7569
      %v7572 = vcvt.s32.f32 %v7565
      %v7573 = vmul.f32 %v7572, %v7570
      %v7574 = vxor.u32 %v7573, 2147483648
      %v7575 = vsel %vm7492, %v7574, %v7573
      %v7576 = vsub.s32 4, %v7552
      %v7577 = vsel %vm7492, %v7576, %v7552
      %v7578 = vsel %vm7491, %v2467, %v7575
      %v7579 = vsel %vm7491, 0, %v7577
      %v7580 = vcosq.f32.pop %v7578
      %v7581 = vsinq.f32.pop %v7578
      %vm7582 = vweird.f32 %v2467
      %v7583 = vand.u32 %v7579, 3
      %vm7584 = vcmp.lt.s32.totalorder %v7583, 2
      %vm7585 = vcmp.eq.s32.totalorder %v7583, 0
      %v7586 = vxor.u32 %v7581, 2147483648
      %v7587 = vsel %vm7585, %v7580, %v7586
      %vm7588 = vcmp.eq.s32.totalorder %v7583, 2
      %v7589 = vxor.u32 %v7580, 2147483648
      %v7590 = vsel %vm7588, %v7589, %v7581
      %v7591 = vsel %vm7584, %v7587, %v7590
      %v7592 = vsel %vm7582, nan, %v7591
      %v7593 = vand.u32 2147483647, %v2468
      %vm7594 = vcmp.le.f32.partialorder %v7593, 0.7853982
      %vm7595 = vcmp.lt.s32.totalorder %v2468, 0
      %v7596 = vand.u32 %v2468, 2139095040
      %v7597 = vshrl.u32 %v7596, 23
      %v7598 = vsub.s32 %v7597, 127
      %v7599 = vand.u32 2147483647, %v2468
      %v7600 = vand.u32 %v7599, 8388607
      %v7601 = vor.u32 %v7600, 8388608
      %v7602 = vsub.s32 0, %v7601
      %v7603 = vadd.s32 %v7598, 1
      %vm7604 = vcmp.gt.s32.totalorder %v7603, 0
      %v7605 = vsel %vm7604, %v7603, 0
      %v7606 = vshrl.u32 %v7605, 5
      %v7607 = vand.u32 %v7605, 31
      %v7608 = vsub.s32 32, %v7607
      %v7609 = vshrl.u32 683565275, %v7608
      %v7610 = vshll.u32 683565275, %v7607
      %v7611 = vshrl.u32 2475754826, %v7608
      %v7612 = vor.u32 %v7610, %v7611
      %v7613 = vshll.u32 2475754826, %v7607
      %v7614 = vshrl.u32 2131351028, %v7608
      %v7615 = vor.u32 %v7613, %v7614
      %v7616 = vshll.u32 2131351028, %v7607
      %v7617 = vshrl.u32 2102212464, %v7608
      %v7618 = vor.u32 %v7616, %v7617
      %v7619 = vshll.u32 2102212464, %v7607
      %v7620 = vshrl.u32 920167782, %v7608
      %v7621 = vor.u32 %v7619, %v7620
      %v7622 = vshll.u32 920167782, %v7607
      %v7623 = vshrl.u32 1326507024, %v7608
      %v7624 = vor.u32 %v7622, %v7623
      %vm7625 = vcmp.lt.s32.totalorder %v7606, 1
      %vm7626 = vcmp.lt.s32.totalorder %v7606, 2
      %vm7627 = vcmp.lt.s32.totalorder %v7606, 3
      %vm7628 = vcmp.lt.s32.totalorder %v7606, 4
      %v7629 = vsel %vm7625, %v7609, %v7612
      %v7630 = vsel %vm7628, %v7618, 2102212464
      %v7631 = vsel %vm7627, %v7615, %v7630
      %v7632 = vsel %vm7626, %v7629, %v7631
      %v7633 = vsel %vm7625, %v7612, %v7615
      %v7634 = vsel %vm7628, %v7621, 920167782
      %v7635 = vsel %vm7627, %v7618, %v7634
      %v7636 = vsel %vm7626, %v7633, %v7635
      %v7637 = vsel %vm7625, %v7615, %v7618
      %v7638 = vsel %vm7628, %v7624, 1326507024
      %v7639 = vsel %vm7627, %v7621, %v7638
      %v7640 = vsel %vm7626, %v7637, %v7639
      %v7641 = vshll.u32 %v7601, 8
      %v7642 = vmul.u32.u64.compose %v7641, %v7640
      %v7643 = vextract.low.u32 %v7642
      %v7644 = vextract.high.u32 %v7642
      %v7645 = vmul.u32.u64.compose %v7641, %v7636
      %v7646 = vextract.low.u32 %v7645
      %v7647 = vextract.high.u32 %v7645
      %v7648 = vmul.u32 %v7641, %v7632
      %v7649 = vadd.s32 %v7644, %v7646
      %vm7650 = vc.u32 %v7644, %v7646
      %v7651 = vadd.s32 %v7647, 1
      %v7652 = vsel %vm7650, %v7651, %v7647
      %v7653 = vadd.s32 %v7648, %v7652
      %v7654 = vadd.s32 %v7653, 536870912
      %v7655 = vshrl.u32 %v7654, 30
      %v7656 = vshll.u32 %v7655, 30
      %v7657 = vsub.s32 %v7653, %v7656
      %vm7658 = vcmp.lt.s32.totalorder %v7657, 0
      %v7659 = vsub.s32 0, %v7657
      %v7660 = vsel %vm7658, %v7659, %v7657
      %v7661 = vclz %v7660
      %v7662 = vsub.s32 %v7661, 2
      %vm7663 = vcmp.gt.s32.totalorder 0, %v7662
      %v7664 = vsel %vm7663, 0, %v7662
      %v7665 = vsub.s32 32, %v7664
      %v7666 = vshll.u32 %v7657, %v7664
      %v7667 = vshrl.u32 %v7649, %v7665
      %v7668 = vor.u32 %v7666, %v7667
      %v7669 = vsub.s32 4294967266, %v7664
      %v7670 = vadd.s32 %v7669, 127
      %v7671 = vshll.u32 %v7670, 23
      %v7672 = vor.u32 4788187, %v7671
      %v7673 = vand.u32 2147483647, %v7672
      %v7675 = vcvt.s32.f32 %v7668
      %v7676 = vmul.f32 %v7675, %v7673
      %v7677 = vxor.u32 %v7676, 2147483648
      %v7678 = vsel %vm7595, %v7677, %v7676
      %v7679 = vsub.s32 4, %v7655
      %v7680 = vsel %vm7595, %v7679, %v7655
      %v7681 = vsel %vm7594, %v2468, %v7678
      %v7682 = vsel %vm7594, 0, %v7680
      %v7683 = vcosq.f32.pop %v7681
      %v7684 = vsinq.f32.pop %v7681
      %vm7685 = vweird.f32 %v2468
      %v7686 = vand.u32 %v7682, 3
      %vm7687 = vcmp.lt.s32.totalorder %v7686, 2
      %vm7688 = vcmp.eq.s32.totalorder %v7686, 0
      %v7689 = vxor.u32 %v7684, 2147483648
      %v7690 = vsel %vm7688, %v7683, %v7689
      %vm7691 = vcmp.eq.s32.totalorder %v7686, 2
      %v7692 = vxor.u32 %v7683, 2147483648
      %v7693 = vsel %vm7691, %v7692, %v7684
      %v7694 = vsel %vm7687, %v7690, %v7693
      %v7695 = vsel %vm7685, nan, %v7694
      %v7696 = vand.u32 2147483647, %v2469
      %vm7697 = vcmp.le.f32.partialorder %v7696, 0.7853982
      %vm7698 = vcmp.lt.s32.totalorder %v2469, 0
      %v7699 = vand.u32 %v2469, 2139095040
      %v7700 = vshrl.u32 %v7699, 23
      %v7701 = vsub.s32 %v7700, 127
      %v7702 = vand.u32 2147483647, %v2469
      %v7703 = vand.u32 %v7702, 8388607
      %v7704 = vor.u32 %v7703, 8388608
      %v7705 = vsub.s32 0, %v7704
      %v7706 = vadd.s32 %v7701, 1
      %vm7707 = vcmp.gt.s32.totalorder %v7706, 0
      %v7708 = vsel %vm7707, %v7706, 0
      %v7709 = vshrl.u32 %v7708, 5
      %v7710 = vand.u32 %v7708, 31
      %v7711 = vsub.s32 32, %v7710
      %v7712 = vshrl.u32 683565275, %v7711
      %v7713 = vshll.u32 683565275, %v7710
      %v7714 = vshrl.u32 2475754826, %v7711
      %v7715 = vor.u32 %v7713, %v7714
      %v7716 = vshll.u32 2475754826, %v7710
      %v7717 = vshrl.u32 2131351028, %v7711
      %v7718 = vor.u32 %v7716, %v7717
      %v7719 = vshll.u32 2131351028, %v7710
      %v7720 = vshrl.u32 2102212464, %v7711
      %v7721 = vor.u32 %v7719, %v7720
      %v7722 = vshll.u32 2102212464, %v7710
      %v7723 = vshrl.u32 920167782, %v7711
      %v7724 = vor.u32 %v7722, %v7723
      %v7725 = vshll.u32 920167782, %v7710
      %v7726 = vshrl.u32 1326507024, %v7711
      %v7727 = vor.u32 %v7725, %v7726
      %vm7728 = vcmp.lt.s32.totalorder %v7709, 1
      %vm7729 = vcmp.lt.s32.totalorder %v7709, 2
      %vm7730 = vcmp.lt.s32.totalorder %v7709, 3
      %vm7731 = vcmp.lt.s32.totalorder %v7709, 4
      %v7732 = vsel %vm7728, %v7712, %v7715
      %v7733 = vsel %vm7731, %v7721, 2102212464
      %v7734 = vsel %vm7730, %v7718, %v7733
      %v7735 = vsel %vm7729, %v7732, %v7734
      %v7736 = vsel %vm7728, %v7715, %v7718
      %v7737 = vsel %vm7731, %v7724, 920167782
      %v7738 = vsel %vm7730, %v7721, %v7737
      %v7739 = vsel %vm7729, %v7736, %v7738
      %v7740 = vsel %vm7728, %v7718, %v7721
      %v7741 = vsel %vm7731, %v7727, 1326507024
      %v7742 = vsel %vm7730, %v7724, %v7741
      %v7743 = vsel %vm7729, %v7740, %v7742
      %v7744 = vshll.u32 %v7704, 8
      %v7745 = vmul.u32.u64.compose %v7744, %v7743
      %v7746 = vextract.low.u32 %v7745
      %v7747 = vextract.high.u32 %v7745
      %v7748 = vmul.u32.u64.compose %v7744, %v7739
      %v7749 = vextract.low.u32 %v7748
      %v7750 = vextract.high.u32 %v7748
      %v7751 = vmul.u32 %v7744, %v7735
      %v7752 = vadd.s32 %v7747, %v7749
      %vm7753 = vc.u32 %v7747, %v7749
      %v7754 = vadd.s32 %v7750, 1
      %v7755 = vsel %vm7753, %v7754, %v7750
      %v7756 = vadd.s32 %v7751, %v7755
      %v7757 = vadd.s32 %v7756, 536870912
      %v7758 = vshrl.u32 %v7757, 30
      %v7759 = vshll.u32 %v7758, 30
      %v7760 = vsub.s32 %v7756, %v7759
      %vm7761 = vcmp.lt.s32.totalorder %v7760, 0
      %v7762 = vsub.s32 0, %v7760
      %v7763 = vsel %vm7761, %v7762, %v7760
      %v7764 = vclz %v7763
      %v7765 = vsub.s32 %v7764, 2
      %vm7766 = vcmp.gt.s32.totalorder 0, %v7765
      %v7767 = vsel %vm7766, 0, %v7765
      %v7768 = vsub.s32 32, %v7767
      %v7769 = vshll.u32 %v7760, %v7767
      %v7770 = vshrl.u32 %v7752, %v7768
      %v7771 = vor.u32 %v7769, %v7770
      %v7772 = vsub.s32 4294967266, %v7767
      %v7773 = vadd.s32 %v7772, 127
      %v7774 = vshll.u32 %v7773, 23
      %v7775 = vor.u32 4788187, %v7774
      %v7776 = vand.u32 2147483647, %v7775
      %v7778 = vcvt.s32.f32 %v7771
      %v7779 = vmul.f32 %v7778, %v7776
      %v7780 = vxor.u32 %v7779, 2147483648
      %v7781 = vsel %vm7698, %v7780, %v7779
      %v7782 = vsub.s32 4, %v7758
      %v7783 = vsel %vm7698, %v7782, %v7758
      %v7784 = vsel %vm7697, %v2469, %v7781
      %v7785 = vsel %vm7697, 0, %v7783
      %v7786 = vcosq.f32.pop %v7784
      %v7787 = vsinq.f32.pop %v7784
      %vm7788 = vweird.f32 %v2469
      %v7789 = vand.u32 %v7785, 3
      %vm7790 = vcmp.lt.s32.totalorder %v7789, 2
      %vm7791 = vcmp.eq.s32.totalorder %v7789, 0
      %v7792 = vxor.u32 %v7787, 2147483648
      %v7793 = vsel %vm7791, %v7786, %v7792
      %vm7794 = vcmp.eq.s32.totalorder %v7789, 2
      %v7795 = vxor.u32 %v7786, 2147483648
      %v7796 = vsel %vm7794, %v7795, %v7787
      %v7797 = vsel %vm7790, %v7793, %v7796
      %v7798 = vsel %vm7788, nan, %v7797
      %v7799 = vand.u32 2147483647, %v2470
      %vm7800 = vcmp.le.f32.partialorder %v7799, 0.7853982
      %vm7801 = vcmp.lt.s32.totalorder %v2470, 0
      %v7802 = vand.u32 %v2470, 2139095040
      %v7803 = vshrl.u32 %v7802, 23
      %v7804 = vsub.s32 %v7803, 127
      %v7805 = vand.u32 2147483647, %v2470
      %v7806 = vand.u32 %v7805, 8388607
      %v7807 = vor.u32 %v7806, 8388608
      %v7808 = vsub.s32 0, %v7807
      %v7809 = vadd.s32 %v7804, 1
      %vm7810 = vcmp.gt.s32.totalorder %v7809, 0
      %v7811 = vsel %vm7810, %v7809, 0
      %v7812 = vshrl.u32 %v7811, 5
      %v7813 = vand.u32 %v7811, 31
      %v7814 = vsub.s32 32, %v7813
      %v7815 = vshrl.u32 683565275, %v7814
      %v7816 = vshll.u32 683565275, %v7813
      %v7817 = vshrl.u32 2475754826, %v7814
      %v7818 = vor.u32 %v7816, %v7817
      %v7819 = vshll.u32 2475754826, %v7813
      %v7820 = vshrl.u32 2131351028, %v7814
      %v7821 = vor.u32 %v7819, %v7820
      %v7822 = vshll.u32 2131351028, %v7813
      %v7823 = vshrl.u32 2102212464, %v7814
      %v7824 = vor.u32 %v7822, %v7823
      %v7825 = vshll.u32 2102212464, %v7813
      %v7826 = vshrl.u32 920167782, %v7814
      %v7827 = vor.u32 %v7825, %v7826
      %v7828 = vshll.u32 920167782, %v7813
      %v7829 = vshrl.u32 1326507024, %v7814
      %v7830 = vor.u32 %v7828, %v7829
      %vm7831 = vcmp.lt.s32.totalorder %v7812, 1
      %vm7832 = vcmp.lt.s32.totalorder %v7812, 2
      %vm7833 = vcmp.lt.s32.totalorder %v7812, 3
      %vm7834 = vcmp.lt.s32.totalorder %v7812, 4
      %v7835 = vsel %vm7831, %v7815, %v7818
      %v7836 = vsel %vm7834, %v7824, 2102212464
      %v7837 = vsel %vm7833, %v7821, %v7836
      %v7838 = vsel %vm7832, %v7835, %v7837
      %v7839 = vsel %vm7831, %v7818, %v7821
      %v7840 = vsel %vm7834, %v7827, 920167782
      %v7841 = vsel %vm7833, %v7824, %v7840
      %v7842 = vsel %vm7832, %v7839, %v7841
      %v7843 = vsel %vm7831, %v7821, %v7824
      %v7844 = vsel %vm7834, %v7830, 1326507024
      %v7845 = vsel %vm7833, %v7827, %v7844
      %v7846 = vsel %vm7832, %v7843, %v7845
      %v7847 = vshll.u32 %v7807, 8
      %v7848 = vmul.u32.u64.compose %v7847, %v7846
      %v7849 = vextract.low.u32 %v7848
      %v7850 = vextract.high.u32 %v7848
      %v7851 = vmul.u32.u64.compose %v7847, %v7842
      %v7852 = vextract.low.u32 %v7851
      %v7853 = vextract.high.u32 %v7851
      %v7854 = vmul.u32 %v7847, %v7838
      %v7855 = vadd.s32 %v7850, %v7852
      %vm7856 = vc.u32 %v7850, %v7852
      %v7857 = vadd.s32 %v7853, 1
      %v7858 = vsel %vm7856, %v7857, %v7853
      %v7859 = vadd.s32 %v7854, %v7858
      %v7860 = vadd.s32 %v7859, 536870912
      %v7861 = vshrl.u32 %v7860, 30
      %v7862 = vshll.u32 %v7861, 30
      %v7863 = vsub.s32 %v7859, %v7862
      %vm7864 = vcmp.lt.s32.totalorder %v7863, 0
      %v7865 = vsub.s32 0, %v7863
      %v7866 = vsel %vm7864, %v7865, %v7863
      %v7867 = vclz %v7866
      %v7868 = vsub.s32 %v7867, 2
      %vm7869 = vcmp.gt.s32.totalorder 0, %v7868
      %v7870 = vsel %vm7869, 0, %v7868
      %v7871 = vsub.s32 32, %v7870
      %v7872 = vshll.u32 %v7863, %v7870
      %v7873 = vshrl.u32 %v7855, %v7871
      %v7874 = vor.u32 %v7872, %v7873
      %v7875 = vsub.s32 4294967266, %v7870
      %v7876 = vadd.s32 %v7875, 127
      %v7877 = vshll.u32 %v7876, 23
      %v7878 = vor.u32 4788187, %v7877
      %v7879 = vand.u32 2147483647, %v7878
      %v7881 = vcvt.s32.f32 %v7874
      %v7882 = vmul.f32 %v7881, %v7879
      %v7883 = vxor.u32 %v7882, 2147483648
      %v7884 = vsel %vm7801, %v7883, %v7882
      %v7885 = vsub.s32 4, %v7861
      %v7886 = vsel %vm7801, %v7885, %v7861
      %v7887 = vsel %vm7800, %v2470, %v7884
      %v7888 = vsel %vm7800, 0, %v7886
      %v7889 = vcosq.f32.pop %v7887
      %v7890 = vsinq.f32.pop %v7887
      %vm7891 = vweird.f32 %v2470
      %v7892 = vand.u32 %v7888, 3
      %vm7893 = vcmp.lt.s32.totalorder %v7892, 2
      %vm7894 = vcmp.eq.s32.totalorder %v7892, 0
      %v7895 = vxor.u32 %v7890, 2147483648
      %v7896 = vsel %vm7894, %v7889, %v7895
      %vm7897 = vcmp.eq.s32.totalorder %v7892, 2
      %v7898 = vxor.u32 %v7889, 2147483648
      %v7899 = vsel %vm7897, %v7898, %v7890
      %v7900 = vsel %vm7893, %v7896, %v7899
      %v7901 = vsel %vm7891, nan, %v7900
      %v7902 = vand.u32 2147483647, %v2471
      %vm7903 = vcmp.le.f32.partialorder %v7902, 0.7853982
      %vm7904 = vcmp.lt.s32.totalorder %v2471, 0
      %v7905 = vand.u32 %v2471, 2139095040
      %v7906 = vshrl.u32 %v7905, 23
      %v7907 = vsub.s32 %v7906, 127
      %v7908 = vand.u32 2147483647, %v2471
      %v7909 = vand.u32 %v7908, 8388607
      %v7910 = vor.u32 %v7909, 8388608
      %v7911 = vsub.s32 0, %v7910
      %v7912 = vadd.s32 %v7907, 1
      %vm7913 = vcmp.gt.s32.totalorder %v7912, 0
      %v7914 = vsel %vm7913, %v7912, 0
      %v7915 = vshrl.u32 %v7914, 5
      %v7916 = vand.u32 %v7914, 31
      %v7917 = vsub.s32 32, %v7916
      %v7918 = vshrl.u32 683565275, %v7917
      %v7919 = vshll.u32 683565275, %v7916
      %v7920 = vshrl.u32 2475754826, %v7917
      %v7921 = vor.u32 %v7919, %v7920
      %v7922 = vshll.u32 2475754826, %v7916
      %v7923 = vshrl.u32 2131351028, %v7917
      %v7924 = vor.u32 %v7922, %v7923
      %v7925 = vshll.u32 2131351028, %v7916
      %v7926 = vshrl.u32 2102212464, %v7917
      %v7927 = vor.u32 %v7925, %v7926
      %v7928 = vshll.u32 2102212464, %v7916
      %v7929 = vshrl.u32 920167782, %v7917
      %v7930 = vor.u32 %v7928, %v7929
      %v7931 = vshll.u32 920167782, %v7916
      %v7932 = vshrl.u32 1326507024, %v7917
      %v7933 = vor.u32 %v7931, %v7932
      %vm7934 = vcmp.lt.s32.totalorder %v7915, 1
      %vm7935 = vcmp.lt.s32.totalorder %v7915, 2
      %vm7936 = vcmp.lt.s32.totalorder %v7915, 3
      %vm7937 = vcmp.lt.s32.totalorder %v7915, 4
      %v7938 = vsel %vm7934, %v7918, %v7921
      %v7939 = vsel %vm7937, %v7927, 2102212464
      %v7940 = vsel %vm7936, %v7924, %v7939
      %v7941 = vsel %vm7935, %v7938, %v7940
      %v7942 = vsel %vm7934, %v7921, %v7924
      %v7943 = vsel %vm7937, %v7930, 920167782
      %v7944 = vsel %vm7936, %v7927, %v7943
      %v7945 = vsel %vm7935, %v7942, %v7944
      %v7946 = vsel %vm7934, %v7924, %v7927
      %v7947 = vsel %vm7937, %v7933, 1326507024
      %v7948 = vsel %vm7936, %v7930, %v7947
      %v7949 = vsel %vm7935, %v7946, %v7948
      %v7950 = vshll.u32 %v7910, 8
      %v7951 = vmul.u32.u64.compose %v7950, %v7949
      %v7952 = vextract.low.u32 %v7951
      %v7953 = vextract.high.u32 %v7951
      %v7954 = vmul.u32.u64.compose %v7950, %v7945
      %v7955 = vextract.low.u32 %v7954
      %v7956 = vextract.high.u32 %v7954
      %v7957 = vmul.u32 %v7950, %v7941
      %v7958 = vadd.s32 %v7953, %v7955
      %vm7959 = vc.u32 %v7953, %v7955
      %v7960 = vadd.s32 %v7956, 1
      %v7961 = vsel %vm7959, %v7960, %v7956
      %v7962 = vadd.s32 %v7957, %v7961
      %v7963 = vadd.s32 %v7962, 536870912
      %v7964 = vshrl.u32 %v7963, 30
      %v7965 = vshll.u32 %v7964, 30
      %v7966 = vsub.s32 %v7962, %v7965
      %vm7967 = vcmp.lt.s32.totalorder %v7966, 0
      %v7968 = vsub.s32 0, %v7966
      %v7969 = vsel %vm7967, %v7968, %v7966
      %v7970 = vclz %v7969
      %v7971 = vsub.s32 %v7970, 2
      %vm7972 = vcmp.gt.s32.totalorder 0, %v7971
      %v7973 = vsel %vm7972, 0, %v7971
      %v7974 = vsub.s32 32, %v7973
      %v7975 = vshll.u32 %v7966, %v7973
      %v7976 = vshrl.u32 %v7958, %v7974
      %v7977 = vor.u32 %v7975, %v7976
      %v7978 = vsub.s32 4294967266, %v7973
      %v7979 = vadd.s32 %v7978, 127
      %v7980 = vshll.u32 %v7979, 23
      %v7981 = vor.u32 4788187, %v7980
      %v7982 = vand.u32 2147483647, %v7981
      %v7984 = vcvt.s32.f32 %v7977
      %v7985 = vmul.f32 %v7984, %v7982
      %v7986 = vxor.u32 %v7985, 2147483648
      %v7987 = vsel %vm7904, %v7986, %v7985
      %v7988 = vsub.s32 4, %v7964
      %v7989 = vsel %vm7904, %v7988, %v7964
      %v7990 = vsel %vm7903, %v2471, %v7987
      %v7991 = vsel %vm7903, 0, %v7989
      %v7992 = vcosq.f32.pop %v7990
      %v7993 = vsinq.f32.pop %v7990
      %vm7994 = vweird.f32 %v2471
      %v7995 = vand.u32 %v7991, 3
      %vm7996 = vcmp.lt.s32.totalorder %v7995, 2
      %vm7997 = vcmp.eq.s32.totalorder %v7995, 0
      %v7998 = vxor.u32 %v7993, 2147483648
      %v7999 = vsel %vm7997, %v7992, %v7998
      %vm8000 = vcmp.eq.s32.totalorder %v7995, 2
      %v8001 = vxor.u32 %v7992, 2147483648
      %v8002 = vsel %vm8000, %v8001, %v7993
      %v8003 = vsel %vm7996, %v7999, %v8002
      %v8004 = vsel %vm7994, nan, %v8003
      %v8005 = vand.u32 2147483647, %v2472
      %vm8006 = vcmp.le.f32.partialorder %v8005, 0.7853982
      %vm8007 = vcmp.lt.s32.totalorder %v2472, 0
      %v8008 = vand.u32 %v2472, 2139095040
      %v8009 = vshrl.u32 %v8008, 23
      %v8010 = vsub.s32 %v8009, 127
      %v8011 = vand.u32 2147483647, %v2472
      %v8012 = vand.u32 %v8011, 8388607
      %v8013 = vor.u32 %v8012, 8388608
      %v8014 = vsub.s32 0, %v8013
      %v8015 = vadd.s32 %v8010, 1
      %vm8016 = vcmp.gt.s32.totalorder %v8015, 0
      %v8017 = vsel %vm8016, %v8015, 0
      %v8018 = vshrl.u32 %v8017, 5
      %v8019 = vand.u32 %v8017, 31
      %v8020 = vsub.s32 32, %v8019
      %v8021 = vshrl.u32 683565275, %v8020
      %v8022 = vshll.u32 683565275, %v8019
      %v8023 = vshrl.u32 2475754826, %v8020
      %v8024 = vor.u32 %v8022, %v8023
      %v8025 = vshll.u32 2475754826, %v8019
      %v8026 = vshrl.u32 2131351028, %v8020
      %v8027 = vor.u32 %v8025, %v8026
      %v8028 = vshll.u32 2131351028, %v8019
      %v8029 = vshrl.u32 2102212464, %v8020
      %v8030 = vor.u32 %v8028, %v8029
      %v8031 = vshll.u32 2102212464, %v8019
      %v8032 = vshrl.u32 920167782, %v8020
      %v8033 = vor.u32 %v8031, %v8032
      %v8034 = vshll.u32 920167782, %v8019
      %v8035 = vshrl.u32 1326507024, %v8020
      %v8036 = vor.u32 %v8034, %v8035
      %vm8037 = vcmp.lt.s32.totalorder %v8018, 1
      %vm8038 = vcmp.lt.s32.totalorder %v8018, 2
      %vm8039 = vcmp.lt.s32.totalorder %v8018, 3
      %vm8040 = vcmp.lt.s32.totalorder %v8018, 4
      %v8041 = vsel %vm8037, %v8021, %v8024
      %v8042 = vsel %vm8040, %v8030, 2102212464
      %v8043 = vsel %vm8039, %v8027, %v8042
      %v8044 = vsel %vm8038, %v8041, %v8043
      %v8045 = vsel %vm8037, %v8024, %v8027
      %v8046 = vsel %vm8040, %v8033, 920167782
      %v8047 = vsel %vm8039, %v8030, %v8046
      %v8048 = vsel %vm8038, %v8045, %v8047
      %v8049 = vsel %vm8037, %v8027, %v8030
      %v8050 = vsel %vm8040, %v8036, 1326507024
      %v8051 = vsel %vm8039, %v8033, %v8050
      %v8052 = vsel %vm8038, %v8049, %v8051
      %v8053 = vshll.u32 %v8013, 8
      %v8054 = vmul.u32.u64.compose %v8053, %v8052
      %v8055 = vextract.low.u32 %v8054
      %v8056 = vextract.high.u32 %v8054
      %v8057 = vmul.u32.u64.compose %v8053, %v8048
      %v8058 = vextract.low.u32 %v8057
      %v8059 = vextract.high.u32 %v8057
      %v8060 = vmul.u32 %v8053, %v8044
      %v8061 = vadd.s32 %v8056, %v8058
      %vm8062 = vc.u32 %v8056, %v8058
      %v8063 = vadd.s32 %v8059, 1
      %v8064 = vsel %vm8062, %v8063, %v8059
      %v8065 = vadd.s32 %v8060, %v8064
      %v8066 = vadd.s32 %v8065, 536870912
      %v8067 = vshrl.u32 %v8066, 30
      %v8068 = vshll.u32 %v8067, 30
      %v8069 = vsub.s32 %v8065, %v8068
      %vm8070 = vcmp.lt.s32.totalorder %v8069, 0
      %v8071 = vsub.s32 0, %v8069
      %v8072 = vsel %vm8070, %v8071, %v8069
      %v8073 = vclz %v8072
      %v8074 = vsub.s32 %v8073, 2
      %vm8075 = vcmp.gt.s32.totalorder 0, %v8074
      %v8076 = vsel %vm8075, 0, %v8074
      %v8077 = vsub.s32 32, %v8076
      %v8078 = vshll.u32 %v8069, %v8076
      %v8079 = vshrl.u32 %v8061, %v8077
      %v8080 = vor.u32 %v8078, %v8079
      %v8081 = vsub.s32 4294967266, %v8076
      %v8082 = vadd.s32 %v8081, 127
      %v8083 = vshll.u32 %v8082, 23
      %v8084 = vor.u32 4788187, %v8083
      %v8085 = vand.u32 2147483647, %v8084
      %v8087 = vcvt.s32.f32 %v8080
      %v8088 = vmul.f32 %v8087, %v8085
      %v8089 = vxor.u32 %v8088, 2147483648
      %v8090 = vsel %vm8007, %v8089, %v8088
      %v8091 = vsub.s32 4, %v8067
      %v8092 = vsel %vm8007, %v8091, %v8067
      %v8093 = vsel %vm8006, %v2472, %v8090
      %v8094 = vsel %vm8006, 0, %v8092
      %v8095 = vcosq.f32.pop %v8093
      %v8096 = vsinq.f32.pop %v8093
      %vm8097 = vweird.f32 %v2472
      %v8098 = vand.u32 %v8094, 3
      %vm8099 = vcmp.lt.s32.totalorder %v8098, 2
      %vm8100 = vcmp.eq.s32.totalorder %v8098, 0
      %v8101 = vxor.u32 %v8096, 2147483648
      %v8102 = vsel %vm8100, %v8095, %v8101
      %vm8103 = vcmp.eq.s32.totalorder %v8098, 2
      %v8104 = vxor.u32 %v8095, 2147483648
      %v8105 = vsel %vm8103, %v8104, %v8096
      %v8106 = vsel %vm8099, %v8102, %v8105
      %v8107 = vsel %vm8097, nan, %v8106
      %v8108 = vand.u32 2147483647, %v2473
      %vm8109 = vcmp.le.f32.partialorder %v8108, 0.7853982
      %vm8110 = vcmp.lt.s32.totalorder %v2473, 0
      %v8111 = vand.u32 %v2473, 2139095040
      %v8112 = vshrl.u32 %v8111, 23
      %v8113 = vsub.s32 %v8112, 127
      %v8114 = vand.u32 2147483647, %v2473
      %v8115 = vand.u32 %v8114, 8388607
      %v8116 = vor.u32 %v8115, 8388608
      %v8117 = vsub.s32 0, %v8116
      %v8118 = vadd.s32 %v8113, 1
      %vm8119 = vcmp.gt.s32.totalorder %v8118, 0
      %v8120 = vsel %vm8119, %v8118, 0
      %v8121 = vshrl.u32 %v8120, 5
      %v8122 = vand.u32 %v8120, 31
      %v8123 = vsub.s32 32, %v8122
      %v8124 = vshrl.u32 683565275, %v8123
      %v8125 = vshll.u32 683565275, %v8122
      %v8126 = vshrl.u32 2475754826, %v8123
      %v8127 = vor.u32 %v8125, %v8126
      %v8128 = vshll.u32 2475754826, %v8122
      %v8129 = vshrl.u32 2131351028, %v8123
      %v8130 = vor.u32 %v8128, %v8129
      %v8131 = vshll.u32 2131351028, %v8122
      %v8132 = vshrl.u32 2102212464, %v8123
      %v8133 = vor.u32 %v8131, %v8132
      %v8134 = vshll.u32 2102212464, %v8122
      %v8135 = vshrl.u32 920167782, %v8123
      %v8136 = vor.u32 %v8134, %v8135
      %v8137 = vshll.u32 920167782, %v8122
      %v8138 = vshrl.u32 1326507024, %v8123
      %v8139 = vor.u32 %v8137, %v8138
      %vm8140 = vcmp.lt.s32.totalorder %v8121, 1
      %vm8141 = vcmp.lt.s32.totalorder %v8121, 2
      %vm8142 = vcmp.lt.s32.totalorder %v8121, 3
      %vm8143 = vcmp.lt.s32.totalorder %v8121, 4
      %v8144 = vsel %vm8140, %v8124, %v8127
      %v8145 = vsel %vm8143, %v8133, 2102212464
      %v8146 = vsel %vm8142, %v8130, %v8145
      %v8147 = vsel %vm8141, %v8144, %v8146
      %v8148 = vsel %vm8140, %v8127, %v8130
      %v8149 = vsel %vm8143, %v8136, 920167782
      %v8150 = vsel %vm8142, %v8133, %v8149
      %v8151 = vsel %vm8141, %v8148, %v8150
      %v8152 = vsel %vm8140, %v8130, %v8133
      %v8153 = vsel %vm8143, %v8139, 1326507024
      %v8154 = vsel %vm8142, %v8136, %v8153
      %v8155 = vsel %vm8141, %v8152, %v8154
      %v8156 = vshll.u32 %v8116, 8
      %v8157 = vmul.u32.u64.compose %v8156, %v8155
      %v8158 = vextract.low.u32 %v8157
      %v8159 = vextract.high.u32 %v8157
      %v8160 = vmul.u32.u64.compose %v8156, %v8151
      %v8161 = vextract.low.u32 %v8160
      %v8162 = vextract.high.u32 %v8160
      %v8163 = vmul.u32 %v8156, %v8147
      %v8164 = vadd.s32 %v8159, %v8161
      %vm8165 = vc.u32 %v8159, %v8161
      %v8166 = vadd.s32 %v8162, 1
      %v8167 = vsel %vm8165, %v8166, %v8162
      %v8168 = vadd.s32 %v8163, %v8167
      %v8169 = vadd.s32 %v8168, 536870912
      %v8170 = vshrl.u32 %v8169, 30
      %v8171 = vshll.u32 %v8170, 30
      %v8172 = vsub.s32 %v8168, %v8171
      %vm8173 = vcmp.lt.s32.totalorder %v8172, 0
      %v8174 = vsub.s32 0, %v8172
      %v8175 = vsel %vm8173, %v8174, %v8172
      %v8176 = vclz %v8175
      %v8177 = vsub.s32 %v8176, 2
      %vm8178 = vcmp.gt.s32.totalorder 0, %v8177
      %v8179 = vsel %vm8178, 0, %v8177
      %v8180 = vsub.s32 32, %v8179
      %v8181 = vshll.u32 %v8172, %v8179
      %v8182 = vshrl.u32 %v8164, %v8180
      %v8183 = vor.u32 %v8181, %v8182
      %v8184 = vsub.s32 4294967266, %v8179
      %v8185 = vadd.s32 %v8184, 127
      %v8186 = vshll.u32 %v8185, 23
      %v8187 = vor.u32 4788187, %v8186
      %v8188 = vand.u32 2147483647, %v8187
      %v8190 = vcvt.s32.f32 %v8183
      %v8191 = vmul.f32 %v8190, %v8188
      %v8192 = vxor.u32 %v8191, 2147483648
      %v8193 = vsel %vm8110, %v8192, %v8191
      %v8194 = vsub.s32 4, %v8170
      %v8195 = vsel %vm8110, %v8194, %v8170
      %v8196 = vsel %vm8109, %v2473, %v8193
      %v8197 = vsel %vm8109, 0, %v8195
      %v8198 = vcosq.f32.pop %v8196
      %v8199 = vsinq.f32.pop %v8196
      %vm8200 = vweird.f32 %v2473
      %v8201 = vand.u32 %v8197, 3
      %vm8202 = vcmp.lt.s32.totalorder %v8201, 2
      %vm8203 = vcmp.eq.s32.totalorder %v8201, 0
      %v8204 = vxor.u32 %v8199, 2147483648
      %v8205 = vsel %vm8203, %v8198, %v8204
      %vm8206 = vcmp.eq.s32.totalorder %v8201, 2
      %v8207 = vxor.u32 %v8198, 2147483648
      %v8208 = vsel %vm8206, %v8207, %v8199
      %v8209 = vsel %vm8202, %v8205, %v8208
      %v8210 = vsel %vm8200, nan, %v8209
      %v8211 = vand.u32 2147483647, %v2474
      %vm8212 = vcmp.le.f32.partialorder %v8211, 0.7853982
      %vm8213 = vcmp.lt.s32.totalorder %v2474, 0
      %v8214 = vand.u32 %v2474, 2139095040
      %v8215 = vshrl.u32 %v8214, 23
      %v8216 = vsub.s32 %v8215, 127
      %v8217 = vand.u32 2147483647, %v2474
      %v8218 = vand.u32 %v8217, 8388607
      %v8219 = vor.u32 %v8218, 8388608
      %v8220 = vsub.s32 0, %v8219
      %v8221 = vadd.s32 %v8216, 1
      %vm8222 = vcmp.gt.s32.totalorder %v8221, 0
      %v8223 = vsel %vm8222, %v8221, 0
      %v8224 = vshrl.u32 %v8223, 5
      %v8225 = vand.u32 %v8223, 31
      %v8226 = vsub.s32 32, %v8225
      %v8227 = vshrl.u32 683565275, %v8226
      %v8228 = vshll.u32 683565275, %v8225
      %v8229 = vshrl.u32 2475754826, %v8226
      %v8230 = vor.u32 %v8228, %v8229
      %v8231 = vshll.u32 2475754826, %v8225
      %v8232 = vshrl.u32 2131351028, %v8226
      %v8233 = vor.u32 %v8231, %v8232
      %v8234 = vshll.u32 2131351028, %v8225
      %v8235 = vshrl.u32 2102212464, %v8226
      %v8236 = vor.u32 %v8234, %v8235
      %v8237 = vshll.u32 2102212464, %v8225
      %v8238 = vshrl.u32 920167782, %v8226
      %v8239 = vor.u32 %v8237, %v8238
      %v8240 = vshll.u32 920167782, %v8225
      %v8241 = vshrl.u32 1326507024, %v8226
      %v8242 = vor.u32 %v8240, %v8241
      %vm8243 = vcmp.lt.s32.totalorder %v8224, 1
      %vm8244 = vcmp.lt.s32.totalorder %v8224, 2
      %vm8245 = vcmp.lt.s32.totalorder %v8224, 3
      %vm8246 = vcmp.lt.s32.totalorder %v8224, 4
      %v8247 = vsel %vm8243, %v8227, %v8230
      %v8248 = vsel %vm8246, %v8236, 2102212464
      %v8249 = vsel %vm8245, %v8233, %v8248
      %v8250 = vsel %vm8244, %v8247, %v8249
      %v8251 = vsel %vm8243, %v8230, %v8233
      %v8252 = vsel %vm8246, %v8239, 920167782
      %v8253 = vsel %vm8245, %v8236, %v8252
      %v8254 = vsel %vm8244, %v8251, %v8253
      %v8255 = vsel %vm8243, %v8233, %v8236
      %v8256 = vsel %vm8246, %v8242, 1326507024
      %v8257 = vsel %vm8245, %v8239, %v8256
      %v8258 = vsel %vm8244, %v8255, %v8257
      %v8259 = vshll.u32 %v8219, 8
      %v8260 = vmul.u32.u64.compose %v8259, %v8258
      %v8261 = vextract.low.u32 %v8260
      %v8262 = vextract.high.u32 %v8260
      %v8263 = vmul.u32.u64.compose %v8259, %v8254
      %v8264 = vextract.low.u32 %v8263
      %v8265 = vextract.high.u32 %v8263
      %v8266 = vmul.u32 %v8259, %v8250
      %v8267 = vadd.s32 %v8262, %v8264
      %vm8268 = vc.u32 %v8262, %v8264
      %v8269 = vadd.s32 %v8265, 1
      %v8270 = vsel %vm8268, %v8269, %v8265
      %v8271 = vadd.s32 %v8266, %v8270
      %v8272 = vadd.s32 %v8271, 536870912
      %v8273 = vshrl.u32 %v8272, 30
      %v8274 = vshll.u32 %v8273, 30
      %v8275 = vsub.s32 %v8271, %v8274
      %vm8276 = vcmp.lt.s32.totalorder %v8275, 0
      %v8277 = vsub.s32 0, %v8275
      %v8278 = vsel %vm8276, %v8277, %v8275
      %v8279 = vclz %v8278
      %v8280 = vsub.s32 %v8279, 2
      %vm8281 = vcmp.gt.s32.totalorder 0, %v8280
      %v8282 = vsel %vm8281, 0, %v8280
      %v8283 = vsub.s32 32, %v8282
      %v8284 = vshll.u32 %v8275, %v8282
      %v8285 = vshrl.u32 %v8267, %v8283
      %v8286 = vor.u32 %v8284, %v8285
      %v8287 = vsub.s32 4294967266, %v8282
      %v8288 = vadd.s32 %v8287, 127
      %v8289 = vshll.u32 %v8288, 23
      %v8290 = vor.u32 4788187, %v8289
      %v8291 = vand.u32 2147483647, %v8290
      %v8293 = vcvt.s32.f32 %v8286
      %v8294 = vmul.f32 %v8293, %v8291
      %v8295 = vxor.u32 %v8294, 2147483648
      %v8296 = vsel %vm8213, %v8295, %v8294
      %v8297 = vsub.s32 4, %v8273
      %v8298 = vsel %vm8213, %v8297, %v8273
      %v8299 = vsel %vm8212, %v2474, %v8296
      %v8300 = vsel %vm8212, 0, %v8298
      %v8301 = vcosq.f32.pop %v8299
      %v8302 = vsinq.f32.pop %v8299
      %vm8303 = vweird.f32 %v2474
      %v8304 = vand.u32 %v8300, 3
      %vm8305 = vcmp.lt.s32.totalorder %v8304, 2
      %vm8306 = vcmp.eq.s32.totalorder %v8304, 0
      %v8307 = vxor.u32 %v8302, 2147483648
      %v8308 = vsel %vm8306, %v8301, %v8307
      %vm8309 = vcmp.eq.s32.totalorder %v8304, 2
      %v8310 = vxor.u32 %v8301, 2147483648
      %v8311 = vsel %vm8309, %v8310, %v8302
      %v8312 = vsel %vm8305, %v8308, %v8311
      %v8313 = vsel %vm8303, nan, %v8312
      %v8314 = vand.u32 2147483647, %v2475
      %vm8315 = vcmp.le.f32.partialorder %v8314, 0.7853982
      %vm8316 = vcmp.lt.s32.totalorder %v2475, 0
      %v8317 = vand.u32 %v2475, 2139095040
      %v8318 = vshrl.u32 %v8317, 23
      %v8319 = vsub.s32 %v8318, 127
      %v8320 = vand.u32 2147483647, %v2475
      %v8321 = vand.u32 %v8320, 8388607
      %v8322 = vor.u32 %v8321, 8388608
      %v8323 = vsub.s32 0, %v8322
      %v8324 = vadd.s32 %v8319, 1
      %vm8325 = vcmp.gt.s32.totalorder %v8324, 0
      %v8326 = vsel %vm8325, %v8324, 0
      %v8327 = vshrl.u32 %v8326, 5
      %v8328 = vand.u32 %v8326, 31
      %v8329 = vsub.s32 32, %v8328
      %v8330 = vshrl.u32 683565275, %v8329
      %v8331 = vshll.u32 683565275, %v8328
      %v8332 = vshrl.u32 2475754826, %v8329
      %v8333 = vor.u32 %v8331, %v8332
      %v8334 = vshll.u32 2475754826, %v8328
      %v8335 = vshrl.u32 2131351028, %v8329
      %v8336 = vor.u32 %v8334, %v8335
      %v8337 = vshll.u32 2131351028, %v8328
      %v8338 = vshrl.u32 2102212464, %v8329
      %v8339 = vor.u32 %v8337, %v8338
      %v8340 = vshll.u32 2102212464, %v8328
      %v8341 = vshrl.u32 920167782, %v8329
      %v8342 = vor.u32 %v8340, %v8341
      %v8343 = vshll.u32 920167782, %v8328
      %v8344 = vshrl.u32 1326507024, %v8329
      %v8345 = vor.u32 %v8343, %v8344
      %vm8346 = vcmp.lt.s32.totalorder %v8327, 1
      %vm8347 = vcmp.lt.s32.totalorder %v8327, 2
      %vm8348 = vcmp.lt.s32.totalorder %v8327, 3
      %vm8349 = vcmp.lt.s32.totalorder %v8327, 4
      %v8350 = vsel %vm8346, %v8330, %v8333
      %v8351 = vsel %vm8349, %v8339, 2102212464
      %v8352 = vsel %vm8348, %v8336, %v8351
      %v8353 = vsel %vm8347, %v8350, %v8352
      %v8354 = vsel %vm8346, %v8333, %v8336
      %v8355 = vsel %vm8349, %v8342, 920167782
      %v8356 = vsel %vm8348, %v8339, %v8355
      %v8357 = vsel %vm8347, %v8354, %v8356
      %v8358 = vsel %vm8346, %v8336, %v8339
      %v8359 = vsel %vm8349, %v8345, 1326507024
      %v8360 = vsel %vm8348, %v8342, %v8359
      %v8361 = vsel %vm8347, %v8358, %v8360
      %v8362 = vshll.u32 %v8322, 8
      %v8363 = vmul.u32.u64.compose %v8362, %v8361
      %v8364 = vextract.low.u32 %v8363
      %v8365 = vextract.high.u32 %v8363
      %v8366 = vmul.u32.u64.compose %v8362, %v8357
      %v8367 = vextract.low.u32 %v8366
      %v8368 = vextract.high.u32 %v8366
      %v8369 = vmul.u32 %v8362, %v8353
      %v8370 = vadd.s32 %v8365, %v8367
      %vm8371 = vc.u32 %v8365, %v8367
      %v8372 = vadd.s32 %v8368, 1
      %v8373 = vsel %vm8371, %v8372, %v8368
      %v8374 = vadd.s32 %v8369, %v8373
      %v8375 = vadd.s32 %v8374, 536870912
      %v8376 = vshrl.u32 %v8375, 30
      %v8377 = vshll.u32 %v8376, 30
      %v8378 = vsub.s32 %v8374, %v8377
      %vm8379 = vcmp.lt.s32.totalorder %v8378, 0
      %v8380 = vsub.s32 0, %v8378
      %v8381 = vsel %vm8379, %v8380, %v8378
      %v8382 = vclz %v8381
      %v8383 = vsub.s32 %v8382, 2
      %vm8384 = vcmp.gt.s32.totalorder 0, %v8383
      %v8385 = vsel %vm8384, 0, %v8383
      %v8386 = vsub.s32 32, %v8385
      %v8387 = vshll.u32 %v8378, %v8385
      %v8388 = vshrl.u32 %v8370, %v8386
      %v8389 = vor.u32 %v8387, %v8388
      %v8390 = vsub.s32 4294967266, %v8385
      %v8391 = vadd.s32 %v8390, 127
      %v8392 = vshll.u32 %v8391, 23
      %v8393 = vor.u32 4788187, %v8392
      %v8394 = vand.u32 2147483647, %v8393
      %v8396 = vcvt.s32.f32 %v8389
      %v8397 = vmul.f32 %v8396, %v8394
      %v8398 = vxor.u32 %v8397, 2147483648
      %v8399 = vsel %vm8316, %v8398, %v8397
      %v8400 = vsub.s32 4, %v8376
      %v8401 = vsel %vm8316, %v8400, %v8376
      %v8402 = vsel %vm8315, %v2475, %v8399
      %v8403 = vsel %vm8315, 0, %v8401
      %v8404 = vcosq.f32.pop %v8402
      %v8405 = vsinq.f32.pop %v8402
      %vm8406 = vweird.f32 %v2475
      %v8407 = vand.u32 %v8403, 3
      %vm8408 = vcmp.lt.s32.totalorder %v8407, 2
      %vm8409 = vcmp.eq.s32.totalorder %v8407, 0
      %v8410 = vxor.u32 %v8405, 2147483648
      %v8411 = vsel %vm8409, %v8404, %v8410
      %vm8412 = vcmp.eq.s32.totalorder %v8407, 2
      %v8413 = vxor.u32 %v8404, 2147483648
      %v8414 = vsel %vm8412, %v8413, %v8405
      %v8415 = vsel %vm8408, %v8411, %v8414
      %v8416 = vsel %vm8406, nan, %v8415
      %8441 = vrot.lane.b32.xlu0 %v3552, 32
      %v8442 = vpop.permute.xlu0 %8441
      %8443 = vrot.lane.b32.xlu0 %v3656, 32
      %v8444 = vpop.permute.xlu0 %8443
      %8445 = vrot.lane.b32.xlu0 %v3760, 32
      %v8446 = vpop.permute.xlu0 %8445
      %8447 = vrot.lane.b32.xlu0 %v3864, 32
      %v8448 = vpop.permute.xlu0 %8447
      %8449 = vrot.lane.b32.xlu0 %v3968, 32
      %v8450 = vpop.permute.xlu0 %8449
      %8451 = vrot.lane.b32.xlu0 %v4072, 32
      %v8452 = vpop.permute.xlu0 %8451
      %8453 = vrot.lane.b32.xlu0 %v4176, 32
      %v8454 = vpop.permute.xlu0 %8453
      %8455 = vrot.lane.b32.xlu0 %v4280, 32
      %v8456 = vpop.permute.xlu0 %8455
      %8457 = vrot.lane.b32.xlu0 %v4384, 32
      %v8458 = vpop.permute.xlu0 %8457
      %8459 = vrot.lane.b32.xlu0 %v4488, 32
      %v8460 = vpop.permute.xlu0 %8459
      %8461 = vrot.lane.b32.xlu0 %v4592, 32
      %v8462 = vpop.permute.xlu0 %8461
      %8463 = vrot.lane.b32.xlu0 %v4696, 32
      %v8464 = vpop.permute.xlu0 %8463
      %8465 = vrot.lane.b32.xlu0 %v4800, 32
      %v8466 = vpop.permute.xlu0 %8465
      %8467 = vrot.lane.b32.xlu0 %v4904, 32
      %v8468 = vpop.permute.xlu0 %8467
      %8469 = vrot.lane.b32.xlu0 %v5008, 32
      %v8470 = vpop.permute.xlu0 %8469
      %8471 = vrot.lane.b32.xlu0 %v5112, 32
      %v8472 = vpop.permute.xlu0 %8471
      %8473 = vrot.lane.b32.xlu0 %v5216, 32
      %v8474 = vpop.permute.xlu0 %8473
      %8475 = vrot.lane.b32.xlu0 %v5320, 32
      %v8476 = vpop.permute.xlu0 %8475
      %8477 = vrot.lane.b32.xlu0 %v5424, 32
      %v8478 = vpop.permute.xlu0 %8477
      %8479 = vrot.lane.b32.xlu0 %v5528, 32
      %v8480 = vpop.permute.xlu0 %8479
      %8481 = vrot.lane.b32.xlu0 %v5632, 32
      %v8482 = vpop.permute.xlu0 %8481
      %8483 = vrot.lane.b32.xlu0 %v5736, 32
      %v8484 = vpop.permute.xlu0 %8483
      %8485 = vrot.lane.b32.xlu0 %v5840, 32
      %v8486 = vpop.permute.xlu0 %8485
      %8487 = vrot.lane.b32.xlu0 %v5944, 32
      %v8488 = vpop.permute.xlu0 %8487
      %vm8489 = vcmask 261120
      %v8490 = vsel %vm8489, %v8442, %v8444
      %v8491 = vsel %vm8489, %v8444, %v8446
      %v8492 = vsel %vm8489, %v8448, %v8450
      %v8493 = vsel %vm8489, %v8450, %v8452
      %v8494 = vsel %vm8489, %v8454, %v8456
      %v8495 = vsel %vm8489, %v8456, %v8458
      %v8496 = vsel %vm8489, %v8460, %v8462
      %v8497 = vsel %vm8489, %v8462, %v8464
      %v8498 = vsel %vm8489, %v8466, %v8468
      %v8499 = vsel %vm8489, %v8468, %v8470
      %v8500 = vsel %vm8489, %v8472, %v8474
      %v8501 = vsel %vm8489, %v8474, %v8476
      %v8502 = vsel %vm8489, %v8478, %v8480
      %v8503 = vsel %vm8489, %v8480, %v8482
      %v8504 = vsel %vm8489, %v8484, %v8486
      %v8505 = vsel %vm8489, %v8486, %v8488
      %8554 = vrot.lane.b32.xlu0 %v6047, 96
      %v8555 = vpop.permute.xlu0 %8554
      %8556 = vrot.lane.b32.xlu0 %v6150, 96
      %v8557 = vpop.permute.xlu0 %8556
      %8558 = vrot.lane.b32.xlu0 %v6253, 96
      %v8559 = vpop.permute.xlu0 %8558
      %8560 = vrot.lane.b32.xlu0 %v6356, 96
      %v8561 = vpop.permute.xlu0 %8560
      %8562 = vrot.lane.b32.xlu0 %v6459, 96
      %v8563 = vpop.permute.xlu0 %8562
      %8564 = vrot.lane.b32.xlu0 %v6562, 96
      %v8565 = vpop.permute.xlu0 %8564
      %8566 = vrot.lane.b32.xlu0 %v6665, 96
      %v8567 = vpop.permute.xlu0 %8566
      %8568 = vrot.lane.b32.xlu0 %v6768, 96
      %v8569 = vpop.permute.xlu0 %8568
      %8570 = vrot.lane.b32.xlu0 %v6871, 96
      %v8571 = vpop.permute.xlu0 %8570
      %8572 = vrot.lane.b32.xlu0 %v6974, 96
      %v8573 = vpop.permute.xlu0 %8572
      %8574 = vrot.lane.b32.xlu0 %v7077, 96
      %v8575 = vpop.permute.xlu0 %8574
      %8576 = vrot.lane.b32.xlu0 %v7180, 96
      %v8577 = vpop.permute.xlu0 %8576
      %8578 = vrot.lane.b32.xlu0 %v7283, 96
      %v8579 = vpop.permute.xlu0 %8578
      %8580 = vrot.lane.b32.xlu0 %v7386, 96
      %v8581 = vpop.permute.xlu0 %8580
      %8582 = vrot.lane.b32.xlu0 %v7489, 96
      %v8583 = vpop.permute.xlu0 %8582
      %8584 = vrot.lane.b32.xlu0 %v7592, 96
      %v8585 = vpop.permute.xlu0 %8584
      %8586 = vrot.lane.b32.xlu0 %v7695, 96
      %v8587 = vpop.permute.xlu0 %8586
      %8588 = vrot.lane.b32.xlu0 %v7798, 96
      %v8589 = vpop.permute.xlu0 %8588
      %8590 = vrot.lane.b32.xlu0 %v7901, 96
      %v8591 = vpop.permute.xlu0 %8590
      %8592 = vrot.lane.b32.xlu0 %v8004, 96
      %v8593 = vpop.permute.xlu0 %8592
      %8594 = vrot.lane.b32.xlu0 %v8107, 96
      %v8595 = vpop.permute.xlu0 %8594
      %8596 = vrot.lane.b32.xlu0 %v8210, 96
      %v8597 = vpop.permute.xlu0 %8596
      %8598 = vrot.lane.b32.xlu0 %v8313, 96
      %v8599 = vpop.permute.xlu0 %8598
      %8600 = vrot.lane.b32.xlu0 %v8416, 96
      %v8601 = vpop.permute.xlu0 %8600
      %vm8602 = vcmask 785408
      %v8603 = vsel %vm8602, %v8555, %v8557
      %v8604 = vsel %vm8602, %v8557, %v8559
      %v8605 = vsel %vm8602, %v8561, %v8563
      %v8606 = vsel %vm8602, %v8563, %v8565
      %v8607 = vsel %vm8602, %v8567, %v8569
      %v8608 = vsel %vm8602, %v8569, %v8571
      %v8609 = vsel %vm8602, %v8573, %v8575
      %v8610 = vsel %vm8602, %v8575, %v8577
      %v8611 = vsel %vm8602, %v8579, %v8581
      %v8612 = vsel %vm8602, %v8581, %v8583
      %v8613 = vsel %vm8602, %v8585, %v8587
      %v8614 = vsel %vm8602, %v8587, %v8589
      %v8615 = vsel %vm8602, %v8591, %v8593
      %v8616 = vsel %vm8602, %v8593, %v8595
      %v8617 = vsel %vm8602, %v8597, %v8599
      %v8618 = vsel %vm8602, %v8599, %v8601
      %v8651 = vsel %vm8489, %v3441, %v8442
      %v8652 = vsel %vm8489, %v3442, %v8448
      %v8653 = vsel %vm8489, %v3443, %v8454
      %v8654 = vsel %vm8489, %v3444, %v8460
      %v8655 = vsel %vm8489, %v3445, %v8466
      %v8656 = vsel %vm8489, %v3446, %v8472
      %v8657 = vsel %vm8489, %v3447, %v8478
      %v8658 = vsel %vm8489, %v3448, %v8484
      %v8659 = vsel %vm8602, %v8491, %v8555
      %v8660 = vsel %vm8602, %v8493, %v8561
      %v8661 = vsel %vm8602, %v8495, %v8567
      %v8662 = vsel %vm8602, %v8497, %v8573
      %v8663 = vsel %vm8602, %v8499, %v8579
      %v8664 = vsel %vm8602, %v8501, %v8585
      %v8665 = vsel %vm8602, %v8503, %v8591
      %v8666 = vsel %vm8602, %v8505, %v8597
      %8667 = vst [vmem:[%s228] sm:$0xff] %v8651
      %8668 = vst [vmem:[%s228 + $0x8] sm:$0xff] %v8490
      %8669 = vst [vmem:[%s228 + $0x10] sm:$0xff] %v8659
      %8670 = vst [vmem:[%s228 + $0x18] sm:$0xff] %v8603
      %8671 = vst [vmem:[%s228 + $0x20] sm:$0xff] %v8604
      %8672 = vst.msk [vmem:[%s228 + $0x28] sm:$0xff] %vm8489, %v8559
      %8673 = vst [vmem:[%s228 + $0x30] sm:$0xff] %v8652
      %8674 = vst [vmem:[%s228 + $0x38] sm:$0xff] %v8492
      %8675 = vst [vmem:[%s228 + $0x40] sm:$0xff] %v8660
      %8676 = vst [vmem:[%s228 + $0x48] sm:$0xff] %v8605
      %8677 = vst [vmem:[%s228 + $0x50] sm:$0xff] %v8606
      %8678 = vst.msk [vmem:[%s228 + $0x58] sm:$0xff] %vm8489, %v8565
      %8679 = vst [vmem:[%s228 + $0x60] sm:$0xff] %v8653
      %8680 = vst [vmem:[%s228 + $0x68] sm:$0xff] %v8494
      %8681 = vst [vmem:[%s228 + $0x70] sm:$0xff] %v8661
      %8682 = vst [vmem:[%s228 + $0x78] sm:$0xff] %v8607
      %8683 = vst [vmem:[%s228 + $0x80] sm:$0xff] %v8608
      %8684 = vst.msk [vmem:[%s228 + $0x88] sm:$0xff] %vm8489, %v8571
      %8685 = vst [vmem:[%s228 + $0x90] sm:$0xff] %v8654
      %8686 = vst [vmem:[%s228 + $0x98] sm:$0xff] %v8496
      %8687 = vst [vmem:[%s228 + $0xa0] sm:$0xff] %v8662
      %8688 = vst [vmem:[%s228 + $0xa8] sm:$0xff] %v8609
      %8689 = vst [vmem:[%s228 + $0xb0] sm:$0xff] %v8610
      %8690 = vst.msk [vmem:[%s228 + $0xb8] sm:$0xff] %vm8489, %v8577
      %8691 = vst [vmem:[%s228 + $0xc0] sm:$0xff] %v8655
      %8692 = vst [vmem:[%s228 + $0xc8] sm:$0xff] %v8498
      %8693 = vst [vmem:[%s228 + $0xd0] sm:$0xff] %v8663
      %8694 = vst [vmem:[%s228 + $0xd8] sm:$0xff] %v8611
      %8695 = vst [vmem:[%s228 + $0xe0] sm:$0xff] %v8612
      %8696 = vst.msk [vmem:[%s228 + $0xe8] sm:$0xff] %vm8489, %v8583
      %8697 = vst [vmem:[%s228 + $0xf0] sm:$0xff] %v8656
      %8698 = vst [vmem:[%s228 + $0xf8] sm:$0xff] %v8500
      %8699 = vst [vmem:[%s228 + $0x100] sm:$0xff] %v8664
      %8700 = vst [vmem:[%s228 + $0x108] sm:$0xff] %v8613
      %8701 = vst [vmem:[%s228 + $0x110] sm:$0xff] %v8614
      %8702 = vst.msk [vmem:[%s228 + $0x118] sm:$0xff] %vm8489, %v8589
      %8703 = vst [vmem:[%s228 + $0x120] sm:$0xff] %v8657
      %8704 = vst [vmem:[%s228 + $0x128] sm:$0xff] %v8502
      %8705 = vst [vmem:[%s228 + $0x130] sm:$0xff] %v8665
      %8706 = vst [vmem:[%s228 + $0x138] sm:$0xff] %v8615
      %8707 = vst [vmem:[%s228 + $0x140] sm:$0xff] %v8616
      %8708 = vst.msk [vmem:[%s228 + $0x148] sm:$0xff] %vm8489, %v8595
      %8709 = vst [vmem:[%s228 + $0x150] sm:$0xff] %v8658
      %8710 = vst [vmem:[%s228 + $0x158] sm:$0xff] %v8504
      %8711 = vst [vmem:[%s228 + $0x160] sm:$0xff] %v8666
      %8712 = vst [vmem:[%s228 + $0x168] sm:$0xff] %v8617
      %8713 = vst [vmem:[%s228 + $0x170] sm:$0xff] %v8618
      %8714 = vst.msk [vmem:[%s228 + $0x178] sm:$0xff] %vm8489, %v8601
      %s8715 = smul.u32 8, %s16
      %p8716 = scmp.lt.s32.totalorder %s8715, 15
      %s8717 = scalar_select %p8716, %s8715, 15
      %s8718 = smul.addr %s8717, 6
      %s8719 = smul.addr %s8718, 8
      %s8720 = scalar_lea.vmem %s5, %s8719
      // Predicated region
      $region41: #{pos_encoding.1} parent=39 // pred_check
        %p8721 = pneg %p144
      $region42: #{pos_encoding.1} parent=39 // pred_check_branch
        %8723 = sbr.rel (%p8721) target = $region44
      $region43: #{pos_encoding.1} parent=39 // pred_region
        %s8724 = smul.u32 8, %s16
      $region44: #{pos_encoding.1} parent=39 // pred_fallthru
        _
    $region40: #{pos_encoding.1} parent=5 // pred_fallthru
      _
    %p8725 = scmp.le.s32.totalorder 2, %s11
    // Predicated region
    $region45: #{pos_encoding.1} parent=5 // pred_check
      %p8726 = pneg %p8725
    $region46: #{pos_encoding.1} parent=5 // pred_check_branch
      %8728 = sbr.rel (%p8726) target = $region48
    $region47: #{pos_encoding.1} parent=5 // pred_region
      %s8729 = ssub.s32 %s11, 2
      // Predicated region
      $region49: #{pos_encoding.1} parent=47 // pred_check
        %p8730 = pneg %p150
      $region50: #{pos_encoding.1} parent=47 // pred_check_branch
        %8732 = sbr.rel (%p8730) target = $region52
      $region51: #{pos_encoding.1} parent=47 // pred_region
        %s8733 = smul.u32 8, %s17
        %p8734 = scmp.lt.s32.totalorder %s8733, 15
        %s8735 = scalar_select %p8734, %s8733, 15
        %s8736 = smul.addr %s8735, 6
        %s8737 = smul.addr %s8736, 8
        %s8738 = scalar_lea.vmem %s5, %s8737
      $region52: #{pos_encoding.1} parent=47 // pred_fallthru
        _
    $region48: #{pos_encoding.1} parent=5 // pred_fallthru
      _
  $region6: #{pos_encoding.1} parent=0 // loop_footer
    %s15 = sadd.s32 1, %s11
  $region7: #{pos_encoding.1} parent=0 // loop_footer_branch
    %10 = sbr.rel target = $region3
  $region8: #{pos_encoding.1} parent=0 // loop_exit
    _

</llo_original>
